<compile_context>
chip_gen: v6e
topology: v6e:2x2x1
jax: 0.10.0
libtpu: 0.0.40
codegen_flags: <defaults>
</compile_context>

<pallas_src>
import jax
import jax.numpy as jnp
from jax.experimental import pallas as pl
from jax.experimental.pallas import tpu as pltpu

# ----------------------------- configuration --------------------------------
B = 2                        # batch
C = 3                        # input channels
IMG = 16                     # image H = W
PATCH = 8                    # patch size
NP = (IMG // PATCH) ** 2     # number of patches (4)
S = NP + 1                   # tokens incl. cls (5)
D = 32                       # embedding dim
HEADS = 4
DH = D // HEADS              # per-head dim (8)
MLP = 4 * D                  # MLP hidden dim (128)
DEPTH = 3                    # total transformer blocks
GRAD_FROM_BLOCK = 2          # bottom 2 blocks = frozen extractor, top 1 = contrastive branch
NUM_ATTR = 4                 # number of attribute heads (small stand-in for 28)
AC = 8                       # attribute_feat_channal (PyTorch default)
CPP = C * PATCH * PATCH      # flattened patch feature size (192)
SCALE = DH ** -0.5


# ----------------------------- in-kernel math helpers ------------------------
def _layer_norm(x, w, b, eps=1e-5):
    mu = jnp.mean(x, axis=-1, keepdims=True)
    var = jnp.mean(jnp.square(x - mu), axis=-1, keepdims=True)
    return (x - mu) * jax.lax.rsqrt(var + eps) * w + b


def _erf(x):
    # Abramowitz & Stegun 7.1.26 polynomial, |err| < 1.5e-7.
    # TODO(synk): replaces exact erf (no guaranteed Mosaic lowering for lax.erf).
    a1, a2, a3, a4, a5 = (0.254829592, -0.284496736, 1.421413741,
                          -1.453152027, 1.061405429)
    p = 0.3275911
    ax = jnp.abs(x)
    t = 1.0 / (1.0 + p * ax)
    poly = ((((a5 * t + a4) * t + a3) * t + a2) * t + a1) * t
    y = 1.0 - poly * jnp.exp(-ax * ax)
    return jnp.where(x >= 0.0, y, -y)


def _gelu(x):
    # exact-erf GELU (PyTorch nn.GELU default)
    return 0.5 * x * (1.0 + _erf(x * 0.7071067811865476))


def _l2_normalize(v, eps=1e-12):
    # F.normalize(p=2, dim=1, eps=1e-12)
    n = jnp.sqrt(jnp.sum(v * v, axis=-1, keepdims=True))
    return v * pl.reciprocal(jnp.maximum(n, eps), approx=True)


# ----------------------------- the fused kernel ------------------------------
def fused_forward_kernel(
        # inputs
        x_tok_ref, tok_add_ref, patch_w_ref,
        ln1_w_ref, ln1_b_ref, qkv_w_ref, qkv_b_ref, proj_w_ref, proj_b_ref,
        ln2_w_ref, ln2_b_ref, fc1_w_ref, fc1_b_ref, fc2_w_ref, fc2_b_ref,
        norm_w_ref, norm_b_ref, ae_w_ref, ae_b_ref, attr_w_ref, attr_b_ref,
        # outputs
        co_out_ref, heads_ref, concat_ref,
        # scratch
        z_scr, qkv_scr):
    f32 = jnp.float32

    # ---- patch embed + cls token + pos embed (cls/pos/bias pre-folded into tok_add;
    #      cls rows of x_tok are zero so the matmul contributes nothing there) ----
    z_scr[...] = (jnp.dot(x_tok_ref[...], patch_w_ref[...],
                          preferred_element_type=f32) + tok_add_ref[...])      # (B*S, D)

    # ---- transformer blocks: bottom (feature_extractor) + top (contrastive_branch) ----
    for d in range(DEPTH):
        z = z_scr[...]
        h = _layer_norm(z, ln1_w_ref[d], ln1_b_ref[d])                         # (B*S, D)
        # fused QKV projection for both batch elements at once
        qkv_scr[...] = (jnp.dot(h, qkv_w_ref[d], preferred_element_type=f32)
                        + qkv_b_ref[d])                                        # (B*S, 3D)
        pw_d = proj_w_ref[d]                                                   # (D, D)
        for b in range(B):
            r0 = b * S
            acc = None
            for hd in range(HEADS):
                q = qkv_scr[r0:r0 + S, hd * DH:(hd + 1) * DH]                  # (S, DH)
                k = qkv_scr[r0:r0 + S, D + hd * DH:D + (hd + 1) * DH]
                v = qkv_scr[r0:r0 + S, 2 * D + hd * DH:2 * D + (hd + 1) * DH]
                s = jax.lax.dot_general(q, k, (((1,), (1,)), ((), ())),
                                        preferred_element_type=f32) * SCALE    # (S, S)
                s = s - jnp.max(s, axis=-1, keepdims=True)
                e = jnp.exp(s)
                p = e * pl.reciprocal(jnp.sum(e, axis=-1, keepdims=True),
                                      approx=True)
                oh = jnp.dot(p, v, preferred_element_type=f32)                 # (S, DH)
                # fused output projection: sum over per-head row-blocks of W_proj
                # == concat(heads) @ W_proj
                t = jnp.dot(oh, pw_d[hd * DH:(hd + 1) * DH, :],
                            preferred_element_type=f32)                        # (S, D)
                acc = t if acc is None else acc + t
            z_scr[r0:r0 + S, :] = z_scr[r0:r0 + S, :] + acc + proj_b_ref[d]
        # MLP on the folded (B*S, D) rows
        z = z_scr[...]
        h2 = _layer_norm(z, ln2_w_ref[d], ln2_b_ref[d])
        h2 = _gelu(jnp.dot(h2, fc1_w_ref[d], preferred_element_type=f32)
                   + fc1_b_ref[d])                                             # (B*S, MLP)
        h2 = (jnp.dot(h2, fc2_w_ref[d], preferred_element_type=f32)
              + fc2_b_ref[d])                                                  # (B*S, D)
        z_scr[...] = z + h2

    # ---- contrastive_branch final LayerNorm -> co_embedding ----
    z_scr[...] = _layer_norm(z_scr[...], norm_w_ref[...], norm_b_ref[...])

    ae_w = ae_w_ref[...]            # (D, AC)   Conv1d(D->AC,1) with BN folded in
    ae_b = ae_b_ref[...]            # (1, AC)
    attr_w = attr_w_ref[...]        # (AC, NUM_ATTR*AC)  all heads stacked, BN folded
    attr_b = attr_b_ref[...]        # (1, NUM_ATTR*AC)

    for b in range(B):
        r0 = b * S
        cls_b = z_scr[r0:r0 + 1, :]                                            # (1, D)
        co_b = z_scr[r0:r0 + S, :]                                             # (S, D)
        # ChannelAvgPoolFlat(kernel=S): mean over all tokens -> att_embedding_out
        mean_b = jnp.mean(co_b, axis=0, keepdims=True)                         # (1, D)
        tok_b = z_scr[r0 + 1:r0 + S, :]                                        # (NP, D)

        # attribute_embedding_branch: Conv1d(D->AC,1) + BatchNorm1d(eval, folded) + GELU
        ae = _gelu(jnp.dot(tok_b, ae_w, preferred_element_type=f32) + ae_b)    # (NP, AC)
        # all NUM_ATTR heads fused: Conv1d(AC->AC,1)+BN(folded)+GELU, then
        # AdaptiveMaxPool1d(1) over tokens + Flatten
        y = _gelu(jnp.dot(ae, attr_w, preferred_element_type=f32) + attr_b)    # (NP, A*AC)
        head_b = jnp.max(y, axis=0, keepdims=True)                             # (1, A*AC)

        co_out_ref[b:b + 1, :] = cls_b                                         # co_embedding_out
        heads_ref[b:b + 1, :] = head_b                                         # head_embedding_list (stacked)
        # eval concat=True output: cat(normalize(co_out), normalize(att_out))
        concat_ref[b:b + 1, 0:D] = _l2_normalize(cls_b)
        concat_ref[b:b + 1, D:2 * D] = _l2_normalize(mean_b)


# ----------------------------- parameters -------------------------------------
def init_params(key):
    ks = iter(jax.random.split(key, 32))

    def nrm(shape, std=0.02):
        return std * jax.random.normal(next(ks), shape, jnp.float32)

    p = {
        # patch embed / tokens
        'patch_w': nrm((CPP, D)),
        'patch_b': nrm((1, D)),
        'cls': nrm((1, 1, D)),
        'pos': nrm((1, S, D)),
        # transformer blocks, stacked along DEPTH
        'ln1_w': jnp.ones((DEPTH, 1, D), jnp.float32),
        'ln1_b': jnp.zeros((DEPTH, 1, D), jnp.float32),
        'qkv_w': nrm((DEPTH, D, 3 * D)), 'qkv_b': nrm((DEPTH, 1, 3 * D)),
        'proj_w': nrm((DEPTH, D, D)), 'proj_b': nrm((DEPTH, 1, D)),
        'ln2_w': jnp.ones((DEPTH, 1, D), jnp.float32),
        'ln2_b': jnp.zeros((DEPTH, 1, D), jnp.float32),
        'fc1_w': nrm((DEPTH, D, MLP)), 'fc1_b': nrm((DEPTH, 1, MLP)),
        'fc2_w': nrm((DEPTH, MLP, D)), 'fc2_b': nrm((DEPTH, 1, D)),
        # contrastive_branch final LayerNorm
        'norm_w': jnp.ones((1, D), jnp.float32),
        'norm_b': jnp.zeros((1, D), jnp.float32),
        # attribute_embedding_branch: Conv1d(D->AC,1) + BatchNorm1d(AC)
        'ae_w': nrm((D, AC)), 'ae_b': nrm((1, AC)),
        'ae_bn_g': jnp.ones((1, AC), jnp.float32), 'ae_bn_b': jnp.zeros((1, AC), jnp.float32),
        'ae_bn_m': jnp.zeros((1, AC), jnp.float32), 'ae_bn_v': jnp.ones((1, AC), jnp.float32),
        # attribute_branch_list: per-attribute Conv1d(AC->AC,1) + BatchNorm1d(AC)
        'attr_w': nrm((NUM_ATTR, AC, AC)), 'attr_b': nrm((NUM_ATTR, 1, AC)),
        'attr_bn_g': jnp.ones((NUM_ATTR, 1, AC), jnp.float32),
        'attr_bn_b': jnp.zeros((NUM_ATTR, 1, AC), jnp.float32),
        'attr_bn_m': jnp.zeros((NUM_ATTR, 1, AC), jnp.float32),
        'attr_bn_v': jnp.ones((NUM_ATTR, 1, AC), jnp.float32),
    }
    return p


# ----------------------------- wrapper-side packing ---------------------------
def _fold_bn(w, b, gamma, beta, mean, var, eps=1e-5):
    # Fold eval-mode BatchNorm1d into a preceding 1x1 conv (token-major matmul form).
    s = gamma * jax.lax.rsqrt(var + eps)          # (1, Cout)
    return w * s, b * s + (beta - mean * s)


def _prepare_token_inputs(params, x_img):
    # NCHW image -> non-overlapping patches flattened in (C, ph, pw) order (conv semantics),
    # with zero rows at the cls positions so one matmul handles the whole token matrix.
    xb = x_img.reshape(B, C, IMG // PATCH, PATCH, IMG // PATCH, PATCH)
    xb = xb.transpose(0, 2, 4, 1, 3, 5).reshape(B, NP, CPP)
    x_tok = jnp.concatenate([jnp.zeros((B, 1, CPP), jnp.float32), xb], axis=1)
    x_tok = x_tok.reshape(B * S, CPP)
    # additive slab: cls row gets cls_token + pos[0]; patch rows get patch_bias + pos[1+i]
    add = jnp.concatenate(
        [params['cls'] + params['pos'][:, :1, :],
         params['patch_b'][None, :, :] + params['pos'][:, 1:, :]], axis=1)     # (1, S, D)
    tok_add = jnp.broadcast_to(add, (B, S, D)).reshape(B * S, D)
    return x_tok, tok_add


@jax.jit
def attribute_transformer_forward(params, x_img):
    x_tok, tok_add = _prepare_token_inputs(params, x_img)

    ae_w, ae_b = _fold_bn(params['ae_w'], params['ae_b'],
                          params['ae_bn_g'], params['ae_bn_b'],
                          params['ae_bn_m'], params['ae_bn_v'])
    aw, ab = [], []
    for a in range(NUM_ATTR):
        w, b_ = _fold_bn(params['attr_w'][a], params['attr_b'][a],
                         params['attr_bn_g'][a], params['attr_bn_b'][a],
                         params['attr_bn_m'][a], params['attr_bn_v'][a])
        aw.append(w)
        ab.append(b_)
    attr_w = jnp.concatenate(aw, axis=1)          # (AC, NUM_ATTR*AC)
    attr_b = jnp.concatenate(ab, axis=1)          # (1,  NUM_ATTR*AC)

    co_out, heads_all, concat_out = pl.pallas_call(
        fused_forward_kernel,
        out_shape=(jax.ShapeDtypeStruct((B, D), jnp.float32),                 # co_embedding_out
                   jax.ShapeDtypeStruct((B, NUM_ATTR * AC), jnp.float32),     # stacked heads
                   jax.ShapeDtypeStruct((B, 2 * D), jnp.float32)),            # eval concat output
        scratch_shapes=[pltpu.VMEM((B * S, D), jnp.float32),                  # token activations
                        pltpu.VMEM((B * S, 3 * D), jnp.float32)],             # fused QKV
    )(x_tok, tok_add, params['patch_w'],
      params['ln1_w'], params['ln1_b'], params['qkv_w'], params['qkv_b'],
      params['proj_w'], params['proj_b'], params['ln2_w'], params['ln2_b'],
      params['fc1_w'], params['fc1_b'], params['fc2_w'], params['fc2_b'],
      params['norm_w'], params['norm_b'], ae_w, ae_b, attr_w, attr_b)

    head_embedding_list = [heads_all[:, a * AC:(a + 1) * AC] for a in range(NUM_ATTR)]
    # Returns: training tuple pieces (co_embedding_out, head_embedding_list) and the
    # eval concat=True output cat(normalize(co_out), normalize(att_embedding_out)).
    return co_out, head_embedding_list, concat_out


# ----------------------------- main --------------------------------------------
if __name__ == "__main__":
    key = jax.random.PRNGKey(0)
    pkey, xkey = jax.random.split(key)
    params = init_params(pkey)
    x = jax.random.normal(xkey, (B, C, IMG, IMG), jnp.float32)   # NCHW, like PyTorch
    co_out, head_list, concat_out = attribute_transformer_forward(params, x)
    jax.block_until_ready((co_out, head_list, concat_out))
    assert co_out.shape == (B, D)
    assert len(head_list) == NUM_ATTR and head_list[0].shape == (B, AC)
    assert concat_out.shape == (B, 2 * D)
    print("KERNEL_OK")
</pallas_src>

<mosaic_0001>
module attributes {stable_mosaic.version = 11 : i64} {
  func.func @fused_forward_kernel(%arg0: memref<10x192xf32, #tpu.memory_space<vmem>>, %arg1: memref<10x32xf32, #tpu.memory_space<vmem>>, %arg2: memref<192x32xf32, #tpu.memory_space<vmem>>, %arg3: memref<3x1x32xf32, #tpu.memory_space<vmem>>, %arg4: memref<3x1x32xf32, #tpu.memory_space<vmem>>, %arg5: memref<3x32x96xf32, #tpu.memory_space<vmem>>, %arg6: memref<3x1x96xf32, #tpu.memory_space<vmem>>, %arg7: memref<3x32x32xf32, #tpu.memory_space<vmem>>, %arg8: memref<3x1x32xf32, #tpu.memory_space<vmem>>, %arg9: memref<3x1x32xf32, #tpu.memory_space<vmem>>, %arg10: memref<3x1x32xf32, #tpu.memory_space<vmem>>, %arg11: memref<3x32x128xf32, #tpu.memory_space<vmem>>, %arg12: memref<3x1x128xf32, #tpu.memory_space<vmem>>, %arg13: memref<3x128x32xf32, #tpu.memory_space<vmem>>, %arg14: memref<3x1x32xf32, #tpu.memory_space<vmem>>, %arg15: memref<1x32xf32, #tpu.memory_space<vmem>>, %arg16: memref<1x32xf32, #tpu.memory_space<vmem>>, %arg17: memref<32x8xf32, #tpu.memory_space<vmem>>, %arg18: memref<1x8xf32, #tpu.memory_space<vmem>>, %arg19: memref<8x32xf32, #tpu.memory_space<vmem>>, %arg20: memref<1x32xf32, #tpu.memory_space<vmem>>, %arg21: memref<2x32xf32, #tpu.memory_space<vmem>>, %arg22: memref<2x32xf32, #tpu.memory_space<vmem>>, %arg23: memref<2x64xf32, #tpu.memory_space<vmem>>, %arg24: memref<10x32xf32, #tpu.memory_space<vmem>>, %arg25: memref<10x96xf32, #tpu.memory_space<vmem>>) attributes {dimension_semantics = [], scalar_prefetch = 0 : i64, scratch_operands = 2 : i64, tpu.core_type = #tpu.core_type<tc>} {
    %c0 = arith.constant 0 : index
    %c0_0 = arith.constant 0 : index
    %0 = vector.load %arg0[%c0, %c0_0] : memref<10x192xf32, #tpu.memory_space<vmem>>, vector<10x192xf32>
    %c0_1 = arith.constant 0 : index
    %c0_2 = arith.constant 0 : index
    %1 = vector.load %arg2[%c0_1, %c0_2] : memref<192x32xf32, #tpu.memory_space<vmem>>, vector<192x32xf32>
    %cst = arith.constant dense<0.000000e+00> : vector<10x32xf32>
    %2 = tpu.matmul %0, %1, %cst {dimension_numbers = #tpu.dot_dimension_numbers<[1], [0], [0], [1], [0, 0, 1, 1], [], []>} : vector<10x192xf32>, vector<192x32xf32>, vector<10x32xf32> -> vector<10x32xf32>
    %c0_3 = arith.constant 0 : index
    %c0_4 = arith.constant 0 : index
    %3 = vector.load %arg1[%c0_3, %c0_4] : memref<10x32xf32, #tpu.memory_space<vmem>>, vector<10x32xf32>
    %4 = arith.addf %2, %3 : vector<10x32xf32>
    %c0_5 = arith.constant 0 : index
    %c0_6 = arith.constant 0 : index
    %5 = vector.load %arg24[%c0_5, %c0_6] : memref<10x32xf32, #tpu.memory_space<vmem>>, vector<10x32xf32>
    tpu.vector_store %arg24[%c0_5, %c0_6], %4 {strides = array<i32>} : memref<10x32xf32, #tpu.memory_space<vmem>>, vector<10x32xf32>,
    %c0_7 = arith.constant 0 : index
    %c0_8 = arith.constant 0 : index
    %6 = vector.load %arg24[%c0_7, %c0_8] : memref<10x32xf32, #tpu.memory_space<vmem>>, vector<10x32xf32>
    %c0_9 = arith.constant 0 : index
    %c0_10 = arith.constant 0 : index
    %c0_11 = arith.constant 0 : index
    %7 = vector.load %arg3[%c0_9, %c0_10, %c0_11] : memref<3x1x32xf32, #tpu.memory_space<vmem>>, vector<1x1x32xf32>
    %8 = vector.shape_cast %7 : vector<1x1x32xf32> to vector<1x32xf32>
    %c0_12 = arith.constant 0 : index
    %c0_13 = arith.constant 0 : index
    %c0_14 = arith.constant 0 : index
    %9 = vector.load %arg4[%c0_12, %c0_13, %c0_14] : memref<3x1x32xf32, #tpu.memory_space<vmem>>, vector<1x1x32xf32>
    %10 = vector.shape_cast %9 : vector<1x1x32xf32> to vector<1x32xf32>
    %cst_15 = arith.constant dense<0.000000e+00> : vector<10xf32>
    %11 = vector.multi_reduction <add>, %6, %cst_15 [1] : vector<10x32xf32> to vector<10xf32>
    %12 = vector.shape_cast %11 : vector<10xf32> to vector<10x1xf32>
    %cst_16 = arith.constant 3.200000e+01 : f32
    %13 = vector.broadcast %cst_16 : f32 to vector<10x1xf32>
    %14 = arith.divf %12, %13 : vector<10x1xf32>
    %15 = vector.broadcast %14 : vector<10x1xf32> to vector<10x32xf32>
    %16 = arith.subf %6, %15 : vector<10x32xf32>
    %17 = arith.mulf %16, %16 : vector<10x32xf32>
    %cst_17 = arith.constant dense<0.000000e+00> : vector<10xf32>
    %18 = vector.multi_reduction <add>, %17, %cst_17 [1] : vector<10x32xf32> to vector<10xf32>
    %19 = vector.shape_cast %18 : vector<10xf32> to vector<10x1xf32>
    %cst_18 = arith.constant 3.200000e+01 : f32
    %20 = vector.broadcast %cst_18 : f32 to vector<10x1xf32>
    %21 = arith.divf %19, %20 : vector<10x1xf32>
    %22 = vector.broadcast %14 : vector<10x1xf32> to vector<10x32xf32>
    %23 = arith.subf %6, %22 : vector<10x32xf32>
    %cst_19 = arith.constant 9.99999974E-6 : f32
    %24 = vector.broadcast %cst_19 : f32 to vector<10x1xf32>
    %25 = arith.addf %21, %24 : vector<10x1xf32>
    %26 = math.rsqrt %25 : vector<10x1xf32>
    %27 = vector.broadcast %26 : vector<10x1xf32> to vector<10x32xf32>
    %28 = arith.mulf %23, %27 : vector<10x32xf32>
    %29 = vector.broadcast %8 : vector<1x32xf32> to vector<10x32xf32>
    %30 = arith.mulf %28, %29 : vector<10x32xf32>
    %31 = vector.broadcast %10 : vector<1x32xf32> to vector<10x32xf32>
    %32 = arith.addf %30, %31 : vector<10x32xf32>
    %c0_20 = arith.constant 0 : index
    %c0_21 = arith.constant 0 : index
    %c0_22 = arith.constant 0 : index
    %33 = vector.load %arg5[%c0_20, %c0_21, %c0_22] : memref<3x32x96xf32, #tpu.memory_space<vmem>>, vector<1x32x96xf32>
    %34 = vector.shape_cast %33 : vector<1x32x96xf32> to vector<32x96xf32>
    %cst_23 = arith.constant dense<0.000000e+00> : vector<10x96xf32>
    %35 = tpu.matmul %32, %34, %cst_23 {dimension_numbers = #tpu.dot_dimension_numbers<[1], [0], [0], [1], [0, 0, 1, 1], [], []>} : vector<10x32xf32>, vector<32x96xf32>, vector<10x96xf32> -> vector<10x96xf32>
    %c0_24 = arith.constant 0 : index
    %c0_25 = arith.constant 0 : index
    %c0_26 = arith.constant 0 : index
    %36 = vector.load %arg6[%c0_24, %c0_25, %c0_26] : memref<3x1x96xf32, #tpu.memory_space<vmem>>, vector<1x1x96xf32>
    %37 = vector.shape_cast %36 : vector<1x1x96xf32> to vector<1x96xf32>
    %38 = vector.broadcast %37 : vector<1x96xf32> to vector<10x96xf32>
    %39 = arith.addf %35, %38 : vector<10x96xf32>
    %c0_27 = arith.constant 0 : index
    %c0_28 = arith.constant 0 : index
    %40 = vector.load %arg25[%c0_27, %c0_28] : memref<10x96xf32, #tpu.memory_space<vmem>>, vector<10x96xf32>
    tpu.vector_store %arg25[%c0_27, %c0_28], %39 {strides = array<i32>} : memref<10x96xf32, #tpu.memory_space<vmem>>, vector<10x96xf32>,
    %c0_29 = arith.constant 0 : index
    %c0_30 = arith.constant 0 : index
    %c0_31 = arith.constant 0 : index
    %41 = vector.load %arg7[%c0_29, %c0_30, %c0_31] : memref<3x32x32xf32, #tpu.memory_space<vmem>>, vector<1x32x32xf32>
    %42 = vector.shape_cast %41 : vector<1x32x32xf32> to vector<32x32xf32>
    %c0_32 = arith.constant 0 : index
    %c0_33 = arith.constant 0 : index
    %43 = vector.load %arg25[%c0_32, %c0_33] : memref<10x96xf32, #tpu.memory_space<vmem>>, vector<5x8xf32>
    %c0_34 = arith.constant 0 : index
    %c32 = arith.constant 32 : index
    %44 = vector.load %arg25[%c0_34, %c32] : memref<10x96xf32, #tpu.memory_space<vmem>>, vector<5x8xf32>
    %c0_35 = arith.constant 0 : index
    %c64 = arith.constant 64 : index
    %45 = vector.load %arg25[%c0_35, %c64] : memref<10x96xf32, #tpu.memory_space<vmem>>, vector<5x8xf32>
    %cst_36 = arith.constant dense<0.000000e+00> : vector<5x5xf32>
    %46 = tpu.matmul %43, %44, %cst_36 {dimension_numbers = #tpu.dot_dimension_numbers<[1], [1], [0], [0], [0, 0, 1, 0], [], []>} : vector<5x8xf32>, vector<5x8xf32>, vector<5x5xf32> -> vector<5x5xf32>
    %cst_37 = arith.constant 0.353553385 : f32
    %47 = vector.broadcast %cst_37 : f32 to vector<5x5xf32>
    %48 = arith.mulf %46, %47 : vector<5x5xf32>
    %cst_38 = arith.constant dense<0xFF800000> : vector<5xf32>
    %49 = vector.multi_reduction <maximumf>, %48, %cst_38 [1] : vector<5x5xf32> to vector<5xf32>
    %50 = vector.shape_cast %49 : vector<5xf32> to vector<5x1xf32>
    %51 = vector.broadcast %50 : vector<5x1xf32> to vector<5x5xf32>
    %52 = arith.subf %48, %51 : vector<5x5xf32>
    %53 = math.exp %52 : vector<5x5xf32>
    %cst_39 = arith.constant dense<0.000000e+00> : vector<5xf32>
    %54 = vector.multi_reduction <add>, %53, %cst_39 [1] : vector<5x5xf32> to vector<5xf32>
    %55 = vector.shape_cast %54 : vector<5xf32> to vector<5x1xf32>
    %56 = tpu.reciprocal %55 {approx = true} : vector<5x1xf32> -> vector<5x1xf32>
    %57 = vector.broadcast %56 : vector<5x1xf32> to vector<5x5xf32>
    %58 = arith.mulf %53, %57 : vector<5x5xf32>
    %cst_40 = arith.constant dense<0.000000e+00> : vector<5x8xf32>
    %59 = tpu.matmul %58, %45, %cst_40 {dimension_numbers = #tpu.dot_dimension_numbers<[1], [0], [0], [1], [0, 0, 1, 1], [], []>} : vector<5x5xf32>, vector<5x8xf32>, vector<5x8xf32> -> vector<5x8xf32>
    %60 = vector.extract_strided_slice %42 {offsets = [0, 0], sizes = [8, 32], strides = [1, 1]} : vector<32x32xf32> to vector<8x32xf32>
    %cst_41 = arith.constant dense<0.000000e+00> : vector<5x32xf32>
    %61 = tpu.matmul %59, %60, %cst_41 {dimension_numbers = #tpu.dot_dimension_numbers<[1], [0], [0], [1], [0, 0, 1, 1], [], []>} : vector<5x8xf32>, vector<8x32xf32>, vector<5x32xf32> -> vector<5x32xf32>
    %c0_42 = arith.constant 0 : index
    %c8 = arith.constant 8 : index
    %62 = vector.load %arg25[%c0_42, %c8] : memref<10x96xf32, #tpu.memory_space<vmem>>, vector<5x8xf32>
    %c0_43 = arith.constant 0 : index
    %c40 = arith.constant 40 : index
    %63 = vector.load %arg25[%c0_43, %c40] : memref<10x96xf32, #tpu.memory_space<vmem>>, vector<5x8xf32>
    %c0_44 = arith.constant 0 : index
    %c72 = arith.constant 72 : index
    %64 = vector.load %arg25[%c0_44, %c72] : memref<10x96xf32, #tpu.memory_space<vmem>>, vector<5x8xf32>
    %cst_45 = arith.constant dense<0.000000e+00> : vector<5x5xf32>
    %65 = tpu.matmul %62, %63, %cst_45 {dimension_numbers = #tpu.dot_dimension_numbers<[1], [1], [0], [0], [0, 0, 1, 0], [], []>} : vector<5x8xf32>, vector<5x8xf32>, vector<5x5xf32> -> vector<5x5xf32>
    %cst_46 = arith.constant 0.353553385 : f32
    %66 = vector.broadcast %cst_46 : f32 to vector<5x5xf32>
    %67 = arith.mulf %65, %66 : vector<5x5xf32>
    %cst_47 = arith.constant dense<0xFF800000> : vector<5xf32>
    %68 = vector.multi_reduction <maximumf>, %67, %cst_47 [1] : vector<5x5xf32> to vector<5xf32>
    %69 = vector.shape_cast %68 : vector<5xf32> to vector<5x1xf32>
    %70 = vector.broadcast %69 : vector<5x1xf32> to vector<5x5xf32>
    %71 = arith.subf %67, %70 : vector<5x5xf32>
    %72 = math.exp %71 : vector<5x5xf32>
    %cst_48 = arith.constant dense<0.000000e+00> : vector<5xf32>
    %73 = vector.multi_reduction <add>, %72, %cst_48 [1] : vector<5x5xf32> to vector<5xf32>
    %74 = vector.shape_cast %73 : vector<5xf32> to vector<5x1xf32>
    %75 = tpu.reciprocal %74 {approx = true} : vector<5x1xf32> -> vector<5x1xf32>
    %76 = vector.broadcast %75 : vector<5x1xf32> to vector<5x5xf32>
    %77 = arith.mulf %72, %76 : vector<5x5xf32>
    %cst_49 = arith.constant dense<0.000000e+00> : vector<5x8xf32>
    %78 = tpu.matmul %77, %64, %cst_49 {dimension_numbers = #tpu.dot_dimension_numbers<[1], [0], [0], [1], [0, 0, 1, 1], [], []>} : vector<5x5xf32>, vector<5x8xf32>, vector<5x8xf32> -> vector<5x8xf32>
    %79 = vector.extract_strided_slice %42 {offsets = [8, 0], sizes = [8, 32], strides = [1, 1]} : vector<32x32xf32> to vector<8x32xf32>
    %cst_50 = arith.constant dense<0.000000e+00> : vector<5x32xf32>
    %80 = tpu.matmul %78, %79, %cst_50 {dimension_numbers = #tpu.dot_dimension_numbers<[1], [0], [0], [1], [0, 0, 1, 1], [], []>} : vector<5x8xf32>, vector<8x32xf32>, vector<5x32xf32> -> vector<5x32xf32>
    %81 = arith.addf %61, %80 : vector<5x32xf32>
    %c0_51 = arith.constant 0 : index
    %c16 = arith.constant 16 : index
    %82 = vector.load %arg25[%c0_51, %c16] : memref<10x96xf32, #tpu.memory_space<vmem>>, vector<5x8xf32>
    %c0_52 = arith.constant 0 : index
    %c48 = arith.constant 48 : index
    %83 = vector.load %arg25[%c0_52, %c48] : memref<10x96xf32, #tpu.memory_space<vmem>>, vector<5x8xf32>
    %c0_53 = arith.constant 0 : index
    %c80 = arith.constant 80 : index
    %84 = vector.load %arg25[%c0_53, %c80] : memref<10x96xf32, #tpu.memory_space<vmem>>, vector<5x8xf32>
    %cst_54 = arith.constant dense<0.000000e+00> : vector<5x5xf32>
    %85 = tpu.matmul %82, %83, %cst_54 {dimension_numbers = #tpu.dot_dimension_numbers<[1], [1], [0], [0], [0, 0, 1, 0], [], []>} : vector<5x8xf32>, vector<5x8xf32>, vector<5x5xf32> -> vector<5x5xf32>
    %cst_55 = arith.constant 0.353553385 : f32
    %86 = vector.broadcast %cst_55 : f32 to vector<5x5xf32>
    %87 = arith.mulf %85, %86 : vector<5x5xf32>
    %cst_56 = arith.constant dense<0xFF800000> : vector<5xf32>
    %88 = vector.multi_reduction <maximumf>, %87, %cst_56 [1] : vector<5x5xf32> to vector<5xf32>
    %89 = vector.shape_cast %88 : vector<5xf32> to vector<5x1xf32>
    %90 = vector.broadcast %89 : vector<5x1xf32> to vector<5x5xf32>
    %91 = arith.subf %87, %90 : vector<5x5xf32>
    %92 = math.exp %91 : vector<5x5xf32>
    %cst_57 = arith.constant dense<0.000000e+00> : vector<5xf32>
    %93 = vector.multi_reduction <add>, %92, %cst_57 [1] : vector<5x5xf32> to vector<5xf32>
    %94 = vector.shape_cast %93 : vector<5xf32> to vector<5x1xf32>
    %95 = tpu.reciprocal %94 {approx = true} : vector<5x1xf32> -> vector<5x1xf32>
    %96 = vector.broadcast %95 : vector<5x1xf32> to vector<5x5xf32>
    %97 = arith.mulf %92, %96 : vector<5x5xf32>
    %cst_58 = arith.constant dense<0.000000e+00> : vector<5x8xf32>
    %98 = tpu.matmul %97, %84, %cst_58 {dimension_numbers = #tpu.dot_dimension_numbers<[1], [0], [0], [1], [0, 0, 1, 1], [], []>} : vector<5x5xf32>, vector<5x8xf32>, vector<5x8xf32> -> vector<5x8xf32>
    %99 = vector.extract_strided_slice %42 {offsets = [16, 0], sizes = [8, 32], strides = [1, 1]} : vector<32x32xf32> to vector<8x32xf32>
    %cst_59 = arith.constant dense<0.000000e+00> : vector<5x32xf32>
    %100 = tpu.matmul %98, %99, %cst_59 {dimension_numbers = #tpu.dot_dimension_numbers<[1], [0], [0], [1], [0, 0, 1, 1], [], []>} : vector<5x8xf32>, vector<8x32xf32>, vector<5x32xf32> -> vector<5x32xf32>
    %101 = arith.addf %81, %100 : vector<5x32xf32>
    %c0_60 = arith.constant 0 : index
    %c24 = arith.constant 24 : index
    %102 = vector.load %arg25[%c0_60, %c24] : memref<10x96xf32, #tpu.memory_space<vmem>>, vector<5x8xf32>
    %c0_61 = arith.constant 0 : index
    %c56 = arith.constant 56 : index
    %103 = vector.load %arg25[%c0_61, %c56] : memref<10x96xf32, #tpu.memory_space<vmem>>, vector<5x8xf32>
    %c0_62 = arith.constant 0 : index
    %c88 = arith.constant 88 : index
    %104 = vector.load %arg25[%c0_62, %c88] : memref<10x96xf32, #tpu.memory_space<vmem>>, vector<5x8xf32>
    %cst_63 = arith.constant dense<0.000000e+00> : vector<5x5xf32>
    %105 = tpu.matmul %102, %103, %cst_63 {dimension_numbers = #tpu.dot_dimension_numbers<[1], [1], [0], [0], [0, 0, 1, 0], [], []>} : vector<5x8xf32>, vector<5x8xf32>, vector<5x5xf32> -> vector<5x5xf32>
    %cst_64 = arith.constant 0.353553385 : f32
    %106 = vector.broadcast %cst_64 : f32 to vector<5x5xf32>
    %107 = arith.mulf %105, %106 : vector<5x5xf32>
    %cst_65 = arith.constant dense<0xFF800000> : vector<5xf32>
    %108 = vector.multi_reduction <maximumf>, %107, %cst_65 [1] : vector<5x5xf32> to vector<5xf32>
    %109 = vector.shape_cast %108 : vector<5xf32> to vector<5x1xf32>
    %110 = vector.broadcast %109 : vector<5x1xf32> to vector<5x5xf32>
    %111 = arith.subf %107, %110 : vector<5x5xf32>
    %112 = math.exp %111 : vector<5x5xf32>
    %cst_66 = arith.constant dense<0.000000e+00> : vector<5xf32>
    %113 = vector.multi_reduction <add>, %112, %cst_66 [1] : vector<5x5xf32> to vector<5xf32>
    %114 = vector.shape_cast %113 : vector<5xf32> to vector<5x1xf32>
    %115 = tpu.reciprocal %114 {approx = true} : vector<5x1xf32> -> vector<5x1xf32>
    %116 = vector.broadcast %115 : vector<5x1xf32> to vector<5x5xf32>
    %117 = arith.mulf %112, %116 : vector<5x5xf32>
    %cst_67 = arith.constant dense<0.000000e+00> : vector<5x8xf32>
    %118 = tpu.matmul %117, %104, %cst_67 {dimension_numbers = #tpu.dot_dimension_numbers<[1], [0], [0], [1], [0, 0, 1, 1], [], []>} : vector<5x5xf32>, vector<5x8xf32>, vector<5x8xf32> -> vector<5x8xf32>
    %119 = vector.extract_strided_slice %42 {offsets = [24, 0], sizes = [8, 32], strides = [1, 1]} : vector<32x32xf32> to vector<8x32xf32>
    %cst_68 = arith.constant dense<0.000000e+00> : vector<5x32xf32>
    %120 = tpu.matmul %118, %119, %cst_68 {dimension_numbers = #tpu.dot_dimension_numbers<[1], [0], [0], [1], [0, 0, 1, 1], [], []>} : vector<5x8xf32>, vector<8x32xf32>, vector<5x32xf32> -> vector<5x32xf32>
    %121 = arith.addf %101, %120 : vector<5x32xf32>
    %c0_69 = arith.constant 0 : index
    %c0_70 = arith.constant 0 : index
    %122 = vector.load %arg24[%c0_69, %c0_70] : memref<10x32xf32, #tpu.memory_space<vmem>>, vector<5x32xf32>
    %123 = arith.addf %122, %121 : vector<5x32xf32>
    %c0_71 = arith.constant 0 : index
    %c0_72 = arith.constant 0 : index
    %c0_73 = arith.constant 0 : index
    %124 = vector.load %arg8[%c0_71, %c0_72, %c0_73] : memref<3x1x32xf32, #tpu.memory_space<vmem>>, vector<1x1x32xf32>
    %125 = vector.shape_cast %124 : vector<1x1x32xf32> to vector<1x32xf32>
    %126 = vector.broadcast %125 : vector<1x32xf32> to vector<5x32xf32>
    %127 = arith.addf %123, %126 : vector<5x32xf32>
    %c0_74 = arith.constant 0 : index
    %c0_75 = arith.constant 0 : index
    %128 = vector.load %arg24[%c0_74, %c0_75] : memref<10x32xf32, #tpu.memory_space<vmem>>, vector<5x32xf32>
    tpu.vector_store %arg24[%c0_74, %c0_75], %127 {strides = array<i32>} : memref<10x32xf32, #tpu.memory_space<vmem>>, vector<5x32xf32>,
    %c5 = arith.constant 5 : index
    %c0_76 = arith.constant 0 : index
    %129 = vector.load %arg25[%c5, %c0_76] : memref<10x96xf32, #tpu.memory_space<vmem>>, vector<5x8xf32>
    %c5_77 = arith.constant 5 : index
    %c32_78 = arith.constant 32 : index
    %130 = vector.load %arg25[%c5_77, %c32_78] : memref<10x96xf32, #tpu.memory_space<vmem>>, vector<5x8xf32>
    %c5_79 = arith.constant 5 : index
    %c64_80 = arith.constant 64 : index
    %131 = vector.load %arg25[%c5_79, %c64_80] : memref<10x96xf32, #tpu.memory_space<vmem>>, vector<5x8xf32>
    %cst_81 = arith.constant dense<0.000000e+00> : vector<5x5xf32>
    %132 = tpu.matmul %129, %130, %cst_81 {dimension_numbers = #tpu.dot_dimension_numbers<[1], [1], [0], [0], [0, 0, 1, 0], [], []>} : vector<5x8xf32>, vector<5x8xf32>, vector<5x5xf32> -> vector<5x5xf32>
    %cst_82 = arith.constant 0.353553385 : f32
    %133 = vector.broadcast %cst_82 : f32 to vector<5x5xf32>
    %134 = arith.mulf %132, %133 : vector<5x5xf32>
    %cst_83 = arith.constant dense<0xFF800000> : vector<5xf32>
    %135 = vector.multi_reduction <maximumf>, %134, %cst_83 [1] : vector<5x5xf32> to vector<5xf32>
    %136 = vector.shape_cast %135 : vector<5xf32> to vector<5x1xf32>
    %137 = vector.broadcast %136 : vector<5x1xf32> to vector<5x5xf32>
    %138 = arith.subf %134, %137 : vector<5x5xf32>
    %139 = math.exp %138 : vector<5x5xf32>
    %cst_84 = arith.constant dense<0.000000e+00> : vector<5xf32>
    %140 = vector.multi_reduction <add>, %139, %cst_84 [1] : vector<5x5xf32> to vector<5xf32>
    %141 = vector.shape_cast %140 : vector<5xf32> to vector<5x1xf32>
    %142 = tpu.reciprocal %141 {approx = true} : vector<5x1xf32> -> vector<5x1xf32>
    %143 = vector.broadcast %142 : vector<5x1xf32> to vector<5x5xf32>
    %144 = arith.mulf %139, %143 : vector<5x5xf32>
    %cst_85 = arith.constant dense<0.000000e+00> : vector<5x8xf32>
    %145 = tpu.matmul %144, %131, %cst_85 {dimension_numbers = #tpu.dot_dimension_numbers<[1], [0], [0], [1], [0, 0, 1, 1], [], []>} : vector<5x5xf32>, vector<5x8xf32>, vector<5x8xf32> -> vector<5x8xf32>
    %146 = vector.extract_strided_slice %42 {offsets = [0, 0], sizes = [8, 32], strides = [1, 1]} : vector<32x32xf32> to vector<8x32xf32>
    %cst_86 = arith.constant dense<0.000000e+00> : vector<5x32xf32>
    %147 = tpu.matmul %145, %146, %cst_86 {dimension_numbers = #tpu.dot_dimension_numbers<[1], [0], [0], [1], [0, 0, 1, 1], [], []>} : vector<5x8xf32>, vector<8x32xf32>, vector<5x32xf32> -> vector<5x32xf32>
    %c5_87 = arith.constant 5 : index
    %c8_88 = arith.constant 8 : index
    %148 = vector.load %arg25[%c5_87, %c8_88] : memref<10x96xf32, #tpu.memory_space<vmem>>, vector<5x8xf32>
    %c5_89 = arith.constant 5 : index
    %c40_90 = arith.constant 40 : index
    %149 = vector.load %arg25[%c5_89, %c40_90] : memref<10x96xf32, #tpu.memory_space<vmem>>, vector<5x8xf32>
    %c5_91 = arith.constant 5 : index
    %c72_92 = arith.constant 72 : index
    %150 = vector.load %arg25[%c5_91, %c72_92] : memref<10x96xf32, #tpu.memory_space<vmem>>, vector<5x8xf32>
    %cst_93 = arith.constant dense<0.000000e+00> : vector<5x5xf32>
    %151 = tpu.matmul %148, %149, %cst_93 {dimension_numbers = #tpu.dot_dimension_numbers<[1], [1], [0], [0], [0, 0, 1, 0], [], []>} : vector<5x8xf32>, vector<5x8xf32>, vector<5x5xf32> -> vector<5x5xf32>
    %cst_94 = arith.constant 0.353553385 : f32
    %152 = vector.broadcast %cst_94 : f32 to vector<5x5xf32>
    %153 = arith.mulf %151, %152 : vector<5x5xf32>
    %cst_95 = arith.constant dense<0xFF800000> : vector<5xf32>
    %154 = vector.multi_reduction <maximumf>, %153, %cst_95 [1] : vector<5x5xf32> to vector<5xf32>
    %155 = vector.shape_cast %154 : vector<5xf32> to vector<5x1xf32>
    %156 = vector.broadcast %155 : vector<5x1xf32> to vector<5x5xf32>
    %157 = arith.subf %153, %156 : vector<5x5xf32>
    %158 = math.exp %157 : vector<5x5xf32>
    %cst_96 = arith.constant dense<0.000000e+00> : vector<5xf32>
    %159 = vector.multi_reduction <add>, %158, %cst_96 [1] : vector<5x5xf32> to vector<5xf32>
    %160 = vector.shape_cast %159 : vector<5xf32> to vector<5x1xf32>
    %161 = tpu.reciprocal %160 {approx = true} : vector<5x1xf32> -> vector<5x1xf32>
    %162 = vector.broadcast %161 : vector<5x1xf32> to vector<5x5xf32>
    %163 = arith.mulf %158, %162 : vector<5x5xf32>
    %cst_97 = arith.constant dense<0.000000e+00> : vector<5x8xf32>
    %164 = tpu.matmul %163, %150, %cst_97 {dimension_numbers = #tpu.dot_dimension_numbers<[1], [0], [0], [1], [0, 0, 1, 1], [], []>} : vector<5x5xf32>, vector<5x8xf32>, vector<5x8xf32> -> vector<5x8xf32>
    %165 = vector.extract_strided_slice %42 {offsets = [8, 0], sizes = [8, 32], strides = [1, 1]} : vector<32x32xf32> to vector<8x32xf32>
    %cst_98 = arith.constant dense<0.000000e+00> : vector<5x32xf32>
    %166 = tpu.matmul %164, %165, %cst_98 {dimension_numbers = #tpu.dot_dimension_numbers<[1], [0], [0], [1], [0, 0, 1, 1], [], []>} : vector<5x8xf32>, vector<8x32xf32>, vector<5x32xf32> -> vector<5x32xf32>
    %167 = arith.addf %147, %166 : vector<5x32xf32>
    %c5_99 = arith.constant 5 : index
    %c16_100 = arith.constant 16 : index
    %168 = vector.load %arg25[%c5_99, %c16_100] : memref<10x96xf32, #tpu.memory_space<vmem>>, vector<5x8xf32>
    %c5_101 = arith.constant 5 : index
    %c48_102 = arith.constant 48 : index
    %169 = vector.load %arg25[%c5_101, %c48_102] : memref<10x96xf32, #tpu.memory_space<vmem>>, vector<5x8xf32>
    %c5_103 = arith.constant 5 : index
    %c80_104 = arith.constant 80 : index
    %170 = vector.load %arg25[%c5_103, %c80_104] : memref<10x96xf32, #tpu.memory_space<vmem>>, vector<5x8xf32>
    %cst_105 = arith.constant dense<0.000000e+00> : vector<5x5xf32>
    %171 = tpu.matmul %168, %169, %cst_105 {dimension_numbers = #tpu.dot_dimension_numbers<[1], [1], [0], [0], [0, 0, 1, 0], [], []>} : vector<5x8xf32>, vector<5x8xf32>, vector<5x5xf32> -> vector<5x5xf32>
    %cst_106 = arith.constant 0.353553385 : f32
    %172 = vector.broadcast %cst_106 : f32 to vector<5x5xf32>
    %173 = arith.mulf %171, %172 : vector<5x5xf32>
    %cst_107 = arith.constant dense<0xFF800000> : vector<5xf32>
    %174 = vector.multi_reduction <maximumf>, %173, %cst_107 [1] : vector<5x5xf32> to vector<5xf32>
    %175 = vector.shape_cast %174 : vector<5xf32> to vector<5x1xf32>
    %176 = vector.broadcast %175 : vector<5x1xf32> to vector<5x5xf32>
    %177 = arith.subf %173, %176 : vector<5x5xf32>
    %178 = math.exp %177 : vector<5x5xf32>
    %cst_108 = arith.constant dense<0.000000e+00> : vector<5xf32>
    %179 = vector.multi_reduction <add>, %178, %cst_108 [1] : vector<5x5xf32> to vector<5xf32>
    %180 = vector.shape_cast %179 : vector<5xf32> to vector<5x1xf32>
    %181 = tpu.reciprocal %180 {approx = true} : vector<5x1xf32> -> vector<5x1xf32>
    %182 = vector.broadcast %181 : vector<5x1xf32> to vector<5x5xf32>
    %183 = arith.mulf %178, %182 : vector<5x5xf32>
    %cst_109 = arith.constant dense<0.000000e+00> : vector<5x8xf32>
    %184 = tpu.matmul %183, %170, %cst_109 {dimension_numbers = #tpu.dot_dimension_numbers<[1], [0], [0], [1], [0, 0, 1, 1], [], []>} : vector<5x5xf32>, vector<5x8xf32>, vector<5x8xf32> -> vector<5x8xf32>
    %185 = vector.extract_strided_slice %42 {offsets = [16, 0], sizes = [8, 32], strides = [1, 1]} : vector<32x32xf32> to vector<8x32xf32>
    %cst_110 = arith.constant dense<0.000000e+00> : vector<5x32xf32>
    %186 = tpu.matmul %184, %185, %cst_110 {dimension_numbers = #tpu.dot_dimension_numbers<[1], [0], [0], [1], [0, 0, 1, 1], [], []>} : vector<5x8xf32>, vector<8x32xf32>, vector<5x32xf32> -> vector<5x32xf32>
    %187 = arith.addf %167, %186 : vector<5x32xf32>
    %c5_111 = arith.constant 5 : index
    %c24_112 = arith.constant 24 : index
    %188 = vector.load %arg25[%c5_111, %c24_112] : memref<10x96xf32, #tpu.memory_space<vmem>>, vector<5x8xf32>
    %c5_113 = arith.constant 5 : index
    %c56_114 = arith.constant 56 : index
    %189 = vector.load %arg25[%c5_113, %c56_114] : memref<10x96xf32, #tpu.memory_space<vmem>>, vector<5x8xf32>
    %c5_115 = arith.constant 5 : index
    %c88_116 = arith.constant 88 : index
    %190 = vector.load %arg25[%c5_115, %c88_116] : memref<10x96xf32, #tpu.memory_space<vmem>>, vector<5x8xf32>
    %cst_117 = arith.constant dense<0.000000e+00> : vector<5x5xf32>
    %191 = tpu.matmul %188, %189, %cst_117 {dimension_numbers = #tpu.dot_dimension_numbers<[1], [1], [0], [0], [0, 0, 1, 0], [], []>} : vector<5x8xf32>, vector<5x8xf32>, vector<5x5xf32> -> vector<5x5xf32>
    %cst_118 = arith.constant 0.353553385 : f32
    %192 = vector.broadcast %cst_118 : f32 to vector<5x5xf32>
    %193 = arith.mulf %191, %192 : vector<5x5xf32>
    %cst_119 = arith.constant dense<0xFF800000> : vector<5xf32>
    %194 = vector.multi_reduction <maximumf>, %193, %cst_119 [1] : vector<5x5xf32> to vector<5xf32>
    %195 = vector.shape_cast %194 : vector<5xf32> to vector<5x1xf32>
    %196 = vector.broadcast %195 : vector<5x1xf32> to vector<5x5xf32>
    %197 = arith.subf %193, %196 : vector<5x5xf32>
    %198 = math.exp %197 : vector<5x5xf32>
    %cst_120 = arith.constant dense<0.000000e+00> : vector<5xf32>
    %199 = vector.multi_reduction <add>, %198, %cst_120 [1] : vector<5x5xf32> to vector<5xf32>
    %200 = vector.shape_cast %199 : vector<5xf32> to vector<5x1xf32>
    %201 = tpu.reciprocal %200 {approx = true} : vector<5x1xf32> -> vector<5x1xf32>
    %202 = vector.broadcast %201 : vector<5x1xf32> to vector<5x5xf32>
    %203 = arith.mulf %198, %202 : vector<5x5xf32>
    %cst_121 = arith.constant dense<0.000000e+00> : vector<5x8xf32>
    %204 = tpu.matmul %203, %190, %cst_121 {dimension_numbers = #tpu.dot_dimension_numbers<[1], [0], [0], [1], [0, 0, 1, 1], [], []>} : vector<5x5xf32>, vector<5x8xf32>, vector<5x8xf32> -> vector<5x8xf32>
    %205 = vector.extract_strided_slice %42 {offsets = [24, 0], sizes = [8, 32], strides = [1, 1]} : vector<32x32xf32> to vector<8x32xf32>
    %cst_122 = arith.constant dense<0.000000e+00> : vector<5x32xf32>
    %206 = tpu.matmul %204, %205, %cst_122 {dimension_numbers = #tpu.dot_dimension_numbers<[1], [0], [0], [1], [0, 0, 1, 1], [], []>} : vector<5x8xf32>, vector<8x32xf32>, vector<5x32xf32> -> vector<5x32xf32>
    %207 = arith.addf %187, %206 : vector<5x32xf32>
    %c5_123 = arith.constant 5 : index
    %c0_124 = arith.constant 0 : index
    %208 = vector.load %arg24[%c5_123, %c0_124] : memref<10x32xf32, #tpu.memory_space<vmem>>, vector<5x32xf32>
    %209 = arith.addf %208, %207 : vector<5x32xf32>
    %c0_125 = arith.constant 0 : index
    %c0_126 = arith.constant 0 : index
    %c0_127 = arith.constant 0 : index
    %210 = vector.load %arg8[%c0_125, %c0_126, %c0_127] : memref<3x1x32xf32, #tpu.memory_space<vmem>>, vector<1x1x32xf32>
    %211 = vector.shape_cast %210 : vector<1x1x32xf32> to vector<1x32xf32>
    %212 = vector.broadcast %211 : vector<1x32xf32> to vector<5x32xf32>
    %213 = arith.addf %209, %212 : vector<5x32xf32>
    %c5_128 = arith.constant 5 : index
    %c0_129 = arith.constant 0 : index
    %214 = vector.load %arg24[%c5_128, %c0_129] : memref<10x32xf32, #tpu.memory_space<vmem>>, vector<5x32xf32>
    tpu.vector_store %arg24[%c5_128, %c0_129], %213 {strides = array<i32>} : memref<10x32xf32, #tpu.memory_space<vmem>>, vector<5x32xf32>,
    %c0_130 = arith.constant 0 : index
    %c0_131 = arith.constant 0 : index
    %215 = vector.load %arg24[%c0_130, %c0_131] : memref<10x32xf32, #tpu.memory_space<vmem>>, vector<10x32xf32>
    %c0_132 = arith.constant 0 : index
    %c0_133 = arith.constant 0 : index
    %c0_134 = arith.constant 0 : index
    %216 = vector.load %arg9[%c0_132, %c0_133, %c0_134] : memref<3x1x32xf32, #tpu.memory_space<vmem>>, vector<1x1x32xf32>
    %217 = vector.shape_cast %216 : vector<1x1x32xf32> to vector<1x32xf32>
    %c0_135 = arith.constant 0 : index
    %c0_136 = arith.constant 0 : index
    %c0_137 = arith.constant 0 : index
    %218 = vector.load %arg10[%c0_135, %c0_136, %c0_137] : memref<3x1x32xf32, #tpu.memory_space<vmem>>, vector<1x1x32xf32>
    %219 = vector.shape_cast %218 : vector<1x1x32xf32> to vector<1x32xf32>
    %cst_138 = arith.constant dense<0.000000e+00> : vector<10xf32>
    %220 = vector.multi_reduction <add>, %215, %cst_138 [1] : vector<10x32xf32> to vector<10xf32>
    %221 = vector.shape_cast %220 : vector<10xf32> to vector<10x1xf32>
    %cst_139 = arith.constant 3.200000e+01 : f32
    %222 = vector.broadcast %cst_139 : f32 to vector<10x1xf32>
    %223 = arith.divf %221, %222 : vector<10x1xf32>
    %224 = vector.broadcast %223 : vector<10x1xf32> to vector<10x32xf32>
    %225 = arith.subf %215, %224 : vector<10x32xf32>
    %226 = arith.mulf %225, %225 : vector<10x32xf32>
    %cst_140 = arith.constant dense<0.000000e+00> : vector<10xf32>
    %227 = vector.multi_reduction <add>, %226, %cst_140 [1] : vector<10x32xf32> to vector<10xf32>
    %228 = vector.shape_cast %227 : vector<10xf32> to vector<10x1xf32>
    %cst_141 = arith.constant 3.200000e+01 : f32
    %229 = vector.broadcast %cst_141 : f32 to vector<10x1xf32>
    %230 = arith.divf %228, %229 : vector<10x1xf32>
    %231 = vector.broadcast %223 : vector<10x1xf32> to vector<10x32xf32>
    %232 = arith.subf %215, %231 : vector<10x32xf32>
    %cst_142 = arith.constant 9.99999974E-6 : f32
    %233 = vector.broadcast %cst_142 : f32 to vector<10x1xf32>
    %234 = arith.addf %230, %233 : vector<10x1xf32>
    %235 = math.rsqrt %234 : vector<10x1xf32>
    %236 = vector.broadcast %235 : vector<10x1xf32> to vector<10x32xf32>
    %237 = arith.mulf %232, %236 : vector<10x32xf32>
    %238 = vector.broadcast %217 : vector<1x32xf32> to vector<10x32xf32>
    %239 = arith.mulf %237, %238 : vector<10x32xf32>
    %240 = vector.broadcast %219 : vector<1x32xf32> to vector<10x32xf32>
    %241 = arith.addf %239, %240 : vector<10x32xf32>
    %c0_143 = arith.constant 0 : index
    %c0_144 = arith.constant 0 : index
    %c0_145 = arith.constant 0 : index
    %242 = vector.load %arg11[%c0_143, %c0_144, %c0_145] : memref<3x32x128xf32, #tpu.memory_space<vmem>>, vector<1x32x128xf32>
    %243 = vector.shape_cast %242 : vector<1x32x128xf32> to vector<32x128xf32>
    %cst_146 = arith.constant dense<0.000000e+00> : vector<10x128xf32>
    %244 = tpu.matmul %241, %243, %cst_146 {dimension_numbers = #tpu.dot_dimension_numbers<[1], [0], [0], [1], [0, 0, 1, 1], [], []>} : vector<10x32xf32>, vector<32x128xf32>, vector<10x128xf32> -> vector<10x128xf32>
    %c0_147 = arith.constant 0 : index
    %c0_148 = arith.constant 0 : index
    %c0_149 = arith.constant 0 : index
    %245 = vector.load %arg12[%c0_147, %c0_148, %c0_149] : memref<3x1x128xf32, #tpu.memory_space<vmem>>, vector<1x1x128xf32>
    %246 = vector.shape_cast %245 : vector<1x1x128xf32> to vector<1x128xf32>
    %247 = vector.broadcast %246 : vector<1x128xf32> to vector<10x128xf32>
    %248 = arith.addf %244, %247 : vector<10x128xf32>
    %cst_150 = arith.constant 5.000000e-01 : f32
    %249 = vector.broadcast %cst_150 : f32 to vector<10x128xf32>
    %250 = arith.mulf %249, %248 : vector<10x128xf32>
    %cst_151 = arith.constant 0.707106769 : f32
    %251 = vector.broadcast %cst_151 : f32 to vector<10x128xf32>
    %252 = arith.mulf %248, %251 : vector<10x128xf32>
    %253 = math.absf %252 : vector<10x128xf32>
    %cst_152 = arith.constant 0.327591091 : f32
    %254 = vector.broadcast %cst_152 : f32 to vector<10x128xf32>
    %255 = arith.mulf %254, %253 : vector<10x128xf32>
    %cst_153 = arith.constant 1.000000e+00 : f32
    %256 = vector.broadcast %cst_153 : f32 to vector<10x128xf32>
    %257 = arith.addf %256, %255 : vector<10x128xf32>
    %cst_154 = arith.constant 1.000000e+00 : f32
    %258 = vector.broadcast %cst_154 : f32 to vector<10x128xf32>
    %259 = arith.divf %258, %257 : vector<10x128xf32>
    %cst_155 = arith.constant 1.06140542 : f32
    %260 = vector.broadcast %cst_155 : f32 to vector<10x128xf32>
    %261 = arith.mulf %260, %259 : vector<10x128xf32>
    %cst_156 = arith.constant -1.45315206 : f32
    %262 = vector.broadcast %cst_156 : f32 to vector<10x128xf32>
    %263 = arith.addf %261, %262 : vector<10x128xf32>
    %264 = arith.mulf %263, %259 : vector<10x128xf32>
    %cst_157 = arith.constant 1.42141378 : f32
    %265 = vector.broadcast %cst_157 : f32 to vector<10x128xf32>
    %266 = arith.addf %264, %265 : vector<10x128xf32>
    %267 = arith.mulf %266, %259 : vector<10x128xf32>
    %cst_158 = arith.constant -0.284496725 : f32
    %268 = vector.broadcast %cst_158 : f32 to vector<10x128xf32>
    %269 = arith.addf %267, %268 : vector<10x128xf32>
    %270 = arith.mulf %269, %259 : vector<10x128xf32>
    %cst_159 = arith.constant 0.254829586 : f32
    %271 = vector.broadcast %cst_159 : f32 to vector<10x128xf32>
    %272 = arith.addf %270, %271 : vector<10x128xf32>
    %273 = arith.mulf %272, %259 : vector<10x128xf32>
    %cst_160 = arith.constant 0.000000e+00 : f32
    %274 = vector.broadcast %cst_160 : f32 to vector<10x128xf32>
    %275 = arith.subf %274, %253 : vector<10x128xf32>
    %276 = arith.mulf %275, %253 : vector<10x128xf32>
    %277 = math.exp %276 : vector<10x128xf32>
    %278 = arith.mulf %273, %277 : vector<10x128xf32>
    %cst_161 = arith.constant 1.000000e+00 : f32
    %279 = vector.broadcast %cst_161 : f32 to vector<10x128xf32>
    %280 = arith.subf %279, %278 : vector<10x128xf32>
    %cst_162 = arith.constant 0.000000e+00 : f32
    %281 = vector.broadcast %cst_162 : f32 to vector<10x128xf32>
    %282 = arith.cmpf oge, %252, %281 : vector<10x128xf32>
    %cst_163 = arith.constant 0.000000e+00 : f32
    %283 = vector.broadcast %cst_163 : f32 to vector<10x128xf32>
    %284 = arith.subf %283, %280 : vector<10x128xf32>
    %285 = arith.select %282, %280, %284 : vector<10x128xi1>, vector<10x128xf32>
    %cst_164 = arith.constant 1.000000e+00 : f32
    %286 = vector.broadcast %cst_164 : f32 to vector<10x128xf32>
    %287 = arith.addf %286, %285 : vector<10x128xf32>
    %288 = arith.mulf %250, %287 : vector<10x128xf32>
    %c0_165 = arith.constant 0 : index
    %c0_166 = arith.constant 0 : index
    %c0_167 = arith.constant 0 : index
    %289 = vector.load %arg13[%c0_165, %c0_166, %c0_167] : memref<3x128x32xf32, #tpu.memory_space<vmem>>, vector<1x128x32xf32>
    %290 = vector.shape_cast %289 : vector<1x128x32xf32> to vector<128x32xf32>
    %cst_168 = arith.constant dense<0.000000e+00> : vector<10x32xf32>
    %291 = tpu.matmul %288, %290, %cst_168 {dimension_numbers = #tpu.dot_dimension_numbers<[1], [0], [0], [1], [0, 0, 1, 1], [], []>} : vector<10x128xf32>, vector<128x32xf32>, vector<10x32xf32> -> vector<10x32xf32>
    %c0_169 = arith.constant 0 : index
    %c0_170 = arith.constant 0 : index
    %c0_171 = arith.constant 0 : index
    %292 = vector.load %arg14[%c0_169, %c0_170, %c0_171] : memref<3x1x32xf32, #tpu.memory_space<vmem>>, vector<1x1x32xf32>
    %293 = vector.shape_cast %292 : vector<1x1x32xf32> to vector<1x32xf32>
    %294 = vector.broadcast %293 : vector<1x32xf32> to vector<10x32xf32>
    %295 = arith.addf %291, %294 : vector<10x32xf32>
    %296 = arith.addf %215, %295 : vector<10x32xf32>
    %c0_172 = arith.constant 0 : index
    %c0_173 = arith.constant 0 : index
    %297 = vector.load %arg24[%c0_172, %c0_173] : memref<10x32xf32, #tpu.memory_space<vmem>>, vector<10x32xf32>
    tpu.vector_store %arg24[%c0_172, %c0_173], %296 {strides = array<i32>} : memref<10x32xf32, #tpu.memory_space<vmem>>, vector<10x32xf32>,
    %c0_174 = arith.constant 0 : index
    %c0_175 = arith.constant 0 : index
    %298 = vector.load %arg24[%c0_174, %c0_175] : memref<10x32xf32, #tpu.memory_space<vmem>>, vector<10x32xf32>
    %c1 = arith.constant 1 : index
    %c0_176 = arith.constant 0 : index
    %c0_177 = arith.constant 0 : index
    %299 = vector.load %arg3[%c1, %c0_176, %c0_177] : memref<3x1x32xf32, #tpu.memory_space<vmem>>, vector<1x1x32xf32>
    %300 = vector.shape_cast %299 : vector<1x1x32xf32> to vector<1x32xf32>
    %c1_178 = arith.constant 1 : index
    %c0_179 = arith.constant 0 : index
    %c0_180 = arith.constant 0 : index
    %301 = vector.load %arg4[%c1_178, %c0_179, %c0_180] : memref<3x1x32xf32, #tpu.memory_space<vmem>>, vector<1x1x32xf32>
    %302 = vector.shape_cast %301 : vector<1x1x32xf32> to vector<1x32xf32>
    %cst_181 = arith.constant dense<0.000000e+00> : vector<10xf32>
    %303 = vector.multi_reduction <add>, %298, %cst_181 [1] : vector<10x32xf32> to vector<10xf32>
    %304 = vector.shape_cast %303 : vector<10xf32> to vector<10x1xf32>
    %cst_182 = arith.constant 3.200000e+01 : f32
    %305 = vector.broadcast %cst_182 : f32 to vector<10x1xf32>
    %306 = arith.divf %304, %305 : vector<10x1xf32>
    %307 = vector.broadcast %306 : vector<10x1xf32> to vector<10x32xf32>
    %308 = arith.subf %298, %307 : vector<10x32xf32>
    %309 = arith.mulf %308, %308 : vector<10x32xf32>
    %cst_183 = arith.constant dense<0.000000e+00> : vector<10xf32>
    %310 = vector.multi_reduction <add>, %309, %cst_183 [1] : vector<10x32xf32> to vector<10xf32>
    %311 = vector.shape_cast %310 : vector<10xf32> to vector<10x1xf32>
    %cst_184 = arith.constant 3.200000e+01 : f32
    %312 = vector.broadcast %cst_184 : f32 to vector<10x1xf32>
    %313 = arith.divf %311, %312 : vector<10x1xf32>
    %314 = vector.broadcast %306 : vector<10x1xf32> to vector<10x32xf32>
    %315 = arith.subf %298, %314 : vector<10x32xf32>
    %cst_185 = arith.constant 9.99999974E-6 : f32
    %316 = vector.broadcast %cst_185 : f32 to vector<10x1xf32>
    %317 = arith.addf %313, %316 : vector<10x1xf32>
    %318 = math.rsqrt %317 : vector<10x1xf32>
    %319 = vector.broadcast %318 : vector<10x1xf32> to vector<10x32xf32>
    %320 = arith.mulf %315, %319 : vector<10x32xf32>
    %321 = vector.broadcast %300 : vector<1x32xf32> to vector<10x32xf32>
    %322 = arith.mulf %320, %321 : vector<10x32xf32>
    %323 = vector.broadcast %302 : vector<1x32xf32> to vector<10x32xf32>
    %324 = arith.addf %322, %323 : vector<10x32xf32>
    %c1_186 = arith.constant 1 : index
    %c0_187 = arith.constant 0 : index
    %c0_188 = arith.constant 0 : index
    %325 = vector.load %arg5[%c1_186, %c0_187, %c0_188] : memref<3x32x96xf32, #tpu.memory_space<vmem>>, vector<1x32x96xf32>
    %326 = vector.shape_cast %325 : vector<1x32x96xf32> to vector<32x96xf32>
    %cst_189 = arith.constant dense<0.000000e+00> : vector<10x96xf32>
    %327 = tpu.matmul %324, %326, %cst_189 {dimension_numbers = #tpu.dot_dimension_numbers<[1], [0], [0], [1], [0, 0, 1, 1], [], []>} : vector<10x32xf32>, vector<32x96xf32>, vector<10x96xf32> -> vector<10x96xf32>
    %c1_190 = arith.constant 1 : index
    %c0_191 = arith.constant 0 : index
    %c0_192 = arith.constant 0 : index
    %328 = vector.load %arg6[%c1_190, %c0_191, %c0_192] : memref<3x1x96xf32, #tpu.memory_space<vmem>>, vector<1x1x96xf32>
    %329 = vector.shape_cast %328 : vector<1x1x96xf32> to vector<1x96xf32>
    %330 = vector.broadcast %329 : vector<1x96xf32> to vector<10x96xf32>
    %331 = arith.addf %327, %330 : vector<10x96xf32>
    %c0_193 = arith.constant 0 : index
    %c0_194 = arith.constant 0 : index
    %332 = vector.load %arg25[%c0_193, %c0_194] : memref<10x96xf32, #tpu.memory_space<vmem>>, vector<10x96xf32>
    tpu.vector_store %arg25[%c0_193, %c0_194], %331 {strides = array<i32>} : memref<10x96xf32, #tpu.memory_space<vmem>>, vector<10x96xf32>,
    %c1_195 = arith.constant 1 : index
    %c0_196 = arith.constant 0 : index
    %c0_197 = arith.constant 0 : index
    %333 = vector.load %arg7[%c1_195, %c0_196, %c0_197] : memref<3x32x32xf32, #tpu.memory_space<vmem>>, vector<1x32x32xf32>
    %334 = vector.shape_cast %333 : vector<1x32x32xf32> to vector<32x32xf32>
    %c0_198 = arith.constant 0 : index
    %c0_199 = arith.constant 0 : index
    %335 = vector.load %arg25[%c0_198, %c0_199] : memref<10x96xf32, #tpu.memory_space<vmem>>, vector<5x8xf32>
    %c0_200 = arith.constant 0 : index
    %c32_201 = arith.constant 32 : index
    %336 = vector.load %arg25[%c0_200, %c32_201] : memref<10x96xf32, #tpu.memory_space<vmem>>, vector<5x8xf32>
    %c0_202 = arith.constant 0 : index
    %c64_203 = arith.constant 64 : index
    %337 = vector.load %arg25[%c0_202, %c64_203] : memref<10x96xf32, #tpu.memory_space<vmem>>, vector<5x8xf32>
    %cst_204 = arith.constant dense<0.000000e+00> : vector<5x5xf32>
    %338 = tpu.matmul %335, %336, %cst_204 {dimension_numbers = #tpu.dot_dimension_numbers<[1], [1], [0], [0], [0, 0, 1, 0], [], []>} : vector<5x8xf32>, vector<5x8xf32>, vector<5x5xf32> -> vector<5x5xf32>
    %cst_205 = arith.constant 0.353553385 : f32
    %339 = vector.broadcast %cst_205 : f32 to vector<5x5xf32>
    %340 = arith.mulf %338, %339 : vector<5x5xf32>
    %cst_206 = arith.constant dense<0xFF800000> : vector<5xf32>
    %341 = vector.multi_reduction <maximumf>, %340, %cst_206 [1] : vector<5x5xf32> to vector<5xf32>
    %342 = vector.shape_cast %341 : vector<5xf32> to vector<5x1xf32>
    %343 = vector.broadcast %342 : vector<5x1xf32> to vector<5x5xf32>
    %344 = arith.subf %340, %343 : vector<5x5xf32>
    %345 = math.exp %344 : vector<5x5xf32>
    %cst_207 = arith.constant dense<0.000000e+00> : vector<5xf32>
    %346 = vector.multi_reduction <add>, %345, %cst_207 [1] : vector<5x5xf32> to vector<5xf32>
    %347 = vector.shape_cast %346 : vector<5xf32> to vector<5x1xf32>
    %348 = tpu.reciprocal %347 {approx = true} : vector<5x1xf32> -> vector<5x1xf32>
    %349 = vector.broadcast %348 : vector<5x1xf32> to vector<5x5xf32>
    %350 = arith.mulf %345, %349 : vector<5x5xf32>
    %cst_208 = arith.constant dense<0.000000e+00> : vector<5x8xf32>
    %351 = tpu.matmul %350, %337, %cst_208 {dimension_numbers = #tpu.dot_dimension_numbers<[1], [0], [0], [1], [0, 0, 1, 1], [], []>} : vector<5x5xf32>, vector<5x8xf32>, vector<5x8xf32> -> vector<5x8xf32>
    %352 = vector.extract_strided_slice %334 {offsets = [0, 0], sizes = [8, 32], strides = [1, 1]} : vector<32x32xf32> to vector<8x32xf32>
    %cst_209 = arith.constant dense<0.000000e+00> : vector<5x32xf32>
    %353 = tpu.matmul %351, %352, %cst_209 {dimension_numbers = #tpu.dot_dimension_numbers<[1], [0], [0], [1], [0, 0, 1, 1], [], []>} : vector<5x8xf32>, vector<8x32xf32>, vector<5x32xf32> -> vector<5x32xf32>
    %c0_210 = arith.constant 0 : index
    %c8_211 = arith.constant 8 : index
    %354 = vector.load %arg25[%c0_210, %c8_211] : memref<10x96xf32, #tpu.memory_space<vmem>>, vector<5x8xf32>
    %c0_212 = arith.constant 0 : index
    %c40_213 = arith.constant 40 : index
    %355 = vector.load %arg25[%c0_212, %c40_213] : memref<10x96xf32, #tpu.memory_space<vmem>>, vector<5x8xf32>
    %c0_214 = arith.constant 0 : index
    %c72_215 = arith.constant 72 : index
    %356 = vector.load %arg25[%c0_214, %c72_215] : memref<10x96xf32, #tpu.memory_space<vmem>>, vector<5x8xf32>
    %cst_216 = arith.constant dense<0.000000e+00> : vector<5x5xf32>
    %357 = tpu.matmul %354, %355, %cst_216 {dimension_numbers = #tpu.dot_dimension_numbers<[1], [1], [0], [0], [0, 0, 1, 0], [], []>} : vector<5x8xf32>, vector<5x8xf32>, vector<5x5xf32> -> vector<5x5xf32>
    %cst_217 = arith.constant 0.353553385 : f32
    %358 = vector.broadcast %cst_217 : f32 to vector<5x5xf32>
    %359 = arith.mulf %357, %358 : vector<5x5xf32>
    %cst_218 = arith.constant dense<0xFF800000> : vector<5xf32>
    %360 = vector.multi_reduction <maximumf>, %359, %cst_218 [1] : vector<5x5xf32> to vector<5xf32>
    %361 = vector.shape_cast %360 : vector<5xf32> to vector<5x1xf32>
    %362 = vector.broadcast %361 : vector<5x1xf32> to vector<5x5xf32>
    %363 = arith.subf %359, %362 : vector<5x5xf32>
    %364 = math.exp %363 : vector<5x5xf32>
    %cst_219 = arith.constant dense<0.000000e+00> : vector<5xf32>
    %365 = vector.multi_reduction <add>, %364, %cst_219 [1] : vector<5x5xf32> to vector<5xf32>
    %366 = vector.shape_cast %365 : vector<5xf32> to vector<5x1xf32>
    %367 = tpu.reciprocal %366 {approx = true} : vector<5x1xf32> -> vector<5x1xf32>
    %368 = vector.broadcast %367 : vector<5x1xf32> to vector<5x5xf32>
    %369 = arith.mulf %364, %368 : vector<5x5xf32>
    %cst_220 = arith.constant dense<0.000000e+00> : vector<5x8xf32>
    %370 = tpu.matmul %369, %356, %cst_220 {dimension_numbers = #tpu.dot_dimension_numbers<[1], [0], [0], [1], [0, 0, 1, 1], [], []>} : vector<5x5xf32>, vector<5x8xf32>, vector<5x8xf32> -> vector<5x8xf32>
    %371 = vector.extract_strided_slice %334 {offsets = [8, 0], sizes = [8, 32], strides = [1, 1]} : vector<32x32xf32> to vector<8x32xf32>
    %cst_221 = arith.constant dense<0.000000e+00> : vector<5x32xf32>
    %372 = tpu.matmul %370, %371, %cst_221 {dimension_numbers = #tpu.dot_dimension_numbers<[1], [0], [0], [1], [0, 0, 1, 1], [], []>} : vector<5x8xf32>, vector<8x32xf32>, vector<5x32xf32> -> vector<5x32xf32>
    %373 = arith.addf %353, %372 : vector<5x32xf32>
    %c0_222 = arith.constant 0 : index
    %c16_223 = arith.constant 16 : index
    %374 = vector.load %arg25[%c0_222, %c16_223] : memref<10x96xf32, #tpu.memory_space<vmem>>, vector<5x8xf32>
    %c0_224 = arith.constant 0 : index
    %c48_225 = arith.constant 48 : index
    %375 = vector.load %arg25[%c0_224, %c48_225] : memref<10x96xf32, #tpu.memory_space<vmem>>, vector<5x8xf32>
    %c0_226 = arith.constant 0 : index
    %c80_227 = arith.constant 80 : index
    %376 = vector.load %arg25[%c0_226, %c80_227] : memref<10x96xf32, #tpu.memory_space<vmem>>, vector<5x8xf32>
    %cst_228 = arith.constant dense<0.000000e+00> : vector<5x5xf32>
    %377 = tpu.matmul %374, %375, %cst_228 {dimension_numbers = #tpu.dot_dimension_numbers<[1], [1], [0], [0], [0, 0, 1, 0], [], []>} : vector<5x8xf32>, vector<5x8xf32>, vector<5x5xf32> -> vector<5x5xf32>
    %cst_229 = arith.constant 0.353553385 : f32
    %378 = vector.broadcast %cst_229 : f32 to vector<5x5xf32>
    %379 = arith.mulf %377, %378 : vector<5x5xf32>
    %cst_230 = arith.constant dense<0xFF800000> : vector<5xf32>
    %380 = vector.multi_reduction <maximumf>, %379, %cst_230 [1] : vector<5x5xf32> to vector<5xf32>
    %381 = vector.shape_cast %380 : vector<5xf32> to vector<5x1xf32>
    %382 = vector.broadcast %381 : vector<5x1xf32> to vector<5x5xf32>
    %383 = arith.subf %379, %382 : vector<5x5xf32>
    %384 = math.exp %383 : vector<5x5xf32>
    %cst_231 = arith.constant dense<0.000000e+00> : vector<5xf32>
    %385 = vector.multi_reduction <add>, %384, %cst_231 [1] : vector<5x5xf32> to vector<5xf32>
    %386 = vector.shape_cast %385 : vector<5xf32> to vector<5x1xf32>
    %387 = tpu.reciprocal %386 {approx = true} : vector<5x1xf32> -> vector<5x1xf32>
    %388 = vector.broadcast %387 : vector<5x1xf32> to vector<5x5xf32>
    %389 = arith.mulf %384, %388 : vector<5x5xf32>
    %cst_232 = arith.constant dense<0.000000e+00> : vector<5x8xf32>
    %390 = tpu.matmul %389, %376, %cst_232 {dimension_numbers = #tpu.dot_dimension_numbers<[1], [0], [0], [1], [0, 0, 1, 1], [], []>} : vector<5x5xf32>, vector<5x8xf32>, vector<5x8xf32> -> vector<5x8xf32>
    %391 = vector.extract_strided_slice %334 {offsets = [16, 0], sizes = [8, 32], strides = [1, 1]} : vector<32x32xf32> to vector<8x32xf32>
    %cst_233 = arith.constant dense<0.000000e+00> : vector<5x32xf32>
    %392 = tpu.matmul %390, %391, %cst_233 {dimension_numbers = #tpu.dot_dimension_numbers<[1], [0], [0], [1], [0, 0, 1, 1], [], []>} : vector<5x8xf32>, vector<8x32xf32>, vector<5x32xf32> -> vector<5x32xf32>
    %393 = arith.addf %373, %392 : vector<5x32xf32>
    %c0_234 = arith.constant 0 : index
    %c24_235 = arith.constant 24 : index
    %394 = vector.load %arg25[%c0_234, %c24_235] : memref<10x96xf32, #tpu.memory_space<vmem>>, vector<5x8xf32>
    %c0_236 = arith.constant 0 : index
    %c56_237 = arith.constant 56 : index
    %395 = vector.load %arg25[%c0_236, %c56_237] : memref<10x96xf32, #tpu.memory_space<vmem>>, vector<5x8xf32>
    %c0_238 = arith.constant 0 : index
    %c88_239 = arith.constant 88 : index
    %396 = vector.load %arg25[%c0_238, %c88_239] : memref<10x96xf32, #tpu.memory_space<vmem>>, vector<5x8xf32>
    %cst_240 = arith.constant dense<0.000000e+00> : vector<5x5xf32>
    %397 = tpu.matmul %394, %395, %cst_240 {dimension_numbers = #tpu.dot_dimension_numbers<[1], [1], [0], [0], [0, 0, 1, 0], [], []>} : vector<5x8xf32>, vector<5x8xf32>, vector<5x5xf32> -> vector<5x5xf32>
    %cst_241 = arith.constant 0.353553385 : f32
    %398 = vector.broadcast %cst_241 : f32 to vector<5x5xf32>
    %399 = arith.mulf %397, %398 : vector<5x5xf32>
    %cst_242 = arith.constant dense<0xFF800000> : vector<5xf32>
    %400 = vector.multi_reduction <maximumf>, %399, %cst_242 [1] : vector<5x5xf32> to vector<5xf32>
    %401 = vector.shape_cast %400 : vector<5xf32> to vector<5x1xf32>
    %402 = vector.broadcast %401 : vector<5x1xf32> to vector<5x5xf32>
    %403 = arith.subf %399, %402 : vector<5x5xf32>
    %404 = math.exp %403 : vector<5x5xf32>
    %cst_243 = arith.constant dense<0.000000e+00> : vector<5xf32>
    %405 = vector.multi_reduction <add>, %404, %cst_243 [1] : vector<5x5xf32> to vector<5xf32>
    %406 = vector.shape_cast %405 : vector<5xf32> to vector<5x1xf32>
    %407 = tpu.reciprocal %406 {approx = true} : vector<5x1xf32> -> vector<5x1xf32>
    %408 = vector.broadcast %407 : vector<5x1xf32> to vector<5x5xf32>
    %409 = arith.mulf %404, %408 : vector<5x5xf32>
    %cst_244 = arith.constant dense<0.000000e+00> : vector<5x8xf32>
    %410 = tpu.matmul %409, %396, %cst_244 {dimension_numbers = #tpu.dot_dimension_numbers<[1], [0], [0], [1], [0, 0, 1, 1], [], []>} : vector<5x5xf32>, vector<5x8xf32>, vector<5x8xf32> -> vector<5x8xf32>
    %411 = vector.extract_strided_slice %334 {offsets = [24, 0], sizes = [8, 32], strides = [1, 1]} : vector<32x32xf32> to vector<8x32xf32>
    %cst_245 = arith.constant dense<0.000000e+00> : vector<5x32xf32>
    %412 = tpu.matmul %410, %411, %cst_245 {dimension_numbers = #tpu.dot_dimension_numbers<[1], [0], [0], [1], [0, 0, 1, 1], [], []>} : vector<5x8xf32>, vector<8x32xf32>, vector<5x32xf32> -> vector<5x32xf32>
    %413 = arith.addf %393, %412 : vector<5x32xf32>
    %c0_246 = arith.constant 0 : index
    %c0_247 = arith.constant 0 : index
    %414 = vector.load %arg24[%c0_246, %c0_247] : memref<10x32xf32, #tpu.memory_space<vmem>>, vector<5x32xf32>
    %415 = arith.addf %414, %413 : vector<5x32xf32>
    %c1_248 = arith.constant 1 : index
    %c0_249 = arith.constant 0 : index
    %c0_250 = arith.constant 0 : index
    %416 = vector.load %arg8[%c1_248, %c0_249, %c0_250] : memref<3x1x32xf32, #tpu.memory_space<vmem>>, vector<1x1x32xf32>
    %417 = vector.shape_cast %416 : vector<1x1x32xf32> to vector<1x32xf32>
    %418 = vector.broadcast %417 : vector<1x32xf32> to vector<5x32xf32>
    %419 = arith.addf %415, %418 : vector<5x32xf32>
    %c0_251 = arith.constant 0 : index
    %c0_252 = arith.constant 0 : index
    %420 = vector.load %arg24[%c0_251, %c0_252] : memref<10x32xf32, #tpu.memory_space<vmem>>, vector<5x32xf32>
    tpu.vector_store %arg24[%c0_251, %c0_252], %419 {strides = array<i32>} : memref<10x32xf32, #tpu.memory_space<vmem>>, vector<5x32xf32>,
    %c5_253 = arith.constant 5 : index
    %c0_254 = arith.constant 0 : index
    %421 = vector.load %arg25[%c5_253, %c0_254] : memref<10x96xf32, #tpu.memory_space<vmem>>, vector<5x8xf32>
    %c5_255 = arith.constant 5 : index
    %c32_256 = arith.constant 32 : index
    %422 = vector.load %arg25[%c5_255, %c32_256] : memref<10x96xf32, #tpu.memory_space<vmem>>, vector<5x8xf32>
    %c5_257 = arith.constant 5 : index
    %c64_258 = arith.constant 64 : index
    %423 = vector.load %arg25[%c5_257, %c64_258] : memref<10x96xf32, #tpu.memory_space<vmem>>, vector<5x8xf32>
    %cst_259 = arith.constant dense<0.000000e+00> : vector<5x5xf32>
    %424 = tpu.matmul %421, %422, %cst_259 {dimension_numbers = #tpu.dot_dimension_numbers<[1], [1], [0], [0], [0, 0, 1, 0], [], []>} : vector<5x8xf32>, vector<5x8xf32>, vector<5x5xf32> -> vector<5x5xf32>
    %cst_260 = arith.constant 0.353553385 : f32
    %425 = vector.broadcast %cst_260 : f32 to vector<5x5xf32>
    %426 = arith.mulf %424, %425 : vector<5x5xf32>
    %cst_261 = arith.constant dense<0xFF800000> : vector<5xf32>
    %427 = vector.multi_reduction <maximumf>, %426, %cst_261 [1] : vector<5x5xf32> to vector<5xf32>
    %428 = vector.shape_cast %427 : vector<5xf32> to vector<5x1xf32>
    %429 = vector.broadcast %428 : vector<5x1xf32> to vector<5x5xf32>
    %430 = arith.subf %426, %429 : vector<5x5xf32>
    %431 = math.exp %430 : vector<5x5xf32>
    %cst_262 = arith.constant dense<0.000000e+00> : vector<5xf32>
    %432 = vector.multi_reduction <add>, %431, %cst_262 [1] : vector<5x5xf32> to vector<5xf32>
    %433 = vector.shape_cast %432 : vector<5xf32> to vector<5x1xf32>
    %434 = tpu.reciprocal %433 {approx = true} : vector<5x1xf32> -> vector<5x1xf32>
    %435 = vector.broadcast %434 : vector<5x1xf32> to vector<5x5xf32>
    %436 = arith.mulf %431, %435 : vector<5x5xf32>
    %cst_263 = arith.constant dense<0.000000e+00> : vector<5x8xf32>
    %437 = tpu.matmul %436, %423, %cst_263 {dimension_numbers = #tpu.dot_dimension_numbers<[1], [0], [0], [1], [0, 0, 1, 1], [], []>} : vector<5x5xf32>, vector<5x8xf32>, vector<5x8xf32> -> vector<5x8xf32>
    %438 = vector.extract_strided_slice %334 {offsets = [0, 0], sizes = [8, 32], strides = [1, 1]} : vector<32x32xf32> to vector<8x32xf32>
    %cst_264 = arith.constant dense<0.000000e+00> : vector<5x32xf32>
    %439 = tpu.matmul %437, %438, %cst_264 {dimension_numbers = #tpu.dot_dimension_numbers<[1], [0], [0], [1], [0, 0, 1, 1], [], []>} : vector<5x8xf32>, vector<8x32xf32>, vector<5x32xf32> -> vector<5x32xf32>
    %c5_265 = arith.constant 5 : index
    %c8_266 = arith.constant 8 : index
    %440 = vector.load %arg25[%c5_265, %c8_266] : memref<10x96xf32, #tpu.memory_space<vmem>>, vector<5x8xf32>
    %c5_267 = arith.constant 5 : index
    %c40_268 = arith.constant 40 : index
    %441 = vector.load %arg25[%c5_267, %c40_268] : memref<10x96xf32, #tpu.memory_space<vmem>>, vector<5x8xf32>
    %c5_269 = arith.constant 5 : index
    %c72_270 = arith.constant 72 : index
    %442 = vector.load %arg25[%c5_269, %c72_270] : memref<10x96xf32, #tpu.memory_space<vmem>>, vector<5x8xf32>
    %cst_271 = arith.constant dense<0.000000e+00> : vector<5x5xf32>
    %443 = tpu.matmul %440, %441, %cst_271 {dimension_numbers = #tpu.dot_dimension_numbers<[1], [1], [0], [0], [0, 0, 1, 0], [], []>} : vector<5x8xf32>, vector<5x8xf32>, vector<5x5xf32> -> vector<5x5xf32>
    %cst_272 = arith.constant 0.353553385 : f32
    %444 = vector.broadcast %cst_272 : f32 to vector<5x5xf32>
    %445 = arith.mulf %443, %444 : vector<5x5xf32>
    %cst_273 = arith.constant dense<0xFF800000> : vector<5xf32>
    %446 = vector.multi_reduction <maximumf>, %445, %cst_273 [1] : vector<5x5xf32> to vector<5xf32>
    %447 = vector.shape_cast %446 : vector<5xf32> to vector<5x1xf32>
    %448 = vector.broadcast %447 : vector<5x1xf32> to vector<5x5xf32>
    %449 = arith.subf %445, %448 : vector<5x5xf32>
    %450 = math.exp %449 : vector<5x5xf32>
    %cst_274 = arith.constant dense<0.000000e+00> : vector<5xf32>
    %451 = vector.multi_reduction <add>, %450, %cst_274 [1] : vector<5x5xf32> to vector<5xf32>
    %452 = vector.shape_cast %451 : vector<5xf32> to vector<5x1xf32>
    %453 = tpu.reciprocal %452 {approx = true} : vector<5x1xf32> -> vector<5x1xf32>
    %454 = vector.broadcast %453 : vector<5x1xf32> to vector<5x5xf32>
    %455 = arith.mulf %450, %454 : vector<5x5xf32>
    %cst_275 = arith.constant dense<0.000000e+00> : vector<5x8xf32>
    %456 = tpu.matmul %455, %442, %cst_275 {dimension_numbers = #tpu.dot_dimension_numbers<[1], [0], [0], [1], [0, 0, 1, 1], [], []>} : vector<5x5xf32>, vector<5x8xf32>, vector<5x8xf32> -> vector<5x8xf32>
    %457 = vector.extract_strided_slice %334 {offsets = [8, 0], sizes = [8, 32], strides = [1, 1]} : vector<32x32xf32> to vector<8x32xf32>
    %cst_276 = arith.constant dense<0.000000e+00> : vector<5x32xf32>
    %458 = tpu.matmul %456, %457, %cst_276 {dimension_numbers = #tpu.dot_dimension_numbers<[1], [0], [0], [1], [0, 0, 1, 1], [], []>} : vector<5x8xf32>, vector<8x32xf32>, vector<5x32xf32> -> vector<5x32xf32>
    %459 = arith.addf %439, %458 : vector<5x32xf32>
    %c5_277 = arith.constant 5 : index
    %c16_278 = arith.constant 16 : index
    %460 = vector.load %arg25[%c5_277, %c16_278] : memref<10x96xf32, #tpu.memory_space<vmem>>, vector<5x8xf32>
    %c5_279 = arith.constant 5 : index
    %c48_280 = arith.constant 48 : index
    %461 = vector.load %arg25[%c5_279, %c48_280] : memref<10x96xf32, #tpu.memory_space<vmem>>, vector<5x8xf32>
    %c5_281 = arith.constant 5 : index
    %c80_282 = arith.constant 80 : index
    %462 = vector.load %arg25[%c5_281, %c80_282] : memref<10x96xf32, #tpu.memory_space<vmem>>, vector<5x8xf32>
    %cst_283 = arith.constant dense<0.000000e+00> : vector<5x5xf32>
    %463 = tpu.matmul %460, %461, %cst_283 {dimension_numbers = #tpu.dot_dimension_numbers<[1], [1], [0], [0], [0, 0, 1, 0], [], []>} : vector<5x8xf32>, vector<5x8xf32>, vector<5x5xf32> -> vector<5x5xf32>
    %cst_284 = arith.constant 0.353553385 : f32
    %464 = vector.broadcast %cst_284 : f32 to vector<5x5xf32>
    %465 = arith.mulf %463, %464 : vector<5x5xf32>
    %cst_285 = arith.constant dense<0xFF800000> : vector<5xf32>
    %466 = vector.multi_reduction <maximumf>, %465, %cst_285 [1] : vector<5x5xf32> to vector<5xf32>
    %467 = vector.shape_cast %466 : vector<5xf32> to vector<5x1xf32>
    %468 = vector.broadcast %467 : vector<5x1xf32> to vector<5x5xf32>
    %469 = arith.subf %465, %468 : vector<5x5xf32>
    %470 = math.exp %469 : vector<5x5xf32>
    %cst_286 = arith.constant dense<0.000000e+00> : vector<5xf32>
    %471 = vector.multi_reduction <add>, %470, %cst_286 [1] : vector<5x5xf32> to vector<5xf32>
    %472 = vector.shape_cast %471 : vector<5xf32> to vector<5x1xf32>
    %473 = tpu.reciprocal %472 {approx = true} : vector<5x1xf32> -> vector<5x1xf32>
    %474 = vector.broadcast %473 : vector<5x1xf32> to vector<5x5xf32>
    %475 = arith.mulf %470, %474 : vector<5x5xf32>
    %cst_287 = arith.constant dense<0.000000e+00> : vector<5x8xf32>
    %476 = tpu.matmul %475, %462, %cst_287 {dimension_numbers = #tpu.dot_dimension_numbers<[1], [0], [0], [1], [0, 0, 1, 1], [], []>} : vector<5x5xf32>, vector<5x8xf32>, vector<5x8xf32> -> vector<5x8xf32>
    %477 = vector.extract_strided_slice %334 {offsets = [16, 0], sizes = [8, 32], strides = [1, 1]} : vector<32x32xf32> to vector<8x32xf32>
    %cst_288 = arith.constant dense<0.000000e+00> : vector<5x32xf32>
    %478 = tpu.matmul %476, %477, %cst_288 {dimension_numbers = #tpu.dot_dimension_numbers<[1], [0], [0], [1], [0, 0, 1, 1], [], []>} : vector<5x8xf32>, vector<8x32xf32>, vector<5x32xf32> -> vector<5x32xf32>
    %479 = arith.addf %459, %478 : vector<5x32xf32>
    %c5_289 = arith.constant 5 : index
    %c24_290 = arith.constant 24 : index
    %480 = vector.load %arg25[%c5_289, %c24_290] : memref<10x96xf32, #tpu.memory_space<vmem>>, vector<5x8xf32>
    %c5_291 = arith.constant 5 : index
    %c56_292 = arith.constant 56 : index
    %481 = vector.load %arg25[%c5_291, %c56_292] : memref<10x96xf32, #tpu.memory_space<vmem>>, vector<5x8xf32>
    %c5_293 = arith.constant 5 : index
    %c88_294 = arith.constant 88 : index
    %482 = vector.load %arg25[%c5_293, %c88_294] : memref<10x96xf32, #tpu.memory_space<vmem>>, vector<5x8xf32>
    %cst_295 = arith.constant dense<0.000000e+00> : vector<5x5xf32>
    %483 = tpu.matmul %480, %481, %cst_295 {dimension_numbers = #tpu.dot_dimension_numbers<[1], [1], [0], [0], [0, 0, 1, 0], [], []>} : vector<5x8xf32>, vector<5x8xf32>, vector<5x5xf32> -> vector<5x5xf32>
    %cst_296 = arith.constant 0.353553385 : f32
    %484 = vector.broadcast %cst_296 : f32 to vector<5x5xf32>
    %485 = arith.mulf %483, %484 : vector<5x5xf32>
    %cst_297 = arith.constant dense<0xFF800000> : vector<5xf32>
    %486 = vector.multi_reduction <maximumf>, %485, %cst_297 [1] : vector<5x5xf32> to vector<5xf32>
    %487 = vector.shape_cast %486 : vector<5xf32> to vector<5x1xf32>
    %488 = vector.broadcast %487 : vector<5x1xf32> to vector<5x5xf32>
    %489 = arith.subf %485, %488 : vector<5x5xf32>
    %490 = math.exp %489 : vector<5x5xf32>
    %cst_298 = arith.constant dense<0.000000e+00> : vector<5xf32>
    %491 = vector.multi_reduction <add>, %490, %cst_298 [1] : vector<5x5xf32> to vector<5xf32>
    %492 = vector.shape_cast %491 : vector<5xf32> to vector<5x1xf32>
    %493 = tpu.reciprocal %492 {approx = true} : vector<5x1xf32> -> vector<5x1xf32>
    %494 = vector.broadcast %493 : vector<5x1xf32> to vector<5x5xf32>
    %495 = arith.mulf %490, %494 : vector<5x5xf32>
    %cst_299 = arith.constant dense<0.000000e+00> : vector<5x8xf32>
    %496 = tpu.matmul %495, %482, %cst_299 {dimension_numbers = #tpu.dot_dimension_numbers<[1], [0], [0], [1], [0, 0, 1, 1], [], []>} : vector<5x5xf32>, vector<5x8xf32>, vector<5x8xf32> -> vector<5x8xf32>
    %497 = vector.extract_strided_slice %334 {offsets = [24, 0], sizes = [8, 32], strides = [1, 1]} : vector<32x32xf32> to vector<8x32xf32>
    %cst_300 = arith.constant dense<0.000000e+00> : vector<5x32xf32>
    %498 = tpu.matmul %496, %497, %cst_300 {dimension_numbers = #tpu.dot_dimension_numbers<[1], [0], [0], [1], [0, 0, 1, 1], [], []>} : vector<5x8xf32>, vector<8x32xf32>, vector<5x32xf32> -> vector<5x32xf32>
    %499 = arith.addf %479, %498 : vector<5x32xf32>
    %c5_301 = arith.constant 5 : index
    %c0_302 = arith.constant 0 : index
    %500 = vector.load %arg24[%c5_301, %c0_302] : memref<10x32xf32, #tpu.memory_space<vmem>>, vector<5x32xf32>
    %501 = arith.addf %500, %499 : vector<5x32xf32>
    %c1_303 = arith.constant 1 : index
    %c0_304 = arith.constant 0 : index
    %c0_305 = arith.constant 0 : index
    %502 = vector.load %arg8[%c1_303, %c0_304, %c0_305] : memref<3x1x32xf32, #tpu.memory_space<vmem>>, vector<1x1x32xf32>
    %503 = vector.shape_cast %502 : vector<1x1x32xf32> to vector<1x32xf32>
    %504 = vector.broadcast %503 : vector<1x32xf32> to vector<5x32xf32>
    %505 = arith.addf %501, %504 : vector<5x32xf32>
    %c5_306 = arith.constant 5 : index
    %c0_307 = arith.constant 0 : index
    %506 = vector.load %arg24[%c5_306, %c0_307] : memref<10x32xf32, #tpu.memory_space<vmem>>, vector<5x32xf32>
    tpu.vector_store %arg24[%c5_306, %c0_307], %505 {strides = array<i32>} : memref<10x32xf32, #tpu.memory_space<vmem>>, vector<5x32xf32>,
    %c0_308 = arith.constant 0 : index
    %c0_309 = arith.constant 0 : index
    %507 = vector.load %arg24[%c0_308, %c0_309] : memref<10x32xf32, #tpu.memory_space<vmem>>, vector<10x32xf32>
    %c1_310 = arith.constant 1 : index
    %c0_311 = arith.constant 0 : index
    %c0_312 = arith.constant 0 : index
    %508 = vector.load %arg9[%c1_310, %c0_311, %c0_312] : memref<3x1x32xf32, #tpu.memory_space<vmem>>, vector<1x1x32xf32>
    %509 = vector.shape_cast %508 : vector<1x1x32xf32> to vector<1x32xf32>
    %c1_313 = arith.constant 1 : index
    %c0_314 = arith.constant 0 : index
    %c0_315 = arith.constant 0 : index
    %510 = vector.load %arg10[%c1_313, %c0_314, %c0_315] : memref<3x1x32xf32, #tpu.memory_space<vmem>>, vector<1x1x32xf32>
    %511 = vector.shape_cast %510 : vector<1x1x32xf32> to vector<1x32xf32>
    %cst_316 = arith.constant dense<0.000000e+00> : vector<10xf32>
    %512 = vector.multi_reduction <add>, %507, %cst_316 [1] : vector<10x32xf32> to vector<10xf32>
    %513 = vector.shape_cast %512 : vector<10xf32> to vector<10x1xf32>
    %cst_317 = arith.constant 3.200000e+01 : f32
    %514 = vector.broadcast %cst_317 : f32 to vector<10x1xf32>
    %515 = arith.divf %513, %514 : vector<10x1xf32>
    %516 = vector.broadcast %515 : vector<10x1xf32> to vector<10x32xf32>
    %517 = arith.subf %507, %516 : vector<10x32xf32>
    %518 = arith.mulf %517, %517 : vector<10x32xf32>
    %cst_318 = arith.constant dense<0.000000e+00> : vector<10xf32>
    %519 = vector.multi_reduction <add>, %518, %cst_318 [1] : vector<10x32xf32> to vector<10xf32>
    %520 = vector.shape_cast %519 : vector<10xf32> to vector<10x1xf32>
    %cst_319 = arith.constant 3.200000e+01 : f32
    %521 = vector.broadcast %cst_319 : f32 to vector<10x1xf32>
    %522 = arith.divf %520, %521 : vector<10x1xf32>
    %523 = vector.broadcast %515 : vector<10x1xf32> to vector<10x32xf32>
    %524 = arith.subf %507, %523 : vector<10x32xf32>
    %cst_320 = arith.constant 9.99999974E-6 : f32
    %525 = vector.broadcast %cst_320 : f32 to vector<10x1xf32>
    %526 = arith.addf %522, %525 : vector<10x1xf32>
    %527 = math.rsqrt %526 : vector<10x1xf32>
    %528 = vector.broadcast %527 : vector<10x1xf32> to vector<10x32xf32>
    %529 = arith.mulf %524, %528 : vector<10x32xf32>
    %530 = vector.broadcast %509 : vector<1x32xf32> to vector<10x32xf32>
    %531 = arith.mulf %529, %530 : vector<10x32xf32>
    %532 = vector.broadcast %511 : vector<1x32xf32> to vector<10x32xf32>
    %533 = arith.addf %531, %532 : vector<10x32xf32>
    %c1_321 = arith.constant 1 : index
    %c0_322 = arith.constant 0 : index
    %c0_323 = arith.constant 0 : index
    %534 = vector.load %arg11[%c1_321, %c0_322, %c0_323] : memref<3x32x128xf32, #tpu.memory_space<vmem>>, vector<1x32x128xf32>
    %535 = vector.shape_cast %534 : vector<1x32x128xf32> to vector<32x128xf32>
    %cst_324 = arith.constant dense<0.000000e+00> : vector<10x128xf32>
    %536 = tpu.matmul %533, %535, %cst_324 {dimension_numbers = #tpu.dot_dimension_numbers<[1], [0], [0], [1], [0, 0, 1, 1], [], []>} : vector<10x32xf32>, vector<32x128xf32>, vector<10x128xf32> -> vector<10x128xf32>
    %c1_325 = arith.constant 1 : index
    %c0_326 = arith.constant 0 : index
    %c0_327 = arith.constant 0 : index
    %537 = vector.load %arg12[%c1_325, %c0_326, %c0_327] : memref<3x1x128xf32, #tpu.memory_space<vmem>>, vector<1x1x128xf32>
    %538 = vector.shape_cast %537 : vector<1x1x128xf32> to vector<1x128xf32>
    %539 = vector.broadcast %538 : vector<1x128xf32> to vector<10x128xf32>
    %540 = arith.addf %536, %539 : vector<10x128xf32>
    %cst_328 = arith.constant 5.000000e-01 : f32
    %541 = vector.broadcast %cst_328 : f32 to vector<10x128xf32>
    %542 = arith.mulf %541, %540 : vector<10x128xf32>
    %cst_329 = arith.constant 0.707106769 : f32
    %543 = vector.broadcast %cst_329 : f32 to vector<10x128xf32>
    %544 = arith.mulf %540, %543 : vector<10x128xf32>
    %545 = math.absf %544 : vector<10x128xf32>
    %cst_330 = arith.constant 0.327591091 : f32
    %546 = vector.broadcast %cst_330 : f32 to vector<10x128xf32>
    %547 = arith.mulf %546, %545 : vector<10x128xf32>
    %cst_331 = arith.constant 1.000000e+00 : f32
    %548 = vector.broadcast %cst_331 : f32 to vector<10x128xf32>
    %549 = arith.addf %548, %547 : vector<10x128xf32>
    %cst_332 = arith.constant 1.000000e+00 : f32
    %550 = vector.broadcast %cst_332 : f32 to vector<10x128xf32>
    %551 = arith.divf %550, %549 : vector<10x128xf32>
    %cst_333 = arith.constant 1.06140542 : f32
    %552 = vector.broadcast %cst_333 : f32 to vector<10x128xf32>
    %553 = arith.mulf %552, %551 : vector<10x128xf32>
    %cst_334 = arith.constant -1.45315206 : f32
    %554 = vector.broadcast %cst_334 : f32 to vector<10x128xf32>
    %555 = arith.addf %553, %554 : vector<10x128xf32>
    %556 = arith.mulf %555, %551 : vector<10x128xf32>
    %cst_335 = arith.constant 1.42141378 : f32
    %557 = vector.broadcast %cst_335 : f32 to vector<10x128xf32>
    %558 = arith.addf %556, %557 : vector<10x128xf32>
    %559 = arith.mulf %558, %551 : vector<10x128xf32>
    %cst_336 = arith.constant -0.284496725 : f32
    %560 = vector.broadcast %cst_336 : f32 to vector<10x128xf32>
    %561 = arith.addf %559, %560 : vector<10x128xf32>
    %562 = arith.mulf %561, %551 : vector<10x128xf32>
    %cst_337 = arith.constant 0.254829586 : f32
    %563 = vector.broadcast %cst_337 : f32 to vector<10x128xf32>
    %564 = arith.addf %562, %563 : vector<10x128xf32>
    %565 = arith.mulf %564, %551 : vector<10x128xf32>
    %cst_338 = arith.constant 0.000000e+00 : f32
    %566 = vector.broadcast %cst_338 : f32 to vector<10x128xf32>
    %567 = arith.subf %566, %545 : vector<10x128xf32>
    %568 = arith.mulf %567, %545 : vector<10x128xf32>
    %569 = math.exp %568 : vector<10x128xf32>
    %570 = arith.mulf %565, %569 : vector<10x128xf32>
    %cst_339 = arith.constant 1.000000e+00 : f32
    %571 = vector.broadcast %cst_339 : f32 to vector<10x128xf32>
    %572 = arith.subf %571, %570 : vector<10x128xf32>
    %cst_340 = arith.constant 0.000000e+00 : f32
    %573 = vector.broadcast %cst_340 : f32 to vector<10x128xf32>
    %574 = arith.cmpf oge, %544, %573 : vector<10x128xf32>
    %cst_341 = arith.constant 0.000000e+00 : f32
    %575 = vector.broadcast %cst_341 : f32 to vector<10x128xf32>
    %576 = arith.subf %575, %572 : vector<10x128xf32>
    %577 = arith.select %574, %572, %576 : vector<10x128xi1>, vector<10x128xf32>
    %cst_342 = arith.constant 1.000000e+00 : f32
    %578 = vector.broadcast %cst_342 : f32 to vector<10x128xf32>
    %579 = arith.addf %578, %577 : vector<10x128xf32>
    %580 = arith.mulf %542, %579 : vector<10x128xf32>
    %c1_343 = arith.constant 1 : index
    %c0_344 = arith.constant 0 : index
    %c0_345 = arith.constant 0 : index
    %581 = vector.load %arg13[%c1_343, %c0_344, %c0_345] : memref<3x128x32xf32, #tpu.memory_space<vmem>>, vector<1x128x32xf32>
    %582 = vector.shape_cast %581 : vector<1x128x32xf32> to vector<128x32xf32>
    %cst_346 = arith.constant dense<0.000000e+00> : vector<10x32xf32>
    %583 = tpu.matmul %580, %582, %cst_346 {dimension_numbers = #tpu.dot_dimension_numbers<[1], [0], [0], [1], [0, 0, 1, 1], [], []>} : vector<10x128xf32>, vector<128x32xf32>, vector<10x32xf32> -> vector<10x32xf32>
    %c1_347 = arith.constant 1 : index
    %c0_348 = arith.constant 0 : index
    %c0_349 = arith.constant 0 : index
    %584 = vector.load %arg14[%c1_347, %c0_348, %c0_349] : memref<3x1x32xf32, #tpu.memory_space<vmem>>, vector<1x1x32xf32>
    %585 = vector.shape_cast %584 : vector<1x1x32xf32> to vector<1x32xf32>
    %586 = vector.broadcast %585 : vector<1x32xf32> to vector<10x32xf32>
    %587 = arith.addf %583, %586 : vector<10x32xf32>
    %588 = arith.addf %507, %587 : vector<10x32xf32>
    %c0_350 = arith.constant 0 : index
    %c0_351 = arith.constant 0 : index
    %589 = vector.load %arg24[%c0_350, %c0_351] : memref<10x32xf32, #tpu.memory_space<vmem>>, vector<10x32xf32>
    tpu.vector_store %arg24[%c0_350, %c0_351], %588 {strides = array<i32>} : memref<10x32xf32, #tpu.memory_space<vmem>>, vector<10x32xf32>,
    %c0_352 = arith.constant 0 : index
    %c0_353 = arith.constant 0 : index
    %590 = vector.load %arg24[%c0_352, %c0_353] : memref<10x32xf32, #tpu.memory_space<vmem>>, vector<10x32xf32>
    %c2 = arith.constant 2 : index
    %c0_354 = arith.constant 0 : index
    %c0_355 = arith.constant 0 : index
    %591 = vector.load %arg3[%c2, %c0_354, %c0_355] : memref<3x1x32xf32, #tpu.memory_space<vmem>>, vector<1x1x32xf32>
    %592 = vector.shape_cast %591 : vector<1x1x32xf32> to vector<1x32xf32>
    %c2_356 = arith.constant 2 : index
    %c0_357 = arith.constant 0 : index
    %c0_358 = arith.constant 0 : index
    %593 = vector.load %arg4[%c2_356, %c0_357, %c0_358] : memref<3x1x32xf32, #tpu.memory_space<vmem>>, vector<1x1x32xf32>
    %594 = vector.shape_cast %593 : vector<1x1x32xf32> to vector<1x32xf32>
    %cst_359 = arith.constant dense<0.000000e+00> : vector<10xf32>
    %595 = vector.multi_reduction <add>, %590, %cst_359 [1] : vector<10x32xf32> to vector<10xf32>
    %596 = vector.shape_cast %595 : vector<10xf32> to vector<10x1xf32>
    %cst_360 = arith.constant 3.200000e+01 : f32
    %597 = vector.broadcast %cst_360 : f32 to vector<10x1xf32>
    %598 = arith.divf %596, %597 : vector<10x1xf32>
    %599 = vector.broadcast %598 : vector<10x1xf32> to vector<10x32xf32>
    %600 = arith.subf %590, %599 : vector<10x32xf32>
    %601 = arith.mulf %600, %600 : vector<10x32xf32>
    %cst_361 = arith.constant dense<0.000000e+00> : vector<10xf32>
    %602 = vector.multi_reduction <add>, %601, %cst_361 [1] : vector<10x32xf32> to vector<10xf32>
    %603 = vector.shape_cast %602 : vector<10xf32> to vector<10x1xf32>
    %cst_362 = arith.constant 3.200000e+01 : f32
    %604 = vector.broadcast %cst_362 : f32 to vector<10x1xf32>
    %605 = arith.divf %603, %604 : vector<10x1xf32>
    %606 = vector.broadcast %598 : vector<10x1xf32> to vector<10x32xf32>
    %607 = arith.subf %590, %606 : vector<10x32xf32>
    %cst_363 = arith.constant 9.99999974E-6 : f32
    %608 = vector.broadcast %cst_363 : f32 to vector<10x1xf32>
    %609 = arith.addf %605, %608 : vector<10x1xf32>
    %610 = math.rsqrt %609 : vector<10x1xf32>
    %611 = vector.broadcast %610 : vector<10x1xf32> to vector<10x32xf32>
    %612 = arith.mulf %607, %611 : vector<10x32xf32>
    %613 = vector.broadcast %592 : vector<1x32xf32> to vector<10x32xf32>
    %614 = arith.mulf %612, %613 : vector<10x32xf32>
    %615 = vector.broadcast %594 : vector<1x32xf32> to vector<10x32xf32>
    %616 = arith.addf %614, %615 : vector<10x32xf32>
    %c2_364 = arith.constant 2 : index
    %c0_365 = arith.constant 0 : index
    %c0_366 = arith.constant 0 : index
    %617 = vector.load %arg5[%c2_364, %c0_365, %c0_366] : memref<3x32x96xf32, #tpu.memory_space<vmem>>, vector<1x32x96xf32>
    %618 = vector.shape_cast %617 : vector<1x32x96xf32> to vector<32x96xf32>
    %cst_367 = arith.constant dense<0.000000e+00> : vector<10x96xf32>
    %619 = tpu.matmul %616, %618, %cst_367 {dimension_numbers = #tpu.dot_dimension_numbers<[1], [0], [0], [1], [0, 0, 1, 1], [], []>} : vector<10x32xf32>, vector<32x96xf32>, vector<10x96xf32> -> vector<10x96xf32>
    %c2_368 = arith.constant 2 : index
    %c0_369 = arith.constant 0 : index
    %c0_370 = arith.constant 0 : index
    %620 = vector.load %arg6[%c2_368, %c0_369, %c0_370] : memref<3x1x96xf32, #tpu.memory_space<vmem>>, vector<1x1x96xf32>
    %621 = vector.shape_cast %620 : vector<1x1x96xf32> to vector<1x96xf32>
    %622 = vector.broadcast %621 : vector<1x96xf32> to vector<10x96xf32>
    %623 = arith.addf %619, %622 : vector<10x96xf32>
    %c0_371 = arith.constant 0 : index
    %c0_372 = arith.constant 0 : index
    %624 = vector.load %arg25[%c0_371, %c0_372] : memref<10x96xf32, #tpu.memory_space<vmem>>, vector<10x96xf32>
    tpu.vector_store %arg25[%c0_371, %c0_372], %623 {strides = array<i32>} : memref<10x96xf32, #tpu.memory_space<vmem>>, vector<10x96xf32>,
    %c2_373 = arith.constant 2 : index
    %c0_374 = arith.constant 0 : index
    %c0_375 = arith.constant 0 : index
    %625 = vector.load %arg7[%c2_373, %c0_374, %c0_375] : memref<3x32x32xf32, #tpu.memory_space<vmem>>, vector<1x32x32xf32>
    %626 = vector.shape_cast %625 : vector<1x32x32xf32> to vector<32x32xf32>
    %c0_376 = arith.constant 0 : index
    %c0_377 = arith.constant 0 : index
    %627 = vector.load %arg25[%c0_376, %c0_377] : memref<10x96xf32, #tpu.memory_space<vmem>>, vector<5x8xf32>
    %c0_378 = arith.constant 0 : index
    %c32_379 = arith.constant 32 : index
    %628 = vector.load %arg25[%c0_378, %c32_379] : memref<10x96xf32, #tpu.memory_space<vmem>>, vector<5x8xf32>
    %c0_380 = arith.constant 0 : index
    %c64_381 = arith.constant 64 : index
    %629 = vector.load %arg25[%c0_380, %c64_381] : memref<10x96xf32, #tpu.memory_space<vmem>>, vector<5x8xf32>
    %cst_382 = arith.constant dense<0.000000e+00> : vector<5x5xf32>
    %630 = tpu.matmul %627, %628, %cst_382 {dimension_numbers = #tpu.dot_dimension_numbers<[1], [1], [0], [0], [0, 0, 1, 0], [], []>} : vector<5x8xf32>, vector<5x8xf32>, vector<5x5xf32> -> vector<5x5xf32>
    %cst_383 = arith.constant 0.353553385 : f32
    %631 = vector.broadcast %cst_383 : f32 to vector<5x5xf32>
    %632 = arith.mulf %630, %631 : vector<5x5xf32>
    %cst_384 = arith.constant dense<0xFF800000> : vector<5xf32>
    %633 = vector.multi_reduction <maximumf>, %632, %cst_384 [1] : vector<5x5xf32> to vector<5xf32>
    %634 = vector.shape_cast %633 : vector<5xf32> to vector<5x1xf32>
    %635 = vector.broadcast %634 : vector<5x1xf32> to vector<5x5xf32>
    %636 = arith.subf %632, %635 : vector<5x5xf32>
    %637 = math.exp %636 : vector<5x5xf32>
    %cst_385 = arith.constant dense<0.000000e+00> : vector<5xf32>
    %638 = vector.multi_reduction <add>, %637, %cst_385 [1] : vector<5x5xf32> to vector<5xf32>
    %639 = vector.shape_cast %638 : vector<5xf32> to vector<5x1xf32>
    %640 = tpu.reciprocal %639 {approx = true} : vector<5x1xf32> -> vector<5x1xf32>
    %641 = vector.broadcast %640 : vector<5x1xf32> to vector<5x5xf32>
    %642 = arith.mulf %637, %641 : vector<5x5xf32>
    %cst_386 = arith.constant dense<0.000000e+00> : vector<5x8xf32>
    %643 = tpu.matmul %642, %629, %cst_386 {dimension_numbers = #tpu.dot_dimension_numbers<[1], [0], [0], [1], [0, 0, 1, 1], [], []>} : vector<5x5xf32>, vector<5x8xf32>, vector<5x8xf32> -> vector<5x8xf32>
    %644 = vector.extract_strided_slice %626 {offsets = [0, 0], sizes = [8, 32], strides = [1, 1]} : vector<32x32xf32> to vector<8x32xf32>
    %cst_387 = arith.constant dense<0.000000e+00> : vector<5x32xf32>
    %645 = tpu.matmul %643, %644, %cst_387 {dimension_numbers = #tpu.dot_dimension_numbers<[1], [0], [0], [1], [0, 0, 1, 1], [], []>} : vector<5x8xf32>, vector<8x32xf32>, vector<5x32xf32> -> vector<5x32xf32>
    %c0_388 = arith.constant 0 : index
    %c8_389 = arith.constant 8 : index
    %646 = vector.load %arg25[%c0_388, %c8_389] : memref<10x96xf32, #tpu.memory_space<vmem>>, vector<5x8xf32>
    %c0_390 = arith.constant 0 : index
    %c40_391 = arith.constant 40 : index
    %647 = vector.load %arg25[%c0_390, %c40_391] : memref<10x96xf32, #tpu.memory_space<vmem>>, vector<5x8xf32>
    %c0_392 = arith.constant 0 : index
    %c72_393 = arith.constant 72 : index
    %648 = vector.load %arg25[%c0_392, %c72_393] : memref<10x96xf32, #tpu.memory_space<vmem>>, vector<5x8xf32>
    %cst_394 = arith.constant dense<0.000000e+00> : vector<5x5xf32>
    %649 = tpu.matmul %646, %647, %cst_394 {dimension_numbers = #tpu.dot_dimension_numbers<[1], [1], [0], [0], [0, 0, 1, 0], [], []>} : vector<5x8xf32>, vector<5x8xf32>, vector<5x5xf32> -> vector<5x5xf32>
    %cst_395 = arith.constant 0.353553385 : f32
    %650 = vector.broadcast %cst_395 : f32 to vector<5x5xf32>
    %651 = arith.mulf %649, %650 : vector<5x5xf32>
    %cst_396 = arith.constant dense<0xFF800000> : vector<5xf32>
    %652 = vector.multi_reduction <maximumf>, %651, %cst_396 [1] : vector<5x5xf32> to vector<5xf32>
    %653 = vector.shape_cast %652 : vector<5xf32> to vector<5x1xf32>
    %654 = vector.broadcast %653 : vector<5x1xf32> to vector<5x5xf32>
    %655 = arith.subf %651, %654 : vector<5x5xf32>
    %656 = math.exp %655 : vector<5x5xf32>
    %cst_397 = arith.constant dense<0.000000e+00> : vector<5xf32>
    %657 = vector.multi_reduction <add>, %656, %cst_397 [1] : vector<5x5xf32> to vector<5xf32>
    %658 = vector.shape_cast %657 : vector<5xf32> to vector<5x1xf32>
    %659 = tpu.reciprocal %658 {approx = true} : vector<5x1xf32> -> vector<5x1xf32>
    %660 = vector.broadcast %659 : vector<5x1xf32> to vector<5x5xf32>
    %661 = arith.mulf %656, %660 : vector<5x5xf32>
    %cst_398 = arith.constant dense<0.000000e+00> : vector<5x8xf32>
    %662 = tpu.matmul %661, %648, %cst_398 {dimension_numbers = #tpu.dot_dimension_numbers<[1], [0], [0], [1], [0, 0, 1, 1], [], []>} : vector<5x5xf32>, vector<5x8xf32>, vector<5x8xf32> -> vector<5x8xf32>
    %663 = vector.extract_strided_slice %626 {offsets = [8, 0], sizes = [8, 32], strides = [1, 1]} : vector<32x32xf32> to vector<8x32xf32>
    %cst_399 = arith.constant dense<0.000000e+00> : vector<5x32xf32>
    %664 = tpu.matmul %662, %663, %cst_399 {dimension_numbers = #tpu.dot_dimension_numbers<[1], [0], [0], [1], [0, 0, 1, 1], [], []>} : vector<5x8xf32>, vector<8x32xf32>, vector<5x32xf32> -> vector<5x32xf32>
    %665 = arith.addf %645, %664 : vector<5x32xf32>
    %c0_400 = arith.constant 0 : index
    %c16_401 = arith.constant 16 : index
    %666 = vector.load %arg25[%c0_400, %c16_401] : memref<10x96xf32, #tpu.memory_space<vmem>>, vector<5x8xf32>
    %c0_402 = arith.constant 0 : index
    %c48_403 = arith.constant 48 : index
    %667 = vector.load %arg25[%c0_402, %c48_403] : memref<10x96xf32, #tpu.memory_space<vmem>>, vector<5x8xf32>
    %c0_404 = arith.constant 0 : index
    %c80_405 = arith.constant 80 : index
    %668 = vector.load %arg25[%c0_404, %c80_405] : memref<10x96xf32, #tpu.memory_space<vmem>>, vector<5x8xf32>
    %cst_406 = arith.constant dense<0.000000e+00> : vector<5x5xf32>
    %669 = tpu.matmul %666, %667, %cst_406 {dimension_numbers = #tpu.dot_dimension_numbers<[1], [1], [0], [0], [0, 0, 1, 0], [], []>} : vector<5x8xf32>, vector<5x8xf32>, vector<5x5xf32> -> vector<5x5xf32>
    %cst_407 = arith.constant 0.353553385 : f32
    %670 = vector.broadcast %cst_407 : f32 to vector<5x5xf32>
    %671 = arith.mulf %669, %670 : vector<5x5xf32>
    %cst_408 = arith.constant dense<0xFF800000> : vector<5xf32>
    %672 = vector.multi_reduction <maximumf>, %671, %cst_408 [1] : vector<5x5xf32> to vector<5xf32>
    %673 = vector.shape_cast %672 : vector<5xf32> to vector<5x1xf32>
    %674 = vector.broadcast %673 : vector<5x1xf32> to vector<5x5xf32>
    %675 = arith.subf %671, %674 : vector<5x5xf32>
    %676 = math.exp %675 : vector<5x5xf32>
    %cst_409 = arith.constant dense<0.000000e+00> : vector<5xf32>
    %677 = vector.multi_reduction <add>, %676, %cst_409 [1] : vector<5x5xf32> to vector<5xf32>
    %678 = vector.shape_cast %677 : vector<5xf32> to vector<5x1xf32>
    %679 = tpu.reciprocal %678 {approx = true} : vector<5x1xf32> -> vector<5x1xf32>
    %680 = vector.broadcast %679 : vector<5x1xf32> to vector<5x5xf32>
    %681 = arith.mulf %676, %680 : vector<5x5xf32>
    %cst_410 = arith.constant dense<0.000000e+00> : vector<5x8xf32>
    %682 = tpu.matmul %681, %668, %cst_410 {dimension_numbers = #tpu.dot_dimension_numbers<[1], [0], [0], [1], [0, 0, 1, 1], [], []>} : vector<5x5xf32>, vector<5x8xf32>, vector<5x8xf32> -> vector<5x8xf32>
    %683 = vector.extract_strided_slice %626 {offsets = [16, 0], sizes = [8, 32], strides = [1, 1]} : vector<32x32xf32> to vector<8x32xf32>
    %cst_411 = arith.constant dense<0.000000e+00> : vector<5x32xf32>
    %684 = tpu.matmul %682, %683, %cst_411 {dimension_numbers = #tpu.dot_dimension_numbers<[1], [0], [0], [1], [0, 0, 1, 1], [], []>} : vector<5x8xf32>, vector<8x32xf32>, vector<5x32xf32> -> vector<5x32xf32>
    %685 = arith.addf %665, %684 : vector<5x32xf32>
    %c0_412 = arith.constant 0 : index
    %c24_413 = arith.constant 24 : index
    %686 = vector.load %arg25[%c0_412, %c24_413] : memref<10x96xf32, #tpu.memory_space<vmem>>, vector<5x8xf32>
    %c0_414 = arith.constant 0 : index
    %c56_415 = arith.constant 56 : index
    %687 = vector.load %arg25[%c0_414, %c56_415] : memref<10x96xf32, #tpu.memory_space<vmem>>, vector<5x8xf32>
    %c0_416 = arith.constant 0 : index
    %c88_417 = arith.constant 88 : index
    %688 = vector.load %arg25[%c0_416, %c88_417] : memref<10x96xf32, #tpu.memory_space<vmem>>, vector<5x8xf32>
    %cst_418 = arith.constant dense<0.000000e+00> : vector<5x5xf32>
    %689 = tpu.matmul %686, %687, %cst_418 {dimension_numbers = #tpu.dot_dimension_numbers<[1], [1], [0], [0], [0, 0, 1, 0], [], []>} : vector<5x8xf32>, vector<5x8xf32>, vector<5x5xf32> -> vector<5x5xf32>
    %cst_419 = arith.constant 0.353553385 : f32
    %690 = vector.broadcast %cst_419 : f32 to vector<5x5xf32>
    %691 = arith.mulf %689, %690 : vector<5x5xf32>
    %cst_420 = arith.constant dense<0xFF800000> : vector<5xf32>
    %692 = vector.multi_reduction <maximumf>, %691, %cst_420 [1] : vector<5x5xf32> to vector<5xf32>
    %693 = vector.shape_cast %692 : vector<5xf32> to vector<5x1xf32>
    %694 = vector.broadcast %693 : vector<5x1xf32> to vector<5x5xf32>
    %695 = arith.subf %691, %694 : vector<5x5xf32>
    %696 = math.exp %695 : vector<5x5xf32>
    %cst_421 = arith.constant dense<0.000000e+00> : vector<5xf32>
    %697 = vector.multi_reduction <add>, %696, %cst_421 [1] : vector<5x5xf32> to vector<5xf32>
    %698 = vector.shape_cast %697 : vector<5xf32> to vector<5x1xf32>
    %699 = tpu.reciprocal %698 {approx = true} : vector<5x1xf32> -> vector<5x1xf32>
    %700 = vector.broadcast %699 : vector<5x1xf32> to vector<5x5xf32>
    %701 = arith.mulf %696, %700 : vector<5x5xf32>
    %cst_422 = arith.constant dense<0.000000e+00> : vector<5x8xf32>
    %702 = tpu.matmul %701, %688, %cst_422 {dimension_numbers = #tpu.dot_dimension_numbers<[1], [0], [0], [1], [0, 0, 1, 1], [], []>} : vector<5x5xf32>, vector<5x8xf32>, vector<5x8xf32> -> vector<5x8xf32>
    %703 = vector.extract_strided_slice %626 {offsets = [24, 0], sizes = [8, 32], strides = [1, 1]} : vector<32x32xf32> to vector<8x32xf32>
    %cst_423 = arith.constant dense<0.000000e+00> : vector<5x32xf32>
    %704 = tpu.matmul %702, %703, %cst_423 {dimension_numbers = #tpu.dot_dimension_numbers<[1], [0], [0], [1], [0, 0, 1, 1], [], []>} : vector<5x8xf32>, vector<8x32xf32>, vector<5x32xf32> -> vector<5x32xf32>
    %705 = arith.addf %685, %704 : vector<5x32xf32>
    %c0_424 = arith.constant 0 : index
    %c0_425 = arith.constant 0 : index
    %706 = vector.load %arg24[%c0_424, %c0_425] : memref<10x32xf32, #tpu.memory_space<vmem>>, vector<5x32xf32>
    %707 = arith.addf %706, %705 : vector<5x32xf32>
    %c2_426 = arith.constant 2 : index
    %c0_427 = arith.constant 0 : index
    %c0_428 = arith.constant 0 : index
    %708 = vector.load %arg8[%c2_426, %c0_427, %c0_428] : memref<3x1x32xf32, #tpu.memory_space<vmem>>, vector<1x1x32xf32>
    %709 = vector.shape_cast %708 : vector<1x1x32xf32> to vector<1x32xf32>
    %710 = vector.broadcast %709 : vector<1x32xf32> to vector<5x32xf32>
    %711 = arith.addf %707, %710 : vector<5x32xf32>
    %c0_429 = arith.constant 0 : index
    %c0_430 = arith.constant 0 : index
    %712 = vector.load %arg24[%c0_429, %c0_430] : memref<10x32xf32, #tpu.memory_space<vmem>>, vector<5x32xf32>
    tpu.vector_store %arg24[%c0_429, %c0_430], %711 {strides = array<i32>} : memref<10x32xf32, #tpu.memory_space<vmem>>, vector<5x32xf32>,
    %c5_431 = arith.constant 5 : index
    %c0_432 = arith.constant 0 : index
    %713 = vector.load %arg25[%c5_431, %c0_432] : memref<10x96xf32, #tpu.memory_space<vmem>>, vector<5x8xf32>
    %c5_433 = arith.constant 5 : index
    %c32_434 = arith.constant 32 : index
    %714 = vector.load %arg25[%c5_433, %c32_434] : memref<10x96xf32, #tpu.memory_space<vmem>>, vector<5x8xf32>
    %c5_435 = arith.constant 5 : index
    %c64_436 = arith.constant 64 : index
    %715 = vector.load %arg25[%c5_435, %c64_436] : memref<10x96xf32, #tpu.memory_space<vmem>>, vector<5x8xf32>
    %cst_437 = arith.constant dense<0.000000e+00> : vector<5x5xf32>
    %716 = tpu.matmul %713, %714, %cst_437 {dimension_numbers = #tpu.dot_dimension_numbers<[1], [1], [0], [0], [0, 0, 1, 0], [], []>} : vector<5x8xf32>, vector<5x8xf32>, vector<5x5xf32> -> vector<5x5xf32>
    %cst_438 = arith.constant 0.353553385 : f32
    %717 = vector.broadcast %cst_438 : f32 to vector<5x5xf32>
    %718 = arith.mulf %716, %717 : vector<5x5xf32>
    %cst_439 = arith.constant dense<0xFF800000> : vector<5xf32>
    %719 = vector.multi_reduction <maximumf>, %718, %cst_439 [1] : vector<5x5xf32> to vector<5xf32>
    %720 = vector.shape_cast %719 : vector<5xf32> to vector<5x1xf32>
    %721 = vector.broadcast %720 : vector<5x1xf32> to vector<5x5xf32>
    %722 = arith.subf %718, %721 : vector<5x5xf32>
    %723 = math.exp %722 : vector<5x5xf32>
    %cst_440 = arith.constant dense<0.000000e+00> : vector<5xf32>
    %724 = vector.multi_reduction <add>, %723, %cst_440 [1] : vector<5x5xf32> to vector<5xf32>
    %725 = vector.shape_cast %724 : vector<5xf32> to vector<5x1xf32>
    %726 = tpu.reciprocal %725 {approx = true} : vector<5x1xf32> -> vector<5x1xf32>
    %727 = vector.broadcast %726 : vector<5x1xf32> to vector<5x5xf32>
    %728 = arith.mulf %723, %727 : vector<5x5xf32>
    %cst_441 = arith.constant dense<0.000000e+00> : vector<5x8xf32>
    %729 = tpu.matmul %728, %715, %cst_441 {dimension_numbers = #tpu.dot_dimension_numbers<[1], [0], [0], [1], [0, 0, 1, 1], [], []>} : vector<5x5xf32>, vector<5x8xf32>, vector<5x8xf32> -> vector<5x8xf32>
    %730 = vector.extract_strided_slice %626 {offsets = [0, 0], sizes = [8, 32], strides = [1, 1]} : vector<32x32xf32> to vector<8x32xf32>
    %cst_442 = arith.constant dense<0.000000e+00> : vector<5x32xf32>
    %731 = tpu.matmul %729, %730, %cst_442 {dimension_numbers = #tpu.dot_dimension_numbers<[1], [0], [0], [1], [0, 0, 1, 1], [], []>} : vector<5x8xf32>, vector<8x32xf32>, vector<5x32xf32> -> vector<5x32xf32>
    %c5_443 = arith.constant 5 : index
    %c8_444 = arith.constant 8 : index
    %732 = vector.load %arg25[%c5_443, %c8_444] : memref<10x96xf32, #tpu.memory_space<vmem>>, vector<5x8xf32>
    %c5_445 = arith.constant 5 : index
    %c40_446 = arith.constant 40 : index
    %733 = vector.load %arg25[%c5_445, %c40_446] : memref<10x96xf32, #tpu.memory_space<vmem>>, vector<5x8xf32>
    %c5_447 = arith.constant 5 : index
    %c72_448 = arith.constant 72 : index
    %734 = vector.load %arg25[%c5_447, %c72_448] : memref<10x96xf32, #tpu.memory_space<vmem>>, vector<5x8xf32>
    %cst_449 = arith.constant dense<0.000000e+00> : vector<5x5xf32>
    %735 = tpu.matmul %732, %733, %cst_449 {dimension_numbers = #tpu.dot_dimension_numbers<[1], [1], [0], [0], [0, 0, 1, 0], [], []>} : vector<5x8xf32>, vector<5x8xf32>, vector<5x5xf32> -> vector<5x5xf32>
    %cst_450 = arith.constant 0.353553385 : f32
    %736 = vector.broadcast %cst_450 : f32 to vector<5x5xf32>
    %737 = arith.mulf %735, %736 : vector<5x5xf32>
    %cst_451 = arith.constant dense<0xFF800000> : vector<5xf32>
    %738 = vector.multi_reduction <maximumf>, %737, %cst_451 [1] : vector<5x5xf32> to vector<5xf32>
    %739 = vector.shape_cast %738 : vector<5xf32> to vector<5x1xf32>
    %740 = vector.broadcast %739 : vector<5x1xf32> to vector<5x5xf32>
    %741 = arith.subf %737, %740 : vector<5x5xf32>
    %742 = math.exp %741 : vector<5x5xf32>
    %cst_452 = arith.constant dense<0.000000e+00> : vector<5xf32>
    %743 = vector.multi_reduction <add>, %742, %cst_452 [1] : vector<5x5xf32> to vector<5xf32>
    %744 = vector.shape_cast %743 : vector<5xf32> to vector<5x1xf32>
    %745 = tpu.reciprocal %744 {approx = true} : vector<5x1xf32> -> vector<5x1xf32>
    %746 = vector.broadcast %745 : vector<5x1xf32> to vector<5x5xf32>
    %747 = arith.mulf %742, %746 : vector<5x5xf32>
    %cst_453 = arith.constant dense<0.000000e+00> : vector<5x8xf32>
    %748 = tpu.matmul %747, %734, %cst_453 {dimension_numbers = #tpu.dot_dimension_numbers<[1], [0], [0], [1], [0, 0, 1, 1], [], []>} : vector<5x5xf32>, vector<5x8xf32>, vector<5x8xf32> -> vector<5x8xf32>
    %749 = vector.extract_strided_slice %626 {offsets = [8, 0], sizes = [8, 32], strides = [1, 1]} : vector<32x32xf32> to vector<8x32xf32>
    %cst_454 = arith.constant dense<0.000000e+00> : vector<5x32xf32>
    %750 = tpu.matmul %748, %749, %cst_454 {dimension_numbers = #tpu.dot_dimension_numbers<[1], [0], [0], [1], [0, 0, 1, 1], [], []>} : vector<5x8xf32>, vector<8x32xf32>, vector<5x32xf32> -> vector<5x32xf32>
    %751 = arith.addf %731, %750 : vector<5x32xf32>
    %c5_455 = arith.constant 5 : index
    %c16_456 = arith.constant 16 : index
    %752 = vector.load %arg25[%c5_455, %c16_456] : memref<10x96xf32, #tpu.memory_space<vmem>>, vector<5x8xf32>
    %c5_457 = arith.constant 5 : index
    %c48_458 = arith.constant 48 : index
    %753 = vector.load %arg25[%c5_457, %c48_458] : memref<10x96xf32, #tpu.memory_space<vmem>>, vector<5x8xf32>
    %c5_459 = arith.constant 5 : index
    %c80_460 = arith.constant 80 : index
    %754 = vector.load %arg25[%c5_459, %c80_460] : memref<10x96xf32, #tpu.memory_space<vmem>>, vector<5x8xf32>
    %cst_461 = arith.constant dense<0.000000e+00> : vector<5x5xf32>
    %755 = tpu.matmul %752, %753, %cst_461 {dimension_numbers = #tpu.dot_dimension_numbers<[1], [1], [0], [0], [0, 0, 1, 0], [], []>} : vector<5x8xf32>, vector<5x8xf32>, vector<5x5xf32> -> vector<5x5xf32>
    %cst_462 = arith.constant 0.353553385 : f32
    %756 = vector.broadcast %cst_462 : f32 to vector<5x5xf32>
    %757 = arith.mulf %755, %756 : vector<5x5xf32>
    %cst_463 = arith.constant dense<0xFF800000> : vector<5xf32>
    %758 = vector.multi_reduction <maximumf>, %757, %cst_463 [1] : vector<5x5xf32> to vector<5xf32>
    %759 = vector.shape_cast %758 : vector<5xf32> to vector<5x1xf32>
    %760 = vector.broadcast %759 : vector<5x1xf32> to vector<5x5xf32>
    %761 = arith.subf %757, %760 : vector<5x5xf32>
    %762 = math.exp %761 : vector<5x5xf32>
    %cst_464 = arith.constant dense<0.000000e+00> : vector<5xf32>
    %763 = vector.multi_reduction <add>, %762, %cst_464 [1] : vector<5x5xf32> to vector<5xf32>
    %764 = vector.shape_cast %763 : vector<5xf32> to vector<5x1xf32>
    %765 = tpu.reciprocal %764 {approx = true} : vector<5x1xf32> -> vector<5x1xf32>
    %766 = vector.broadcast %765 : vector<5x1xf32> to vector<5x5xf32>
    %767 = arith.mulf %762, %766 : vector<5x5xf32>
    %cst_465 = arith.constant dense<0.000000e+00> : vector<5x8xf32>
    %768 = tpu.matmul %767, %754, %cst_465 {dimension_numbers = #tpu.dot_dimension_numbers<[1], [0], [0], [1], [0, 0, 1, 1], [], []>} : vector<5x5xf32>, vector<5x8xf32>, vector<5x8xf32> -> vector<5x8xf32>
    %769 = vector.extract_strided_slice %626 {offsets = [16, 0], sizes = [8, 32], strides = [1, 1]} : vector<32x32xf32> to vector<8x32xf32>
    %cst_466 = arith.constant dense<0.000000e+00> : vector<5x32xf32>
    %770 = tpu.matmul %768, %769, %cst_466 {dimension_numbers = #tpu.dot_dimension_numbers<[1], [0], [0], [1], [0, 0, 1, 1], [], []>} : vector<5x8xf32>, vector<8x32xf32>, vector<5x32xf32> -> vector<5x32xf32>
    %771 = arith.addf %751, %770 : vector<5x32xf32>
    %c5_467 = arith.constant 5 : index
    %c24_468 = arith.constant 24 : index
    %772 = vector.load %arg25[%c5_467, %c24_468] : memref<10x96xf32, #tpu.memory_space<vmem>>, vector<5x8xf32>
    %c5_469 = arith.constant 5 : index
    %c56_470 = arith.constant 56 : index
    %773 = vector.load %arg25[%c5_469, %c56_470] : memref<10x96xf32, #tpu.memory_space<vmem>>, vector<5x8xf32>
    %c5_471 = arith.constant 5 : index
    %c88_472 = arith.constant 88 : index
    %774 = vector.load %arg25[%c5_471, %c88_472] : memref<10x96xf32, #tpu.memory_space<vmem>>, vector<5x8xf32>
    %cst_473 = arith.constant dense<0.000000e+00> : vector<5x5xf32>
    %775 = tpu.matmul %772, %773, %cst_473 {dimension_numbers = #tpu.dot_dimension_numbers<[1], [1], [0], [0], [0, 0, 1, 0], [], []>} : vector<5x8xf32>, vector<5x8xf32>, vector<5x5xf32> -> vector<5x5xf32>
    %cst_474 = arith.constant 0.353553385 : f32
    %776 = vector.broadcast %cst_474 : f32 to vector<5x5xf32>
    %777 = arith.mulf %775, %776 : vector<5x5xf32>
    %cst_475 = arith.constant dense<0xFF800000> : vector<5xf32>
    %778 = vector.multi_reduction <maximumf>, %777, %cst_475 [1] : vector<5x5xf32> to vector<5xf32>
    %779 = vector.shape_cast %778 : vector<5xf32> to vector<5x1xf32>
    %780 = vector.broadcast %779 : vector<5x1xf32> to vector<5x5xf32>
    %781 = arith.subf %777, %780 : vector<5x5xf32>
    %782 = math.exp %781 : vector<5x5xf32>
    %cst_476 = arith.constant dense<0.000000e+00> : vector<5xf32>
    %783 = vector.multi_reduction <add>, %782, %cst_476 [1] : vector<5x5xf32> to vector<5xf32>
    %784 = vector.shape_cast %783 : vector<5xf32> to vector<5x1xf32>
    %785 = tpu.reciprocal %784 {approx = true} : vector<5x1xf32> -> vector<5x1xf32>
    %786 = vector.broadcast %785 : vector<5x1xf32> to vector<5x5xf32>
    %787 = arith.mulf %782, %786 : vector<5x5xf32>
    %cst_477 = arith.constant dense<0.000000e+00> : vector<5x8xf32>
    %788 = tpu.matmul %787, %774, %cst_477 {dimension_numbers = #tpu.dot_dimension_numbers<[1], [0], [0], [1], [0, 0, 1, 1], [], []>} : vector<5x5xf32>, vector<5x8xf32>, vector<5x8xf32> -> vector<5x8xf32>
    %789 = vector.extract_strided_slice %626 {offsets = [24, 0], sizes = [8, 32], strides = [1, 1]} : vector<32x32xf32> to vector<8x32xf32>
    %cst_478 = arith.constant dense<0.000000e+00> : vector<5x32xf32>
    %790 = tpu.matmul %788, %789, %cst_478 {dimension_numbers = #tpu.dot_dimension_numbers<[1], [0], [0], [1], [0, 0, 1, 1], [], []>} : vector<5x8xf32>, vector<8x32xf32>, vector<5x32xf32> -> vector<5x32xf32>
    %791 = arith.addf %771, %790 : vector<5x32xf32>
    %c5_479 = arith.constant 5 : index
    %c0_480 = arith.constant 0 : index
    %792 = vector.load %arg24[%c5_479, %c0_480] : memref<10x32xf32, #tpu.memory_space<vmem>>, vector<5x32xf32>
    %793 = arith.addf %792, %791 : vector<5x32xf32>
    %c2_481 = arith.constant 2 : index
    %c0_482 = arith.constant 0 : index
    %c0_483 = arith.constant 0 : index
    %794 = vector.load %arg8[%c2_481, %c0_482, %c0_483] : memref<3x1x32xf32, #tpu.memory_space<vmem>>, vector<1x1x32xf32>
    %795 = vector.shape_cast %794 : vector<1x1x32xf32> to vector<1x32xf32>
    %796 = vector.broadcast %795 : vector<1x32xf32> to vector<5x32xf32>
    %797 = arith.addf %793, %796 : vector<5x32xf32>
    %c5_484 = arith.constant 5 : index
    %c0_485 = arith.constant 0 : index
    %798 = vector.load %arg24[%c5_484, %c0_485] : memref<10x32xf32, #tpu.memory_space<vmem>>, vector<5x32xf32>
    tpu.vector_store %arg24[%c5_484, %c0_485], %797 {strides = array<i32>} : memref<10x32xf32, #tpu.memory_space<vmem>>, vector<5x32xf32>,
    %c0_486 = arith.constant 0 : index
    %c0_487 = arith.constant 0 : index
    %799 = vector.load %arg24[%c0_486, %c0_487] : memref<10x32xf32, #tpu.memory_space<vmem>>, vector<10x32xf32>
    %c2_488 = arith.constant 2 : index
    %c0_489 = arith.constant 0 : index
    %c0_490 = arith.constant 0 : index
    %800 = vector.load %arg9[%c2_488, %c0_489, %c0_490] : memref<3x1x32xf32, #tpu.memory_space<vmem>>, vector<1x1x32xf32>
    %801 = vector.shape_cast %800 : vector<1x1x32xf32> to vector<1x32xf32>
    %c2_491 = arith.constant 2 : index
    %c0_492 = arith.constant 0 : index
    %c0_493 = arith.constant 0 : index
    %802 = vector.load %arg10[%c2_491, %c0_492, %c0_493] : memref<3x1x32xf32, #tpu.memory_space<vmem>>, vector<1x1x32xf32>
    %803 = vector.shape_cast %802 : vector<1x1x32xf32> to vector<1x32xf32>
    %cst_494 = arith.constant dense<0.000000e+00> : vector<10xf32>
    %804 = vector.multi_reduction <add>, %799, %cst_494 [1] : vector<10x32xf32> to vector<10xf32>
    %805 = vector.shape_cast %804 : vector<10xf32> to vector<10x1xf32>
    %cst_495 = arith.constant 3.200000e+01 : f32
    %806 = vector.broadcast %cst_495 : f32 to vector<10x1xf32>
    %807 = arith.divf %805, %806 : vector<10x1xf32>
    %808 = vector.broadcast %807 : vector<10x1xf32> to vector<10x32xf32>
    %809 = arith.subf %799, %808 : vector<10x32xf32>
    %810 = arith.mulf %809, %809 : vector<10x32xf32>
    %cst_496 = arith.constant dense<0.000000e+00> : vector<10xf32>
    %811 = vector.multi_reduction <add>, %810, %cst_496 [1] : vector<10x32xf32> to vector<10xf32>
    %812 = vector.shape_cast %811 : vector<10xf32> to vector<10x1xf32>
    %cst_497 = arith.constant 3.200000e+01 : f32
    %813 = vector.broadcast %cst_497 : f32 to vector<10x1xf32>
    %814 = arith.divf %812, %813 : vector<10x1xf32>
    %815 = vector.broadcast %807 : vector<10x1xf32> to vector<10x32xf32>
    %816 = arith.subf %799, %815 : vector<10x32xf32>
    %cst_498 = arith.constant 9.99999974E-6 : f32
    %817 = vector.broadcast %cst_498 : f32 to vector<10x1xf32>
    %818 = arith.addf %814, %817 : vector<10x1xf32>
    %819 = math.rsqrt %818 : vector<10x1xf32>
    %820 = vector.broadcast %819 : vector<10x1xf32> to vector<10x32xf32>
    %821 = arith.mulf %816, %820 : vector<10x32xf32>
    %822 = vector.broadcast %801 : vector<1x32xf32> to vector<10x32xf32>
    %823 = arith.mulf %821, %822 : vector<10x32xf32>
    %824 = vector.broadcast %803 : vector<1x32xf32> to vector<10x32xf32>
    %825 = arith.addf %823, %824 : vector<10x32xf32>
    %c2_499 = arith.constant 2 : index
    %c0_500 = arith.constant 0 : index
    %c0_501 = arith.constant 0 : index
    %826 = vector.load %arg11[%c2_499, %c0_500, %c0_501] : memref<3x32x128xf32, #tpu.memory_space<vmem>>, vector<1x32x128xf32>
    %827 = vector.shape_cast %826 : vector<1x32x128xf32> to vector<32x128xf32>
    %cst_502 = arith.constant dense<0.000000e+00> : vector<10x128xf32>
    %828 = tpu.matmul %825, %827, %cst_502 {dimension_numbers = #tpu.dot_dimension_numbers<[1], [0], [0], [1], [0, 0, 1, 1], [], []>} : vector<10x32xf32>, vector<32x128xf32>, vector<10x128xf32> -> vector<10x128xf32>
    %c2_503 = arith.constant 2 : index
    %c0_504 = arith.constant 0 : index
    %c0_505 = arith.constant 0 : index
    %829 = vector.load %arg12[%c2_503, %c0_504, %c0_505] : memref<3x1x128xf32, #tpu.memory_space<vmem>>, vector<1x1x128xf32>
    %830 = vector.shape_cast %829 : vector<1x1x128xf32> to vector<1x128xf32>
    %831 = vector.broadcast %830 : vector<1x128xf32> to vector<10x128xf32>
    %832 = arith.addf %828, %831 : vector<10x128xf32>
    %cst_506 = arith.constant 5.000000e-01 : f32
    %833 = vector.broadcast %cst_506 : f32 to vector<10x128xf32>
    %834 = arith.mulf %833, %832 : vector<10x128xf32>
    %cst_507 = arith.constant 0.707106769 : f32
    %835 = vector.broadcast %cst_507 : f32 to vector<10x128xf32>
    %836 = arith.mulf %832, %835 : vector<10x128xf32>
    %837 = math.absf %836 : vector<10x128xf32>
    %cst_508 = arith.constant 0.327591091 : f32
    %838 = vector.broadcast %cst_508 : f32 to vector<10x128xf32>
    %839 = arith.mulf %838, %837 : vector<10x128xf32>
    %cst_509 = arith.constant 1.000000e+00 : f32
    %840 = vector.broadcast %cst_509 : f32 to vector<10x128xf32>
    %841 = arith.addf %840, %839 : vector<10x128xf32>
    %cst_510 = arith.constant 1.000000e+00 : f32
    %842 = vector.broadcast %cst_510 : f32 to vector<10x128xf32>
    %843 = arith.divf %842, %841 : vector<10x128xf32>
    %cst_511 = arith.constant 1.06140542 : f32
    %844 = vector.broadcast %cst_511 : f32 to vector<10x128xf32>
    %845 = arith.mulf %844, %843 : vector<10x128xf32>
    %cst_512 = arith.constant -1.45315206 : f32
    %846 = vector.broadcast %cst_512 : f32 to vector<10x128xf32>
    %847 = arith.addf %845, %846 : vector<10x128xf32>
    %848 = arith.mulf %847, %843 : vector<10x128xf32>
    %cst_513 = arith.constant 1.42141378 : f32
    %849 = vector.broadcast %cst_513 : f32 to vector<10x128xf32>
    %850 = arith.addf %848, %849 : vector<10x128xf32>
    %851 = arith.mulf %850, %843 : vector<10x128xf32>
    %cst_514 = arith.constant -0.284496725 : f32
    %852 = vector.broadcast %cst_514 : f32 to vector<10x128xf32>
    %853 = arith.addf %851, %852 : vector<10x128xf32>
    %854 = arith.mulf %853, %843 : vector<10x128xf32>
    %cst_515 = arith.constant 0.254829586 : f32
    %855 = vector.broadcast %cst_515 : f32 to vector<10x128xf32>
    %856 = arith.addf %854, %855 : vector<10x128xf32>
    %857 = arith.mulf %856, %843 : vector<10x128xf32>
    %cst_516 = arith.constant 0.000000e+00 : f32
    %858 = vector.broadcast %cst_516 : f32 to vector<10x128xf32>
    %859 = arith.subf %858, %837 : vector<10x128xf32>
    %860 = arith.mulf %859, %837 : vector<10x128xf32>
    %861 = math.exp %860 : vector<10x128xf32>
    %862 = arith.mulf %857, %861 : vector<10x128xf32>
    %cst_517 = arith.constant 1.000000e+00 : f32
    %863 = vector.broadcast %cst_517 : f32 to vector<10x128xf32>
    %864 = arith.subf %863, %862 : vector<10x128xf32>
    %cst_518 = arith.constant 0.000000e+00 : f32
    %865 = vector.broadcast %cst_518 : f32 to vector<10x128xf32>
    %866 = arith.cmpf oge, %836, %865 : vector<10x128xf32>
    %cst_519 = arith.constant 0.000000e+00 : f32
    %867 = vector.broadcast %cst_519 : f32 to vector<10x128xf32>
    %868 = arith.subf %867, %864 : vector<10x128xf32>
    %869 = arith.select %866, %864, %868 : vector<10x128xi1>, vector<10x128xf32>
    %cst_520 = arith.constant 1.000000e+00 : f32
    %870 = vector.broadcast %cst_520 : f32 to vector<10x128xf32>
    %871 = arith.addf %870, %869 : vector<10x128xf32>
    %872 = arith.mulf %834, %871 : vector<10x128xf32>
    %c2_521 = arith.constant 2 : index
    %c0_522 = arith.constant 0 : index
    %c0_523 = arith.constant 0 : index
    %873 = vector.load %arg13[%c2_521, %c0_522, %c0_523] : memref<3x128x32xf32, #tpu.memory_space<vmem>>, vector<1x128x32xf32>
    %874 = vector.shape_cast %873 : vector<1x128x32xf32> to vector<128x32xf32>
    %cst_524 = arith.constant dense<0.000000e+00> : vector<10x32xf32>
    %875 = tpu.matmul %872, %874, %cst_524 {dimension_numbers = #tpu.dot_dimension_numbers<[1], [0], [0], [1], [0, 0, 1, 1], [], []>} : vector<10x128xf32>, vector<128x32xf32>, vector<10x32xf32> -> vector<10x32xf32>
    %c2_525 = arith.constant 2 : index
    %c0_526 = arith.constant 0 : index
    %c0_527 = arith.constant 0 : index
    %876 = vector.load %arg14[%c2_525, %c0_526, %c0_527] : memref<3x1x32xf32, #tpu.memory_space<vmem>>, vector<1x1x32xf32>
    %877 = vector.shape_cast %876 : vector<1x1x32xf32> to vector<1x32xf32>
    %878 = vector.broadcast %877 : vector<1x32xf32> to vector<10x32xf32>
    %879 = arith.addf %875, %878 : vector<10x32xf32>
    %880 = arith.addf %799, %879 : vector<10x32xf32>
    %c0_528 = arith.constant 0 : index
    %c0_529 = arith.constant 0 : index
    %881 = vector.load %arg24[%c0_528, %c0_529] : memref<10x32xf32, #tpu.memory_space<vmem>>, vector<10x32xf32>
    tpu.vector_store %arg24[%c0_528, %c0_529], %880 {strides = array<i32>} : memref<10x32xf32, #tpu.memory_space<vmem>>, vector<10x32xf32>,
    %c0_530 = arith.constant 0 : index
    %c0_531 = arith.constant 0 : index
    %882 = vector.load %arg24[%c0_530, %c0_531] : memref<10x32xf32, #tpu.memory_space<vmem>>, vector<10x32xf32>
    %c0_532 = arith.constant 0 : index
    %c0_533 = arith.constant 0 : index
    %883 = vector.load %arg15[%c0_532, %c0_533] : memref<1x32xf32, #tpu.memory_space<vmem>>, vector<1x32xf32>
    %c0_534 = arith.constant 0 : index
    %c0_535 = arith.constant 0 : index
    %884 = vector.load %arg16[%c0_534, %c0_535] : memref<1x32xf32, #tpu.memory_space<vmem>>, vector<1x32xf32>
    %cst_536 = arith.constant dense<0.000000e+00> : vector<10xf32>
    %885 = vector.multi_reduction <add>, %882, %cst_536 [1] : vector<10x32xf32> to vector<10xf32>
    %886 = vector.shape_cast %885 : vector<10xf32> to vector<10x1xf32>
    %cst_537 = arith.constant 3.200000e+01 : f32
    %887 = vector.broadcast %cst_537 : f32 to vector<10x1xf32>
    %888 = arith.divf %886, %887 : vector<10x1xf32>
    %889 = vector.broadcast %888 : vector<10x1xf32> to vector<10x32xf32>
    %890 = arith.subf %882, %889 : vector<10x32xf32>
    %891 = arith.mulf %890, %890 : vector<10x32xf32>
    %cst_538 = arith.constant dense<0.000000e+00> : vector<10xf32>
    %892 = vector.multi_reduction <add>, %891, %cst_538 [1] : vector<10x32xf32> to vector<10xf32>
    %893 = vector.shape_cast %892 : vector<10xf32> to vector<10x1xf32>
    %cst_539 = arith.constant 3.200000e+01 : f32
    %894 = vector.broadcast %cst_539 : f32 to vector<10x1xf32>
    %895 = arith.divf %893, %894 : vector<10x1xf32>
    %896 = vector.broadcast %888 : vector<10x1xf32> to vector<10x32xf32>
    %897 = arith.subf %882, %896 : vector<10x32xf32>
    %cst_540 = arith.constant 9.99999974E-6 : f32
    %898 = vector.broadcast %cst_540 : f32 to vector<10x1xf32>
    %899 = arith.addf %895, %898 : vector<10x1xf32>
    %900 = math.rsqrt %899 : vector<10x1xf32>
    %901 = vector.broadcast %900 : vector<10x1xf32> to vector<10x32xf32>
    %902 = arith.mulf %897, %901 : vector<10x32xf32>
    %903 = vector.broadcast %883 : vector<1x32xf32> to vector<10x32xf32>
    %904 = arith.mulf %902, %903 : vector<10x32xf32>
    %905 = vector.broadcast %884 : vector<1x32xf32> to vector<10x32xf32>
    %906 = arith.addf %904, %905 : vector<10x32xf32>
    %c0_541 = arith.constant 0 : index
    %c0_542 = arith.constant 0 : index
    %907 = vector.load %arg24[%c0_541, %c0_542] : memref<10x32xf32, #tpu.memory_space<vmem>>, vector<10x32xf32>
    tpu.vector_store %arg24[%c0_541, %c0_542], %906 {strides = array<i32>} : memref<10x32xf32, #tpu.memory_space<vmem>>, vector<10x32xf32>,
    %c0_543 = arith.constant 0 : index
    %c0_544 = arith.constant 0 : index
    %908 = vector.load %arg17[%c0_543, %c0_544] : memref<32x8xf32, #tpu.memory_space<vmem>>, vector<32x8xf32>
    %c0_545 = arith.constant 0 : index
    %c0_546 = arith.constant 0 : index
    %909 = vector.load %arg18[%c0_545, %c0_546] : memref<1x8xf32, #tpu.memory_space<vmem>>, vector<1x8xf32>
    %c0_547 = arith.constant 0 : index
    %c0_548 = arith.constant 0 : index
    %910 = vector.load %arg19[%c0_547, %c0_548] : memref<8x32xf32, #tpu.memory_space<vmem>>, vector<8x32xf32>
    %c0_549 = arith.constant 0 : index
    %c0_550 = arith.constant 0 : index
    %911 = vector.load %arg20[%c0_549, %c0_550] : memref<1x32xf32, #tpu.memory_space<vmem>>, vector<1x32xf32>
    %c0_551 = arith.constant 0 : index
    %c0_552 = arith.constant 0 : index
    %912 = vector.load %arg24[%c0_551, %c0_552] : memref<10x32xf32, #tpu.memory_space<vmem>>, vector<1x32xf32>
    %c0_553 = arith.constant 0 : index
    %c0_554 = arith.constant 0 : index
    %913 = vector.load %arg24[%c0_553, %c0_554] : memref<10x32xf32, #tpu.memory_space<vmem>>, vector<5x32xf32>
    %cst_555 = arith.constant dense<0.000000e+00> : vector<32xf32>
    %914 = vector.multi_reduction <add>, %913, %cst_555 [0] : vector<5x32xf32> to vector<32xf32>
    %915 = vector.shape_cast %914 : vector<32xf32> to vector<1x32xf32>
    %cst_556 = arith.constant 5.000000e+00 : f32
    %916 = vector.broadcast %cst_556 : f32 to vector<1x32xf32>
    %917 = arith.divf %915, %916 : vector<1x32xf32>
    %c1_557 = arith.constant 1 : index
    %c0_558 = arith.constant 0 : index
    %918 = vector.load %arg24[%c1_557, %c0_558] : memref<10x32xf32, #tpu.memory_space<vmem>>, vector<4x32xf32>
    %cst_559 = arith.constant dense<0.000000e+00> : vector<4x8xf32>
    %919 = tpu.matmul %918, %908, %cst_559 {dimension_numbers = #tpu.dot_dimension_numbers<[1], [0], [0], [1], [0, 0, 1, 1], [], []>} : vector<4x32xf32>, vector<32x8xf32>, vector<4x8xf32> -> vector<4x8xf32>
    %920 = vector.broadcast %909 : vector<1x8xf32> to vector<4x8xf32>
    %921 = arith.addf %919, %920 : vector<4x8xf32>
    %cst_560 = arith.constant 5.000000e-01 : f32
    %922 = vector.broadcast %cst_560 : f32 to vector<4x8xf32>
    %923 = arith.mulf %922, %921 : vector<4x8xf32>
    %cst_561 = arith.constant 0.707106769 : f32
    %924 = vector.broadcast %cst_561 : f32 to vector<4x8xf32>
    %925 = arith.mulf %921, %924 : vector<4x8xf32>
    %926 = math.absf %925 : vector<4x8xf32>
    %cst_562 = arith.constant 0.327591091 : f32
    %927 = vector.broadcast %cst_562 : f32 to vector<4x8xf32>
    %928 = arith.mulf %927, %926 : vector<4x8xf32>
    %cst_563 = arith.constant 1.000000e+00 : f32
    %929 = vector.broadcast %cst_563 : f32 to vector<4x8xf32>
    %930 = arith.addf %929, %928 : vector<4x8xf32>
    %cst_564 = arith.constant 1.000000e+00 : f32
    %931 = vector.broadcast %cst_564 : f32 to vector<4x8xf32>
    %932 = arith.divf %931, %930 : vector<4x8xf32>
    %cst_565 = arith.constant 1.06140542 : f32
    %933 = vector.broadcast %cst_565 : f32 to vector<4x8xf32>
    %934 = arith.mulf %933, %932 : vector<4x8xf32>
    %cst_566 = arith.constant -1.45315206 : f32
    %935 = vector.broadcast %cst_566 : f32 to vector<4x8xf32>
    %936 = arith.addf %934, %935 : vector<4x8xf32>
    %937 = arith.mulf %936, %932 : vector<4x8xf32>
    %cst_567 = arith.constant 1.42141378 : f32
    %938 = vector.broadcast %cst_567 : f32 to vector<4x8xf32>
    %939 = arith.addf %937, %938 : vector<4x8xf32>
    %940 = arith.mulf %939, %932 : vector<4x8xf32>
    %cst_568 = arith.constant -0.284496725 : f32
    %941 = vector.broadcast %cst_568 : f32 to vector<4x8xf32>
    %942 = arith.addf %940, %941 : vector<4x8xf32>
    %943 = arith.mulf %942, %932 : vector<4x8xf32>
    %cst_569 = arith.constant 0.254829586 : f32
    %944 = vector.broadcast %cst_569 : f32 to vector<4x8xf32>
    %945 = arith.addf %943, %944 : vector<4x8xf32>
    %946 = arith.mulf %945, %932 : vector<4x8xf32>
    %cst_570 = arith.constant 0.000000e+00 : f32
    %947 = vector.broadcast %cst_570 : f32 to vector<4x8xf32>
    %948 = arith.subf %947, %926 : vector<4x8xf32>
    %949 = arith.mulf %948, %926 : vector<4x8xf32>
    %950 = math.exp %949 : vector<4x8xf32>
    %951 = arith.mulf %946, %950 : vector<4x8xf32>
    %cst_571 = arith.constant 1.000000e+00 : f32
    %952 = vector.broadcast %cst_571 : f32 to vector<4x8xf32>
    %953 = arith.subf %952, %951 : vector<4x8xf32>
    %cst_572 = arith.constant 0.000000e+00 : f32
    %954 = vector.broadcast %cst_572 : f32 to vector<4x8xf32>
    %955 = arith.cmpf oge, %925, %954 : vector<4x8xf32>
    %cst_573 = arith.constant 0.000000e+00 : f32
    %956 = vector.broadcast %cst_573 : f32 to vector<4x8xf32>
    %957 = arith.subf %956, %953 : vector<4x8xf32>
    %958 = arith.select %955, %953, %957 : vector<4x8xi1>, vector<4x8xf32>
    %cst_574 = arith.constant 1.000000e+00 : f32
    %959 = vector.broadcast %cst_574 : f32 to vector<4x8xf32>
    %960 = arith.addf %959, %958 : vector<4x8xf32>
    %961 = arith.mulf %923, %960 : vector<4x8xf32>
    %cst_575 = arith.constant dense<0.000000e+00> : vector<4x32xf32>
    %962 = tpu.matmul %961, %910, %cst_575 {dimension_numbers = #tpu.dot_dimension_numbers<[1], [0], [0], [1], [0, 0, 1, 1], [], []>} : vector<4x8xf32>, vector<8x32xf32>, vector<4x32xf32> -> vector<4x32xf32>
    %963 = vector.broadcast %911 : vector<1x32xf32> to vector<4x32xf32>
    %964 = arith.addf %962, %963 : vector<4x32xf32>
    %cst_576 = arith.constant 5.000000e-01 : f32
    %965 = vector.broadcast %cst_576 : f32 to vector<4x32xf32>
    %966 = arith.mulf %965, %964 : vector<4x32xf32>
    %cst_577 = arith.constant 0.707106769 : f32
    %967 = vector.broadcast %cst_577 : f32 to vector<4x32xf32>
    %968 = arith.mulf %964, %967 : vector<4x32xf32>
    %969 = math.absf %968 : vector<4x32xf32>
    %cst_578 = arith.constant 0.327591091 : f32
    %970 = vector.broadcast %cst_578 : f32 to vector<4x32xf32>
    %971 = arith.mulf %970, %969 : vector<4x32xf32>
    %cst_579 = arith.constant 1.000000e+00 : f32
    %972 = vector.broadcast %cst_579 : f32 to vector<4x32xf32>
    %973 = arith.addf %972, %971 : vector<4x32xf32>
    %cst_580 = arith.constant 1.000000e+00 : f32
    %974 = vector.broadcast %cst_580 : f32 to vector<4x32xf32>
    %975 = arith.divf %974, %973 : vector<4x32xf32>
    %cst_581 = arith.constant 1.06140542 : f32
    %976 = vector.broadcast %cst_581 : f32 to vector<4x32xf32>
    %977 = arith.mulf %976, %975 : vector<4x32xf32>
    %cst_582 = arith.constant -1.45315206 : f32
    %978 = vector.broadcast %cst_582 : f32 to vector<4x32xf32>
    %979 = arith.addf %977, %978 : vector<4x32xf32>
    %980 = arith.mulf %979, %975 : vector<4x32xf32>
    %cst_583 = arith.constant 1.42141378 : f32
    %981 = vector.broadcast %cst_583 : f32 to vector<4x32xf32>
    %982 = arith.addf %980, %981 : vector<4x32xf32>
    %983 = arith.mulf %982, %975 : vector<4x32xf32>
    %cst_584 = arith.constant -0.284496725 : f32
    %984 = vector.broadcast %cst_584 : f32 to vector<4x32xf32>
    %985 = arith.addf %983, %984 : vector<4x32xf32>
    %986 = arith.mulf %985, %975 : vector<4x32xf32>
    %cst_585 = arith.constant 0.254829586 : f32
    %987 = vector.broadcast %cst_585 : f32 to vector<4x32xf32>
    %988 = arith.addf %986, %987 : vector<4x32xf32>
    %989 = arith.mulf %988, %975 : vector<4x32xf32>
    %cst_586 = arith.constant 0.000000e+00 : f32
    %990 = vector.broadcast %cst_586 : f32 to vector<4x32xf32>
    %991 = arith.subf %990, %969 : vector<4x32xf32>
    %992 = arith.mulf %991, %969 : vector<4x32xf32>
    %993 = math.exp %992 : vector<4x32xf32>
    %994 = arith.mulf %989, %993 : vector<4x32xf32>
    %cst_587 = arith.constant 1.000000e+00 : f32
    %995 = vector.broadcast %cst_587 : f32 to vector<4x32xf32>
    %996 = arith.subf %995, %994 : vector<4x32xf32>
    %cst_588 = arith.constant 0.000000e+00 : f32
    %997 = vector.broadcast %cst_588 : f32 to vector<4x32xf32>
    %998 = arith.cmpf oge, %968, %997 : vector<4x32xf32>
    %cst_589 = arith.constant 0.000000e+00 : f32
    %999 = vector.broadcast %cst_589 : f32 to vector<4x32xf32>
    %1000 = arith.subf %999, %996 : vector<4x32xf32>
    %1001 = arith.select %998, %996, %1000 : vector<4x32xi1>, vector<4x32xf32>
    %cst_590 = arith.constant 1.000000e+00 : f32
    %1002 = vector.broadcast %cst_590 : f32 to vector<4x32xf32>
    %1003 = arith.addf %1002, %1001 : vector<4x32xf32>
    %1004 = arith.mulf %966, %1003 : vector<4x32xf32>
    %cst_591 = arith.constant dense<0xFF800000> : vector<32xf32>
    %1005 = vector.multi_reduction <maximumf>, %1004, %cst_591 [0] : vector<4x32xf32> to vector<32xf32>
    %1006 = vector.shape_cast %1005 : vector<32xf32> to vector<1x32xf32>
    %c0_592 = arith.constant 0 : index
    %c0_593 = arith.constant 0 : index
    %1007 = vector.load %arg21[%c0_592, %c0_593] : memref<2x32xf32, #tpu.memory_space<vmem>>, vector<1x32xf32>
    tpu.vector_store %arg21[%c0_592, %c0_593], %912 {strides = array<i32>} : memref<2x32xf32, #tpu.memory_space<vmem>>, vector<1x32xf32>,
    %c0_594 = arith.constant 0 : index
    %c0_595 = arith.constant 0 : index
    %1008 = vector.load %arg22[%c0_594, %c0_595] : memref<2x32xf32, #tpu.memory_space<vmem>>, vector<1x32xf32>
    tpu.vector_store %arg22[%c0_594, %c0_595], %1006 {strides = array<i32>} : memref<2x32xf32, #tpu.memory_space<vmem>>, vector<1x32xf32>,
    %1009 = arith.mulf %912, %912 : vector<1x32xf32>
    %cst_596 = arith.constant dense<0.000000e+00> : vector<1xf32>
    %1010 = vector.multi_reduction <add>, %1009, %cst_596 [1] : vector<1x32xf32> to vector<1xf32>
    %1011 = vector.shape_cast %1010 : vector<1xf32> to vector<1x1xf32>
    %1012 = math.sqrt %1011 : vector<1x1xf32>
    %cst_597 = arith.constant 9.99999996E-13 : f32
    %1013 = vector.broadcast %cst_597 : f32 to vector<1x1xf32>
    %1014 = arith.maximumf %1012, %1013 : vector<1x1xf32>
    %1015 = tpu.reciprocal %1014 {approx = true} : vector<1x1xf32> -> vector<1x1xf32>
    %1016 = vector.broadcast %1015 : vector<1x1xf32> to vector<1x32xf32>
    %1017 = arith.mulf %912, %1016 : vector<1x32xf32>
    %c0_598 = arith.constant 0 : index
    %c0_599 = arith.constant 0 : index
    %1018 = vector.load %arg23[%c0_598, %c0_599] : memref<2x64xf32, #tpu.memory_space<vmem>>, vector<1x32xf32>
    tpu.vector_store %arg23[%c0_598, %c0_599], %1017 {strides = array<i32>} : memref<2x64xf32, #tpu.memory_space<vmem>>, vector<1x32xf32>,
    %1019 = arith.mulf %917, %917 : vector<1x32xf32>
    %cst_600 = arith.constant dense<0.000000e+00> : vector<1xf32>
    %1020 = vector.multi_reduction <add>, %1019, %cst_600 [1] : vector<1x32xf32> to vector<1xf32>
    %1021 = vector.shape_cast %1020 : vector<1xf32> to vector<1x1xf32>
    %1022 = math.sqrt %1021 : vector<1x1xf32>
    %cst_601 = arith.constant 9.99999996E-13 : f32
    %1023 = vector.broadcast %cst_601 : f32 to vector<1x1xf32>
    %1024 = arith.maximumf %1022, %1023 : vector<1x1xf32>
    %1025 = tpu.reciprocal %1024 {approx = true} : vector<1x1xf32> -> vector<1x1xf32>
    %1026 = vector.broadcast %1025 : vector<1x1xf32> to vector<1x32xf32>
    %1027 = arith.mulf %917, %1026 : vector<1x32xf32>
    %c0_602 = arith.constant 0 : index
    %c32_603 = arith.constant 32 : index
    %1028 = vector.load %arg23[%c0_602, %c32_603] : memref<2x64xf32, #tpu.memory_space<vmem>>, vector<1x32xf32>
    tpu.vector_store %arg23[%c0_602, %c32_603], %1027 {strides = array<i32>} : memref<2x64xf32, #tpu.memory_space<vmem>>, vector<1x32xf32>,
    %c5_604 = arith.constant 5 : index
    %c0_605 = arith.constant 0 : index
    %1029 = vector.load %arg24[%c5_604, %c0_605] : memref<10x32xf32, #tpu.memory_space<vmem>>, vector<1x32xf32>
    %c5_606 = arith.constant 5 : index
    %c0_607 = arith.constant 0 : index
    %1030 = vector.load %arg24[%c5_606, %c0_607] : memref<10x32xf32, #tpu.memory_space<vmem>>, vector<5x32xf32>
    %cst_608 = arith.constant dense<0.000000e+00> : vector<32xf32>
    %1031 = vector.multi_reduction <add>, %1030, %cst_608 [0] : vector<5x32xf32> to vector<32xf32>
    %1032 = vector.shape_cast %1031 : vector<32xf32> to vector<1x32xf32>
    %cst_609 = arith.constant 5.000000e+00 : f32
    %1033 = vector.broadcast %cst_609 : f32 to vector<1x32xf32>
    %1034 = arith.divf %1032, %1033 : vector<1x32xf32>
    %c6 = arith.constant 6 : index
    %c0_610 = arith.constant 0 : index
    %1035 = vector.load %arg24[%c6, %c0_610] : memref<10x32xf32, #tpu.memory_space<vmem>>, vector<4x32xf32>
    %cst_611 = arith.constant dense<0.000000e+00> : vector<4x8xf32>
    %1036 = tpu.matmul %1035, %908, %cst_611 {dimension_numbers = #tpu.dot_dimension_numbers<[1], [0], [0], [1], [0, 0, 1, 1], [], []>} : vector<4x32xf32>, vector<32x8xf32>, vector<4x8xf32> -> vector<4x8xf32>
    %1037 = vector.broadcast %909 : vector<1x8xf32> to vector<4x8xf32>
    %1038 = arith.addf %1036, %1037 : vector<4x8xf32>
    %cst_612 = arith.constant 5.000000e-01 : f32
    %1039 = vector.broadcast %cst_612 : f32 to vector<4x8xf32>
    %1040 = arith.mulf %1039, %1038 : vector<4x8xf32>
    %cst_613 = arith.constant 0.707106769 : f32
    %1041 = vector.broadcast %cst_613 : f32 to vector<4x8xf32>
    %1042 = arith.mulf %1038, %1041 : vector<4x8xf32>
    %1043 = math.absf %1042 : vector<4x8xf32>
    %cst_614 = arith.constant 0.327591091 : f32
    %1044 = vector.broadcast %cst_614 : f32 to vector<4x8xf32>
    %1045 = arith.mulf %1044, %1043 : vector<4x8xf32>
    %cst_615 = arith.constant 1.000000e+00 : f32
    %1046 = vector.broadcast %cst_615 : f32 to vector<4x8xf32>
    %1047 = arith.addf %1046, %1045 : vector<4x8xf32>
    %cst_616 = arith.constant 1.000000e+00 : f32
    %1048 = vector.broadcast %cst_616 : f32 to vector<4x8xf32>
    %1049 = arith.divf %1048, %1047 : vector<4x8xf32>
    %cst_617 = arith.constant 1.06140542 : f32
    %1050 = vector.broadcast %cst_617 : f32 to vector<4x8xf32>
    %1051 = arith.mulf %1050, %1049 : vector<4x8xf32>
    %cst_618 = arith.constant -1.45315206 : f32
    %1052 = vector.broadcast %cst_618 : f32 to vector<4x8xf32>
    %1053 = arith.addf %1051, %1052 : vector<4x8xf32>
    %1054 = arith.mulf %1053, %1049 : vector<4x8xf32>
    %cst_619 = arith.constant 1.42141378 : f32
    %1055 = vector.broadcast %cst_619 : f32 to vector<4x8xf32>
    %1056 = arith.addf %1054, %1055 : vector<4x8xf32>
    %1057 = arith.mulf %1056, %1049 : vector<4x8xf32>
    %cst_620 = arith.constant -0.284496725 : f32
    %1058 = vector.broadcast %cst_620 : f32 to vector<4x8xf32>
    %1059 = arith.addf %1057, %1058 : vector<4x8xf32>
    %1060 = arith.mulf %1059, %1049 : vector<4x8xf32>
    %cst_621 = arith.constant 0.254829586 : f32
    %1061 = vector.broadcast %cst_621 : f32 to vector<4x8xf32>
    %1062 = arith.addf %1060, %1061 : vector<4x8xf32>
    %1063 = arith.mulf %1062, %1049 : vector<4x8xf32>
    %cst_622 = arith.constant 0.000000e+00 : f32
    %1064 = vector.broadcast %cst_622 : f32 to vector<4x8xf32>
    %1065 = arith.subf %1064, %1043 : vector<4x8xf32>
    %1066 = arith.mulf %1065, %1043 : vector<4x8xf32>
    %1067 = math.exp %1066 : vector<4x8xf32>
    %1068 = arith.mulf %1063, %1067 : vector<4x8xf32>
    %cst_623 = arith.constant 1.000000e+00 : f32
    %1069 = vector.broadcast %cst_623 : f32 to vector<4x8xf32>
    %1070 = arith.subf %1069, %1068 : vector<4x8xf32>
    %cst_624 = arith.constant 0.000000e+00 : f32
    %1071 = vector.broadcast %cst_624 : f32 to vector<4x8xf32>
    %1072 = arith.cmpf oge, %1042, %1071 : vector<4x8xf32>
    %cst_625 = arith.constant 0.000000e+00 : f32
    %1073 = vector.broadcast %cst_625 : f32 to vector<4x8xf32>
    %1074 = arith.subf %1073, %1070 : vector<4x8xf32>
    %1075 = arith.select %1072, %1070, %1074 : vector<4x8xi1>, vector<4x8xf32>
    %cst_626 = arith.constant 1.000000e+00 : f32
    %1076 = vector.broadcast %cst_626 : f32 to vector<4x8xf32>
    %1077 = arith.addf %1076, %1075 : vector<4x8xf32>
    %1078 = arith.mulf %1040, %1077 : vector<4x8xf32>
    %cst_627 = arith.constant dense<0.000000e+00> : vector<4x32xf32>
    %1079 = tpu.matmul %1078, %910, %cst_627 {dimension_numbers = #tpu.dot_dimension_numbers<[1], [0], [0], [1], [0, 0, 1, 1], [], []>} : vector<4x8xf32>, vector<8x32xf32>, vector<4x32xf32> -> vector<4x32xf32>
    %1080 = vector.broadcast %911 : vector<1x32xf32> to vector<4x32xf32>
    %1081 = arith.addf %1079, %1080 : vector<4x32xf32>
    %cst_628 = arith.constant 5.000000e-01 : f32
    %1082 = vector.broadcast %cst_628 : f32 to vector<4x32xf32>
    %1083 = arith.mulf %1082, %1081 : vector<4x32xf32>
    %cst_629 = arith.constant 0.707106769 : f32
    %1084 = vector.broadcast %cst_629 : f32 to vector<4x32xf32>
    %1085 = arith.mulf %1081, %1084 : vector<4x32xf32>
    %1086 = math.absf %1085 : vector<4x32xf32>
    %cst_630 = arith.constant 0.327591091 : f32
    %1087 = vector.broadcast %cst_630 : f32 to vector<4x32xf32>
    %1088 = arith.mulf %1087, %1086 : vector<4x32xf32>
    %cst_631 = arith.constant 1.000000e+00 : f32
    %1089 = vector.broadcast %cst_631 : f32 to vector<4x32xf32>
    %1090 = arith.addf %1089, %1088 : vector<4x32xf32>
    %cst_632 = arith.constant 1.000000e+00 : f32
    %1091 = vector.broadcast %cst_632 : f32 to vector<4x32xf32>
    %1092 = arith.divf %1091, %1090 : vector<4x32xf32>
    %cst_633 = arith.constant 1.06140542 : f32
    %1093 = vector.broadcast %cst_633 : f32 to vector<4x32xf32>
    %1094 = arith.mulf %1093, %1092 : vector<4x32xf32>
    %cst_634 = arith.constant -1.45315206 : f32
    %1095 = vector.broadcast %cst_634 : f32 to vector<4x32xf32>
    %1096 = arith.addf %1094, %1095 : vector<4x32xf32>
    %1097 = arith.mulf %1096, %1092 : vector<4x32xf32>
    %cst_635 = arith.constant 1.42141378 : f32
    %1098 = vector.broadcast %cst_635 : f32 to vector<4x32xf32>
    %1099 = arith.addf %1097, %1098 : vector<4x32xf32>
    %1100 = arith.mulf %1099, %1092 : vector<4x32xf32>
    %cst_636 = arith.constant -0.284496725 : f32
    %1101 = vector.broadcast %cst_636 : f32 to vector<4x32xf32>
    %1102 = arith.addf %1100, %1101 : vector<4x32xf32>
    %1103 = arith.mulf %1102, %1092 : vector<4x32xf32>
    %cst_637 = arith.constant 0.254829586 : f32
    %1104 = vector.broadcast %cst_637 : f32 to vector<4x32xf32>
    %1105 = arith.addf %1103, %1104 : vector<4x32xf32>
    %1106 = arith.mulf %1105, %1092 : vector<4x32xf32>
    %cst_638 = arith.constant 0.000000e+00 : f32
    %1107 = vector.broadcast %cst_638 : f32 to vector<4x32xf32>
    %1108 = arith.subf %1107, %1086 : vector<4x32xf32>
    %1109 = arith.mulf %1108, %1086 : vector<4x32xf32>
    %1110 = math.exp %1109 : vector<4x32xf32>
    %1111 = arith.mulf %1106, %1110 : vector<4x32xf32>
    %cst_639 = arith.constant 1.000000e+00 : f32
    %1112 = vector.broadcast %cst_639 : f32 to vector<4x32xf32>
    %1113 = arith.subf %1112, %1111 : vector<4x32xf32>
    %cst_640 = arith.constant 0.000000e+00 : f32
    %1114 = vector.broadcast %cst_640 : f32 to vector<4x32xf32>
    %1115 = arith.cmpf oge, %1085, %1114 : vector<4x32xf32>
    %cst_641 = arith.constant 0.000000e+00 : f32
    %1116 = vector.broadcast %cst_641 : f32 to vector<4x32xf32>
    %1117 = arith.subf %1116, %1113 : vector<4x32xf32>
    %1118 = arith.select %1115, %1113, %1117 : vector<4x32xi1>, vector<4x32xf32>
    %cst_642 = arith.constant 1.000000e+00 : f32
    %1119 = vector.broadcast %cst_642 : f32 to vector<4x32xf32>
    %1120 = arith.addf %1119, %1118 : vector<4x32xf32>
    %1121 = arith.mulf %1083, %1120 : vector<4x32xf32>
    %cst_643 = arith.constant dense<0xFF800000> : vector<32xf32>
    %1122 = vector.multi_reduction <maximumf>, %1121, %cst_643 [0] : vector<4x32xf32> to vector<32xf32>
    %1123 = vector.shape_cast %1122 : vector<32xf32> to vector<1x32xf32>
    %c1_644 = arith.constant 1 : index
    %c0_645 = arith.constant 0 : index
    %1124 = vector.load %arg21[%c1_644, %c0_645] : memref<2x32xf32, #tpu.memory_space<vmem>>, vector<1x32xf32>
    tpu.vector_store %arg21[%c1_644, %c0_645], %1029 {strides = array<i32>} : memref<2x32xf32, #tpu.memory_space<vmem>>, vector<1x32xf32>,
    %c1_646 = arith.constant 1 : index
    %c0_647 = arith.constant 0 : index
    %1125 = vector.load %arg22[%c1_646, %c0_647] : memref<2x32xf32, #tpu.memory_space<vmem>>, vector<1x32xf32>
    tpu.vector_store %arg22[%c1_646, %c0_647], %1123 {strides = array<i32>} : memref<2x32xf32, #tpu.memory_space<vmem>>, vector<1x32xf32>,
    %1126 = arith.mulf %1029, %1029 : vector<1x32xf32>
    %cst_648 = arith.constant dense<0.000000e+00> : vector<1xf32>
    %1127 = vector.multi_reduction <add>, %1126, %cst_648 [1] : vector<1x32xf32> to vector<1xf32>
    %1128 = vector.shape_cast %1127 : vector<1xf32> to vector<1x1xf32>
    %1129 = math.sqrt %1128 : vector<1x1xf32>
    %cst_649 = arith.constant 9.99999996E-13 : f32
    %1130 = vector.broadcast %cst_649 : f32 to vector<1x1xf32>
    %1131 = arith.maximumf %1129, %1130 : vector<1x1xf32>
    %1132 = tpu.reciprocal %1131 {approx = true} : vector<1x1xf32> -> vector<1x1xf32>
    %1133 = vector.broadcast %1132 : vector<1x1xf32> to vector<1x32xf32>
    %1134 = arith.mulf %1029, %1133 : vector<1x32xf32>
    %c1_650 = arith.constant 1 : index
    %c0_651 = arith.constant 0 : index
    %1135 = vector.load %arg23[%c1_650, %c0_651] : memref<2x64xf32, #tpu.memory_space<vmem>>, vector<1x32xf32>
    tpu.vector_store %arg23[%c1_650, %c0_651], %1134 {strides = array<i32>} : memref<2x64xf32, #tpu.memory_space<vmem>>, vector<1x32xf32>,
    %1136 = arith.mulf %1034, %1034 : vector<1x32xf32>
    %cst_652 = arith.constant dense<0.000000e+00> : vector<1xf32>
    %1137 = vector.multi_reduction <add>, %1136, %cst_652 [1] : vector<1x32xf32> to vector<1xf32>
    %1138 = vector.shape_cast %1137 : vector<1xf32> to vector<1x1xf32>
    %1139 = math.sqrt %1138 : vector<1x1xf32>
    %cst_653 = arith.constant 9.99999996E-13 : f32
    %1140 = vector.broadcast %cst_653 : f32 to vector<1x1xf32>
    %1141 = arith.maximumf %1139, %1140 : vector<1x1xf32>
    %1142 = tpu.reciprocal %1141 {approx = true} : vector<1x1xf32> -> vector<1x1xf32>
    %1143 = vector.broadcast %1142 : vector<1x1xf32> to vector<1x32xf32>
    %1144 = arith.mulf %1034, %1143 : vector<1x32xf32>
    %c1_654 = arith.constant 1 : index
    %c32_655 = arith.constant 32 : index
    %1145 = vector.load %arg23[%c1_654, %c32_655] : memref<2x64xf32, #tpu.memory_space<vmem>>, vector<1x32xf32>
    tpu.vector_store %arg23[%c1_654, %c32_655], %1144 {strides = array<i32>} : memref<2x64xf32, #tpu.memory_space<vmem>>, vector<1x32xf32>,
    return
  }
}

</mosaic_0001>

<llo_original>
// kernel: attribute_transformer_forward.1
$region0: #{attribute_transformer_forward.1}
  #allocation0 [shape = 'u32[]', space=smem, size = 0x4, offset = 0x4, fixed_abs, tag = 'smem constant byte address 0x4 - core index']
  #allocation1 [shape = 'u32[144,128]{1,0:T(1,128)}', space=vmem, size = 0x12000, scoped, tag = 'internal scratch']
  #allocation2 [shape = 'f32[10,32]{1,0:T(8,128)}', space=vmem, size = 0x2000, scoped, tag = 'scratch operand']
  #allocation3 [shape = 'f32[10,96]{1,0:T(8,128)}', space=vmem, size = 0x2000, scoped, tag = 'scratch operand']
  %s0 = inlined_call_operand.vmem [shape: f32[10,192], index: 0, kind: input, shape index: {}]
  %s1 = inlined_call_operand.vmem [shape: f32[10,32], index: 1, kind: input, shape index: {}]
  %s2 = inlined_call_operand.vmem [shape: f32[192,32], index: 2, kind: input, shape index: {}]
  %s3 = inlined_call_operand.vmem [shape: f32[3,1,32], index: 3, kind: input, shape index: {}]
  %s4 = inlined_call_operand.vmem [shape: f32[3,1,32], index: 4, kind: input, shape index: {}]
  %s5 = inlined_call_operand.vmem [shape: f32[3,32,96], index: 5, kind: input, shape index: {}]
  %s6 = inlined_call_operand.vmem [shape: f32[3,1,96], index: 6, kind: input, shape index: {}]
  %s7 = inlined_call_operand.vmem [shape: f32[3,32,32], index: 7, kind: input, shape index: {}]
  %s8 = inlined_call_operand.vmem [shape: f32[3,1,32], index: 8, kind: input, shape index: {}]
  %s9 = inlined_call_operand.vmem [shape: f32[3,1,32], index: 9, kind: input, shape index: {}]
  %s10 = inlined_call_operand.vmem [shape: f32[3,1,32], index: 10, kind: input, shape index: {}]
  %s11 = inlined_call_operand.vmem [shape: f32[3,32,128], index: 11, kind: input, shape index: {}]
  %s12 = inlined_call_operand.vmem [shape: f32[3,1,128], index: 12, kind: input, shape index: {}]
  %s13 = inlined_call_operand.vmem [shape: f32[3,128,32], index: 13, kind: input, shape index: {}]
  %s14 = inlined_call_operand.vmem [shape: f32[3,1,32], index: 14, kind: input, shape index: {}]
  %s15 = inlined_call_operand.vmem [shape: f32[1,32], index: 15, kind: input, shape index: {}]
  %s16 = inlined_call_operand.vmem [shape: f32[1,32], index: 16, kind: input, shape index: {}]
  %s17 = inlined_call_operand.vmem [shape: f32[32,8], index: 17, kind: input, shape index: {}]
  %s18 = inlined_call_operand.vmem [shape: f32[1,8], index: 18, kind: input, shape index: {}]
  %s19 = inlined_call_operand.vmem [shape: f32[8,32], index: 19, kind: input, shape index: {}]
  %s20 = inlined_call_operand.vmem [shape: f32[1,32], index: 20, kind: input, shape index: {}]
  %s21 = inlined_call_operand.hbm [shape: f32[2,32], index: 21, kind: output, shape index: {0}]
  %s22 = inlined_call_operand.vmem [shape: f32[2,32], index: 22, kind: output, shape index: {1}]
  %s23 = inlined_call_operand.hbm [shape: f32[2,64], index: 23, kind: output, shape index: {2}]
  %24 = xla_tuple %s21, %s22, %s23
  %s25 = sld [smem:[#allocation0]]
  $region110: #{attribute_transformer_forward.1} parent=0
    _
  %s27 = ssub.s32 1, %s25
  %s28 = scalar_select 0, %s27, %s25
  $region1: #{attribute_transformer_forward.1} parent=0
    #allocation4 [shape = 'u8[1024]{0}', space=vmem, size = 0x400, scoped, tag = 'output window, operand 0, single buffered']
    #allocation5 [shape = 's32[1]{0}', space=sflag, size = 0x4, scoped, tag = 'scoped memory for attribute_transformer_forward.1']
    #allocation6 [shape = 'u8[1024]{0}', space=vmem, size = 0x400, scoped, tag = 'output window, operand 2, single buffered']
    #allocation7 [shape = 's32[1]{0}', space=sflag, size = 0x4, scoped, tag = 'scoped memory for attribute_transformer_forward.1']
    %29 = vsyncpa [#allocation5], 0
    %30 = vsyncpa [#allocation7], 0
    // Predicated region
    $region2: #{attribute_transformer_forward.1} parent=1 // pred_check
      _
    $region3: #{attribute_transformer_forward.1} parent=1 // pred_check_branch
      %32 = sbr.rel (0) target = $region5
    $region4: #{attribute_transformer_forward.1} parent=1 // pred_region
      _
    $region5: #{attribute_transformer_forward.1} parent=1 // pred_fallthru
      _
    // Predicated region
    $region6: #{attribute_transformer_forward.1} parent=1 // pred_check
      _
    $region7: #{attribute_transformer_forward.1} parent=1 // pred_check_branch
      %34 = sbr.rel (0) target = $region9
    $region8: #{attribute_transformer_forward.1} parent=1 // pred_region
      _
    $region9: #{attribute_transformer_forward.1} parent=1 // pred_fallthru
      _
    // Predicated region
    $region10: #{attribute_transformer_forward.1} parent=1 // pred_check
      _
    $region11: #{attribute_transformer_forward.1} parent=1 // pred_check_branch
      %36 = sbr.rel (0) target = $region13
    $region12: #{attribute_transformer_forward.1} parent=1 // pred_region
      _
    $region13: #{attribute_transformer_forward.1} parent=1 // pred_fallthru
      _
    // Predicated region
    $region14: #{attribute_transformer_forward.1} parent=1 // pred_check
      _
    $region15: #{attribute_transformer_forward.1} parent=1 // pred_check_branch
      %38 = sbr.rel (0) target = $region17
    $region16: #{attribute_transformer_forward.1} parent=1 // pred_region
      _
    $region17: #{attribute_transformer_forward.1} parent=1 // pred_fallthru
      _
    // Predicated region
    $region18: #{attribute_transformer_forward.1} parent=1 // pred_check
      _
    $region19: #{attribute_transformer_forward.1} parent=1 // pred_check_branch
      %40 = sbr.rel (0) target = $region21
    $region20: #{attribute_transformer_forward.1} parent=1 // pred_region
      _
    $region21: #{attribute_transformer_forward.1} parent=1 // pred_fallthru
      _
    // Predicated region
    $region22: #{attribute_transformer_forward.1} parent=1 // pred_check
      _
    $region23: #{attribute_transformer_forward.1} parent=1 // pred_check_branch
      %42 = sbr.rel (0) target = $region25
    $region24: #{attribute_transformer_forward.1} parent=1 // pred_region
      _
    $region25: #{attribute_transformer_forward.1} parent=1 // pred_fallthru
      _
    // Predicated region
    $region26: #{attribute_transformer_forward.1} parent=1 // pred_check
      _
    $region27: #{attribute_transformer_forward.1} parent=1 // pred_check_branch
      %44 = sbr.rel (0) target = $region29
    $region28: #{attribute_transformer_forward.1} parent=1 // pred_region
      _
    $region29: #{attribute_transformer_forward.1} parent=1 // pred_fallthru
      _
    // Predicated region
    $region30: #{attribute_transformer_forward.1} parent=1 // pred_check
      _
    $region31: #{attribute_transformer_forward.1} parent=1 // pred_check_branch
      %46 = sbr.rel (0) target = $region33
    $region32: #{attribute_transformer_forward.1} parent=1 // pred_region
      _
    $region33: #{attribute_transformer_forward.1} parent=1 // pred_fallthru
      _
    // Predicated region
    $region34: #{attribute_transformer_forward.1} parent=1 // pred_check
      _
    $region35: #{attribute_transformer_forward.1} parent=1 // pred_check_branch
      %48 = sbr.rel (0) target = $region37
    $region36: #{attribute_transformer_forward.1} parent=1 // pred_region
      _
    $region37: #{attribute_transformer_forward.1} parent=1 // pred_fallthru
      _
    // Predicated region
    $region38: #{attribute_transformer_forward.1} parent=1 // pred_check
      _
    $region39: #{attribute_transformer_forward.1} parent=1 // pred_check_branch
      %50 = sbr.rel (0) target = $region41
    $region40: #{attribute_transformer_forward.1} parent=1 // pred_region
      _
    $region41: #{attribute_transformer_forward.1} parent=1 // pred_fallthru
      _
    // Predicated region
    $region42: #{attribute_transformer_forward.1} parent=1 // pred_check
      _
    $region43: #{attribute_transformer_forward.1} parent=1 // pred_check_branch
      %52 = sbr.rel (0) target = $region45
    $region44: #{attribute_transformer_forward.1} parent=1 // pred_region
      _
    $region45: #{attribute_transformer_forward.1} parent=1 // pred_fallthru
      _
    // Predicated region
    $region46: #{attribute_transformer_forward.1} parent=1 // pred_check
      _
    $region47: #{attribute_transformer_forward.1} parent=1 // pred_check_branch
      %54 = sbr.rel (0) target = $region49
    $region48: #{attribute_transformer_forward.1} parent=1 // pred_region
      _
    $region49: #{attribute_transformer_forward.1} parent=1 // pred_fallthru
      _
    // Predicated region
    $region50: #{attribute_transformer_forward.1} parent=1 // pred_check
      _
    $region51: #{attribute_transformer_forward.1} parent=1 // pred_check_branch
      %56 = sbr.rel (0) target = $region53
    $region52: #{attribute_transformer_forward.1} parent=1 // pred_region
      _
    $region53: #{attribute_transformer_forward.1} parent=1 // pred_fallthru
      _
    // Predicated region
    $region54: #{attribute_transformer_forward.1} parent=1 // pred_check
      _
    $region55: #{attribute_transformer_forward.1} parent=1 // pred_check_branch
      %58 = sbr.rel (0) target = $region57
    $region56: #{attribute_transformer_forward.1} parent=1 // pred_region
      _
    $region57: #{attribute_transformer_forward.1} parent=1 // pred_fallthru
      _
    // Predicated region
    $region58: #{attribute_transformer_forward.1} parent=1 // pred_check
      _
    $region59: #{attribute_transformer_forward.1} parent=1 // pred_check_branch
      %60 = sbr.rel (0) target = $region61
    $region60: #{attribute_transformer_forward.1} parent=1 // pred_region
      _
    $region61: #{attribute_transformer_forward.1} parent=1 // pred_fallthru
      _
    // Predicated region
    $region62: #{attribute_transformer_forward.1} parent=1 // pred_check
      _
    $region63: #{attribute_transformer_forward.1} parent=1 // pred_check_branch
      %62 = sbr.rel (0) target = $region65
    $region64: #{attribute_transformer_forward.1} parent=1 // pred_region
      _
    $region65: #{attribute_transformer_forward.1} parent=1 // pred_fallthru
      _
    // Predicated region
    $region66: #{attribute_transformer_forward.1} parent=1 // pred_check
      _
    $region67: #{attribute_transformer_forward.1} parent=1 // pred_check_branch
      %64 = sbr.rel (0) target = $region69
    $region68: #{attribute_transformer_forward.1} parent=1 // pred_region
      _
    $region69: #{attribute_transformer_forward.1} parent=1 // pred_fallthru
      _
    // Predicated region
    $region70: #{attribute_transformer_forward.1} parent=1 // pred_check
      _
    $region71: #{attribute_transformer_forward.1} parent=1 // pred_check_branch
      %66 = sbr.rel (0) target = $region73
    $region72: #{attribute_transformer_forward.1} parent=1 // pred_region
      _
    $region73: #{attribute_transformer_forward.1} parent=1 // pred_fallthru
      _
    // Predicated region
    $region74: #{attribute_transformer_forward.1} parent=1 // pred_check
      _
    $region75: #{attribute_transformer_forward.1} parent=1 // pred_check_branch
      %68 = sbr.rel (0) target = $region77
    $region76: #{attribute_transformer_forward.1} parent=1 // pred_region
      _
    $region77: #{attribute_transformer_forward.1} parent=1 // pred_fallthru
      _
    // Predicated region
    $region78: #{attribute_transformer_forward.1} parent=1 // pred_check
      _
    $region79: #{attribute_transformer_forward.1} parent=1 // pred_check_branch
      %70 = sbr.rel (0) target = $region81
    $region80: #{attribute_transformer_forward.1} parent=1 // pred_region
      _
    $region81: #{attribute_transformer_forward.1} parent=1 // pred_fallthru
      _
    // Predicated region
    $region82: #{attribute_transformer_forward.1} parent=1 // pred_check
      _
    $region83: #{attribute_transformer_forward.1} parent=1 // pred_check_branch
      %72 = sbr.rel (0) target = $region85
    $region84: #{attribute_transformer_forward.1} parent=1 // pred_region
      _
    $region85: #{attribute_transformer_forward.1} parent=1 // pred_fallthru
      _
    %v73 = vld [vmem:[%s0] sm:$0xff]
    %v74 = vld [vmem:[%s0 + $0x8] sm:$0xff]
    %v75 = vld [vmem:[%s0 + $0x10] sm:$0x3]
    %v76 = vld [vmem:[%s0 + $0x18] sm:$0x3]
    %v77 = vld [vmem:[%s2] sm:$0xff]
    %v78 = vld [vmem:[%s2 + $0x8] sm:$0xff]
    %v79 = vld [vmem:[%s2 + $0x10] sm:$0xff]
    %v80 = vld [vmem:[%s2 + $0x18] sm:$0xff]
    %v81 = vld [vmem:[%s2 + $0x20] sm:$0xff]
    %v82 = vld [vmem:[%s2 + $0x28] sm:$0xff]
    %v83 = vld [vmem:[%s2 + $0x30] sm:$0xff]
    %v84 = vld [vmem:[%s2 + $0x38] sm:$0xff]
    %v85 = vld [vmem:[%s2 + $0x40] sm:$0xff]
    %v86 = vld [vmem:[%s2 + $0x48] sm:$0xff]
    %v87 = vld [vmem:[%s2 + $0x50] sm:$0xff]
    %v88 = vld [vmem:[%s2 + $0x58] sm:$0xff]
    %v89 = vld [vmem:[%s2 + $0x60] sm:$0xff]
    %v90 = vld [vmem:[%s2 + $0x68] sm:$0xff]
    %v91 = vld [vmem:[%s2 + $0x70] sm:$0xff]
    %v92 = vld [vmem:[%s2 + $0x78] sm:$0xff]
    %v93 = vld [vmem:[%s2 + $0x80] sm:$0xff]
    %v94 = vld [vmem:[%s2 + $0x88] sm:$0xff]
    %v95 = vld [vmem:[%s2 + $0x90] sm:$0xff]
    %v96 = vld [vmem:[%s2 + $0x98] sm:$0xff]
    %v97 = vld [vmem:[%s2 + $0xa0] sm:$0xff]
    %v98 = vld [vmem:[%s2 + $0xa8] sm:$0xff]
    %v99 = vld [vmem:[%s2 + $0xb0] sm:$0xff]
    %v100 = vld [vmem:[%s2 + $0xb8] sm:$0xff]
    %v101 = vld [vmem:[%s1] sm:$0xff]
    %v102 = vld [vmem:[%s1 + $0x8] sm:$0x3]
    %vm103 = vcmask 523264
    %v105 = vsel %vm103, %v74, 0
    %v108 = vsel %vm103, %v76, 0
    %110 = vmatprep.subr.mxu0 0.0
    %111 = vmatpush1.msra.mxu0 %v92
    %112 = vmatprep.subr.mxu0 0.0
    %113 = vmatpush1.msra.mxu0 %v91
    %114 = vmatprep.subr.mxu0 0.0
    %115 = vmatpush1.msra.mxu0 %v90
    %116 = vmatprep.subr.mxu0 0.0
    %117 = vmatpush1.msra.mxu0 %v89
    %118 = vmatprep.subr.mxu0 0.0
    %119 = vmatpush1.msra.mxu0 %v88
    %120 = vmatprep.subr.mxu0 0.0
    %121 = vmatpush1.msra.mxu0 %v87
    %122 = vmatprep.subr.mxu0 0.0
    %123 = vmatpush1.msra.mxu0 %v86
    %124 = vmatprep.subr.mxu0 0.0
    %125 = vmatpush1.msra.mxu0 %v85
    %126 = vmatprep.subr.mxu0 0.0
    %127 = vmatpush1.msra.mxu0 %v84
    %128 = vmatprep.subr.mxu0 0.0
    %129 = vmatpush1.msra.mxu0 %v83
    %130 = vmatprep.subr.mxu0 0.0
    %131 = vmatpush1.msra.mxu0 %v82
    %132 = vmatprep.subr.mxu0 0.0
    %133 = vmatpush1.msra.mxu0 %v81
    %134 = vmatprep.subr.mxu0 0.0
    %135 = vmatpush1.msra.mxu0 %v80
    %136 = vmatprep.subr.mxu0 0.0
    %137 = vmatpush1.msra.mxu0 %v79
    %138 = vmatprep.subr.mxu0 0.0
    %139 = vmatpush1.msra.mxu0 %v78
    %140 = vmatprep.subr.mxu0 0.0
    %141 = vmatpush1.msra.mxu0 %v77
    %142 = vmatprep.subr.mxu0 0.0
    %143 = vmatpush2.msra.mxu0 0.0
    %144 = vmatprep.subr.mxu0 0.0
    %145 = vmatpush2.msra.mxu0 0.0
    %146 = vmatprep.subr.mxu0 0.0
    %147 = vmatpush2.msra.mxu0 0.0
    %148 = vmatprep.subr.mxu0 0.0
    %149 = vmatpush2.msra.mxu0 0.0
    %150 = vmatprep.subr.mxu0 0.0
    %151 = vmatpush2.msra.mxu0 0.0
    %152 = vmatprep.subr.mxu0 0.0
    %153 = vmatpush2.msra.mxu0 0.0
    %154 = vmatprep.subr.mxu0 0.0
    %155 = vmatpush2.msra.mxu0 0.0
    %156 = vmatprep.subr.mxu0 0.0
    %157 = vmatpush2.msra.mxu0 0.0
    %158 = vmatprep.subr.mxu0 0.0
    %159 = vmatpush2.msra.mxu0 %v100
    %160 = vmatprep.subr.mxu0 0.0
    %161 = vmatpush2.msra.mxu0 %v99
    %162 = vmatprep.subr.mxu0 0.0
    %163 = vmatpush2.msra.mxu0 %v98
    %164 = vmatprep.subr.mxu0 0.0
    %165 = vmatpush2.msra.mxu0 %v97
    %166 = vmatprep.subr.mxu0 0.0
    %167 = vmatpush2.msra.mxu0 %v96
    %168 = vmatprep.subr.mxu0 0.0
    %169 = vmatpush2.msra.mxu0 %v95
    %170 = vmatprep.subr.mxu0 0.0
    %171 = vmatpush2.msra.mxu0 %v94
    %172 = vmatprep.subr.mxu0 0.0
    %173 = vmatpush2.msra.mxu0 %v93
    %174 = vmatprep.mubr.f32.mxu0 %v105
    %175 = vmatmul.mubr.f32.gmra.mxu0 %v73
    %v176 = vpop.f32.mrf.mxu0
    %v177 = vadd.f32 %v101, %v176
    %v178 = vpop.f32.mrf.mxu0
    %179 = vmatprep.mubr.f32.mxu0 %v108
    %180 = vmatmul.mubr.f32.gmra.mxu0 %v75
    %v181 = vpop.f32.mrf.mxu0
    %v182 = vadd.f32 %v102, %v181
    %v183 = vpop.f32.mrf.mxu0
    %184 = vdwg.mxu0
    %vm185 = vcmask 261120
    %186 = vst.msk [vmem:[#allocation2] sm:$0xff] %vm185, %v177
    %vm187 = vcmask 254976
    %188 = vst.msk [vmem:[#allocation2 + $0x8] sm:$0x3] %vm187, %v182
    %v189 = vld [vmem:[#allocation2] sm:$0xff]
    %v190 = vld [vmem:[#allocation2 + $0x8] sm:$0x3]
    %v191 = vld [vmem:[%s3] sm:$0x1]
    %v192 = vld [vmem:[%s4] sm:$0x1]
    %v193 = vsel %vm185, %v189, 0.0
    %194 = vadd.xlane.f32.xlu0 %v193
    %v195 = vpop.xlane.xlu0 %194
    %v196 = vsel %vm187, %v190, 0.0
    %197 = vadd.xlane.f32.xlu0 %v196
    %v198 = vpop.xlane.xlu0 %197
    %v199 = vrcp.pop 32.0
    %v200 = vmul.f32 %v195, %v199
    %v201 = vmul.f32 %v198, %v199
    %v202 = vsub.f32 %v189, %v200
    %v203 = vsub.f32 %v190, %v201
    %v204 = vmul.f32 %v202, %v202
    %v205 = vmul.f32 %v203, %v203
    %v206 = vsel %vm185, %v204, 0.0
    %207 = vadd.xlane.f32.xlu0 %v206
    %v208 = vpop.xlane.xlu0 %207
    %v209 = vsel %vm187, %v205, 0.0
    %210 = vadd.xlane.f32.xlu0 %v209
    %v211 = vpop.xlane.xlu0 %210
    %v212 = vmul.f32 %v208, %v199
    %v213 = vmul.f32 %v211, %v199
    %v214 = vadd.f32 %v212, 1e-05
    %v215 = vadd.f32 %v213, 1e-05
    %v216 = vrsqrt.pop %v214
    %v217 = vrsqrt.pop %v215
    %v218 = vmul.f32 %v202, %v216
    %v219 = vmul.f32 %v203, %v217
    %v221 = vlaneseq
    %v222 = vshrl.u32 %v221, 7
    %v223 = vsub.s32 0, %v222
    %v224 = vrot.slane %v191, %v223
    %v226 = vmul.f32 %v218, %v224
    %v227 = vmul.f32 %v219, %v224
    %v229 = vlaneseq
    %v230 = vshrl.u32 %v229, 7
    %v231 = vsub.s32 0, %v230
    %v232 = vrot.slane %v192, %v231
    %v234 = vadd.f32 %v226, %v232
    %v235 = vadd.f32 %v227, %v232
    %v236 = vld [vmem:[%s5] sm:$0xff]
    %v237 = vld [vmem:[%s5 + $0x8] sm:$0xff]
    %v238 = vld [vmem:[%s5 + $0x10] sm:$0xff]
    %v239 = vld [vmem:[%s5 + $0x18] sm:$0xff]
    %v240 = vld [vmem:[%s6] sm:$0x1]
    %v242 = vlaneseq
    %v243 = vshrl.u32 %v242, 7
    %v244 = vsub.s32 0, %v243
    %v245 = vrot.slane %v240, %v244
    %v248 = vsel %vm185, %v234, 0
    %v251 = vsel %vm185, %v235, 0
    %253 = vmatprep.subr.mxu0 0.0
    %254 = vmatpush1.msra.mxu0 0.0
    %255 = vmatprep.subr.mxu0 0.0
    %256 = vmatpush1.msra.mxu0 0.0
    %257 = vmatprep.subr.mxu0 0.0
    %258 = vmatpush1.msra.mxu0 0.0
    %259 = vmatprep.subr.mxu0 0.0
    %260 = vmatpush1.msra.mxu0 0.0
    %261 = vmatprep.subr.mxu0 0.0
    %262 = vmatpush1.msra.mxu0 0.0
    %263 = vmatprep.subr.mxu0 0.0
    %264 = vmatpush1.msra.mxu0 0.0
    %265 = vmatprep.subr.mxu0 0.0
    %266 = vmatpush1.msra.mxu0 0.0
    %267 = vmatprep.subr.mxu0 0.0
    %268 = vmatpush1.msra.mxu0 0.0
    %269 = vmatprep.subr.mxu0 0.0
    %270 = vmatpush1.msra.mxu0 0.0
    %271 = vmatprep.subr.mxu0 0.0
    %272 = vmatpush1.msra.mxu0 0.0
    %273 = vmatprep.subr.mxu0 0.0
    %274 = vmatpush1.msra.mxu0 0.0
    %275 = vmatprep.subr.mxu0 0.0
    %276 = vmatpush1.msra.mxu0 0.0
    %277 = vmatprep.subr.mxu0 0.0
    %278 = vmatpush1.msra.mxu0 %v239
    %279 = vmatprep.subr.mxu0 0.0
    %280 = vmatpush1.msra.mxu0 %v238
    %281 = vmatprep.subr.mxu0 0.0
    %282 = vmatpush1.msra.mxu0 %v237
    %283 = vmatprep.subr.mxu0 0.0
    %284 = vmatpush1.msra.mxu0 %v236
    %285 = vmatprep.subr.mxu0 0.0
    %286 = vmatpush2.msra.mxu0 0.0
    %287 = vmatprep.subr.mxu0 0.0
    %288 = vmatpush2.msra.mxu0 0.0
    %289 = vmatprep.subr.mxu0 0.0
    %290 = vmatpush2.msra.mxu0 0.0
    %291 = vmatprep.subr.mxu0 0.0
    %292 = vmatpush2.msra.mxu0 0.0
    %293 = vmatprep.subr.mxu0 0.0
    %294 = vmatpush2.msra.mxu0 0.0
    %295 = vmatprep.subr.mxu0 0.0
    %296 = vmatpush2.msra.mxu0 0.0
    %297 = vmatprep.subr.mxu0 0.0
    %298 = vmatpush2.msra.mxu0 0.0
    %299 = vmatprep.subr.mxu0 0.0
    %300 = vmatpush2.msra.mxu0 0.0
    %301 = vmatprep.subr.mxu0 0.0
    %302 = vmatpush2.msra.mxu0 0.0
    %303 = vmatprep.subr.mxu0 0.0
    %304 = vmatpush2.msra.mxu0 0.0
    %305 = vmatprep.subr.mxu0 0.0
    %306 = vmatpush2.msra.mxu0 0.0
    %307 = vmatprep.subr.mxu0 0.0
    %308 = vmatpush2.msra.mxu0 0.0
    %309 = vmatprep.subr.mxu0 0.0
    %310 = vmatpush2.msra.mxu0 0.0
    %311 = vmatprep.subr.mxu0 0.0
    %312 = vmatpush2.msra.mxu0 0.0
    %313 = vmatprep.subr.mxu0 0.0
    %314 = vmatpush2.msra.mxu0 0.0
    %315 = vmatprep.subr.mxu0 0.0
    %316 = vmatpush2.msra.mxu0 0.0
    %317 = vmatprep.mubr.f32.mxu0 0.0
    %318 = vmatmul.mubr.f32.gmra.mxu0 %v248
    %v319 = vpop.f32.mrf.mxu0
    %v320 = vadd.f32 %v245, %v319
    %v321 = vpop.f32.mrf.mxu0
    %322 = vmatprep.mubr.f32.mxu0 0.0
    %323 = vmatmul.mubr.f32.gmra.mxu0 %v251
    %v324 = vpop.f32.mrf.mxu0
    %v325 = vadd.f32 %v245, %v324
    %v326 = vpop.f32.mrf.mxu0
    %327 = vdwg.mxu0
    %vm328 = vcmask 785408
    %329 = vst.msk [vmem:[#allocation3] sm:$0xff] %vm328, %v320
    %vm330 = vcmask 779264
    %331 = vst.msk [vmem:[#allocation3 + $0x8] sm:$0x3] %vm330, %v325
    %v332 = vld [vmem:[%s7] sm:$0xff]
    %v333 = vld [vmem:[%s7 + $0x8] sm:$0xff]
    %v334 = vld [vmem:[%s7 + $0x10] sm:$0xff]
    %v335 = vld [vmem:[%s7 + $0x18] sm:$0xff]
    %v336 = vld [vmem:[#allocation3] sm:$0x1f]
    %338 = vrot.lane.b32.xlu0 %v336, 96
    %v339 = vpop.permute.xlu0 %338
    %vm340 = vcmask 64512
    %v341 = vsel %vm340, %v336, 0
    %v343 = vsel %vm340, %v339, 0
    %345 = vmatprep.subr.mxu0 0.0
    %346 = vmatpush1.xpose.msra.mxu0 0.0
    %347 = vmatprep.subr.mxu0 0.0
    %348 = vmatpush1.xpose.msra.mxu0 0.0
    %349 = vmatprep.subr.mxu0 0.0
    %350 = vmatpush1.xpose.msra.mxu0 0.0
    %351 = vmatprep.subr.mxu0 0.0
    %352 = vmatpush1.xpose.msra.mxu0 0.0
    %353 = vmatprep.subr.mxu0 0.0
    %354 = vmatpush1.xpose.msra.mxu0 0.0
    %355 = vmatprep.subr.mxu0 0.0
    %356 = vmatpush1.xpose.msra.mxu0 0.0
    %357 = vmatprep.subr.mxu0 0.0
    %358 = vmatpush1.xpose.msra.mxu0 0.0
    %359 = vmatprep.subr.mxu0 0.0
    %360 = vmatpush1.xpose.msra.mxu0 0.0
    %361 = vmatprep.subr.mxu0 0.0
    %362 = vmatpush1.xpose.msra.mxu0 0.0
    %363 = vmatprep.subr.mxu0 0.0
    %364 = vmatpush1.xpose.msra.mxu0 0.0
    %365 = vmatprep.subr.mxu0 0.0
    %366 = vmatpush1.xpose.msra.mxu0 0.0
    %367 = vmatprep.subr.mxu0 0.0
    %368 = vmatpush1.xpose.msra.mxu0 0.0
    %369 = vmatprep.subr.mxu0 0.0
    %370 = vmatpush1.xpose.msra.mxu0 0.0
    %371 = vmatprep.subr.mxu0 0.0
    %372 = vmatpush1.xpose.msra.mxu0 0.0
    %373 = vmatprep.subr.mxu0 0.0
    %374 = vmatpush1.xpose.msra.mxu0 0.0
    %375 = vmatprep.subr.mxu0 0.0
    %376 = vmatpush1.xpose.msra.mxu0 %v343
    %377 = vmatprep.subr.mxu0 0.0
    %378 = vmatpush2.xpose.msra.mxu0 0.0
    %379 = vmatprep.subr.mxu0 0.0
    %380 = vmatpush2.xpose.msra.mxu0 0.0
    %381 = vmatprep.subr.mxu0 0.0
    %382 = vmatpush2.xpose.msra.mxu0 0.0
    %383 = vmatprep.subr.mxu0 0.0
    %384 = vmatpush2.xpose.msra.mxu0 0.0
    %385 = vmatprep.subr.mxu0 0.0
    %386 = vmatpush2.xpose.msra.mxu0 0.0
    %387 = vmatprep.subr.mxu0 0.0
    %388 = vmatpush2.xpose.msra.mxu0 0.0
    %389 = vmatprep.subr.mxu0 0.0
    %390 = vmatpush2.xpose.msra.mxu0 0.0
    %391 = vmatprep.subr.mxu0 0.0
    %392 = vmatpush2.xpose.msra.mxu0 0.0
    %393 = vmatprep.subr.mxu0 0.0
    %394 = vmatpush2.xpose.msra.mxu0 0.0
    %395 = vmatprep.subr.mxu0 0.0
    %396 = vmatpush2.xpose.msra.mxu0 0.0
    %397 = vmatprep.subr.mxu0 0.0
    %398 = vmatpush2.xpose.msra.mxu0 0.0
    %399 = vmatprep.subr.mxu0 0.0
    %400 = vmatpush2.xpose.msra.mxu0 0.0
    %401 = vmatprep.subr.mxu0 0.0
    %402 = vmatpush2.xpose.msra.mxu0 0.0
    %403 = vmatprep.subr.mxu0 0.0
    %404 = vmatpush2.xpose.msra.mxu0 0.0
    %405 = vmatprep.subr.mxu0 0.0
    %406 = vmatpush2.xpose.msra.mxu0 0.0
    %407 = vmatprep.subr.mxu0 0.0
    %408 = vmatpush2.xpose.msra.mxu0 0.0
    %409 = vmatprep.mubr.f32.mxu0 0.0
    %410 = vmatmul.mubr.f32.gmra.mxu0 %v341
    %v411 = vpop.f32.mrf.mxu0
    %v412 = vadd.f32 0.0, %v411
    %v413 = vpop.f32.mrf.mxu0
    %414 = vdwg.mxu0
    %v415 = vmul.f32 %v412, 0.35355338
    %vm416 = vcmask 36864
    %v417 = vsel %vm416, %v415, -inf
    %418 = vmax.xlane.f32.xlu0 %v417
    %v419 = vpop.xlane.xlu0 %418
    %v420 = vsub.f32 %v415, %v419
    %v421 = vmul.f32 %v420, 1.442695
    %v422 = vpow.pop %v421
    %v423 = vsel %vm416, %v422, 0.0
    %424 = vadd.xlane.f32.xlu0 %v423
    %v425 = vpop.xlane.xlu0 %424
    %v426 = vrcp.pop %v425
    %v427 = vmul.f32 %v422, %v426
    %428 = vrot.lane.b32.xlu0 %v336, 64
    %v429 = vpop.permute.xlu0 %428
    %vm430 = vcmask 39936
    %v432 = vsel %vm430, %v427, 0
    %vm434 = vcmask 1044480
    %v435 = vsel %vm434, %v429, 0
    %437 = vmatprep.subr.mxu0 0.0
    %438 = vmatpush1.msra.mxu0 0.0
    %439 = vmatprep.subr.mxu0 0.0
    %440 = vmatpush1.msra.mxu0 0.0
    %441 = vmatprep.subr.mxu0 0.0
    %442 = vmatpush1.msra.mxu0 0.0
    %443 = vmatprep.subr.mxu0 0.0
    %444 = vmatpush1.msra.mxu0 0.0
    %445 = vmatprep.subr.mxu0 0.0
    %446 = vmatpush1.msra.mxu0 0.0
    %447 = vmatprep.subr.mxu0 0.0
    %448 = vmatpush1.msra.mxu0 0.0
    %449 = vmatprep.subr.mxu0 0.0
    %450 = vmatpush1.msra.mxu0 0.0
    %451 = vmatprep.subr.mxu0 0.0
    %452 = vmatpush1.msra.mxu0 0.0
    %453 = vmatprep.subr.mxu0 0.0
    %454 = vmatpush1.msra.mxu0 0.0
    %455 = vmatprep.subr.mxu0 0.0
    %456 = vmatpush1.msra.mxu0 0.0
    %457 = vmatprep.subr.mxu0 0.0
    %458 = vmatpush1.msra.mxu0 0.0
    %459 = vmatprep.subr.mxu0 0.0
    %460 = vmatpush1.msra.mxu0 0.0
    %461 = vmatprep.subr.mxu0 0.0
    %462 = vmatpush1.msra.mxu0 0.0
    %463 = vmatprep.subr.mxu0 0.0
    %464 = vmatpush1.msra.mxu0 0.0
    %465 = vmatprep.subr.mxu0 0.0
    %466 = vmatpush1.msra.mxu0 0.0
    %467 = vmatprep.subr.mxu0 0.0
    %468 = vmatpush1.msra.mxu0 %v435
    %469 = vmatprep.subr.mxu0 0.0
    %470 = vmatpush2.msra.mxu0 0.0
    %471 = vmatprep.subr.mxu0 0.0
    %472 = vmatpush2.msra.mxu0 0.0
    %473 = vmatprep.subr.mxu0 0.0
    %474 = vmatpush2.msra.mxu0 0.0
    %475 = vmatprep.subr.mxu0 0.0
    %476 = vmatpush2.msra.mxu0 0.0
    %477 = vmatprep.subr.mxu0 0.0
    %478 = vmatpush2.msra.mxu0 0.0
    %479 = vmatprep.subr.mxu0 0.0
    %480 = vmatpush2.msra.mxu0 0.0
    %481 = vmatprep.subr.mxu0 0.0
    %482 = vmatpush2.msra.mxu0 0.0
    %483 = vmatprep.subr.mxu0 0.0
    %484 = vmatpush2.msra.mxu0 0.0
    %485 = vmatprep.subr.mxu0 0.0
    %486 = vmatpush2.msra.mxu0 0.0
    %487 = vmatprep.subr.mxu0 0.0
    %488 = vmatpush2.msra.mxu0 0.0
    %489 = vmatprep.subr.mxu0 0.0
    %490 = vmatpush2.msra.mxu0 0.0
    %491 = vmatprep.subr.mxu0 0.0
    %492 = vmatpush2.msra.mxu0 0.0
    %493 = vmatprep.subr.mxu0 0.0
    %494 = vmatpush2.msra.mxu0 0.0
    %495 = vmatprep.subr.mxu0 0.0
    %496 = vmatpush2.msra.mxu0 0.0
    %497 = vmatprep.subr.mxu0 0.0
    %498 = vmatpush2.msra.mxu0 0.0
    %499 = vmatprep.subr.mxu0 0.0
    %500 = vmatpush2.msra.mxu0 0.0
    %501 = vmatprep.mubr.f32.mxu0 0.0
    %502 = vmatmul.mubr.f32.gmra.mxu0 %v432
    %v503 = vpop.f32.mrf.mxu0
    %v504 = vadd.f32 0.0, %v503
    %v505 = vpop.f32.mrf.mxu0
    %506 = vdwg.mxu0
    %507 = vrot.lane.b32.xlu0 %v336, 120
    %v508 = vpop.permute.xlu0 %507
    %509 = vrot.lane.b32.xlu0 %v336, 88
    %v510 = vpop.permute.xlu0 %509
    %v511 = vsel %vm340, %v508, 0
    %v513 = vsel %vm340, %v510, 0
    %515 = vmatprep.subr.mxu0 0.0
    %516 = vmatpush1.xpose.msra.mxu0 0.0
    %517 = vmatprep.subr.mxu0 0.0
    %518 = vmatpush1.xpose.msra.mxu0 0.0
    %519 = vmatprep.subr.mxu0 0.0
    %520 = vmatpush1.xpose.msra.mxu0 0.0
    %521 = vmatprep.subr.mxu0 0.0
    %522 = vmatpush1.xpose.msra.mxu0 0.0
    %523 = vmatprep.subr.mxu0 0.0
    %524 = vmatpush1.xpose.msra.mxu0 0.0
    %525 = vmatprep.subr.mxu0 0.0
    %526 = vmatpush1.xpose.msra.mxu0 0.0
    %527 = vmatprep.subr.mxu0 0.0
    %528 = vmatpush1.xpose.msra.mxu0 0.0
    %529 = vmatprep.subr.mxu0 0.0
    %530 = vmatpush1.xpose.msra.mxu0 0.0
    %531 = vmatprep.subr.mxu0 0.0
    %532 = vmatpush1.xpose.msra.mxu0 0.0
    %533 = vmatprep.subr.mxu0 0.0
    %534 = vmatpush1.xpose.msra.mxu0 0.0
    %535 = vmatprep.subr.mxu0 0.0
    %536 = vmatpush1.xpose.msra.mxu0 0.0
    %537 = vmatprep.subr.mxu0 0.0
    %538 = vmatpush1.xpose.msra.mxu0 0.0
    %539 = vmatprep.subr.mxu0 0.0
    %540 = vmatpush1.xpose.msra.mxu0 0.0
    %541 = vmatprep.subr.mxu0 0.0
    %542 = vmatpush1.xpose.msra.mxu0 0.0
    %543 = vmatprep.subr.mxu0 0.0
    %544 = vmatpush1.xpose.msra.mxu0 0.0
    %545 = vmatprep.subr.mxu0 0.0
    %546 = vmatpush1.xpose.msra.mxu0 %v513
    %547 = vmatprep.subr.mxu0 0.0
    %548 = vmatpush2.xpose.msra.mxu0 0.0
    %549 = vmatprep.subr.mxu0 0.0
    %550 = vmatpush2.xpose.msra.mxu0 0.0
    %551 = vmatprep.subr.mxu0 0.0
    %552 = vmatpush2.xpose.msra.mxu0 0.0
    %553 = vmatprep.subr.mxu0 0.0
    %554 = vmatpush2.xpose.msra.mxu0 0.0
    %555 = vmatprep.subr.mxu0 0.0
    %556 = vmatpush2.xpose.msra.mxu0 0.0
    %557 = vmatprep.subr.mxu0 0.0
    %558 = vmatpush2.xpose.msra.mxu0 0.0
    %559 = vmatprep.subr.mxu0 0.0
    %560 = vmatpush2.xpose.msra.mxu0 0.0
    %561 = vmatprep.subr.mxu0 0.0
    %562 = vmatpush2.xpose.msra.mxu0 0.0
    %563 = vmatprep.subr.mxu0 0.0
    %564 = vmatpush2.xpose.msra.mxu0 0.0
    %565 = vmatprep.subr.mxu0 0.0
    %566 = vmatpush2.xpose.msra.mxu0 0.0
    %567 = vmatprep.subr.mxu0 0.0
    %568 = vmatpush2.xpose.msra.mxu0 0.0
    %569 = vmatprep.subr.mxu0 0.0
    %570 = vmatpush2.xpose.msra.mxu0 0.0
    %571 = vmatprep.subr.mxu0 0.0
    %572 = vmatpush2.xpose.msra.mxu0 0.0
    %573 = vmatprep.subr.mxu0 0.0
    %574 = vmatpush2.xpose.msra.mxu0 0.0
    %575 = vmatprep.subr.mxu0 0.0
    %576 = vmatpush2.xpose.msra.mxu0 0.0
    %577 = vmatprep.subr.mxu0 0.0
    %578 = vmatpush2.xpose.msra.mxu0 0.0
    %579 = vmatprep.mubr.f32.mxu0 0.0
    %580 = vmatmul.mubr.f32.gmra.mxu0 %v511
    %v581 = vpop.f32.mrf.mxu0
    %v582 = vadd.f32 0.0, %v581
    %v583 = vpop.f32.mrf.mxu0
    %584 = vdwg.mxu0
    %v585 = vmul.f32 %v582, 0.35355338
    %v586 = vsel %vm416, %v585, -inf
    %587 = vmax.xlane.f32.xlu0 %v586
    %v588 = vpop.xlane.xlu0 %587
    %v589 = vsub.f32 %v585, %v588
    %v590 = vmul.f32 %v589, 1.442695
    %v591 = vpow.pop %v590
    %v592 = vsel %vm416, %v591, 0.0
    %593 = vadd.xlane.f32.xlu0 %v592
    %v594 = vpop.xlane.xlu0 %593
    %v595 = vrcp.pop %v594
    %v596 = vmul.f32 %v591, %v595
    %597 = vrot.lane.b32.xlu0 %v336, 56
    %v598 = vpop.permute.xlu0 %597
    %v600 = vsel %vm430, %v596, 0
    %v602 = vsel %vm434, %v598, 0
    %604 = vmatprep.subr.mxu0 0.0
    %605 = vmatpush1.msra.mxu0 0.0
    %606 = vmatprep.subr.mxu0 0.0
    %607 = vmatpush1.msra.mxu0 0.0
    %608 = vmatprep.subr.mxu0 0.0
    %609 = vmatpush1.msra.mxu0 0.0
    %610 = vmatprep.subr.mxu0 0.0
    %611 = vmatpush1.msra.mxu0 0.0
    %612 = vmatprep.subr.mxu0 0.0
    %613 = vmatpush1.msra.mxu0 0.0
    %614 = vmatprep.subr.mxu0 0.0
    %615 = vmatpush1.msra.mxu0 0.0
    %616 = vmatprep.subr.mxu0 0.0
    %617 = vmatpush1.msra.mxu0 0.0
    %618 = vmatprep.subr.mxu0 0.0
    %619 = vmatpush1.msra.mxu0 0.0
    %620 = vmatprep.subr.mxu0 0.0
    %621 = vmatpush1.msra.mxu0 0.0
    %622 = vmatprep.subr.mxu0 0.0
    %623 = vmatpush1.msra.mxu0 0.0
    %624 = vmatprep.subr.mxu0 0.0
    %625 = vmatpush1.msra.mxu0 0.0
    %626 = vmatprep.subr.mxu0 0.0
    %627 = vmatpush1.msra.mxu0 0.0
    %628 = vmatprep.subr.mxu0 0.0
    %629 = vmatpush1.msra.mxu0 0.0
    %630 = vmatprep.subr.mxu0 0.0
    %631 = vmatpush1.msra.mxu0 0.0
    %632 = vmatprep.subr.mxu0 0.0
    %633 = vmatpush1.msra.mxu0 0.0
    %634 = vmatprep.subr.mxu0 0.0
    %635 = vmatpush1.msra.mxu0 %v602
    %636 = vmatprep.subr.mxu0 0.0
    %637 = vmatpush2.msra.mxu0 0.0
    %638 = vmatprep.subr.mxu0 0.0
    %639 = vmatpush2.msra.mxu0 0.0
    %640 = vmatprep.subr.mxu0 0.0
    %641 = vmatpush2.msra.mxu0 0.0
    %642 = vmatprep.subr.mxu0 0.0
    %643 = vmatpush2.msra.mxu0 0.0
    %644 = vmatprep.subr.mxu0 0.0
    %645 = vmatpush2.msra.mxu0 0.0
    %646 = vmatprep.subr.mxu0 0.0
    %647 = vmatpush2.msra.mxu0 0.0
    %648 = vmatprep.subr.mxu0 0.0
    %649 = vmatpush2.msra.mxu0 0.0
    %650 = vmatprep.subr.mxu0 0.0
    %651 = vmatpush2.msra.mxu0 0.0
    %652 = vmatprep.subr.mxu0 0.0
    %653 = vmatpush2.msra.mxu0 0.0
    %654 = vmatprep.subr.mxu0 0.0
    %655 = vmatpush2.msra.mxu0 0.0
    %656 = vmatprep.subr.mxu0 0.0
    %657 = vmatpush2.msra.mxu0 0.0
    %658 = vmatprep.subr.mxu0 0.0
    %659 = vmatpush2.msra.mxu0 0.0
    %660 = vmatprep.subr.mxu0 0.0
    %661 = vmatpush2.msra.mxu0 0.0
    %662 = vmatprep.subr.mxu0 0.0
    %663 = vmatpush2.msra.mxu0 0.0
    %664 = vmatprep.subr.mxu0 0.0
    %665 = vmatpush2.msra.mxu0 0.0
    %666 = vmatprep.subr.mxu0 0.0
    %667 = vmatpush2.msra.mxu0 0.0
    %668 = vmatprep.mubr.f32.mxu0 0.0
    %669 = vmatmul.mubr.f32.gmra.mxu0 %v600
    %v670 = vpop.f32.mrf.mxu0
    %v671 = vadd.f32 0.0, %v670
    %v672 = vpop.f32.mrf.mxu0
    %673 = vdwg.mxu0
    %v675 = vsel %vm340, %v671, 0
    %677 = vmatprep.subr.mxu0 0.0
    %678 = vmatpush1.msra.mxu0 0.0
    %679 = vmatprep.subr.mxu0 0.0
    %680 = vmatpush1.msra.mxu0 0.0
    %681 = vmatprep.subr.mxu0 0.0
    %682 = vmatpush1.msra.mxu0 0.0
    %683 = vmatprep.subr.mxu0 0.0
    %684 = vmatpush1.msra.mxu0 0.0
    %685 = vmatprep.subr.mxu0 0.0
    %686 = vmatpush1.msra.mxu0 0.0
    %687 = vmatprep.subr.mxu0 0.0
    %688 = vmatpush1.msra.mxu0 0.0
    %689 = vmatprep.subr.mxu0 0.0
    %690 = vmatpush1.msra.mxu0 0.0
    %691 = vmatprep.subr.mxu0 0.0
    %692 = vmatpush1.msra.mxu0 0.0
    %693 = vmatprep.subr.mxu0 0.0
    %694 = vmatpush1.msra.mxu0 0.0
    %695 = vmatprep.subr.mxu0 0.0
    %696 = vmatpush1.msra.mxu0 0.0
    %697 = vmatprep.subr.mxu0 0.0
    %698 = vmatpush1.msra.mxu0 0.0
    %699 = vmatprep.subr.mxu0 0.0
    %700 = vmatpush1.msra.mxu0 0.0
    %701 = vmatprep.subr.mxu0 0.0
    %702 = vmatpush1.msra.mxu0 0.0
    %703 = vmatprep.subr.mxu0 0.0
    %704 = vmatpush1.msra.mxu0 0.0
    %705 = vmatprep.subr.mxu0 0.0
    %706 = vmatpush1.msra.mxu0 0.0
    %707 = vmatprep.subr.mxu0 0.0
    %708 = vmatpush1.msra.mxu0 %v333
    %709 = vmatprep.subr.mxu0 0.0
    %710 = vmatpush2.msra.mxu0 0.0
    %711 = vmatprep.subr.mxu0 0.0
    %712 = vmatpush2.msra.mxu0 0.0
    %713 = vmatprep.subr.mxu0 0.0
    %714 = vmatpush2.msra.mxu0 0.0
    %715 = vmatprep.subr.mxu0 0.0
    %716 = vmatpush2.msra.mxu0 0.0
    %717 = vmatprep.subr.mxu0 0.0
    %718 = vmatpush2.msra.mxu0 0.0
    %719 = vmatprep.subr.mxu0 0.0
    %720 = vmatpush2.msra.mxu0 0.0
    %721 = vmatprep.subr.mxu0 0.0
    %722 = vmatpush2.msra.mxu0 0.0
    %723 = vmatprep.subr.mxu0 0.0
    %724 = vmatpush2.msra.mxu0 0.0
    %725 = vmatprep.subr.mxu0 0.0
    %726 = vmatpush2.msra.mxu0 0.0
    %727 = vmatprep.subr.mxu0 0.0
    %728 = vmatpush2.msra.mxu0 0.0
    %729 = vmatprep.subr.mxu0 0.0
    %730 = vmatpush2.msra.mxu0 0.0
    %731 = vmatprep.subr.mxu0 0.0
    %732 = vmatpush2.msra.mxu0 0.0
    %733 = vmatprep.subr.mxu0 0.0
    %734 = vmatpush2.msra.mxu0 0.0
    %735 = vmatprep.subr.mxu0 0.0
    %736 = vmatpush2.msra.mxu0 0.0
    %737 = vmatprep.subr.mxu0 0.0
    %738 = vmatpush2.msra.mxu0 0.0
    %739 = vmatprep.subr.mxu0 0.0
    %740 = vmatpush2.msra.mxu0 0.0
    %741 = vmatprep.mubr.f32.mxu0 0.0
    %742 = vmatmul.mubr.f32.gmra.mxu0 %v675
    %v743 = vpop.f32.mrf.mxu0
    %v744 = vadd.f32 0.0, %v743
    %v745 = vpop.f32.mrf.mxu0
    %746 = vdwg.mxu0
    %v748 = vsel %vm340, %v504, 0
    %750 = vmatprep.subr.mxu0 0.0
    %751 = vmatpush1.msra.mxu0 0.0
    %752 = vmatprep.subr.mxu0 0.0
    %753 = vmatpush1.msra.mxu0 0.0
    %754 = vmatprep.subr.mxu0 0.0
    %755 = vmatpush1.msra.mxu0 0.0
    %756 = vmatprep.subr.mxu0 0.0
    %757 = vmatpush1.msra.mxu0 0.0
    %758 = vmatprep.subr.mxu0 0.0
    %759 = vmatpush1.msra.mxu0 0.0
    %760 = vmatprep.subr.mxu0 0.0
    %761 = vmatpush1.msra.mxu0 0.0
    %762 = vmatprep.subr.mxu0 0.0
    %763 = vmatpush1.msra.mxu0 0.0
    %764 = vmatprep.subr.mxu0 0.0
    %765 = vmatpush1.msra.mxu0 0.0
    %766 = vmatprep.subr.mxu0 0.0
    %767 = vmatpush1.msra.mxu0 0.0
    %768 = vmatprep.subr.mxu0 0.0
    %769 = vmatpush1.msra.mxu0 0.0
    %770 = vmatprep.subr.mxu0 0.0
    %771 = vmatpush1.msra.mxu0 0.0
    %772 = vmatprep.subr.mxu0 0.0
    %773 = vmatpush1.msra.mxu0 0.0
    %774 = vmatprep.subr.mxu0 0.0
    %775 = vmatpush1.msra.mxu0 0.0
    %776 = vmatprep.subr.mxu0 0.0
    %777 = vmatpush1.msra.mxu0 0.0
    %778 = vmatprep.subr.mxu0 0.0
    %779 = vmatpush1.msra.mxu0 0.0
    %780 = vmatprep.subr.mxu0 0.0
    %781 = vmatpush1.msra.mxu0 %v332
    %782 = vmatprep.subr.mxu0 0.0
    %783 = vmatpush2.msra.mxu0 0.0
    %784 = vmatprep.subr.mxu0 0.0
    %785 = vmatpush2.msra.mxu0 0.0
    %786 = vmatprep.subr.mxu0 0.0
    %787 = vmatpush2.msra.mxu0 0.0
    %788 = vmatprep.subr.mxu0 0.0
    %789 = vmatpush2.msra.mxu0 0.0
    %790 = vmatprep.subr.mxu0 0.0
    %791 = vmatpush2.msra.mxu0 0.0
    %792 = vmatprep.subr.mxu0 0.0
    %793 = vmatpush2.msra.mxu0 0.0
    %794 = vmatprep.subr.mxu0 0.0
    %795 = vmatpush2.msra.mxu0 0.0
    %796 = vmatprep.subr.mxu0 0.0
    %797 = vmatpush2.msra.mxu0 0.0
    %798 = vmatprep.subr.mxu0 0.0
    %799 = vmatpush2.msra.mxu0 0.0
    %800 = vmatprep.subr.mxu0 0.0
    %801 = vmatpush2.msra.mxu0 0.0
    %802 = vmatprep.subr.mxu0 0.0
    %803 = vmatpush2.msra.mxu0 0.0
    %804 = vmatprep.subr.mxu0 0.0
    %805 = vmatpush2.msra.mxu0 0.0
    %806 = vmatprep.subr.mxu0 0.0
    %807 = vmatpush2.msra.mxu0 0.0
    %808 = vmatprep.subr.mxu0 0.0
    %809 = vmatpush2.msra.mxu0 0.0
    %810 = vmatprep.subr.mxu0 0.0
    %811 = vmatpush2.msra.mxu0 0.0
    %812 = vmatprep.subr.mxu0 0.0
    %813 = vmatpush2.msra.mxu0 0.0
    %814 = vmatprep.mubr.f32.mxu0 0.0
    %815 = vmatmul.mubr.f32.gmra.mxu0 %v748
    %v816 = vpop.f32.mrf.mxu0
    %v817 = vadd.f32 %v744, %v816
    %v818 = vpop.f32.mrf.mxu0
    %819 = vdwg.mxu0
    %820 = vrot.lane.b32.xlu0 %v336, 112
    %v821 = vpop.permute.xlu0 %820
    %822 = vrot.lane.b32.xlu0 %v336, 80
    %v823 = vpop.permute.xlu0 %822
    %v824 = vsel %vm340, %v821, 0
    %v826 = vsel %vm340, %v823, 0
    %828 = vmatprep.subr.mxu0 0.0
    %829 = vmatpush1.xpose.msra.mxu0 0.0
    %830 = vmatprep.subr.mxu0 0.0
    %831 = vmatpush1.xpose.msra.mxu0 0.0
    %832 = vmatprep.subr.mxu0 0.0
    %833 = vmatpush1.xpose.msra.mxu0 0.0
    %834 = vmatprep.subr.mxu0 0.0
    %835 = vmatpush1.xpose.msra.mxu0 0.0
    %836 = vmatprep.subr.mxu0 0.0
    %837 = vmatpush1.xpose.msra.mxu0 0.0
    %838 = vmatprep.subr.mxu0 0.0
    %839 = vmatpush1.xpose.msra.mxu0 0.0
    %840 = vmatprep.subr.mxu0 0.0
    %841 = vmatpush1.xpose.msra.mxu0 0.0
    %842 = vmatprep.subr.mxu0 0.0
    %843 = vmatpush1.xpose.msra.mxu0 0.0
    %844 = vmatprep.subr.mxu0 0.0
    %845 = vmatpush1.xpose.msra.mxu0 0.0
    %846 = vmatprep.subr.mxu0 0.0
    %847 = vmatpush1.xpose.msra.mxu0 0.0
    %848 = vmatprep.subr.mxu0 0.0
    %849 = vmatpush1.xpose.msra.mxu0 0.0
    %850 = vmatprep.subr.mxu0 0.0
    %851 = vmatpush1.xpose.msra.mxu0 0.0
    %852 = vmatprep.subr.mxu0 0.0
    %853 = vmatpush1.xpose.msra.mxu0 0.0
    %854 = vmatprep.subr.mxu0 0.0
    %855 = vmatpush1.xpose.msra.mxu0 0.0
    %856 = vmatprep.subr.mxu0 0.0
    %857 = vmatpush1.xpose.msra.mxu0 0.0
    %858 = vmatprep.subr.mxu0 0.0
    %859 = vmatpush1.xpose.msra.mxu0 %v826
    %860 = vmatprep.subr.mxu0 0.0
    %861 = vmatpush2.xpose.msra.mxu0 0.0
    %862 = vmatprep.subr.mxu0 0.0
    %863 = vmatpush2.xpose.msra.mxu0 0.0
    %864 = vmatprep.subr.mxu0 0.0
    %865 = vmatpush2.xpose.msra.mxu0 0.0
    %866 = vmatprep.subr.mxu0 0.0
    %867 = vmatpush2.xpose.msra.mxu0 0.0
    %868 = vmatprep.subr.mxu0 0.0
    %869 = vmatpush2.xpose.msra.mxu0 0.0
    %870 = vmatprep.subr.mxu0 0.0
    %871 = vmatpush2.xpose.msra.mxu0 0.0
    %872 = vmatprep.subr.mxu0 0.0
    %873 = vmatpush2.xpose.msra.mxu0 0.0
    %874 = vmatprep.subr.mxu0 0.0
    %875 = vmatpush2.xpose.msra.mxu0 0.0
    %876 = vmatprep.subr.mxu0 0.0
    %877 = vmatpush2.xpose.msra.mxu0 0.0
    %878 = vmatprep.subr.mxu0 0.0
    %879 = vmatpush2.xpose.msra.mxu0 0.0
    %880 = vmatprep.subr.mxu0 0.0
    %881 = vmatpush2.xpose.msra.mxu0 0.0
    %882 = vmatprep.subr.mxu0 0.0
    %883 = vmatpush2.xpose.msra.mxu0 0.0
    %884 = vmatprep.subr.mxu0 0.0
    %885 = vmatpush2.xpose.msra.mxu0 0.0
    %886 = vmatprep.subr.mxu0 0.0
    %887 = vmatpush2.xpose.msra.mxu0 0.0
    %888 = vmatprep.subr.mxu0 0.0
    %889 = vmatpush2.xpose.msra.mxu0 0.0
    %890 = vmatprep.subr.mxu0 0.0
    %891 = vmatpush2.xpose.msra.mxu0 0.0
    %892 = vmatprep.mubr.f32.mxu0 0.0
    %893 = vmatmul.mubr.f32.gmra.mxu0 %v824
    %v894 = vpop.f32.mrf.mxu0
    %v895 = vadd.f32 0.0, %v894
    %v896 = vpop.f32.mrf.mxu0
    %897 = vdwg.mxu0
    %v898 = vmul.f32 %v895, 0.35355338
    %v899 = vsel %vm416, %v898, -inf
    %900 = vmax.xlane.f32.xlu0 %v899
    %v901 = vpop.xlane.xlu0 %900
    %v902 = vsub.f32 %v898, %v901
    %v903 = vmul.f32 %v902, 1.442695
    %v904 = vpow.pop %v903
    %v905 = vsel %vm416, %v904, 0.0
    %906 = vadd.xlane.f32.xlu0 %v905
    %v907 = vpop.xlane.xlu0 %906
    %v908 = vrcp.pop %v907
    %v909 = vmul.f32 %v904, %v908
    %910 = vrot.lane.b32.xlu0 %v336, 48
    %v911 = vpop.permute.xlu0 %910
    %v913 = vsel %vm430, %v909, 0
    %v915 = vsel %vm434, %v911, 0
    %917 = vmatprep.subr.mxu0 0.0
    %918 = vmatpush1.msra.mxu0 0.0
    %919 = vmatprep.subr.mxu0 0.0
    %920 = vmatpush1.msra.mxu0 0.0
    %921 = vmatprep.subr.mxu0 0.0
    %922 = vmatpush1.msra.mxu0 0.0
    %923 = vmatprep.subr.mxu0 0.0
    %924 = vmatpush1.msra.mxu0 0.0
    %925 = vmatprep.subr.mxu0 0.0
    %926 = vmatpush1.msra.mxu0 0.0
    %927 = vmatprep.subr.mxu0 0.0
    %928 = vmatpush1.msra.mxu0 0.0
    %929 = vmatprep.subr.mxu0 0.0
    %930 = vmatpush1.msra.mxu0 0.0
    %931 = vmatprep.subr.mxu0 0.0
    %932 = vmatpush1.msra.mxu0 0.0
    %933 = vmatprep.subr.mxu0 0.0
    %934 = vmatpush1.msra.mxu0 0.0
    %935 = vmatprep.subr.mxu0 0.0
    %936 = vmatpush1.msra.mxu0 0.0
    %937 = vmatprep.subr.mxu0 0.0
    %938 = vmatpush1.msra.mxu0 0.0
    %939 = vmatprep.subr.mxu0 0.0
    %940 = vmatpush1.msra.mxu0 0.0
    %941 = vmatprep.subr.mxu0 0.0
    %942 = vmatpush1.msra.mxu0 0.0
    %943 = vmatprep.subr.mxu0 0.0
    %944 = vmatpush1.msra.mxu0 0.0
    %945 = vmatprep.subr.mxu0 0.0
    %946 = vmatpush1.msra.mxu0 0.0
    %947 = vmatprep.subr.mxu0 0.0
    %948 = vmatpush1.msra.mxu0 %v915
    %949 = vmatprep.subr.mxu0 0.0
    %950 = vmatpush2.msra.mxu0 0.0
    %951 = vmatprep.subr.mxu0 0.0
    %952 = vmatpush2.msra.mxu0 0.0
    %953 = vmatprep.subr.mxu0 0.0
    %954 = vmatpush2.msra.mxu0 0.0
    %955 = vmatprep.subr.mxu0 0.0
    %956 = vmatpush2.msra.mxu0 0.0
    %957 = vmatprep.subr.mxu0 0.0
    %958 = vmatpush2.msra.mxu0 0.0
    %959 = vmatprep.subr.mxu0 0.0
    %960 = vmatpush2.msra.mxu0 0.0
    %961 = vmatprep.subr.mxu0 0.0
    %962 = vmatpush2.msra.mxu0 0.0
    %963 = vmatprep.subr.mxu0 0.0
    %964 = vmatpush2.msra.mxu0 0.0
    %965 = vmatprep.subr.mxu0 0.0
    %966 = vmatpush2.msra.mxu0 0.0
    %967 = vmatprep.subr.mxu0 0.0
    %968 = vmatpush2.msra.mxu0 0.0
    %969 = vmatprep.subr.mxu0 0.0
    %970 = vmatpush2.msra.mxu0 0.0
    %971 = vmatprep.subr.mxu0 0.0
    %972 = vmatpush2.msra.mxu0 0.0
    %973 = vmatprep.subr.mxu0 0.0
    %974 = vmatpush2.msra.mxu0 0.0
    %975 = vmatprep.subr.mxu0 0.0
    %976 = vmatpush2.msra.mxu0 0.0
    %977 = vmatprep.subr.mxu0 0.0
    %978 = vmatpush2.msra.mxu0 0.0
    %979 = vmatprep.subr.mxu0 0.0
    %980 = vmatpush2.msra.mxu0 0.0
    %981 = vmatprep.mubr.f32.mxu0 0.0
    %982 = vmatmul.mubr.f32.gmra.mxu0 %v913
    %v983 = vpop.f32.mrf.mxu0
    %v984 = vadd.f32 0.0, %v983
    %v985 = vpop.f32.mrf.mxu0
    %986 = vdwg.mxu0
    %v988 = vsel %vm340, %v984, 0
    %990 = vmatprep.subr.mxu0 0.0
    %991 = vmatpush1.msra.mxu0 0.0
    %992 = vmatprep.subr.mxu0 0.0
    %993 = vmatpush1.msra.mxu0 0.0
    %994 = vmatprep.subr.mxu0 0.0
    %995 = vmatpush1.msra.mxu0 0.0
    %996 = vmatprep.subr.mxu0 0.0
    %997 = vmatpush1.msra.mxu0 0.0
    %998 = vmatprep.subr.mxu0 0.0
    %999 = vmatpush1.msra.mxu0 0.0
    %1000 = vmatprep.subr.mxu0 0.0
    %1001 = vmatpush1.msra.mxu0 0.0
    %1002 = vmatprep.subr.mxu0 0.0
    %1003 = vmatpush1.msra.mxu0 0.0
    %1004 = vmatprep.subr.mxu0 0.0
    %1005 = vmatpush1.msra.mxu0 0.0
    %1006 = vmatprep.subr.mxu0 0.0
    %1007 = vmatpush1.msra.mxu0 0.0
    %1008 = vmatprep.subr.mxu0 0.0
    %1009 = vmatpush1.msra.mxu0 0.0
    %1010 = vmatprep.subr.mxu0 0.0
    %1011 = vmatpush1.msra.mxu0 0.0
    %1012 = vmatprep.subr.mxu0 0.0
    %1013 = vmatpush1.msra.mxu0 0.0
    %1014 = vmatprep.subr.mxu0 0.0
    %1015 = vmatpush1.msra.mxu0 0.0
    %1016 = vmatprep.subr.mxu0 0.0
    %1017 = vmatpush1.msra.mxu0 0.0
    %1018 = vmatprep.subr.mxu0 0.0
    %1019 = vmatpush1.msra.mxu0 0.0
    %1020 = vmatprep.subr.mxu0 0.0
    %1021 = vmatpush1.msra.mxu0 %v334
    %1022 = vmatprep.subr.mxu0 0.0
    %1023 = vmatpush2.msra.mxu0 0.0
    %1024 = vmatprep.subr.mxu0 0.0
    %1025 = vmatpush2.msra.mxu0 0.0
    %1026 = vmatprep.subr.mxu0 0.0
    %1027 = vmatpush2.msra.mxu0 0.0
    %1028 = vmatprep.subr.mxu0 0.0
    %1029 = vmatpush2.msra.mxu0 0.0
    %1030 = vmatprep.subr.mxu0 0.0
    %1031 = vmatpush2.msra.mxu0 0.0
    %1032 = vmatprep.subr.mxu0 0.0
    %1033 = vmatpush2.msra.mxu0 0.0
    %1034 = vmatprep.subr.mxu0 0.0
    %1035 = vmatpush2.msra.mxu0 0.0
    %1036 = vmatprep.subr.mxu0 0.0
    %1037 = vmatpush2.msra.mxu0 0.0
    %1038 = vmatprep.subr.mxu0 0.0
    %1039 = vmatpush2.msra.mxu0 0.0
    %1040 = vmatprep.subr.mxu0 0.0
    %1041 = vmatpush2.msra.mxu0 0.0
    %1042 = vmatprep.subr.mxu0 0.0
    %1043 = vmatpush2.msra.mxu0 0.0
    %1044 = vmatprep.subr.mxu0 0.0
    %1045 = vmatpush2.msra.mxu0 0.0
    %1046 = vmatprep.subr.mxu0 0.0
    %1047 = vmatpush2.msra.mxu0 0.0
    %1048 = vmatprep.subr.mxu0 0.0
    %1049 = vmatpush2.msra.mxu0 0.0
    %1050 = vmatprep.subr.mxu0 0.0
    %1051 = vmatpush2.msra.mxu0 0.0
    %1052 = vmatprep.subr.mxu0 0.0
    %1053 = vmatpush2.msra.mxu0 0.0
    %1054 = vmatprep.mubr.f32.mxu0 0.0
    %1055 = vmatmul.mubr.f32.gmra.mxu0 %v988
    %v1056 = vpop.f32.mrf.mxu0
    %v1057 = vadd.f32 0.0, %v1056
    %v1058 = vpop.f32.mrf.mxu0
    %1059 = vdwg.mxu0
    %v1060 = vadd.f32 %v817, %v1057
    %1061 = vrot.lane.b32.xlu0 %v336, 104
    %v1062 = vpop.permute.xlu0 %1061
    %1063 = vrot.lane.b32.xlu0 %v336, 72
    %v1064 = vpop.permute.xlu0 %1063
    %v1065 = vsel %vm340, %v1062, 0
    %v1067 = vsel %vm340, %v1064, 0
    %1069 = vmatprep.subr.mxu0 0.0
    %1070 = vmatpush1.xpose.msra.mxu0 0.0
    %1071 = vmatprep.subr.mxu0 0.0
    %1072 = vmatpush1.xpose.msra.mxu0 0.0
    %1073 = vmatprep.subr.mxu0 0.0
    %1074 = vmatpush1.xpose.msra.mxu0 0.0
    %1075 = vmatprep.subr.mxu0 0.0
    %1076 = vmatpush1.xpose.msra.mxu0 0.0
    %1077 = vmatprep.subr.mxu0 0.0
    %1078 = vmatpush1.xpose.msra.mxu0 0.0
    %1079 = vmatprep.subr.mxu0 0.0
    %1080 = vmatpush1.xpose.msra.mxu0 0.0
    %1081 = vmatprep.subr.mxu0 0.0
    %1082 = vmatpush1.xpose.msra.mxu0 0.0
    %1083 = vmatprep.subr.mxu0 0.0
    %1084 = vmatpush1.xpose.msra.mxu0 0.0
    %1085 = vmatprep.subr.mxu0 0.0
    %1086 = vmatpush1.xpose.msra.mxu0 0.0
    %1087 = vmatprep.subr.mxu0 0.0
    %1088 = vmatpush1.xpose.msra.mxu0 0.0
    %1089 = vmatprep.subr.mxu0 0.0
    %1090 = vmatpush1.xpose.msra.mxu0 0.0
    %1091 = vmatprep.subr.mxu0 0.0
    %1092 = vmatpush1.xpose.msra.mxu0 0.0
    %1093 = vmatprep.subr.mxu0 0.0
    %1094 = vmatpush1.xpose.msra.mxu0 0.0
    %1095 = vmatprep.subr.mxu0 0.0
    %1096 = vmatpush1.xpose.msra.mxu0 0.0
    %1097 = vmatprep.subr.mxu0 0.0
    %1098 = vmatpush1.xpose.msra.mxu0 0.0
    %1099 = vmatprep.subr.mxu0 0.0
    %1100 = vmatpush1.xpose.msra.mxu0 %v1067
    %1101 = vmatprep.subr.mxu0 0.0
    %1102 = vmatpush2.xpose.msra.mxu0 0.0
    %1103 = vmatprep.subr.mxu0 0.0
    %1104 = vmatpush2.xpose.msra.mxu0 0.0
    %1105 = vmatprep.subr.mxu0 0.0
    %1106 = vmatpush2.xpose.msra.mxu0 0.0
    %1107 = vmatprep.subr.mxu0 0.0
    %1108 = vmatpush2.xpose.msra.mxu0 0.0
    %1109 = vmatprep.subr.mxu0 0.0
    %1110 = vmatpush2.xpose.msra.mxu0 0.0
    %1111 = vmatprep.subr.mxu0 0.0
    %1112 = vmatpush2.xpose.msra.mxu0 0.0
    %1113 = vmatprep.subr.mxu0 0.0
    %1114 = vmatpush2.xpose.msra.mxu0 0.0
    %1115 = vmatprep.subr.mxu0 0.0
    %1116 = vmatpush2.xpose.msra.mxu0 0.0
    %1117 = vmatprep.subr.mxu0 0.0
    %1118 = vmatpush2.xpose.msra.mxu0 0.0
    %1119 = vmatprep.subr.mxu0 0.0
    %1120 = vmatpush2.xpose.msra.mxu0 0.0
    %1121 = vmatprep.subr.mxu0 0.0
    %1122 = vmatpush2.xpose.msra.mxu0 0.0
    %1123 = vmatprep.subr.mxu0 0.0
    %1124 = vmatpush2.xpose.msra.mxu0 0.0
    %1125 = vmatprep.subr.mxu0 0.0
    %1126 = vmatpush2.xpose.msra.mxu0 0.0
    %1127 = vmatprep.subr.mxu0 0.0
    %1128 = vmatpush2.xpose.msra.mxu0 0.0
    %1129 = vmatprep.subr.mxu0 0.0
    %1130 = vmatpush2.xpose.msra.mxu0 0.0
    %1131 = vmatprep.subr.mxu0 0.0
    %1132 = vmatpush2.xpose.msra.mxu0 0.0
    %1133 = vmatprep.mubr.f32.mxu0 0.0
    %1134 = vmatmul.mubr.f32.gmra.mxu0 %v1065
    %v1135 = vpop.f32.mrf.mxu0
    %v1136 = vadd.f32 0.0, %v1135
    %v1137 = vpop.f32.mrf.mxu0
    %1138 = vdwg.mxu0
    %v1139 = vmul.f32 %v1136, 0.35355338
    %v1140 = vsel %vm416, %v1139, -inf
    %1141 = vmax.xlane.f32.xlu0 %v1140
    %v1142 = vpop.xlane.xlu0 %1141
    %v1143 = vsub.f32 %v1139, %v1142
    %v1144 = vmul.f32 %v1143, 1.442695
    %v1145 = vpow.pop %v1144
    %v1146 = vsel %vm416, %v1145, 0.0
    %1147 = vadd.xlane.f32.xlu0 %v1146
    %v1148 = vpop.xlane.xlu0 %1147
    %v1149 = vrcp.pop %v1148
    %v1150 = vmul.f32 %v1145, %v1149
    %1151 = vrot.lane.b32.xlu0 %v336, 40
    %v1152 = vpop.permute.xlu0 %1151
    %v1154 = vsel %vm430, %v1150, 0
    %v1156 = vsel %vm434, %v1152, 0
    %1158 = vmatprep.subr.mxu0 0.0
    %1159 = vmatpush1.msra.mxu0 0.0
    %1160 = vmatprep.subr.mxu0 0.0
    %1161 = vmatpush1.msra.mxu0 0.0
    %1162 = vmatprep.subr.mxu0 0.0
    %1163 = vmatpush1.msra.mxu0 0.0
    %1164 = vmatprep.subr.mxu0 0.0
    %1165 = vmatpush1.msra.mxu0 0.0
    %1166 = vmatprep.subr.mxu0 0.0
    %1167 = vmatpush1.msra.mxu0 0.0
    %1168 = vmatprep.subr.mxu0 0.0
    %1169 = vmatpush1.msra.mxu0 0.0
    %1170 = vmatprep.subr.mxu0 0.0
    %1171 = vmatpush1.msra.mxu0 0.0
    %1172 = vmatprep.subr.mxu0 0.0
    %1173 = vmatpush1.msra.mxu0 0.0
    %1174 = vmatprep.subr.mxu0 0.0
    %1175 = vmatpush1.msra.mxu0 0.0
    %1176 = vmatprep.subr.mxu0 0.0
    %1177 = vmatpush1.msra.mxu0 0.0
    %1178 = vmatprep.subr.mxu0 0.0
    %1179 = vmatpush1.msra.mxu0 0.0
    %1180 = vmatprep.subr.mxu0 0.0
    %1181 = vmatpush1.msra.mxu0 0.0
    %1182 = vmatprep.subr.mxu0 0.0
    %1183 = vmatpush1.msra.mxu0 0.0
    %1184 = vmatprep.subr.mxu0 0.0
    %1185 = vmatpush1.msra.mxu0 0.0
    %1186 = vmatprep.subr.mxu0 0.0
    %1187 = vmatpush1.msra.mxu0 0.0
    %1188 = vmatprep.subr.mxu0 0.0
    %1189 = vmatpush1.msra.mxu0 %v1156
    %1190 = vmatprep.subr.mxu0 0.0
    %1191 = vmatpush2.msra.mxu0 0.0
    %1192 = vmatprep.subr.mxu0 0.0
    %1193 = vmatpush2.msra.mxu0 0.0
    %1194 = vmatprep.subr.mxu0 0.0
    %1195 = vmatpush2.msra.mxu0 0.0
    %1196 = vmatprep.subr.mxu0 0.0
    %1197 = vmatpush2.msra.mxu0 0.0
    %1198 = vmatprep.subr.mxu0 0.0
    %1199 = vmatpush2.msra.mxu0 0.0
    %1200 = vmatprep.subr.mxu0 0.0
    %1201 = vmatpush2.msra.mxu0 0.0
    %1202 = vmatprep.subr.mxu0 0.0
    %1203 = vmatpush2.msra.mxu0 0.0
    %1204 = vmatprep.subr.mxu0 0.0
    %1205 = vmatpush2.msra.mxu0 0.0
    %1206 = vmatprep.subr.mxu0 0.0
    %1207 = vmatpush2.msra.mxu0 0.0
    %1208 = vmatprep.subr.mxu0 0.0
    %1209 = vmatpush2.msra.mxu0 0.0
    %1210 = vmatprep.subr.mxu0 0.0
    %1211 = vmatpush2.msra.mxu0 0.0
    %1212 = vmatprep.subr.mxu0 0.0
    %1213 = vmatpush2.msra.mxu0 0.0
    %1214 = vmatprep.subr.mxu0 0.0
    %1215 = vmatpush2.msra.mxu0 0.0
    %1216 = vmatprep.subr.mxu0 0.0
    %1217 = vmatpush2.msra.mxu0 0.0
    %1218 = vmatprep.subr.mxu0 0.0
    %1219 = vmatpush2.msra.mxu0 0.0
    %1220 = vmatprep.subr.mxu0 0.0
    %1221 = vmatpush2.msra.mxu0 0.0
    %1222 = vmatprep.mubr.f32.mxu0 0.0
    %1223 = vmatmul.mubr.f32.gmra.mxu0 %v1154
    %v1224 = vpop.f32.mrf.mxu0
    %v1225 = vadd.f32 0.0, %v1224
    %v1226 = vpop.f32.mrf.mxu0
    %1227 = vdwg.mxu0
    %v1229 = vsel %vm340, %v1225, 0
    %1231 = vmatprep.subr.mxu0 0.0
    %1232 = vmatpush1.msra.mxu0 0.0
    %1233 = vmatprep.subr.mxu0 0.0
    %1234 = vmatpush1.msra.mxu0 0.0
    %1235 = vmatprep.subr.mxu0 0.0
    %1236 = vmatpush1.msra.mxu0 0.0
    %1237 = vmatprep.subr.mxu0 0.0
    %1238 = vmatpush1.msra.mxu0 0.0
    %1239 = vmatprep.subr.mxu0 0.0
    %1240 = vmatpush1.msra.mxu0 0.0
    %1241 = vmatprep.subr.mxu0 0.0
    %1242 = vmatpush1.msra.mxu0 0.0
    %1243 = vmatprep.subr.mxu0 0.0
    %1244 = vmatpush1.msra.mxu0 0.0
    %1245 = vmatprep.subr.mxu0 0.0
    %1246 = vmatpush1.msra.mxu0 0.0
    %1247 = vmatprep.subr.mxu0 0.0
    %1248 = vmatpush1.msra.mxu0 0.0
    %1249 = vmatprep.subr.mxu0 0.0
    %1250 = vmatpush1.msra.mxu0 0.0
    %1251 = vmatprep.subr.mxu0 0.0
    %1252 = vmatpush1.msra.mxu0 0.0
    %1253 = vmatprep.subr.mxu0 0.0
    %1254 = vmatpush1.msra.mxu0 0.0
    %1255 = vmatprep.subr.mxu0 0.0
    %1256 = vmatpush1.msra.mxu0 0.0
    %1257 = vmatprep.subr.mxu0 0.0
    %1258 = vmatpush1.msra.mxu0 0.0
    %1259 = vmatprep.subr.mxu0 0.0
    %1260 = vmatpush1.msra.mxu0 0.0
    %1261 = vmatprep.subr.mxu0 0.0
    %1262 = vmatpush1.msra.mxu0 %v335
    %1263 = vmatprep.subr.mxu0 0.0
    %1264 = vmatpush2.msra.mxu0 0.0
    %1265 = vmatprep.subr.mxu0 0.0
    %1266 = vmatpush2.msra.mxu0 0.0
    %1267 = vmatprep.subr.mxu0 0.0
    %1268 = vmatpush2.msra.mxu0 0.0
    %1269 = vmatprep.subr.mxu0 0.0
    %1270 = vmatpush2.msra.mxu0 0.0
    %1271 = vmatprep.subr.mxu0 0.0
    %1272 = vmatpush2.msra.mxu0 0.0
    %1273 = vmatprep.subr.mxu0 0.0
    %1274 = vmatpush2.msra.mxu0 0.0
    %1275 = vmatprep.subr.mxu0 0.0
    %1276 = vmatpush2.msra.mxu0 0.0
    %1277 = vmatprep.subr.mxu0 0.0
    %1278 = vmatpush2.msra.mxu0 0.0
    %1279 = vmatprep.subr.mxu0 0.0
    %1280 = vmatpush2.msra.mxu0 0.0
    %1281 = vmatprep.subr.mxu0 0.0
    %1282 = vmatpush2.msra.mxu0 0.0
    %1283 = vmatprep.subr.mxu0 0.0
    %1284 = vmatpush2.msra.mxu0 0.0
    %1285 = vmatprep.subr.mxu0 0.0
    %1286 = vmatpush2.msra.mxu0 0.0
    %1287 = vmatprep.subr.mxu0 0.0
    %1288 = vmatpush2.msra.mxu0 0.0
    %1289 = vmatprep.subr.mxu0 0.0
    %1290 = vmatpush2.msra.mxu0 0.0
    %1291 = vmatprep.subr.mxu0 0.0
    %1292 = vmatpush2.msra.mxu0 0.0
    %1293 = vmatprep.subr.mxu0 0.0
    %1294 = vmatpush2.msra.mxu0 0.0
    %1295 = vmatprep.mubr.f32.mxu0 0.0
    %1296 = vmatmul.mubr.f32.gmra.mxu0 %v1229
    %v1297 = vpop.f32.mrf.mxu0
    %v1298 = vadd.f32 0.0, %v1297
    %v1299 = vpop.f32.mrf.mxu0
    %1300 = vdwg.mxu0
    %v1301 = vadd.f32 %v1060, %v1298
    %v1302 = vld [vmem:[#allocation2] sm:$0x1f]
    %v1303 = vadd.f32 %v1302, %v1301
    %v1304 = vld [vmem:[%s8] sm:$0x1]
    %v1306 = vlaneseq
    %v1307 = vshrl.u32 %v1306, 7
    %v1308 = vsub.s32 0, %v1307
    %v1309 = vrot.slane %v1304, %v1308
    %v1311 = vadd.f32 %v1303, %v1309
    %vm1312 = vcmask 258048
    %1313 = vst.msk [vmem:[#allocation2] sm:$0x1f] %vm1312, %v1311
    %v1314 = vld [vmem:[#allocation3 + $0x5] sm:$0x1f]
    %1316 = vrot.lane.b32.xlu0 %v1314, 96
    %v1317 = vpop.permute.xlu0 %1316
    %v1318 = vsel %vm340, %v1314, 0
    %v1320 = vsel %vm340, %v1317, 0
    %1322 = vmatprep.subr.mxu0 0.0
    %1323 = vmatpush1.xpose.msra.mxu0 0.0
    %1324 = vmatprep.subr.mxu0 0.0
    %1325 = vmatpush1.xpose.msra.mxu0 0.0
    %1326 = vmatprep.subr.mxu0 0.0
    %1327 = vmatpush1.xpose.msra.mxu0 0.0
    %1328 = vmatprep.subr.mxu0 0.0
    %1329 = vmatpush1.xpose.msra.mxu0 0.0
    %1330 = vmatprep.subr.mxu0 0.0
    %1331 = vmatpush1.xpose.msra.mxu0 0.0
    %1332 = vmatprep.subr.mxu0 0.0
    %1333 = vmatpush1.xpose.msra.mxu0 0.0
    %1334 = vmatprep.subr.mxu0 0.0
    %1335 = vmatpush1.xpose.msra.mxu0 0.0
    %1336 = vmatprep.subr.mxu0 0.0
    %1337 = vmatpush1.xpose.msra.mxu0 0.0
    %1338 = vmatprep.subr.mxu0 0.0
    %1339 = vmatpush1.xpose.msra.mxu0 0.0
    %1340 = vmatprep.subr.mxu0 0.0
    %1341 = vmatpush1.xpose.msra.mxu0 0.0
    %1342 = vmatprep.subr.mxu0 0.0
    %1343 = vmatpush1.xpose.msra.mxu0 0.0
    %1344 = vmatprep.subr.mxu0 0.0
    %1345 = vmatpush1.xpose.msra.mxu0 0.0
    %1346 = vmatprep.subr.mxu0 0.0
    %1347 = vmatpush1.xpose.msra.mxu0 0.0
    %1348 = vmatprep.subr.mxu0 0.0
    %1349 = vmatpush1.xpose.msra.mxu0 0.0
    %1350 = vmatprep.subr.mxu0 0.0
    %1351 = vmatpush1.xpose.msra.mxu0 0.0
    %1352 = vmatprep.subr.mxu0 0.0
    %1353 = vmatpush1.xpose.msra.mxu0 %v1320
    %1354 = vmatprep.subr.mxu0 0.0
    %1355 = vmatpush2.xpose.msra.mxu0 0.0
    %1356 = vmatprep.subr.mxu0 0.0
    %1357 = vmatpush2.xpose.msra.mxu0 0.0
    %1358 = vmatprep.subr.mxu0 0.0
    %1359 = vmatpush2.xpose.msra.mxu0 0.0
    %1360 = vmatprep.subr.mxu0 0.0
    %1361 = vmatpush2.xpose.msra.mxu0 0.0
    %1362 = vmatprep.subr.mxu0 0.0
    %1363 = vmatpush2.xpose.msra.mxu0 0.0
    %1364 = vmatprep.subr.mxu0 0.0
    %1365 = vmatpush2.xpose.msra.mxu0 0.0
    %1366 = vmatprep.subr.mxu0 0.0
    %1367 = vmatpush2.xpose.msra.mxu0 0.0
    %1368 = vmatprep.subr.mxu0 0.0
    %1369 = vmatpush2.xpose.msra.mxu0 0.0
    %1370 = vmatprep.subr.mxu0 0.0
    %1371 = vmatpush2.xpose.msra.mxu0 0.0
    %1372 = vmatprep.subr.mxu0 0.0
    %1373 = vmatpush2.xpose.msra.mxu0 0.0
    %1374 = vmatprep.subr.mxu0 0.0
    %1375 = vmatpush2.xpose.msra.mxu0 0.0
    %1376 = vmatprep.subr.mxu0 0.0
    %1377 = vmatpush2.xpose.msra.mxu0 0.0
    %1378 = vmatprep.subr.mxu0 0.0
    %1379 = vmatpush2.xpose.msra.mxu0 0.0
    %1380 = vmatprep.subr.mxu0 0.0
    %1381 = vmatpush2.xpose.msra.mxu0 0.0
    %1382 = vmatprep.subr.mxu0 0.0
    %1383 = vmatpush2.xpose.msra.mxu0 0.0
    %1384 = vmatprep.subr.mxu0 0.0
    %1385 = vmatpush2.xpose.msra.mxu0 0.0
    %1386 = vmatprep.mubr.f32.mxu0 0.0
    %1387 = vmatmul.mubr.f32.gmra.mxu0 %v1318
    %v1388 = vpop.f32.mrf.mxu0
    %v1389 = vadd.f32 0.0, %v1388
    %v1390 = vpop.f32.mrf.mxu0
    %1391 = vdwg.mxu0
    %v1392 = vmul.f32 %v1389, 0.35355338
    %v1393 = vsel %vm416, %v1392, -inf
    %1394 = vmax.xlane.f32.xlu0 %v1393
    %v1395 = vpop.xlane.xlu0 %1394
    %v1396 = vsub.f32 %v1392, %v1395
    %v1397 = vmul.f32 %v1396, 1.442695
    %v1398 = vpow.pop %v1397
    %v1399 = vsel %vm416, %v1398, 0.0
    %1400 = vadd.xlane.f32.xlu0 %v1399
    %v1401 = vpop.xlane.xlu0 %1400
    %v1402 = vrcp.pop %v1401
    %v1403 = vmul.f32 %v1398, %v1402
    %1404 = vrot.lane.b32.xlu0 %v1314, 64
    %v1405 = vpop.permute.xlu0 %1404
    %v1407 = vsel %vm430, %v1403, 0
    %v1409 = vsel %vm434, %v1405, 0
    %1411 = vmatprep.subr.mxu0 0.0
    %1412 = vmatpush1.msra.mxu0 0.0
    %1413 = vmatprep.subr.mxu0 0.0
    %1414 = vmatpush1.msra.mxu0 0.0
    %1415 = vmatprep.subr.mxu0 0.0
    %1416 = vmatpush1.msra.mxu0 0.0
    %1417 = vmatprep.subr.mxu0 0.0
    %1418 = vmatpush1.msra.mxu0 0.0
    %1419 = vmatprep.subr.mxu0 0.0
    %1420 = vmatpush1.msra.mxu0 0.0
    %1421 = vmatprep.subr.mxu0 0.0
    %1422 = vmatpush1.msra.mxu0 0.0
    %1423 = vmatprep.subr.mxu0 0.0
    %1424 = vmatpush1.msra.mxu0 0.0
    %1425 = vmatprep.subr.mxu0 0.0
    %1426 = vmatpush1.msra.mxu0 0.0
    %1427 = vmatprep.subr.mxu0 0.0
    %1428 = vmatpush1.msra.mxu0 0.0
    %1429 = vmatprep.subr.mxu0 0.0
    %1430 = vmatpush1.msra.mxu0 0.0
    %1431 = vmatprep.subr.mxu0 0.0
    %1432 = vmatpush1.msra.mxu0 0.0
    %1433 = vmatprep.subr.mxu0 0.0
    %1434 = vmatpush1.msra.mxu0 0.0
    %1435 = vmatprep.subr.mxu0 0.0
    %1436 = vmatpush1.msra.mxu0 0.0
    %1437 = vmatprep.subr.mxu0 0.0
    %1438 = vmatpush1.msra.mxu0 0.0
    %1439 = vmatprep.subr.mxu0 0.0
    %1440 = vmatpush1.msra.mxu0 0.0
    %1441 = vmatprep.subr.mxu0 0.0
    %1442 = vmatpush1.msra.mxu0 %v1409
    %1443 = vmatprep.subr.mxu0 0.0
    %1444 = vmatpush2.msra.mxu0 0.0
    %1445 = vmatprep.subr.mxu0 0.0
    %1446 = vmatpush2.msra.mxu0 0.0
    %1447 = vmatprep.subr.mxu0 0.0
    %1448 = vmatpush2.msra.mxu0 0.0
    %1449 = vmatprep.subr.mxu0 0.0
    %1450 = vmatpush2.msra.mxu0 0.0
    %1451 = vmatprep.subr.mxu0 0.0
    %1452 = vmatpush2.msra.mxu0 0.0
    %1453 = vmatprep.subr.mxu0 0.0
    %1454 = vmatpush2.msra.mxu0 0.0
    %1455 = vmatprep.subr.mxu0 0.0
    %1456 = vmatpush2.msra.mxu0 0.0
    %1457 = vmatprep.subr.mxu0 0.0
    %1458 = vmatpush2.msra.mxu0 0.0
    %1459 = vmatprep.subr.mxu0 0.0
    %1460 = vmatpush2.msra.mxu0 0.0
    %1461 = vmatprep.subr.mxu0 0.0
    %1462 = vmatpush2.msra.mxu0 0.0
    %1463 = vmatprep.subr.mxu0 0.0
    %1464 = vmatpush2.msra.mxu0 0.0
    %1465 = vmatprep.subr.mxu0 0.0
    %1466 = vmatpush2.msra.mxu0 0.0
    %1467 = vmatprep.subr.mxu0 0.0
    %1468 = vmatpush2.msra.mxu0 0.0
    %1469 = vmatprep.subr.mxu0 0.0
    %1470 = vmatpush2.msra.mxu0 0.0
    %1471 = vmatprep.subr.mxu0 0.0
    %1472 = vmatpush2.msra.mxu0 0.0
    %1473 = vmatprep.subr.mxu0 0.0
    %1474 = vmatpush2.msra.mxu0 0.0
    %1475 = vmatprep.mubr.f32.mxu0 0.0
    %1476 = vmatmul.mubr.f32.gmra.mxu0 %v1407
    %v1477 = vpop.f32.mrf.mxu0
    %v1478 = vadd.f32 0.0, %v1477
    %v1479 = vpop.f32.mrf.mxu0
    %1480 = vdwg.mxu0
    %1481 = vrot.lane.b32.xlu0 %v1314, 120
    %v1482 = vpop.permute.xlu0 %1481
    %1483 = vrot.lane.b32.xlu0 %v1314, 88
    %v1484 = vpop.permute.xlu0 %1483
    %v1485 = vsel %vm340, %v1482, 0
    %v1487 = vsel %vm340, %v1484, 0
    %1489 = vmatprep.subr.mxu0 0.0
    %1490 = vmatpush1.xpose.msra.mxu0 0.0
    %1491 = vmatprep.subr.mxu0 0.0
    %1492 = vmatpush1.xpose.msra.mxu0 0.0
    %1493 = vmatprep.subr.mxu0 0.0
    %1494 = vmatpush1.xpose.msra.mxu0 0.0
    %1495 = vmatprep.subr.mxu0 0.0
    %1496 = vmatpush1.xpose.msra.mxu0 0.0
    %1497 = vmatprep.subr.mxu0 0.0
    %1498 = vmatpush1.xpose.msra.mxu0 0.0
    %1499 = vmatprep.subr.mxu0 0.0
    %1500 = vmatpush1.xpose.msra.mxu0 0.0
    %1501 = vmatprep.subr.mxu0 0.0
    %1502 = vmatpush1.xpose.msra.mxu0 0.0
    %1503 = vmatprep.subr.mxu0 0.0
    %1504 = vmatpush1.xpose.msra.mxu0 0.0
    %1505 = vmatprep.subr.mxu0 0.0
    %1506 = vmatpush1.xpose.msra.mxu0 0.0
    %1507 = vmatprep.subr.mxu0 0.0
    %1508 = vmatpush1.xpose.msra.mxu0 0.0
    %1509 = vmatprep.subr.mxu0 0.0
    %1510 = vmatpush1.xpose.msra.mxu0 0.0
    %1511 = vmatprep.subr.mxu0 0.0
    %1512 = vmatpush1.xpose.msra.mxu0 0.0
    %1513 = vmatprep.subr.mxu0 0.0
    %1514 = vmatpush1.xpose.msra.mxu0 0.0
    %1515 = vmatprep.subr.mxu0 0.0
    %1516 = vmatpush1.xpose.msra.mxu0 0.0
    %1517 = vmatprep.subr.mxu0 0.0
    %1518 = vmatpush1.xpose.msra.mxu0 0.0
    %1519 = vmatprep.subr.mxu0 0.0
    %1520 = vmatpush1.xpose.msra.mxu0 %v1487
    %1521 = vmatprep.subr.mxu0 0.0
    %1522 = vmatpush2.xpose.msra.mxu0 0.0
    %1523 = vmatprep.subr.mxu0 0.0
    %1524 = vmatpush2.xpose.msra.mxu0 0.0
    %1525 = vmatprep.subr.mxu0 0.0
    %1526 = vmatpush2.xpose.msra.mxu0 0.0
    %1527 = vmatprep.subr.mxu0 0.0
    %1528 = vmatpush2.xpose.msra.mxu0 0.0
    %1529 = vmatprep.subr.mxu0 0.0
    %1530 = vmatpush2.xpose.msra.mxu0 0.0
    %1531 = vmatprep.subr.mxu0 0.0
    %1532 = vmatpush2.xpose.msra.mxu0 0.0
    %1533 = vmatprep.subr.mxu0 0.0
    %1534 = vmatpush2.xpose.msra.mxu0 0.0
    %1535 = vmatprep.subr.mxu0 0.0
    %1536 = vmatpush2.xpose.msra.mxu0 0.0
    %1537 = vmatprep.subr.mxu0 0.0
    %1538 = vmatpush2.xpose.msra.mxu0 0.0
    %1539 = vmatprep.subr.mxu0 0.0
    %1540 = vmatpush2.xpose.msra.mxu0 0.0
    %1541 = vmatprep.subr.mxu0 0.0
    %1542 = vmatpush2.xpose.msra.mxu0 0.0
    %1543 = vmatprep.subr.mxu0 0.0
    %1544 = vmatpush2.xpose.msra.mxu0 0.0
    %1545 = vmatprep.subr.mxu0 0.0
    %1546 = vmatpush2.xpose.msra.mxu0 0.0
    %1547 = vmatprep.subr.mxu0 0.0
    %1548 = vmatpush2.xpose.msra.mxu0 0.0
    %1549 = vmatprep.subr.mxu0 0.0
    %1550 = vmatpush2.xpose.msra.mxu0 0.0
    %1551 = vmatprep.subr.mxu0 0.0
    %1552 = vmatpush2.xpose.msra.mxu0 0.0
    %1553 = vmatprep.mubr.f32.mxu0 0.0
    %1554 = vmatmul.mubr.f32.gmra.mxu0 %v1485
    %v1555 = vpop.f32.mrf.mxu0
    %v1556 = vadd.f32 0.0, %v1555
    %v1557 = vpop.f32.mrf.mxu0
    %1558 = vdwg.mxu0
    %v1559 = vmul.f32 %v1556, 0.35355338
    %v1560 = vsel %vm416, %v1559, -inf
    %1561 = vmax.xlane.f32.xlu0 %v1560
    %v1562 = vpop.xlane.xlu0 %1561
    %v1563 = vsub.f32 %v1559, %v1562
    %v1564 = vmul.f32 %v1563, 1.442695
    %v1565 = vpow.pop %v1564
    %v1566 = vsel %vm416, %v1565, 0.0
    %1567 = vadd.xlane.f32.xlu0 %v1566
    %v1568 = vpop.xlane.xlu0 %1567
    %v1569 = vrcp.pop %v1568
    %v1570 = vmul.f32 %v1565, %v1569
    %1571 = vrot.lane.b32.xlu0 %v1314, 56
    %v1572 = vpop.permute.xlu0 %1571
    %v1574 = vsel %vm430, %v1570, 0
    %v1576 = vsel %vm434, %v1572, 0
    %1578 = vmatprep.subr.mxu0 0.0
    %1579 = vmatpush1.msra.mxu0 0.0
    %1580 = vmatprep.subr.mxu0 0.0
    %1581 = vmatpush1.msra.mxu0 0.0
    %1582 = vmatprep.subr.mxu0 0.0
    %1583 = vmatpush1.msra.mxu0 0.0
    %1584 = vmatprep.subr.mxu0 0.0
    %1585 = vmatpush1.msra.mxu0 0.0
    %1586 = vmatprep.subr.mxu0 0.0
    %1587 = vmatpush1.msra.mxu0 0.0
    %1588 = vmatprep.subr.mxu0 0.0
    %1589 = vmatpush1.msra.mxu0 0.0
    %1590 = vmatprep.subr.mxu0 0.0
    %1591 = vmatpush1.msra.mxu0 0.0
    %1592 = vmatprep.subr.mxu0 0.0
    %1593 = vmatpush1.msra.mxu0 0.0
    %1594 = vmatprep.subr.mxu0 0.0
    %1595 = vmatpush1.msra.mxu0 0.0
    %1596 = vmatprep.subr.mxu0 0.0
    %1597 = vmatpush1.msra.mxu0 0.0
    %1598 = vmatprep.subr.mxu0 0.0
    %1599 = vmatpush1.msra.mxu0 0.0
    %1600 = vmatprep.subr.mxu0 0.0
    %1601 = vmatpush1.msra.mxu0 0.0
    %1602 = vmatprep.subr.mxu0 0.0
    %1603 = vmatpush1.msra.mxu0 0.0
    %1604 = vmatprep.subr.mxu0 0.0
    %1605 = vmatpush1.msra.mxu0 0.0
    %1606 = vmatprep.subr.mxu0 0.0
    %1607 = vmatpush1.msra.mxu0 0.0
    %1608 = vmatprep.subr.mxu0 0.0
    %1609 = vmatpush1.msra.mxu0 %v1576
    %1610 = vmatprep.subr.mxu0 0.0
    %1611 = vmatpush2.msra.mxu0 0.0
    %1612 = vmatprep.subr.mxu0 0.0
    %1613 = vmatpush2.msra.mxu0 0.0
    %1614 = vmatprep.subr.mxu0 0.0
    %1615 = vmatpush2.msra.mxu0 0.0
    %1616 = vmatprep.subr.mxu0 0.0
    %1617 = vmatpush2.msra.mxu0 0.0
    %1618 = vmatprep.subr.mxu0 0.0
    %1619 = vmatpush2.msra.mxu0 0.0
    %1620 = vmatprep.subr.mxu0 0.0
    %1621 = vmatpush2.msra.mxu0 0.0
    %1622 = vmatprep.subr.mxu0 0.0
    %1623 = vmatpush2.msra.mxu0 0.0
    %1624 = vmatprep.subr.mxu0 0.0
    %1625 = vmatpush2.msra.mxu0 0.0
    %1626 = vmatprep.subr.mxu0 0.0
    %1627 = vmatpush2.msra.mxu0 0.0
    %1628 = vmatprep.subr.mxu0 0.0
    %1629 = vmatpush2.msra.mxu0 0.0
    %1630 = vmatprep.subr.mxu0 0.0
    %1631 = vmatpush2.msra.mxu0 0.0
    %1632 = vmatprep.subr.mxu0 0.0
    %1633 = vmatpush2.msra.mxu0 0.0
    %1634 = vmatprep.subr.mxu0 0.0
    %1635 = vmatpush2.msra.mxu0 0.0
    %1636 = vmatprep.subr.mxu0 0.0
    %1637 = vmatpush2.msra.mxu0 0.0
    %1638 = vmatprep.subr.mxu0 0.0
    %1639 = vmatpush2.msra.mxu0 0.0
    %1640 = vmatprep.subr.mxu0 0.0
    %1641 = vmatpush2.msra.mxu0 0.0
    %1642 = vmatprep.mubr.f32.mxu0 0.0
    %1643 = vmatmul.mubr.f32.gmra.mxu0 %v1574
    %v1644 = vpop.f32.mrf.mxu0
    %v1645 = vadd.f32 0.0, %v1644
    %v1646 = vpop.f32.mrf.mxu0
    %1647 = vdwg.mxu0
    %v1649 = vsel %vm340, %v1645, 0
    %1651 = vmatprep.subr.mxu0 0.0
    %1652 = vmatpush1.msra.mxu0 0.0
    %1653 = vmatprep.subr.mxu0 0.0
    %1654 = vmatpush1.msra.mxu0 0.0
    %1655 = vmatprep.subr.mxu0 0.0
    %1656 = vmatpush1.msra.mxu0 0.0
    %1657 = vmatprep.subr.mxu0 0.0
    %1658 = vmatpush1.msra.mxu0 0.0
    %1659 = vmatprep.subr.mxu0 0.0
    %1660 = vmatpush1.msra.mxu0 0.0
    %1661 = vmatprep.subr.mxu0 0.0
    %1662 = vmatpush1.msra.mxu0 0.0
    %1663 = vmatprep.subr.mxu0 0.0
    %1664 = vmatpush1.msra.mxu0 0.0
    %1665 = vmatprep.subr.mxu0 0.0
    %1666 = vmatpush1.msra.mxu0 0.0
    %1667 = vmatprep.subr.mxu0 0.0
    %1668 = vmatpush1.msra.mxu0 0.0
    %1669 = vmatprep.subr.mxu0 0.0
    %1670 = vmatpush1.msra.mxu0 0.0
    %1671 = vmatprep.subr.mxu0 0.0
    %1672 = vmatpush1.msra.mxu0 0.0
    %1673 = vmatprep.subr.mxu0 0.0
    %1674 = vmatpush1.msra.mxu0 0.0
    %1675 = vmatprep.subr.mxu0 0.0
    %1676 = vmatpush1.msra.mxu0 0.0
    %1677 = vmatprep.subr.mxu0 0.0
    %1678 = vmatpush1.msra.mxu0 0.0
    %1679 = vmatprep.subr.mxu0 0.0
    %1680 = vmatpush1.msra.mxu0 0.0
    %1681 = vmatprep.subr.mxu0 0.0
    %1682 = vmatpush1.msra.mxu0 %v333
    %1683 = vmatprep.subr.mxu0 0.0
    %1684 = vmatpush2.msra.mxu0 0.0
    %1685 = vmatprep.subr.mxu0 0.0
    %1686 = vmatpush2.msra.mxu0 0.0
    %1687 = vmatprep.subr.mxu0 0.0
    %1688 = vmatpush2.msra.mxu0 0.0
    %1689 = vmatprep.subr.mxu0 0.0
    %1690 = vmatpush2.msra.mxu0 0.0
    %1691 = vmatprep.subr.mxu0 0.0
    %1692 = vmatpush2.msra.mxu0 0.0
    %1693 = vmatprep.subr.mxu0 0.0
    %1694 = vmatpush2.msra.mxu0 0.0
    %1695 = vmatprep.subr.mxu0 0.0
    %1696 = vmatpush2.msra.mxu0 0.0
    %1697 = vmatprep.subr.mxu0 0.0
    %1698 = vmatpush2.msra.mxu0 0.0
    %1699 = vmatprep.subr.mxu0 0.0
    %1700 = vmatpush2.msra.mxu0 0.0
    %1701 = vmatprep.subr.mxu0 0.0
    %1702 = vmatpush2.msra.mxu0 0.0
    %1703 = vmatprep.subr.mxu0 0.0
    %1704 = vmatpush2.msra.mxu0 0.0
    %1705 = vmatprep.subr.mxu0 0.0
    %1706 = vmatpush2.msra.mxu0 0.0
    %1707 = vmatprep.subr.mxu0 0.0
    %1708 = vmatpush2.msra.mxu0 0.0
    %1709 = vmatprep.subr.mxu0 0.0
    %1710 = vmatpush2.msra.mxu0 0.0
    %1711 = vmatprep.subr.mxu0 0.0
    %1712 = vmatpush2.msra.mxu0 0.0
    %1713 = vmatprep.subr.mxu0 0.0
    %1714 = vmatpush2.msra.mxu0 0.0
    %1715 = vmatprep.mubr.f32.mxu0 0.0
    %1716 = vmatmul.mubr.f32.gmra.mxu0 %v1649
    %v1717 = vpop.f32.mrf.mxu0
    %v1718 = vadd.f32 0.0, %v1717
    %v1719 = vpop.f32.mrf.mxu0
    %1720 = vdwg.mxu0
    %v1722 = vsel %vm340, %v1478, 0
    %1724 = vmatprep.subr.mxu0 0.0
    %1725 = vmatpush1.msra.mxu0 0.0
    %1726 = vmatprep.subr.mxu0 0.0
    %1727 = vmatpush1.msra.mxu0 0.0
    %1728 = vmatprep.subr.mxu0 0.0
    %1729 = vmatpush1.msra.mxu0 0.0
    %1730 = vmatprep.subr.mxu0 0.0
    %1731 = vmatpush1.msra.mxu0 0.0
    %1732 = vmatprep.subr.mxu0 0.0
    %1733 = vmatpush1.msra.mxu0 0.0
    %1734 = vmatprep.subr.mxu0 0.0
    %1735 = vmatpush1.msra.mxu0 0.0
    %1736 = vmatprep.subr.mxu0 0.0
    %1737 = vmatpush1.msra.mxu0 0.0
    %1738 = vmatprep.subr.mxu0 0.0
    %1739 = vmatpush1.msra.mxu0 0.0
    %1740 = vmatprep.subr.mxu0 0.0
    %1741 = vmatpush1.msra.mxu0 0.0
    %1742 = vmatprep.subr.mxu0 0.0
    %1743 = vmatpush1.msra.mxu0 0.0
    %1744 = vmatprep.subr.mxu0 0.0
    %1745 = vmatpush1.msra.mxu0 0.0
    %1746 = vmatprep.subr.mxu0 0.0
    %1747 = vmatpush1.msra.mxu0 0.0
    %1748 = vmatprep.subr.mxu0 0.0
    %1749 = vmatpush1.msra.mxu0 0.0
    %1750 = vmatprep.subr.mxu0 0.0
    %1751 = vmatpush1.msra.mxu0 0.0
    %1752 = vmatprep.subr.mxu0 0.0
    %1753 = vmatpush1.msra.mxu0 0.0
    %1754 = vmatprep.subr.mxu0 0.0
    %1755 = vmatpush1.msra.mxu0 %v332
    %1756 = vmatprep.subr.mxu0 0.0
    %1757 = vmatpush2.msra.mxu0 0.0
    %1758 = vmatprep.subr.mxu0 0.0
    %1759 = vmatpush2.msra.mxu0 0.0
    %1760 = vmatprep.subr.mxu0 0.0
    %1761 = vmatpush2.msra.mxu0 0.0
    %1762 = vmatprep.subr.mxu0 0.0
    %1763 = vmatpush2.msra.mxu0 0.0
    %1764 = vmatprep.subr.mxu0 0.0
    %1765 = vmatpush2.msra.mxu0 0.0
    %1766 = vmatprep.subr.mxu0 0.0
    %1767 = vmatpush2.msra.mxu0 0.0
    %1768 = vmatprep.subr.mxu0 0.0
    %1769 = vmatpush2.msra.mxu0 0.0
    %1770 = vmatprep.subr.mxu0 0.0
    %1771 = vmatpush2.msra.mxu0 0.0
    %1772 = vmatprep.subr.mxu0 0.0
    %1773 = vmatpush2.msra.mxu0 0.0
    %1774 = vmatprep.subr.mxu0 0.0
    %1775 = vmatpush2.msra.mxu0 0.0
    %1776 = vmatprep.subr.mxu0 0.0
    %1777 = vmatpush2.msra.mxu0 0.0
    %1778 = vmatprep.subr.mxu0 0.0
    %1779 = vmatpush2.msra.mxu0 0.0
    %1780 = vmatprep.subr.mxu0 0.0
    %1781 = vmatpush2.msra.mxu0 0.0
    %1782 = vmatprep.subr.mxu0 0.0
    %1783 = vmatpush2.msra.mxu0 0.0
    %1784 = vmatprep.subr.mxu0 0.0
    %1785 = vmatpush2.msra.mxu0 0.0
    %1786 = vmatprep.subr.mxu0 0.0
    %1787 = vmatpush2.msra.mxu0 0.0
    %1788 = vmatprep.mubr.f32.mxu0 0.0
    %1789 = vmatmul.mubr.f32.gmra.mxu0 %v1722
    %v1790 = vpop.f32.mrf.mxu0
    %v1791 = vadd.f32 %v1718, %v1790
    %v1792 = vpop.f32.mrf.mxu0
    %1793 = vdwg.mxu0
    %1794 = vrot.lane.b32.xlu0 %v1314, 112
    %v1795 = vpop.permute.xlu0 %1794
    %1796 = vrot.lane.b32.xlu0 %v1314, 80
    %v1797 = vpop.permute.xlu0 %1796
    %v1798 = vsel %vm340, %v1795, 0
    %v1800 = vsel %vm340, %v1797, 0
    %1802 = vmatprep.subr.mxu0 0.0
    %1803 = vmatpush1.xpose.msra.mxu0 0.0
    %1804 = vmatprep.subr.mxu0 0.0
    %1805 = vmatpush1.xpose.msra.mxu0 0.0
    %1806 = vmatprep.subr.mxu0 0.0
    %1807 = vmatpush1.xpose.msra.mxu0 0.0
    %1808 = vmatprep.subr.mxu0 0.0
    %1809 = vmatpush1.xpose.msra.mxu0 0.0
    %1810 = vmatprep.subr.mxu0 0.0
    %1811 = vmatpush1.xpose.msra.mxu0 0.0
    %1812 = vmatprep.subr.mxu0 0.0
    %1813 = vmatpush1.xpose.msra.mxu0 0.0
    %1814 = vmatprep.subr.mxu0 0.0
    %1815 = vmatpush1.xpose.msra.mxu0 0.0
    %1816 = vmatprep.subr.mxu0 0.0
    %1817 = vmatpush1.xpose.msra.mxu0 0.0
    %1818 = vmatprep.subr.mxu0 0.0
    %1819 = vmatpush1.xpose.msra.mxu0 0.0
    %1820 = vmatprep.subr.mxu0 0.0
    %1821 = vmatpush1.xpose.msra.mxu0 0.0
    %1822 = vmatprep.subr.mxu0 0.0
    %1823 = vmatpush1.xpose.msra.mxu0 0.0
    %1824 = vmatprep.subr.mxu0 0.0
    %1825 = vmatpush1.xpose.msra.mxu0 0.0
    %1826 = vmatprep.subr.mxu0 0.0
    %1827 = vmatpush1.xpose.msra.mxu0 0.0
    %1828 = vmatprep.subr.mxu0 0.0
    %1829 = vmatpush1.xpose.msra.mxu0 0.0
    %1830 = vmatprep.subr.mxu0 0.0
    %1831 = vmatpush1.xpose.msra.mxu0 0.0
    %1832 = vmatprep.subr.mxu0 0.0
    %1833 = vmatpush1.xpose.msra.mxu0 %v1800
    %1834 = vmatprep.subr.mxu0 0.0
    %1835 = vmatpush2.xpose.msra.mxu0 0.0
    %1836 = vmatprep.subr.mxu0 0.0
    %1837 = vmatpush2.xpose.msra.mxu0 0.0
    %1838 = vmatprep.subr.mxu0 0.0
    %1839 = vmatpush2.xpose.msra.mxu0 0.0
    %1840 = vmatprep.subr.mxu0 0.0
    %1841 = vmatpush2.xpose.msra.mxu0 0.0
    %1842 = vmatprep.subr.mxu0 0.0
    %1843 = vmatpush2.xpose.msra.mxu0 0.0
    %1844 = vmatprep.subr.mxu0 0.0
    %1845 = vmatpush2.xpose.msra.mxu0 0.0
    %1846 = vmatprep.subr.mxu0 0.0
    %1847 = vmatpush2.xpose.msra.mxu0 0.0
    %1848 = vmatprep.subr.mxu0 0.0
    %1849 = vmatpush2.xpose.msra.mxu0 0.0
    %1850 = vmatprep.subr.mxu0 0.0
    %1851 = vmatpush2.xpose.msra.mxu0 0.0
    %1852 = vmatprep.subr.mxu0 0.0
    %1853 = vmatpush2.xpose.msra.mxu0 0.0
    %1854 = vmatprep.subr.mxu0 0.0
    %1855 = vmatpush2.xpose.msra.mxu0 0.0
    %1856 = vmatprep.subr.mxu0 0.0
    %1857 = vmatpush2.xpose.msra.mxu0 0.0
    %1858 = vmatprep.subr.mxu0 0.0
    %1859 = vmatpush2.xpose.msra.mxu0 0.0
    %1860 = vmatprep.subr.mxu0 0.0
    %1861 = vmatpush2.xpose.msra.mxu0 0.0
    %1862 = vmatprep.subr.mxu0 0.0
    %1863 = vmatpush2.xpose.msra.mxu0 0.0
    %1864 = vmatprep.subr.mxu0 0.0
    %1865 = vmatpush2.xpose.msra.mxu0 0.0
    %1866 = vmatprep.mubr.f32.mxu0 0.0
    %1867 = vmatmul.mubr.f32.gmra.mxu0 %v1798
    %v1868 = vpop.f32.mrf.mxu0
    %v1869 = vadd.f32 0.0, %v1868
    %v1870 = vpop.f32.mrf.mxu0
    %1871 = vdwg.mxu0
    %v1872 = vmul.f32 %v1869, 0.35355338
    %v1873 = vsel %vm416, %v1872, -inf
    %1874 = vmax.xlane.f32.xlu0 %v1873
    %v1875 = vpop.xlane.xlu0 %1874
    %v1876 = vsub.f32 %v1872, %v1875
    %v1877 = vmul.f32 %v1876, 1.442695
    %v1878 = vpow.pop %v1877
    %v1879 = vsel %vm416, %v1878, 0.0
    %1880 = vadd.xlane.f32.xlu0 %v1879
    %v1881 = vpop.xlane.xlu0 %1880
    %v1882 = vrcp.pop %v1881
    %v1883 = vmul.f32 %v1878, %v1882
    %1884 = vrot.lane.b32.xlu0 %v1314, 48
    %v1885 = vpop.permute.xlu0 %1884
    %v1887 = vsel %vm430, %v1883, 0
    %v1889 = vsel %vm434, %v1885, 0
    %1891 = vmatprep.subr.mxu0 0.0
    %1892 = vmatpush1.msra.mxu0 0.0
    %1893 = vmatprep.subr.mxu0 0.0
    %1894 = vmatpush1.msra.mxu0 0.0
    %1895 = vmatprep.subr.mxu0 0.0
    %1896 = vmatpush1.msra.mxu0 0.0
    %1897 = vmatprep.subr.mxu0 0.0
    %1898 = vmatpush1.msra.mxu0 0.0
    %1899 = vmatprep.subr.mxu0 0.0
    %1900 = vmatpush1.msra.mxu0 0.0
    %1901 = vmatprep.subr.mxu0 0.0
    %1902 = vmatpush1.msra.mxu0 0.0
    %1903 = vmatprep.subr.mxu0 0.0
    %1904 = vmatpush1.msra.mxu0 0.0
    %1905 = vmatprep.subr.mxu0 0.0
    %1906 = vmatpush1.msra.mxu0 0.0
    %1907 = vmatprep.subr.mxu0 0.0
    %1908 = vmatpush1.msra.mxu0 0.0
    %1909 = vmatprep.subr.mxu0 0.0
    %1910 = vmatpush1.msra.mxu0 0.0
    %1911 = vmatprep.subr.mxu0 0.0
    %1912 = vmatpush1.msra.mxu0 0.0
    %1913 = vmatprep.subr.mxu0 0.0
    %1914 = vmatpush1.msra.mxu0 0.0
    %1915 = vmatprep.subr.mxu0 0.0
    %1916 = vmatpush1.msra.mxu0 0.0
    %1917 = vmatprep.subr.mxu0 0.0
    %1918 = vmatpush1.msra.mxu0 0.0
    %1919 = vmatprep.subr.mxu0 0.0
    %1920 = vmatpush1.msra.mxu0 0.0
    %1921 = vmatprep.subr.mxu0 0.0
    %1922 = vmatpush1.msra.mxu0 %v1889
    %1923 = vmatprep.subr.mxu0 0.0
    %1924 = vmatpush2.msra.mxu0 0.0
    %1925 = vmatprep.subr.mxu0 0.0
    %1926 = vmatpush2.msra.mxu0 0.0
    %1927 = vmatprep.subr.mxu0 0.0
    %1928 = vmatpush2.msra.mxu0 0.0
    %1929 = vmatprep.subr.mxu0 0.0
    %1930 = vmatpush2.msra.mxu0 0.0
    %1931 = vmatprep.subr.mxu0 0.0
    %1932 = vmatpush2.msra.mxu0 0.0
    %1933 = vmatprep.subr.mxu0 0.0
    %1934 = vmatpush2.msra.mxu0 0.0
    %1935 = vmatprep.subr.mxu0 0.0
    %1936 = vmatpush2.msra.mxu0 0.0
    %1937 = vmatprep.subr.mxu0 0.0
    %1938 = vmatpush2.msra.mxu0 0.0
    %1939 = vmatprep.subr.mxu0 0.0
    %1940 = vmatpush2.msra.mxu0 0.0
    %1941 = vmatprep.subr.mxu0 0.0
    %1942 = vmatpush2.msra.mxu0 0.0
    %1943 = vmatprep.subr.mxu0 0.0
    %1944 = vmatpush2.msra.mxu0 0.0
    %1945 = vmatprep.subr.mxu0 0.0
    %1946 = vmatpush2.msra.mxu0 0.0
    %1947 = vmatprep.subr.mxu0 0.0
    %1948 = vmatpush2.msra.mxu0 0.0
    %1949 = vmatprep.subr.mxu0 0.0
    %1950 = vmatpush2.msra.mxu0 0.0
    %1951 = vmatprep.subr.mxu0 0.0
    %1952 = vmatpush2.msra.mxu0 0.0
    %1953 = vmatprep.subr.mxu0 0.0
    %1954 = vmatpush2.msra.mxu0 0.0
    %1955 = vmatprep.mubr.f32.mxu0 0.0
    %1956 = vmatmul.mubr.f32.gmra.mxu0 %v1887
    %v1957 = vpop.f32.mrf.mxu0
    %v1958 = vadd.f32 0.0, %v1957
    %v1959 = vpop.f32.mrf.mxu0
    %1960 = vdwg.mxu0
    %v1962 = vsel %vm340, %v1958, 0
    %1964 = vmatprep.subr.mxu0 0.0
    %1965 = vmatpush1.msra.mxu0 0.0
    %1966 = vmatprep.subr.mxu0 0.0
    %1967 = vmatpush1.msra.mxu0 0.0
    %1968 = vmatprep.subr.mxu0 0.0
    %1969 = vmatpush1.msra.mxu0 0.0
    %1970 = vmatprep.subr.mxu0 0.0
    %1971 = vmatpush1.msra.mxu0 0.0
    %1972 = vmatprep.subr.mxu0 0.0
    %1973 = vmatpush1.msra.mxu0 0.0
    %1974 = vmatprep.subr.mxu0 0.0
    %1975 = vmatpush1.msra.mxu0 0.0
    %1976 = vmatprep.subr.mxu0 0.0
    %1977 = vmatpush1.msra.mxu0 0.0
    %1978 = vmatprep.subr.mxu0 0.0
    %1979 = vmatpush1.msra.mxu0 0.0
    %1980 = vmatprep.subr.mxu0 0.0
    %1981 = vmatpush1.msra.mxu0 0.0
    %1982 = vmatprep.subr.mxu0 0.0
    %1983 = vmatpush1.msra.mxu0 0.0
    %1984 = vmatprep.subr.mxu0 0.0
    %1985 = vmatpush1.msra.mxu0 0.0
    %1986 = vmatprep.subr.mxu0 0.0
    %1987 = vmatpush1.msra.mxu0 0.0
    %1988 = vmatprep.subr.mxu0 0.0
    %1989 = vmatpush1.msra.mxu0 0.0
    %1990 = vmatprep.subr.mxu0 0.0
    %1991 = vmatpush1.msra.mxu0 0.0
    %1992 = vmatprep.subr.mxu0 0.0
    %1993 = vmatpush1.msra.mxu0 0.0
    %1994 = vmatprep.subr.mxu0 0.0
    %1995 = vmatpush1.msra.mxu0 %v334
    %1996 = vmatprep.subr.mxu0 0.0
    %1997 = vmatpush2.msra.mxu0 0.0
    %1998 = vmatprep.subr.mxu0 0.0
    %1999 = vmatpush2.msra.mxu0 0.0
    %2000 = vmatprep.subr.mxu0 0.0
    %2001 = vmatpush2.msra.mxu0 0.0
    %2002 = vmatprep.subr.mxu0 0.0
    %2003 = vmatpush2.msra.mxu0 0.0
    %2004 = vmatprep.subr.mxu0 0.0
    %2005 = vmatpush2.msra.mxu0 0.0
    %2006 = vmatprep.subr.mxu0 0.0
    %2007 = vmatpush2.msra.mxu0 0.0
    %2008 = vmatprep.subr.mxu0 0.0
    %2009 = vmatpush2.msra.mxu0 0.0
    %2010 = vmatprep.subr.mxu0 0.0
    %2011 = vmatpush2.msra.mxu0 0.0
    %2012 = vmatprep.subr.mxu0 0.0
    %2013 = vmatpush2.msra.mxu0 0.0
    %2014 = vmatprep.subr.mxu0 0.0
    %2015 = vmatpush2.msra.mxu0 0.0
    %2016 = vmatprep.subr.mxu0 0.0
    %2017 = vmatpush2.msra.mxu0 0.0
    %2018 = vmatprep.subr.mxu0 0.0
    %2019 = vmatpush2.msra.mxu0 0.0
    %2020 = vmatprep.subr.mxu0 0.0
    %2021 = vmatpush2.msra.mxu0 0.0
    %2022 = vmatprep.subr.mxu0 0.0
    %2023 = vmatpush2.msra.mxu0 0.0
    %2024 = vmatprep.subr.mxu0 0.0
    %2025 = vmatpush2.msra.mxu0 0.0
    %2026 = vmatprep.subr.mxu0 0.0
    %2027 = vmatpush2.msra.mxu0 0.0
    %2028 = vmatprep.mubr.f32.mxu0 0.0
    %2029 = vmatmul.mubr.f32.gmra.mxu0 %v1962
    %v2030 = vpop.f32.mrf.mxu0
    %v2031 = vadd.f32 0.0, %v2030
    %v2032 = vpop.f32.mrf.mxu0
    %2033 = vdwg.mxu0
    %v2034 = vadd.f32 %v1791, %v2031
    %2035 = vrot.lane.b32.xlu0 %v1314, 104
    %v2036 = vpop.permute.xlu0 %2035
    %2037 = vrot.lane.b32.xlu0 %v1314, 72
    %v2038 = vpop.permute.xlu0 %2037
    %v2039 = vsel %vm340, %v2036, 0
    %v2041 = vsel %vm340, %v2038, 0
    %2043 = vmatprep.subr.mxu0 0.0
    %2044 = vmatpush1.xpose.msra.mxu0 0.0
    %2045 = vmatprep.subr.mxu0 0.0
    %2046 = vmatpush1.xpose.msra.mxu0 0.0
    %2047 = vmatprep.subr.mxu0 0.0
    %2048 = vmatpush1.xpose.msra.mxu0 0.0
    %2049 = vmatprep.subr.mxu0 0.0
    %2050 = vmatpush1.xpose.msra.mxu0 0.0
    %2051 = vmatprep.subr.mxu0 0.0
    %2052 = vmatpush1.xpose.msra.mxu0 0.0
    %2053 = vmatprep.subr.mxu0 0.0
    %2054 = vmatpush1.xpose.msra.mxu0 0.0
    %2055 = vmatprep.subr.mxu0 0.0
    %2056 = vmatpush1.xpose.msra.mxu0 0.0
    %2057 = vmatprep.subr.mxu0 0.0
    %2058 = vmatpush1.xpose.msra.mxu0 0.0
    %2059 = vmatprep.subr.mxu0 0.0
    %2060 = vmatpush1.xpose.msra.mxu0 0.0
    %2061 = vmatprep.subr.mxu0 0.0
    %2062 = vmatpush1.xpose.msra.mxu0 0.0
    %2063 = vmatprep.subr.mxu0 0.0
    %2064 = vmatpush1.xpose.msra.mxu0 0.0
    %2065 = vmatprep.subr.mxu0 0.0
    %2066 = vmatpush1.xpose.msra.mxu0 0.0
    %2067 = vmatprep.subr.mxu0 0.0
    %2068 = vmatpush1.xpose.msra.mxu0 0.0
    %2069 = vmatprep.subr.mxu0 0.0
    %2070 = vmatpush1.xpose.msra.mxu0 0.0
    %2071 = vmatprep.subr.mxu0 0.0
    %2072 = vmatpush1.xpose.msra.mxu0 0.0
    %2073 = vmatprep.subr.mxu0 0.0
    %2074 = vmatpush1.xpose.msra.mxu0 %v2041
    %2075 = vmatprep.subr.mxu0 0.0
    %2076 = vmatpush2.xpose.msra.mxu0 0.0
    %2077 = vmatprep.subr.mxu0 0.0
    %2078 = vmatpush2.xpose.msra.mxu0 0.0
    %2079 = vmatprep.subr.mxu0 0.0
    %2080 = vmatpush2.xpose.msra.mxu0 0.0
    %2081 = vmatprep.subr.mxu0 0.0
    %2082 = vmatpush2.xpose.msra.mxu0 0.0
    %2083 = vmatprep.subr.mxu0 0.0
    %2084 = vmatpush2.xpose.msra.mxu0 0.0
    %2085 = vmatprep.subr.mxu0 0.0
    %2086 = vmatpush2.xpose.msra.mxu0 0.0
    %2087 = vmatprep.subr.mxu0 0.0
    %2088 = vmatpush2.xpose.msra.mxu0 0.0
    %2089 = vmatprep.subr.mxu0 0.0
    %2090 = vmatpush2.xpose.msra.mxu0 0.0
    %2091 = vmatprep.subr.mxu0 0.0
    %2092 = vmatpush2.xpose.msra.mxu0 0.0
    %2093 = vmatprep.subr.mxu0 0.0
    %2094 = vmatpush2.xpose.msra.mxu0 0.0
    %2095 = vmatprep.subr.mxu0 0.0
    %2096 = vmatpush2.xpose.msra.mxu0 0.0
    %2097 = vmatprep.subr.mxu0 0.0
    %2098 = vmatpush2.xpose.msra.mxu0 0.0
    %2099 = vmatprep.subr.mxu0 0.0
    %2100 = vmatpush2.xpose.msra.mxu0 0.0
    %2101 = vmatprep.subr.mxu0 0.0
    %2102 = vmatpush2.xpose.msra.mxu0 0.0
    %2103 = vmatprep.subr.mxu0 0.0
    %2104 = vmatpush2.xpose.msra.mxu0 0.0
    %2105 = vmatprep.subr.mxu0 0.0
    %2106 = vmatpush2.xpose.msra.mxu0 0.0
    %2107 = vmatprep.mubr.f32.mxu0 0.0
    %2108 = vmatmul.mubr.f32.gmra.mxu0 %v2039
    %v2109 = vpop.f32.mrf.mxu0
    %v2110 = vadd.f32 0.0, %v2109
    %v2111 = vpop.f32.mrf.mxu0
    %2112 = vdwg.mxu0
    %v2113 = vmul.f32 %v2110, 0.35355338
    %v2114 = vsel %vm416, %v2113, -inf
    %2115 = vmax.xlane.f32.xlu0 %v2114
    %v2116 = vpop.xlane.xlu0 %2115
    %v2117 = vsub.f32 %v2113, %v2116
    %v2118 = vmul.f32 %v2117, 1.442695
    %v2119 = vpow.pop %v2118
    %v2120 = vsel %vm416, %v2119, 0.0
    %2121 = vadd.xlane.f32.xlu0 %v2120
    %v2122 = vpop.xlane.xlu0 %2121
    %v2123 = vrcp.pop %v2122
    %v2124 = vmul.f32 %v2119, %v2123
    %2125 = vrot.lane.b32.xlu0 %v1314, 40
    %v2126 = vpop.permute.xlu0 %2125
    %v2128 = vsel %vm430, %v2124, 0
    %v2130 = vsel %vm434, %v2126, 0
    %2132 = vmatprep.subr.mxu0 0.0
    %2133 = vmatpush1.msra.mxu0 0.0
    %2134 = vmatprep.subr.mxu0 0.0
    %2135 = vmatpush1.msra.mxu0 0.0
    %2136 = vmatprep.subr.mxu0 0.0
    %2137 = vmatpush1.msra.mxu0 0.0
    %2138 = vmatprep.subr.mxu0 0.0
    %2139 = vmatpush1.msra.mxu0 0.0
    %2140 = vmatprep.subr.mxu0 0.0
    %2141 = vmatpush1.msra.mxu0 0.0
    %2142 = vmatprep.subr.mxu0 0.0
    %2143 = vmatpush1.msra.mxu0 0.0
    %2144 = vmatprep.subr.mxu0 0.0
    %2145 = vmatpush1.msra.mxu0 0.0
    %2146 = vmatprep.subr.mxu0 0.0
    %2147 = vmatpush1.msra.mxu0 0.0
    %2148 = vmatprep.subr.mxu0 0.0
    %2149 = vmatpush1.msra.mxu0 0.0
    %2150 = vmatprep.subr.mxu0 0.0
    %2151 = vmatpush1.msra.mxu0 0.0
    %2152 = vmatprep.subr.mxu0 0.0
    %2153 = vmatpush1.msra.mxu0 0.0
    %2154 = vmatprep.subr.mxu0 0.0
    %2155 = vmatpush1.msra.mxu0 0.0
    %2156 = vmatprep.subr.mxu0 0.0
    %2157 = vmatpush1.msra.mxu0 0.0
    %2158 = vmatprep.subr.mxu0 0.0
    %2159 = vmatpush1.msra.mxu0 0.0
    %2160 = vmatprep.subr.mxu0 0.0
    %2161 = vmatpush1.msra.mxu0 0.0
    %2162 = vmatprep.subr.mxu0 0.0
    %2163 = vmatpush1.msra.mxu0 %v2130
    %2164 = vmatprep.subr.mxu0 0.0
    %2165 = vmatpush2.msra.mxu0 0.0
    %2166 = vmatprep.subr.mxu0 0.0
    %2167 = vmatpush2.msra.mxu0 0.0
    %2168 = vmatprep.subr.mxu0 0.0
    %2169 = vmatpush2.msra.mxu0 0.0
    %2170 = vmatprep.subr.mxu0 0.0
    %2171 = vmatpush2.msra.mxu0 0.0
    %2172 = vmatprep.subr.mxu0 0.0
    %2173 = vmatpush2.msra.mxu0 0.0
    %2174 = vmatprep.subr.mxu0 0.0
    %2175 = vmatpush2.msra.mxu0 0.0
    %2176 = vmatprep.subr.mxu0 0.0
    %2177 = vmatpush2.msra.mxu0 0.0
    %2178 = vmatprep.subr.mxu0 0.0
    %2179 = vmatpush2.msra.mxu0 0.0
    %2180 = vmatprep.subr.mxu0 0.0
    %2181 = vmatpush2.msra.mxu0 0.0
    %2182 = vmatprep.subr.mxu0 0.0
    %2183 = vmatpush2.msra.mxu0 0.0
    %2184 = vmatprep.subr.mxu0 0.0
    %2185 = vmatpush2.msra.mxu0 0.0
    %2186 = vmatprep.subr.mxu0 0.0
    %2187 = vmatpush2.msra.mxu0 0.0
    %2188 = vmatprep.subr.mxu0 0.0
    %2189 = vmatpush2.msra.mxu0 0.0
    %2190 = vmatprep.subr.mxu0 0.0
    %2191 = vmatpush2.msra.mxu0 0.0
    %2192 = vmatprep.subr.mxu0 0.0
    %2193 = vmatpush2.msra.mxu0 0.0
    %2194 = vmatprep.subr.mxu0 0.0
    %2195 = vmatpush2.msra.mxu0 0.0
    %2196 = vmatprep.mubr.f32.mxu0 0.0
    %2197 = vmatmul.mubr.f32.gmra.mxu0 %v2128
    %v2198 = vpop.f32.mrf.mxu0
    %v2199 = vadd.f32 0.0, %v2198
    %v2200 = vpop.f32.mrf.mxu0
    %2201 = vdwg.mxu0
    %v2203 = vsel %vm340, %v2199, 0
    %2205 = vmatprep.subr.mxu0 0.0
    %2206 = vmatpush1.msra.mxu0 0.0
    %2207 = vmatprep.subr.mxu0 0.0
    %2208 = vmatpush1.msra.mxu0 0.0
    %2209 = vmatprep.subr.mxu0 0.0
    %2210 = vmatpush1.msra.mxu0 0.0
    %2211 = vmatprep.subr.mxu0 0.0
    %2212 = vmatpush1.msra.mxu0 0.0
    %2213 = vmatprep.subr.mxu0 0.0
    %2214 = vmatpush1.msra.mxu0 0.0
    %2215 = vmatprep.subr.mxu0 0.0
    %2216 = vmatpush1.msra.mxu0 0.0
    %2217 = vmatprep.subr.mxu0 0.0
    %2218 = vmatpush1.msra.mxu0 0.0
    %2219 = vmatprep.subr.mxu0 0.0
    %2220 = vmatpush1.msra.mxu0 0.0
    %2221 = vmatprep.subr.mxu0 0.0
    %2222 = vmatpush1.msra.mxu0 0.0
    %2223 = vmatprep.subr.mxu0 0.0
    %2224 = vmatpush1.msra.mxu0 0.0
    %2225 = vmatprep.subr.mxu0 0.0
    %2226 = vmatpush1.msra.mxu0 0.0
    %2227 = vmatprep.subr.mxu0 0.0
    %2228 = vmatpush1.msra.mxu0 0.0
    %2229 = vmatprep.subr.mxu0 0.0
    %2230 = vmatpush1.msra.mxu0 0.0
    %2231 = vmatprep.subr.mxu0 0.0
    %2232 = vmatpush1.msra.mxu0 0.0
    %2233 = vmatprep.subr.mxu0 0.0
    %2234 = vmatpush1.msra.mxu0 0.0
    %2235 = vmatprep.subr.mxu0 0.0
    %2236 = vmatpush1.msra.mxu0 %v335
    %2237 = vmatprep.subr.mxu0 0.0
    %2238 = vmatpush2.msra.mxu0 0.0
    %2239 = vmatprep.subr.mxu0 0.0
    %2240 = vmatpush2.msra.mxu0 0.0
    %2241 = vmatprep.subr.mxu0 0.0
    %2242 = vmatpush2.msra.mxu0 0.0
    %2243 = vmatprep.subr.mxu0 0.0
    %2244 = vmatpush2.msra.mxu0 0.0
    %2245 = vmatprep.subr.mxu0 0.0
    %2246 = vmatpush2.msra.mxu0 0.0
    %2247 = vmatprep.subr.mxu0 0.0
    %2248 = vmatpush2.msra.mxu0 0.0
    %2249 = vmatprep.subr.mxu0 0.0
    %2250 = vmatpush2.msra.mxu0 0.0
    %2251 = vmatprep.subr.mxu0 0.0
    %2252 = vmatpush2.msra.mxu0 0.0
    %2253 = vmatprep.subr.mxu0 0.0
    %2254 = vmatpush2.msra.mxu0 0.0
    %2255 = vmatprep.subr.mxu0 0.0
    %2256 = vmatpush2.msra.mxu0 0.0
    %2257 = vmatprep.subr.mxu0 0.0
    %2258 = vmatpush2.msra.mxu0 0.0
    %2259 = vmatprep.subr.mxu0 0.0
    %2260 = vmatpush2.msra.mxu0 0.0
    %2261 = vmatprep.subr.mxu0 0.0
    %2262 = vmatpush2.msra.mxu0 0.0
    %2263 = vmatprep.subr.mxu0 0.0
    %2264 = vmatpush2.msra.mxu0 0.0
    %2265 = vmatprep.subr.mxu0 0.0
    %2266 = vmatpush2.msra.mxu0 0.0
    %2267 = vmatprep.subr.mxu0 0.0
    %2268 = vmatpush2.msra.mxu0 0.0
    %2269 = vmatprep.mubr.f32.mxu0 0.0
    %2270 = vmatmul.mubr.f32.gmra.mxu0 %v2203
    %v2271 = vpop.f32.mrf.mxu0
    %v2272 = vadd.f32 0.0, %v2271
    %v2273 = vpop.f32.mrf.mxu0
    %2274 = vdwg.mxu0
    %v2275 = vadd.f32 %v2034, %v2272
    %v2276 = vld [vmem:[#allocation2 + $0x5] sm:$0x1f]
    %v2277 = vadd.f32 %v2276, %v2275
    %v2278 = vld [vmem:[%s8] sm:$0x1]
    %v2280 = vlaneseq
    %v2281 = vshrl.u32 %v2280, 7
    %v2282 = vsub.s32 0, %v2281
    %v2283 = vrot.slane %v2278, %v2282
    %v2285 = vadd.f32 %v2277, %v2283
    %2286 = vst.msk [vmem:[#allocation2 + $0x5] sm:$0x1f] %vm1312, %v2285
    %v2287 = vld [vmem:[#allocation2] sm:$0xff]
    %v2288 = vld [vmem:[#allocation2 + $0x8] sm:$0x3]
    %v2289 = vld [vmem:[%s9] sm:$0x1]
    %v2290 = vld [vmem:[%s10] sm:$0x1]
    %v2291 = vsel %vm185, %v2287, 0.0
    %2292 = vadd.xlane.f32.xlu0 %v2291
    %v2293 = vpop.xlane.xlu0 %2292
    %v2294 = vsel %vm187, %v2288, 0.0
    %2295 = vadd.xlane.f32.xlu0 %v2294
    %v2296 = vpop.xlane.xlu0 %2295
    %v2297 = vmul.f32 %v2293, %v199
    %v2298 = vmul.f32 %v2296, %v199
    %v2299 = vsub.f32 %v2287, %v2297
    %v2300 = vsub.f32 %v2288, %v2298
    %v2301 = vmul.f32 %v2299, %v2299
    %v2302 = vmul.f32 %v2300, %v2300
    %v2303 = vsel %vm185, %v2301, 0.0
    %2304 = vadd.xlane.f32.xlu0 %v2303
    %v2305 = vpop.xlane.xlu0 %2304
    %v2306 = vsel %vm187, %v2302, 0.0
    %2307 = vadd.xlane.f32.xlu0 %v2306
    %v2308 = vpop.xlane.xlu0 %2307
    %v2309 = vmul.f32 %v2305, %v199
    %v2310 = vmul.f32 %v2308, %v199
    %v2311 = vadd.f32 %v2309, 1e-05
    %v2312 = vadd.f32 %v2310, 1e-05
    %v2313 = vrsqrt.pop %v2311
    %v2314 = vrsqrt.pop %v2312
    %v2315 = vmul.f32 %v2299, %v2313
    %v2316 = vmul.f32 %v2300, %v2314
    %v2318 = vlaneseq
    %v2319 = vshrl.u32 %v2318, 7
    %v2320 = vsub.s32 0, %v2319
    %v2321 = vrot.slane %v2289, %v2320
    %v2323 = vmul.f32 %v2315, %v2321
    %v2324 = vmul.f32 %v2316, %v2321
    %v2326 = vlaneseq
    %v2327 = vshrl.u32 %v2326, 7
    %v2328 = vsub.s32 0, %v2327
    %v2329 = vrot.slane %v2290, %v2328
    %v2331 = vadd.f32 %v2323, %v2329
    %v2332 = vadd.f32 %v2324, %v2329
    %v2333 = vld [vmem:[%s11] sm:$0xff]
    %v2334 = vld [vmem:[%s11 + $0x8] sm:$0xff]
    %v2335 = vld [vmem:[%s11 + $0x10] sm:$0xff]
    %v2336 = vld [vmem:[%s11 + $0x18] sm:$0xff]
    %v2337 = vld [vmem:[%s12] sm:$0x1]
    %v2339 = vlaneseq
    %v2340 = vshrl.u32 %v2339, 7
    %v2341 = vsub.s32 0, %v2340
    %v2342 = vrot.slane %v2337, %v2341
    %v2345 = vsel %vm185, %v2331, 0
    %v2348 = vsel %vm185, %v2332, 0
    %2350 = vmatprep.subr.mxu0 0.0
    %2351 = vmatpush1.msra.mxu0 0.0
    %2352 = vmatprep.subr.mxu0 0.0
    %2353 = vmatpush1.msra.mxu0 0.0
    %2354 = vmatprep.subr.mxu0 0.0
    %2355 = vmatpush1.msra.mxu0 0.0
    %2356 = vmatprep.subr.mxu0 0.0
    %2357 = vmatpush1.msra.mxu0 0.0
    %2358 = vmatprep.subr.mxu0 0.0
    %2359 = vmatpush1.msra.mxu0 0.0
    %2360 = vmatprep.subr.mxu0 0.0
    %2361 = vmatpush1.msra.mxu0 0.0
    %2362 = vmatprep.subr.mxu0 0.0
    %2363 = vmatpush1.msra.mxu0 0.0
    %2364 = vmatprep.subr.mxu0 0.0
    %2365 = vmatpush1.msra.mxu0 0.0
    %2366 = vmatprep.subr.mxu0 0.0
    %2367 = vmatpush1.msra.mxu0 0.0
    %2368 = vmatprep.subr.mxu0 0.0
    %2369 = vmatpush1.msra.mxu0 0.0
    %2370 = vmatprep.subr.mxu0 0.0
    %2371 = vmatpush1.msra.mxu0 0.0
    %2372 = vmatprep.subr.mxu0 0.0
    %2373 = vmatpush1.msra.mxu0 0.0
    %2374 = vmatprep.subr.mxu0 0.0
    %2375 = vmatpush1.msra.mxu0 %v2336
    %2376 = vmatprep.subr.mxu0 0.0
    %2377 = vmatpush1.msra.mxu0 %v2335
    %2378 = vmatprep.subr.mxu0 0.0
    %2379 = vmatpush1.msra.mxu0 %v2334
    %2380 = vmatprep.subr.mxu0 0.0
    %2381 = vmatpush1.msra.mxu0 %v2333
    %2382 = vmatprep.subr.mxu0 0.0
    %2383 = vmatpush2.msra.mxu0 0.0
    %2384 = vmatprep.subr.mxu0 0.0
    %2385 = vmatpush2.msra.mxu0 0.0
    %2386 = vmatprep.subr.mxu0 0.0
    %2387 = vmatpush2.msra.mxu0 0.0
    %2388 = vmatprep.subr.mxu0 0.0
    %2389 = vmatpush2.msra.mxu0 0.0
    %2390 = vmatprep.subr.mxu0 0.0
    %2391 = vmatpush2.msra.mxu0 0.0
    %2392 = vmatprep.subr.mxu0 0.0
    %2393 = vmatpush2.msra.mxu0 0.0
    %2394 = vmatprep.subr.mxu0 0.0
    %2395 = vmatpush2.msra.mxu0 0.0
    %2396 = vmatprep.subr.mxu0 0.0
    %2397 = vmatpush2.msra.mxu0 0.0
    %2398 = vmatprep.subr.mxu0 0.0
    %2399 = vmatpush2.msra.mxu0 0.0
    %2400 = vmatprep.subr.mxu0 0.0
    %2401 = vmatpush2.msra.mxu0 0.0
    %2402 = vmatprep.subr.mxu0 0.0
    %2403 = vmatpush2.msra.mxu0 0.0
    %2404 = vmatprep.subr.mxu0 0.0
    %2405 = vmatpush2.msra.mxu0 0.0
    %2406 = vmatprep.subr.mxu0 0.0
    %2407 = vmatpush2.msra.mxu0 0.0
    %2408 = vmatprep.subr.mxu0 0.0
    %2409 = vmatpush2.msra.mxu0 0.0
    %2410 = vmatprep.subr.mxu0 0.0
    %2411 = vmatpush2.msra.mxu0 0.0
    %2412 = vmatprep.subr.mxu0 0.0
    %2413 = vmatpush2.msra.mxu0 0.0
    %2414 = vmatprep.mubr.f32.mxu0 0.0
    %2415 = vmatmul.mubr.f32.gmra.mxu0 %v2345
    %v2416 = vpop.f32.mrf.mxu0
    %v2417 = vadd.f32 %v2342, %v2416
    %v2418 = vpop.f32.mrf.mxu0
    %2419 = vmatprep.mubr.f32.mxu0 0.0
    %2420 = vmatmul.mubr.f32.gmra.mxu0 %v2348
    %v2421 = vpop.f32.mrf.mxu0
    %v2422 = vadd.f32 %v2342, %v2421
    %v2423 = vpop.f32.mrf.mxu0
    %2424 = vdwg.mxu0
    %v2425 = vmul.f32 %v2417, 0.5
    %v2426 = vmul.f32 %v2422, 0.5
    %v2427 = vmul.f32 %v2417, 0.70710677
    %v2428 = vmul.f32 %v2422, 0.70710677
    %v2429 = vand.u32 2147483647, %v2427
    %v2430 = vand.u32 2147483647, %v2428
    %v2431 = vmul.f32 %v2429, 0.3275911
    %v2432 = vmul.f32 %v2430, 0.3275911
    %v2433 = vadd.f32 %v2431, 1.0
    %v2434 = vadd.f32 %v2432, 1.0
    %v2435 = vrcp.pop %v2433
    %v2436 = vmul.f32 1.0, %v2435
    %v2437 = vrcp.pop %v2434
    %v2438 = vmul.f32 1.0, %v2437
    %v2439 = vmul.f32 %v2436, 1.0614054
    %v2440 = vmul.f32 %v2438, 1.0614054
    %v2441 = vadd.f32 %v2439, -1.4531521
    %v2442 = vadd.f32 %v2440, -1.4531521
    %v2443 = vmul.f32 %v2441, %v2436
    %v2444 = vmul.f32 %v2442, %v2438
    %v2445 = vadd.f32 %v2443, 1.4214138
    %v2446 = vadd.f32 %v2444, 1.4214138
    %v2447 = vmul.f32 %v2445, %v2436
    %v2448 = vmul.f32 %v2446, %v2438
    %v2449 = vadd.f32 %v2447, -0.28449672
    %v2450 = vadd.f32 %v2448, -0.28449672
    %v2451 = vmul.f32 %v2449, %v2436
    %v2452 = vmul.f32 %v2450, %v2438
    %v2453 = vadd.f32 %v2451, 0.2548296
    %v2454 = vadd.f32 %v2452, 0.2548296
    %v2455 = vmul.f32 %v2453, %v2436
    %v2456 = vmul.f32 %v2454, %v2438
    %v2457 = vsub.f32 0.0, %v2429
    %v2458 = vsub.f32 0.0, %v2430
    %v2459 = vmul.f32 %v2457, %v2429
    %v2460 = vmul.f32 %v2458, %v2430
    %v2461 = vmul.f32 %v2459, 1.442695
    %v2462 = vpow.pop %v2461
    %v2463 = vmul.f32 %v2460, 1.442695
    %v2464 = vpow.pop %v2463
    %v2465 = vmul.f32 %v2455, %v2462
    %v2466 = vmul.f32 %v2456, %v2464
    %v2467 = vsub.f32 1.0, %v2465
    %v2468 = vsub.f32 1.0, %v2466
    %vm2469 = vcmp.ge.f32.partialorder %v2427, 0.0
    %vm2470 = vcmp.ge.f32.partialorder %v2428, 0.0
    %v2471 = vsub.f32 0.0, %v2467
    %v2472 = vsub.f32 0.0, %v2468
    %v2473 = vsel %vm2469, %v2467, %v2471
    %v2474 = vsel %vm2470, %v2468, %v2472
    %v2475 = vadd.f32 %v2473, 1.0
    %v2476 = vadd.f32 %v2474, 1.0
    %v2477 = vmul.f32 %v2425, %v2475
    %v2478 = vmul.f32 %v2426, %v2476
    %v2479 = vld [vmem:[%s13] sm:$0xff]
    %v2480 = vld [vmem:[%s13 + $0x8] sm:$0xff]
    %v2481 = vld [vmem:[%s13 + $0x10] sm:$0xff]
    %v2482 = vld [vmem:[%s13 + $0x18] sm:$0xff]
    %v2483 = vld [vmem:[%s13 + $0x20] sm:$0xff]
    %v2484 = vld [vmem:[%s13 + $0x28] sm:$0xff]
    %v2485 = vld [vmem:[%s13 + $0x30] sm:$0xff]
    %v2486 = vld [vmem:[%s13 + $0x38] sm:$0xff]
    %v2487 = vld [vmem:[%s13 + $0x40] sm:$0xff]
    %v2488 = vld [vmem:[%s13 + $0x48] sm:$0xff]
    %v2489 = vld [vmem:[%s13 + $0x50] sm:$0xff]
    %v2490 = vld [vmem:[%s13 + $0x58] sm:$0xff]
    %v2491 = vld [vmem:[%s13 + $0x60] sm:$0xff]
    %v2492 = vld [vmem:[%s13 + $0x68] sm:$0xff]
    %v2493 = vld [vmem:[%s13 + $0x70] sm:$0xff]
    %v2494 = vld [vmem:[%s13 + $0x78] sm:$0xff]
    %v2495 = vld [vmem:[%s14] sm:$0x1]
    %v2497 = vlaneseq
    %v2498 = vshrl.u32 %v2497, 7
    %v2499 = vsub.s32 0, %v2498
    %v2500 = vrot.slane %v2495, %v2499
    %2502 = vmatprep.subr.mxu0 0.0
    %2503 = vmatpush1.msra.mxu0 %v2494
    %2504 = vmatprep.subr.mxu0 0.0
    %2505 = vmatpush1.msra.mxu0 %v2493
    %2506 = vmatprep.subr.mxu0 0.0
    %2507 = vmatpush1.msra.mxu0 %v2492
    %2508 = vmatprep.subr.mxu0 0.0
    %2509 = vmatpush1.msra.mxu0 %v2491
    %2510 = vmatprep.subr.mxu0 0.0
    %2511 = vmatpush1.msra.mxu0 %v2490
    %2512 = vmatprep.subr.mxu0 0.0
    %2513 = vmatpush1.msra.mxu0 %v2489
    %2514 = vmatprep.subr.mxu0 0.0
    %2515 = vmatpush1.msra.mxu0 %v2488
    %2516 = vmatprep.subr.mxu0 0.0
    %2517 = vmatpush1.msra.mxu0 %v2487
    %2518 = vmatprep.subr.mxu0 0.0
    %2519 = vmatpush1.msra.mxu0 %v2486
    %2520 = vmatprep.subr.mxu0 0.0
    %2521 = vmatpush1.msra.mxu0 %v2485
    %2522 = vmatprep.subr.mxu0 0.0
    %2523 = vmatpush1.msra.mxu0 %v2484
    %2524 = vmatprep.subr.mxu0 0.0
    %2525 = vmatpush1.msra.mxu0 %v2483
    %2526 = vmatprep.subr.mxu0 0.0
    %2527 = vmatpush1.msra.mxu0 %v2482
    %2528 = vmatprep.subr.mxu0 0.0
    %2529 = vmatpush1.msra.mxu0 %v2481
    %2530 = vmatprep.subr.mxu0 0.0
    %2531 = vmatpush1.msra.mxu0 %v2480
    %2532 = vmatprep.subr.mxu0 0.0
    %2533 = vmatpush1.msra.mxu0 %v2479
    %2534 = vmatprep.subr.mxu0 0.0
    %2535 = vmatpush2.msra.mxu0 0.0
    %2536 = vmatprep.subr.mxu0 0.0
    %2537 = vmatpush2.msra.mxu0 0.0
    %2538 = vmatprep.subr.mxu0 0.0
    %2539 = vmatpush2.msra.mxu0 0.0
    %2540 = vmatprep.subr.mxu0 0.0
    %2541 = vmatpush2.msra.mxu0 0.0
    %2542 = vmatprep.subr.mxu0 0.0
    %2543 = vmatpush2.msra.mxu0 0.0
    %2544 = vmatprep.subr.mxu0 0.0
    %2545 = vmatpush2.msra.mxu0 0.0
    %2546 = vmatprep.subr.mxu0 0.0
    %2547 = vmatpush2.msra.mxu0 0.0
    %2548 = vmatprep.subr.mxu0 0.0
    %2549 = vmatpush2.msra.mxu0 0.0
    %2550 = vmatprep.subr.mxu0 0.0
    %2551 = vmatpush2.msra.mxu0 0.0
    %2552 = vmatprep.subr.mxu0 0.0
    %2553 = vmatpush2.msra.mxu0 0.0
    %2554 = vmatprep.subr.mxu0 0.0
    %2555 = vmatpush2.msra.mxu0 0.0
    %2556 = vmatprep.subr.mxu0 0.0
    %2557 = vmatpush2.msra.mxu0 0.0
    %2558 = vmatprep.subr.mxu0 0.0
    %2559 = vmatpush2.msra.mxu0 0.0
    %2560 = vmatprep.subr.mxu0 0.0
    %2561 = vmatpush2.msra.mxu0 0.0
    %2562 = vmatprep.subr.mxu0 0.0
    %2563 = vmatpush2.msra.mxu0 0.0
    %2564 = vmatprep.subr.mxu0 0.0
    %2565 = vmatpush2.msra.mxu0 0.0
    %2566 = vmatprep.mubr.f32.mxu0 0.0
    %2567 = vmatmul.mubr.f32.gmra.mxu0 %v2477
    %v2568 = vpop.f32.mrf.mxu0
    %v2569 = vadd.f32 %v2500, %v2568
    %v2570 = vpop.f32.mrf.mxu0
    %2571 = vmatprep.mubr.f32.mxu0 0.0
    %2572 = vmatmul.mubr.f32.gmra.mxu0 %v2478
    %v2573 = vpop.f32.mrf.mxu0
    %v2574 = vadd.f32 %v2500, %v2573
    %v2575 = vpop.f32.mrf.mxu0
    %2576 = vdwg.mxu0
    %v2577 = vadd.f32 %v2287, %v2569
    %v2578 = vadd.f32 %v2288, %v2574
    %2579 = vst.msk [vmem:[#allocation2] sm:$0xff] %vm185, %v2577
    %2580 = vst.msk [vmem:[#allocation2 + $0x8] sm:$0x3] %vm187, %v2578
    %v2581 = vld [vmem:[#allocation2] sm:$0xff]
    %v2582 = vld [vmem:[#allocation2 + $0x8] sm:$0x3]
    %s2583 = scalar_lea.vmem %s3, 1
    %v2584 = vld [vmem:[%s2583] sm:$0x1]
    %s2585 = scalar_lea.vmem %s4, 1
    %v2586 = vld [vmem:[%s2585] sm:$0x1]
    %v2587 = vsel %vm185, %v2581, 0.0
    %2588 = vadd.xlane.f32.xlu0 %v2587
    %v2589 = vpop.xlane.xlu0 %2588
    %v2590 = vsel %vm187, %v2582, 0.0
    %2591 = vadd.xlane.f32.xlu0 %v2590
    %v2592 = vpop.xlane.xlu0 %2591
    %v2593 = vmul.f32 %v2589, %v199
    %v2594 = vmul.f32 %v2592, %v199
    %v2595 = vsub.f32 %v2581, %v2593
    %v2596 = vsub.f32 %v2582, %v2594
    %v2597 = vmul.f32 %v2595, %v2595
    %v2598 = vmul.f32 %v2596, %v2596
    %v2599 = vsel %vm185, %v2597, 0.0
    %2600 = vadd.xlane.f32.xlu0 %v2599
    %v2601 = vpop.xlane.xlu0 %2600
    %v2602 = vsel %vm187, %v2598, 0.0
    %2603 = vadd.xlane.f32.xlu0 %v2602
    %v2604 = vpop.xlane.xlu0 %2603
    %v2605 = vmul.f32 %v2601, %v199
    %v2606 = vmul.f32 %v2604, %v199
    %v2607 = vadd.f32 %v2605, 1e-05
    %v2608 = vadd.f32 %v2606, 1e-05
    %v2609 = vrsqrt.pop %v2607
    %v2610 = vrsqrt.pop %v2608
    %v2611 = vmul.f32 %v2595, %v2609
    %v2612 = vmul.f32 %v2596, %v2610
    %v2614 = vlaneseq
    %v2615 = vshrl.u32 %v2614, 7
    %v2616 = vsub.s32 0, %v2615
    %v2617 = vrot.slane %v2584, %v2616
    %v2619 = vmul.f32 %v2611, %v2617
    %v2620 = vmul.f32 %v2612, %v2617
    %v2622 = vlaneseq
    %v2623 = vshrl.u32 %v2622, 7
    %v2624 = vsub.s32 0, %v2623
    %v2625 = vrot.slane %v2586, %v2624
    %v2627 = vadd.f32 %v2619, %v2625
    %v2628 = vadd.f32 %v2620, %v2625
    %s2629 = scalar_lea.vmem %s5, 32
    %v2630 = vld [vmem:[%s2629] sm:$0xff]
    %v2631 = vld [vmem:[%s2629 + $0x8] sm:$0xff]
    %v2632 = vld [vmem:[%s2629 + $0x10] sm:$0xff]
    %v2633 = vld [vmem:[%s2629 + $0x18] sm:$0xff]
    %s2634 = scalar_lea.vmem %s6, 1
    %v2635 = vld [vmem:[%s2634] sm:$0x1]
    %v2637 = vlaneseq
    %v2638 = vshrl.u32 %v2637, 7
    %v2639 = vsub.s32 0, %v2638
    %v2640 = vrot.slane %v2635, %v2639
    %v2643 = vsel %vm185, %v2627, 0
    %v2646 = vsel %vm185, %v2628, 0
    %2648 = vmatprep.subr.mxu0 0.0
    %2649 = vmatpush1.msra.mxu0 0.0
    %2650 = vmatprep.subr.mxu0 0.0
    %2651 = vmatpush1.msra.mxu0 0.0
    %2652 = vmatprep.subr.mxu0 0.0
    %2653 = vmatpush1.msra.mxu0 0.0
    %2654 = vmatprep.subr.mxu0 0.0
    %2655 = vmatpush1.msra.mxu0 0.0
    %2656 = vmatprep.subr.mxu0 0.0
    %2657 = vmatpush1.msra.mxu0 0.0
    %2658 = vmatprep.subr.mxu0 0.0
    %2659 = vmatpush1.msra.mxu0 0.0
    %2660 = vmatprep.subr.mxu0 0.0
    %2661 = vmatpush1.msra.mxu0 0.0
    %2662 = vmatprep.subr.mxu0 0.0
    %2663 = vmatpush1.msra.mxu0 0.0
    %2664 = vmatprep.subr.mxu0 0.0
    %2665 = vmatpush1.msra.mxu0 0.0
    %2666 = vmatprep.subr.mxu0 0.0
    %2667 = vmatpush1.msra.mxu0 0.0
    %2668 = vmatprep.subr.mxu0 0.0
    %2669 = vmatpush1.msra.mxu0 0.0
    %2670 = vmatprep.subr.mxu0 0.0
    %2671 = vmatpush1.msra.mxu0 0.0
    %2672 = vmatprep.subr.mxu0 0.0
    %2673 = vmatpush1.msra.mxu0 %v2633
    %2674 = vmatprep.subr.mxu0 0.0
    %2675 = vmatpush1.msra.mxu0 %v2632
    %2676 = vmatprep.subr.mxu0 0.0
    %2677 = vmatpush1.msra.mxu0 %v2631
    %2678 = vmatprep.subr.mxu0 0.0
    %2679 = vmatpush1.msra.mxu0 %v2630
    %2680 = vmatprep.subr.mxu0 0.0
    %2681 = vmatpush2.msra.mxu0 0.0
    %2682 = vmatprep.subr.mxu0 0.0
    %2683 = vmatpush2.msra.mxu0 0.0
    %2684 = vmatprep.subr.mxu0 0.0
    %2685 = vmatpush2.msra.mxu0 0.0
    %2686 = vmatprep.subr.mxu0 0.0
    %2687 = vmatpush2.msra.mxu0 0.0
    %2688 = vmatprep.subr.mxu0 0.0
    %2689 = vmatpush2.msra.mxu0 0.0
    %2690 = vmatprep.subr.mxu0 0.0
    %2691 = vmatpush2.msra.mxu0 0.0
    %2692 = vmatprep.subr.mxu0 0.0
    %2693 = vmatpush2.msra.mxu0 0.0
    %2694 = vmatprep.subr.mxu0 0.0
    %2695 = vmatpush2.msra.mxu0 0.0
    %2696 = vmatprep.subr.mxu0 0.0
    %2697 = vmatpush2.msra.mxu0 0.0
    %2698 = vmatprep.subr.mxu0 0.0
    %2699 = vmatpush2.msra.mxu0 0.0
    %2700 = vmatprep.subr.mxu0 0.0
    %2701 = vmatpush2.msra.mxu0 0.0
    %2702 = vmatprep.subr.mxu0 0.0
    %2703 = vmatpush2.msra.mxu0 0.0
    %2704 = vmatprep.subr.mxu0 0.0
    %2705 = vmatpush2.msra.mxu0 0.0
    %2706 = vmatprep.subr.mxu0 0.0
    %2707 = vmatpush2.msra.mxu0 0.0
    %2708 = vmatprep.subr.mxu0 0.0
    %2709 = vmatpush2.msra.mxu0 0.0
    %2710 = vmatprep.subr.mxu0 0.0
    %2711 = vmatpush2.msra.mxu0 0.0
    %2712 = vmatprep.mubr.f32.mxu0 0.0
    %2713 = vmatmul.mubr.f32.gmra.mxu0 %v2643
    %v2714 = vpop.f32.mrf.mxu0
    %v2715 = vadd.f32 %v2640, %v2714
    %v2716 = vpop.f32.mrf.mxu0
    %2717 = vmatprep.mubr.f32.mxu0 0.0
    %2718 = vmatmul.mubr.f32.gmra.mxu0 %v2646
    %v2719 = vpop.f32.mrf.mxu0
    %v2720 = vadd.f32 %v2640, %v2719
    %v2721 = vpop.f32.mrf.mxu0
    %2722 = vdwg.mxu0
    %2723 = vst.msk [vmem:[#allocation3] sm:$0xff] %vm328, %v2715
    %2724 = vst.msk [vmem:[#allocation3 + $0x8] sm:$0x3] %vm330, %v2720
    %s2725 = scalar_lea.vmem %s7, 32
    %v2726 = vld [vmem:[%s2725] sm:$0xff]
    %v2727 = vld [vmem:[%s2725 + $0x8] sm:$0xff]
    %v2728 = vld [vmem:[%s2725 + $0x10] sm:$0xff]
    %v2729 = vld [vmem:[%s2725 + $0x18] sm:$0xff]
    %v2730 = vld [vmem:[#allocation3] sm:$0x1f]
    %2732 = vrot.lane.b32.xlu0 %v2730, 96
    %v2733 = vpop.permute.xlu0 %2732
    %v2734 = vsel %vm340, %v2730, 0
    %v2736 = vsel %vm340, %v2733, 0
    %2738 = vmatprep.subr.mxu0 0.0
    %2739 = vmatpush1.xpose.msra.mxu0 0.0
    %2740 = vmatprep.subr.mxu0 0.0
    %2741 = vmatpush1.xpose.msra.mxu0 0.0
    %2742 = vmatprep.subr.mxu0 0.0
    %2743 = vmatpush1.xpose.msra.mxu0 0.0
    %2744 = vmatprep.subr.mxu0 0.0
    %2745 = vmatpush1.xpose.msra.mxu0 0.0
    %2746 = vmatprep.subr.mxu0 0.0
    %2747 = vmatpush1.xpose.msra.mxu0 0.0
    %2748 = vmatprep.subr.mxu0 0.0
    %2749 = vmatpush1.xpose.msra.mxu0 0.0
    %2750 = vmatprep.subr.mxu0 0.0
    %2751 = vmatpush1.xpose.msra.mxu0 0.0
    %2752 = vmatprep.subr.mxu0 0.0
    %2753 = vmatpush1.xpose.msra.mxu0 0.0
    %2754 = vmatprep.subr.mxu0 0.0
    %2755 = vmatpush1.xpose.msra.mxu0 0.0
    %2756 = vmatprep.subr.mxu0 0.0
    %2757 = vmatpush1.xpose.msra.mxu0 0.0
    %2758 = vmatprep.subr.mxu0 0.0
    %2759 = vmatpush1.xpose.msra.mxu0 0.0
    %2760 = vmatprep.subr.mxu0 0.0
    %2761 = vmatpush1.xpose.msra.mxu0 0.0
    %2762 = vmatprep.subr.mxu0 0.0
    %2763 = vmatpush1.xpose.msra.mxu0 0.0
    %2764 = vmatprep.subr.mxu0 0.0
    %2765 = vmatpush1.xpose.msra.mxu0 0.0
    %2766 = vmatprep.subr.mxu0 0.0
    %2767 = vmatpush1.xpose.msra.mxu0 0.0
    %2768 = vmatprep.subr.mxu0 0.0
    %2769 = vmatpush1.xpose.msra.mxu0 %v2736
    %2770 = vmatprep.subr.mxu0 0.0
    %2771 = vmatpush2.xpose.msra.mxu0 0.0
    %2772 = vmatprep.subr.mxu0 0.0
    %2773 = vmatpush2.xpose.msra.mxu0 0.0
    %2774 = vmatprep.subr.mxu0 0.0
    %2775 = vmatpush2.xpose.msra.mxu0 0.0
    %2776 = vmatprep.subr.mxu0 0.0
    %2777 = vmatpush2.xpose.msra.mxu0 0.0
    %2778 = vmatprep.subr.mxu0 0.0
    %2779 = vmatpush2.xpose.msra.mxu0 0.0
    %2780 = vmatprep.subr.mxu0 0.0
    %2781 = vmatpush2.xpose.msra.mxu0 0.0
    %2782 = vmatprep.subr.mxu0 0.0
    %2783 = vmatpush2.xpose.msra.mxu0 0.0
    %2784 = vmatprep.subr.mxu0 0.0
    %2785 = vmatpush2.xpose.msra.mxu0 0.0
    %2786 = vmatprep.subr.mxu0 0.0
    %2787 = vmatpush2.xpose.msra.mxu0 0.0
    %2788 = vmatprep.subr.mxu0 0.0
    %2789 = vmatpush2.xpose.msra.mxu0 0.0
    %2790 = vmatprep.subr.mxu0 0.0
    %2791 = vmatpush2.xpose.msra.mxu0 0.0
    %2792 = vmatprep.subr.mxu0 0.0
    %2793 = vmatpush2.xpose.msra.mxu0 0.0
    %2794 = vmatprep.subr.mxu0 0.0
    %2795 = vmatpush2.xpose.msra.mxu0 0.0
    %2796 = vmatprep.subr.mxu0 0.0
    %2797 = vmatpush2.xpose.msra.mxu0 0.0
    %2798 = vmatprep.subr.mxu0 0.0
    %2799 = vmatpush2.xpose.msra.mxu0 0.0
    %2800 = vmatprep.subr.mxu0 0.0
    %2801 = vmatpush2.xpose.msra.mxu0 0.0
    %2802 = vmatprep.mubr.f32.mxu0 0.0
    %2803 = vmatmul.mubr.f32.gmra.mxu0 %v2734
    %v2804 = vpop.f32.mrf.mxu0
    %v2805 = vadd.f32 0.0, %v2804
    %v2806 = vpop.f32.mrf.mxu0
    %2807 = vdwg.mxu0
    %v2808 = vmul.f32 %v2805, 0.35355338
    %v2809 = vsel %vm416, %v2808, -inf
    %2810 = vmax.xlane.f32.xlu0 %v2809
    %v2811 = vpop.xlane.xlu0 %2810
    %v2812 = vsub.f32 %v2808, %v2811
    %v2813 = vmul.f32 %v2812, 1.442695
    %v2814 = vpow.pop %v2813
    %v2815 = vsel %vm416, %v2814, 0.0
    %2816 = vadd.xlane.f32.xlu0 %v2815
    %v2817 = vpop.xlane.xlu0 %2816
    %v2818 = vrcp.pop %v2817
    %v2819 = vmul.f32 %v2814, %v2818
    %2820 = vrot.lane.b32.xlu0 %v2730, 64
    %v2821 = vpop.permute.xlu0 %2820
    %v2823 = vsel %vm430, %v2819, 0
    %v2825 = vsel %vm434, %v2821, 0
    %2827 = vmatprep.subr.mxu0 0.0
    %2828 = vmatpush1.msra.mxu0 0.0
    %2829 = vmatprep.subr.mxu0 0.0
    %2830 = vmatpush1.msra.mxu0 0.0
    %2831 = vmatprep.subr.mxu0 0.0
    %2832 = vmatpush1.msra.mxu0 0.0
    %2833 = vmatprep.subr.mxu0 0.0
    %2834 = vmatpush1.msra.mxu0 0.0
    %2835 = vmatprep.subr.mxu0 0.0
    %2836 = vmatpush1.msra.mxu0 0.0
    %2837 = vmatprep.subr.mxu0 0.0
    %2838 = vmatpush1.msra.mxu0 0.0
    %2839 = vmatprep.subr.mxu0 0.0
    %2840 = vmatpush1.msra.mxu0 0.0
    %2841 = vmatprep.subr.mxu0 0.0
    %2842 = vmatpush1.msra.mxu0 0.0
    %2843 = vmatprep.subr.mxu0 0.0
    %2844 = vmatpush1.msra.mxu0 0.0
    %2845 = vmatprep.subr.mxu0 0.0
    %2846 = vmatpush1.msra.mxu0 0.0
    %2847 = vmatprep.subr.mxu0 0.0
    %2848 = vmatpush1.msra.mxu0 0.0
    %2849 = vmatprep.subr.mxu0 0.0
    %2850 = vmatpush1.msra.mxu0 0.0
    %2851 = vmatprep.subr.mxu0 0.0
    %2852 = vmatpush1.msra.mxu0 0.0
    %2853 = vmatprep.subr.mxu0 0.0
    %2854 = vmatpush1.msra.mxu0 0.0
    %2855 = vmatprep.subr.mxu0 0.0
    %2856 = vmatpush1.msra.mxu0 0.0
    %2857 = vmatprep.subr.mxu0 0.0
    %2858 = vmatpush1.msra.mxu0 %v2825
    %2859 = vmatprep.subr.mxu0 0.0
    %2860 = vmatpush2.msra.mxu0 0.0
    %2861 = vmatprep.subr.mxu0 0.0
    %2862 = vmatpush2.msra.mxu0 0.0
    %2863 = vmatprep.subr.mxu0 0.0
    %2864 = vmatpush2.msra.mxu0 0.0
    %2865 = vmatprep.subr.mxu0 0.0
    %2866 = vmatpush2.msra.mxu0 0.0
    %2867 = vmatprep.subr.mxu0 0.0
    %2868 = vmatpush2.msra.mxu0 0.0
    %2869 = vmatprep.subr.mxu0 0.0
    %2870 = vmatpush2.msra.mxu0 0.0
    %2871 = vmatprep.subr.mxu0 0.0
    %2872 = vmatpush2.msra.mxu0 0.0
    %2873 = vmatprep.subr.mxu0 0.0
    %2874 = vmatpush2.msra.mxu0 0.0
    %2875 = vmatprep.subr.mxu0 0.0
    %2876 = vmatpush2.msra.mxu0 0.0
    %2877 = vmatprep.subr.mxu0 0.0
    %2878 = vmatpush2.msra.mxu0 0.0
    %2879 = vmatprep.subr.mxu0 0.0
    %2880 = vmatpush2.msra.mxu0 0.0
    %2881 = vmatprep.subr.mxu0 0.0
    %2882 = vmatpush2.msra.mxu0 0.0
    %2883 = vmatprep.subr.mxu0 0.0
    %2884 = vmatpush2.msra.mxu0 0.0
    %2885 = vmatprep.subr.mxu0 0.0
    %2886 = vmatpush2.msra.mxu0 0.0
    %2887 = vmatprep.subr.mxu0 0.0
    %2888 = vmatpush2.msra.mxu0 0.0
    %2889 = vmatprep.subr.mxu0 0.0
    %2890 = vmatpush2.msra.mxu0 0.0
    %2891 = vmatprep.mubr.f32.mxu0 0.0
    %2892 = vmatmul.mubr.f32.gmra.mxu0 %v2823
    %v2893 = vpop.f32.mrf.mxu0
    %v2894 = vadd.f32 0.0, %v2893
    %v2895 = vpop.f32.mrf.mxu0
    %2896 = vdwg.mxu0
    %2897 = vrot.lane.b32.xlu0 %v2730, 120
    %v2898 = vpop.permute.xlu0 %2897
    %2899 = vrot.lane.b32.xlu0 %v2730, 88
    %v2900 = vpop.permute.xlu0 %2899
    %v2901 = vsel %vm340, %v2898, 0
    %v2903 = vsel %vm340, %v2900, 0
    %2905 = vmatprep.subr.mxu0 0.0
    %2906 = vmatpush1.xpose.msra.mxu0 0.0
    %2907 = vmatprep.subr.mxu0 0.0
    %2908 = vmatpush1.xpose.msra.mxu0 0.0
    %2909 = vmatprep.subr.mxu0 0.0
    %2910 = vmatpush1.xpose.msra.mxu0 0.0
    %2911 = vmatprep.subr.mxu0 0.0
    %2912 = vmatpush1.xpose.msra.mxu0 0.0
    %2913 = vmatprep.subr.mxu0 0.0
    %2914 = vmatpush1.xpose.msra.mxu0 0.0
    %2915 = vmatprep.subr.mxu0 0.0
    %2916 = vmatpush1.xpose.msra.mxu0 0.0
    %2917 = vmatprep.subr.mxu0 0.0
    %2918 = vmatpush1.xpose.msra.mxu0 0.0
    %2919 = vmatprep.subr.mxu0 0.0
    %2920 = vmatpush1.xpose.msra.mxu0 0.0
    %2921 = vmatprep.subr.mxu0 0.0
    %2922 = vmatpush1.xpose.msra.mxu0 0.0
    %2923 = vmatprep.subr.mxu0 0.0
    %2924 = vmatpush1.xpose.msra.mxu0 0.0
    %2925 = vmatprep.subr.mxu0 0.0
    %2926 = vmatpush1.xpose.msra.mxu0 0.0
    %2927 = vmatprep.subr.mxu0 0.0
    %2928 = vmatpush1.xpose.msra.mxu0 0.0
    %2929 = vmatprep.subr.mxu0 0.0
    %2930 = vmatpush1.xpose.msra.mxu0 0.0
    %2931 = vmatprep.subr.mxu0 0.0
    %2932 = vmatpush1.xpose.msra.mxu0 0.0
    %2933 = vmatprep.subr.mxu0 0.0
    %2934 = vmatpush1.xpose.msra.mxu0 0.0
    %2935 = vmatprep.subr.mxu0 0.0
    %2936 = vmatpush1.xpose.msra.mxu0 %v2903
    %2937 = vmatprep.subr.mxu0 0.0
    %2938 = vmatpush2.xpose.msra.mxu0 0.0
    %2939 = vmatprep.subr.mxu0 0.0
    %2940 = vmatpush2.xpose.msra.mxu0 0.0
    %2941 = vmatprep.subr.mxu0 0.0
    %2942 = vmatpush2.xpose.msra.mxu0 0.0
    %2943 = vmatprep.subr.mxu0 0.0
    %2944 = vmatpush2.xpose.msra.mxu0 0.0
    %2945 = vmatprep.subr.mxu0 0.0
    %2946 = vmatpush2.xpose.msra.mxu0 0.0
    %2947 = vmatprep.subr.mxu0 0.0
    %2948 = vmatpush2.xpose.msra.mxu0 0.0
    %2949 = vmatprep.subr.mxu0 0.0
    %2950 = vmatpush2.xpose.msra.mxu0 0.0
    %2951 = vmatprep.subr.mxu0 0.0
    %2952 = vmatpush2.xpose.msra.mxu0 0.0
    %2953 = vmatprep.subr.mxu0 0.0
    %2954 = vmatpush2.xpose.msra.mxu0 0.0
    %2955 = vmatprep.subr.mxu0 0.0
    %2956 = vmatpush2.xpose.msra.mxu0 0.0
    %2957 = vmatprep.subr.mxu0 0.0
    %2958 = vmatpush2.xpose.msra.mxu0 0.0
    %2959 = vmatprep.subr.mxu0 0.0
    %2960 = vmatpush2.xpose.msra.mxu0 0.0
    %2961 = vmatprep.subr.mxu0 0.0
    %2962 = vmatpush2.xpose.msra.mxu0 0.0
    %2963 = vmatprep.subr.mxu0 0.0
    %2964 = vmatpush2.xpose.msra.mxu0 0.0
    %2965 = vmatprep.subr.mxu0 0.0
    %2966 = vmatpush2.xpose.msra.mxu0 0.0
    %2967 = vmatprep.subr.mxu0 0.0
    %2968 = vmatpush2.xpose.msra.mxu0 0.0
    %2969 = vmatprep.mubr.f32.mxu0 0.0
    %2970 = vmatmul.mubr.f32.gmra.mxu0 %v2901
    %v2971 = vpop.f32.mrf.mxu0
    %v2972 = vadd.f32 0.0, %v2971
    %v2973 = vpop.f32.mrf.mxu0
    %2974 = vdwg.mxu0
    %v2975 = vmul.f32 %v2972, 0.35355338
    %v2976 = vsel %vm416, %v2975, -inf
    %2977 = vmax.xlane.f32.xlu0 %v2976
    %v2978 = vpop.xlane.xlu0 %2977
    %v2979 = vsub.f32 %v2975, %v2978
    %v2980 = vmul.f32 %v2979, 1.442695
    %v2981 = vpow.pop %v2980
    %v2982 = vsel %vm416, %v2981, 0.0
    %2983 = vadd.xlane.f32.xlu0 %v2982
    %v2984 = vpop.xlane.xlu0 %2983
    %v2985 = vrcp.pop %v2984
    %v2986 = vmul.f32 %v2981, %v2985
    %2987 = vrot.lane.b32.xlu0 %v2730, 56
    %v2988 = vpop.permute.xlu0 %2987
    %v2990 = vsel %vm430, %v2986, 0
    %v2992 = vsel %vm434, %v2988, 0
    %2994 = vmatprep.subr.mxu0 0.0
    %2995 = vmatpush1.msra.mxu0 0.0
    %2996 = vmatprep.subr.mxu0 0.0
    %2997 = vmatpush1.msra.mxu0 0.0
    %2998 = vmatprep.subr.mxu0 0.0
    %2999 = vmatpush1.msra.mxu0 0.0
    %3000 = vmatprep.subr.mxu0 0.0
    %3001 = vmatpush1.msra.mxu0 0.0
    %3002 = vmatprep.subr.mxu0 0.0
    %3003 = vmatpush1.msra.mxu0 0.0
    %3004 = vmatprep.subr.mxu0 0.0
    %3005 = vmatpush1.msra.mxu0 0.0
    %3006 = vmatprep.subr.mxu0 0.0
    %3007 = vmatpush1.msra.mxu0 0.0
    %3008 = vmatprep.subr.mxu0 0.0
    %3009 = vmatpush1.msra.mxu0 0.0
    %3010 = vmatprep.subr.mxu0 0.0
    %3011 = vmatpush1.msra.mxu0 0.0
    %3012 = vmatprep.subr.mxu0 0.0
    %3013 = vmatpush1.msra.mxu0 0.0
    %3014 = vmatprep.subr.mxu0 0.0
    %3015 = vmatpush1.msra.mxu0 0.0
    %3016 = vmatprep.subr.mxu0 0.0
    %3017 = vmatpush1.msra.mxu0 0.0
    %3018 = vmatprep.subr.mxu0 0.0
    %3019 = vmatpush1.msra.mxu0 0.0
    %3020 = vmatprep.subr.mxu0 0.0
    %3021 = vmatpush1.msra.mxu0 0.0
    %3022 = vmatprep.subr.mxu0 0.0
    %3023 = vmatpush1.msra.mxu0 0.0
    %3024 = vmatprep.subr.mxu0 0.0
    %3025 = vmatpush1.msra.mxu0 %v2992
    %3026 = vmatprep.subr.mxu0 0.0
    %3027 = vmatpush2.msra.mxu0 0.0
    %3028 = vmatprep.subr.mxu0 0.0
    %3029 = vmatpush2.msra.mxu0 0.0
    %3030 = vmatprep.subr.mxu0 0.0
    %3031 = vmatpush2.msra.mxu0 0.0
    %3032 = vmatprep.subr.mxu0 0.0
    %3033 = vmatpush2.msra.mxu0 0.0
    %3034 = vmatprep.subr.mxu0 0.0
    %3035 = vmatpush2.msra.mxu0 0.0
    %3036 = vmatprep.subr.mxu0 0.0
    %3037 = vmatpush2.msra.mxu0 0.0
    %3038 = vmatprep.subr.mxu0 0.0
    %3039 = vmatpush2.msra.mxu0 0.0
    %3040 = vmatprep.subr.mxu0 0.0
    %3041 = vmatpush2.msra.mxu0 0.0
    %3042 = vmatprep.subr.mxu0 0.0
    %3043 = vmatpush2.msra.mxu0 0.0
    %3044 = vmatprep.subr.mxu0 0.0
    %3045 = vmatpush2.msra.mxu0 0.0
    %3046 = vmatprep.subr.mxu0 0.0
    %3047 = vmatpush2.msra.mxu0 0.0
    %3048 = vmatprep.subr.mxu0 0.0
    %3049 = vmatpush2.msra.mxu0 0.0
    %3050 = vmatprep.subr.mxu0 0.0
    %3051 = vmatpush2.msra.mxu0 0.0
    %3052 = vmatprep.subr.mxu0 0.0
    %3053 = vmatpush2.msra.mxu0 0.0
    %3054 = vmatprep.subr.mxu0 0.0
    %3055 = vmatpush2.msra.mxu0 0.0
    %3056 = vmatprep.subr.mxu0 0.0
    %3057 = vmatpush2.msra.mxu0 0.0
    %3058 = vmatprep.mubr.f32.mxu0 0.0
    %3059 = vmatmul.mubr.f32.gmra.mxu0 %v2990
    %v3060 = vpop.f32.mrf.mxu0
    %v3061 = vadd.f32 0.0, %v3060
    %v3062 = vpop.f32.mrf.mxu0
    %3063 = vdwg.mxu0
    %v3065 = vsel %vm340, %v3061, 0
    %3067 = vmatprep.subr.mxu0 0.0
    %3068 = vmatpush1.msra.mxu0 0.0
    %3069 = vmatprep.subr.mxu0 0.0
    %3070 = vmatpush1.msra.mxu0 0.0
    %3071 = vmatprep.subr.mxu0 0.0
    %3072 = vmatpush1.msra.mxu0 0.0
    %3073 = vmatprep.subr.mxu0 0.0
    %3074 = vmatpush1.msra.mxu0 0.0
    %3075 = vmatprep.subr.mxu0 0.0
    %3076 = vmatpush1.msra.mxu0 0.0
    %3077 = vmatprep.subr.mxu0 0.0
    %3078 = vmatpush1.msra.mxu0 0.0
    %3079 = vmatprep.subr.mxu0 0.0
    %3080 = vmatpush1.msra.mxu0 0.0
    %3081 = vmatprep.subr.mxu0 0.0
    %3082 = vmatpush1.msra.mxu0 0.0
    %3083 = vmatprep.subr.mxu0 0.0
    %3084 = vmatpush1.msra.mxu0 0.0
    %3085 = vmatprep.subr.mxu0 0.0
    %3086 = vmatpush1.msra.mxu0 0.0
    %3087 = vmatprep.subr.mxu0 0.0
    %3088 = vmatpush1.msra.mxu0 0.0
    %3089 = vmatprep.subr.mxu0 0.0
    %3090 = vmatpush1.msra.mxu0 0.0
    %3091 = vmatprep.subr.mxu0 0.0
    %3092 = vmatpush1.msra.mxu0 0.0
    %3093 = vmatprep.subr.mxu0 0.0
    %3094 = vmatpush1.msra.mxu0 0.0
    %3095 = vmatprep.subr.mxu0 0.0
    %3096 = vmatpush1.msra.mxu0 0.0
    %3097 = vmatprep.subr.mxu0 0.0
    %3098 = vmatpush1.msra.mxu0 %v2727
    %3099 = vmatprep.subr.mxu0 0.0
    %3100 = vmatpush2.msra.mxu0 0.0
    %3101 = vmatprep.subr.mxu0 0.0
    %3102 = vmatpush2.msra.mxu0 0.0
    %3103 = vmatprep.subr.mxu0 0.0
    %3104 = vmatpush2.msra.mxu0 0.0
    %3105 = vmatprep.subr.mxu0 0.0
    %3106 = vmatpush2.msra.mxu0 0.0
    %3107 = vmatprep.subr.mxu0 0.0
    %3108 = vmatpush2.msra.mxu0 0.0
    %3109 = vmatprep.subr.mxu0 0.0
    %3110 = vmatpush2.msra.mxu0 0.0
    %3111 = vmatprep.subr.mxu0 0.0
    %3112 = vmatpush2.msra.mxu0 0.0
    %3113 = vmatprep.subr.mxu0 0.0
    %3114 = vmatpush2.msra.mxu0 0.0
    %3115 = vmatprep.subr.mxu0 0.0
    %3116 = vmatpush2.msra.mxu0 0.0
    %3117 = vmatprep.subr.mxu0 0.0
    %3118 = vmatpush2.msra.mxu0 0.0
    %3119 = vmatprep.subr.mxu0 0.0
    %3120 = vmatpush2.msra.mxu0 0.0
    %3121 = vmatprep.subr.mxu0 0.0
    %3122 = vmatpush2.msra.mxu0 0.0
    %3123 = vmatprep.subr.mxu0 0.0
    %3124 = vmatpush2.msra.mxu0 0.0
    %3125 = vmatprep.subr.mxu0 0.0
    %3126 = vmatpush2.msra.mxu0 0.0
    %3127 = vmatprep.subr.mxu0 0.0
    %3128 = vmatpush2.msra.mxu0 0.0
    %3129 = vmatprep.subr.mxu0 0.0
    %3130 = vmatpush2.msra.mxu0 0.0
    %3131 = vmatprep.mubr.f32.mxu0 0.0
    %3132 = vmatmul.mubr.f32.gmra.mxu0 %v3065
    %v3133 = vpop.f32.mrf.mxu0
    %v3134 = vadd.f32 0.0, %v3133
    %v3135 = vpop.f32.mrf.mxu0
    %3136 = vdwg.mxu0
    %v3138 = vsel %vm340, %v2894, 0
    %3140 = vmatprep.subr.mxu0 0.0
    %3141 = vmatpush1.msra.mxu0 0.0
    %3142 = vmatprep.subr.mxu0 0.0
    %3143 = vmatpush1.msra.mxu0 0.0
    %3144 = vmatprep.subr.mxu0 0.0
    %3145 = vmatpush1.msra.mxu0 0.0
    %3146 = vmatprep.subr.mxu0 0.0
    %3147 = vmatpush1.msra.mxu0 0.0
    %3148 = vmatprep.subr.mxu0 0.0
    %3149 = vmatpush1.msra.mxu0 0.0
    %3150 = vmatprep.subr.mxu0 0.0
    %3151 = vmatpush1.msra.mxu0 0.0
    %3152 = vmatprep.subr.mxu0 0.0
    %3153 = vmatpush1.msra.mxu0 0.0
    %3154 = vmatprep.subr.mxu0 0.0
    %3155 = vmatpush1.msra.mxu0 0.0
    %3156 = vmatprep.subr.mxu0 0.0
    %3157 = vmatpush1.msra.mxu0 0.0
    %3158 = vmatprep.subr.mxu0 0.0
    %3159 = vmatpush1.msra.mxu0 0.0
    %3160 = vmatprep.subr.mxu0 0.0
    %3161 = vmatpush1.msra.mxu0 0.0
    %3162 = vmatprep.subr.mxu0 0.0
    %3163 = vmatpush1.msra.mxu0 0.0
    %3164 = vmatprep.subr.mxu0 0.0
    %3165 = vmatpush1.msra.mxu0 0.0
    %3166 = vmatprep.subr.mxu0 0.0
    %3167 = vmatpush1.msra.mxu0 0.0
    %3168 = vmatprep.subr.mxu0 0.0
    %3169 = vmatpush1.msra.mxu0 0.0
    %3170 = vmatprep.subr.mxu0 0.0
    %3171 = vmatpush1.msra.mxu0 %v2726
    %3172 = vmatprep.subr.mxu0 0.0
    %3173 = vmatpush2.msra.mxu0 0.0
    %3174 = vmatprep.subr.mxu0 0.0
    %3175 = vmatpush2.msra.mxu0 0.0
    %3176 = vmatprep.subr.mxu0 0.0
    %3177 = vmatpush2.msra.mxu0 0.0
    %3178 = vmatprep.subr.mxu0 0.0
    %3179 = vmatpush2.msra.mxu0 0.0
    %3180 = vmatprep.subr.mxu0 0.0
    %3181 = vmatpush2.msra.mxu0 0.0
    %3182 = vmatprep.subr.mxu0 0.0
    %3183 = vmatpush2.msra.mxu0 0.0
    %3184 = vmatprep.subr.mxu0 0.0
    %3185 = vmatpush2.msra.mxu0 0.0
    %3186 = vmatprep.subr.mxu0 0.0
    %3187 = vmatpush2.msra.mxu0 0.0
    %3188 = vmatprep.subr.mxu0 0.0
    %3189 = vmatpush2.msra.mxu0 0.0
    %3190 = vmatprep.subr.mxu0 0.0
    %3191 = vmatpush2.msra.mxu0 0.0
    %3192 = vmatprep.subr.mxu0 0.0
    %3193 = vmatpush2.msra.mxu0 0.0
    %3194 = vmatprep.subr.mxu0 0.0
    %3195 = vmatpush2.msra.mxu0 0.0
    %3196 = vmatprep.subr.mxu0 0.0
    %3197 = vmatpush2.msra.mxu0 0.0
    %3198 = vmatprep.subr.mxu0 0.0
    %3199 = vmatpush2.msra.mxu0 0.0
    %3200 = vmatprep.subr.mxu0 0.0
    %3201 = vmatpush2.msra.mxu0 0.0
    %3202 = vmatprep.subr.mxu0 0.0
    %3203 = vmatpush2.msra.mxu0 0.0
    %3204 = vmatprep.mubr.f32.mxu0 0.0
    %3205 = vmatmul.mubr.f32.gmra.mxu0 %v3138
    %v3206 = vpop.f32.mrf.mxu0
    %v3207 = vadd.f32 %v3134, %v3206
    %v3208 = vpop.f32.mrf.mxu0
    %3209 = vdwg.mxu0
    %3210 = vrot.lane.b32.xlu0 %v2730, 112
    %v3211 = vpop.permute.xlu0 %3210
    %3212 = vrot.lane.b32.xlu0 %v2730, 80
    %v3213 = vpop.permute.xlu0 %3212
    %v3214 = vsel %vm340, %v3211, 0
    %v3216 = vsel %vm340, %v3213, 0
    %3218 = vmatprep.subr.mxu0 0.0
    %3219 = vmatpush1.xpose.msra.mxu0 0.0
    %3220 = vmatprep.subr.mxu0 0.0
    %3221 = vmatpush1.xpose.msra.mxu0 0.0
    %3222 = vmatprep.subr.mxu0 0.0
    %3223 = vmatpush1.xpose.msra.mxu0 0.0
    %3224 = vmatprep.subr.mxu0 0.0
    %3225 = vmatpush1.xpose.msra.mxu0 0.0
    %3226 = vmatprep.subr.mxu0 0.0
    %3227 = vmatpush1.xpose.msra.mxu0 0.0
    %3228 = vmatprep.subr.mxu0 0.0
    %3229 = vmatpush1.xpose.msra.mxu0 0.0
    %3230 = vmatprep.subr.mxu0 0.0
    %3231 = vmatpush1.xpose.msra.mxu0 0.0
    %3232 = vmatprep.subr.mxu0 0.0
    %3233 = vmatpush1.xpose.msra.mxu0 0.0
    %3234 = vmatprep.subr.mxu0 0.0
    %3235 = vmatpush1.xpose.msra.mxu0 0.0
    %3236 = vmatprep.subr.mxu0 0.0
    %3237 = vmatpush1.xpose.msra.mxu0 0.0
    %3238 = vmatprep.subr.mxu0 0.0
    %3239 = vmatpush1.xpose.msra.mxu0 0.0
    %3240 = vmatprep.subr.mxu0 0.0
    %3241 = vmatpush1.xpose.msra.mxu0 0.0
    %3242 = vmatprep.subr.mxu0 0.0
    %3243 = vmatpush1.xpose.msra.mxu0 0.0
    %3244 = vmatprep.subr.mxu0 0.0
    %3245 = vmatpush1.xpose.msra.mxu0 0.0
    %3246 = vmatprep.subr.mxu0 0.0
    %3247 = vmatpush1.xpose.msra.mxu0 0.0
    %3248 = vmatprep.subr.mxu0 0.0
    %3249 = vmatpush1.xpose.msra.mxu0 %v3216
    %3250 = vmatprep.subr.mxu0 0.0
    %3251 = vmatpush2.xpose.msra.mxu0 0.0
    %3252 = vmatprep.subr.mxu0 0.0
    %3253 = vmatpush2.xpose.msra.mxu0 0.0
    %3254 = vmatprep.subr.mxu0 0.0
    %3255 = vmatpush2.xpose.msra.mxu0 0.0
    %3256 = vmatprep.subr.mxu0 0.0
    %3257 = vmatpush2.xpose.msra.mxu0 0.0
    %3258 = vmatprep.subr.mxu0 0.0
    %3259 = vmatpush2.xpose.msra.mxu0 0.0
    %3260 = vmatprep.subr.mxu0 0.0
    %3261 = vmatpush2.xpose.msra.mxu0 0.0
    %3262 = vmatprep.subr.mxu0 0.0
    %3263 = vmatpush2.xpose.msra.mxu0 0.0
    %3264 = vmatprep.subr.mxu0 0.0
    %3265 = vmatpush2.xpose.msra.mxu0 0.0
    %3266 = vmatprep.subr.mxu0 0.0
    %3267 = vmatpush2.xpose.msra.mxu0 0.0
    %3268 = vmatprep.subr.mxu0 0.0
    %3269 = vmatpush2.xpose.msra.mxu0 0.0
    %3270 = vmatprep.subr.mxu0 0.0
    %3271 = vmatpush2.xpose.msra.mxu0 0.0
    %3272 = vmatprep.subr.mxu0 0.0
    %3273 = vmatpush2.xpose.msra.mxu0 0.0
    %3274 = vmatprep.subr.mxu0 0.0
    %3275 = vmatpush2.xpose.msra.mxu0 0.0
    %3276 = vmatprep.subr.mxu0 0.0
    %3277 = vmatpush2.xpose.msra.mxu0 0.0
    %3278 = vmatprep.subr.mxu0 0.0
    %3279 = vmatpush2.xpose.msra.mxu0 0.0
    %3280 = vmatprep.subr.mxu0 0.0
    %3281 = vmatpush2.xpose.msra.mxu0 0.0
    %3282 = vmatprep.mubr.f32.mxu0 0.0
    %3283 = vmatmul.mubr.f32.gmra.mxu0 %v3214
    %v3284 = vpop.f32.mrf.mxu0
    %v3285 = vadd.f32 0.0, %v3284
    %v3286 = vpop.f32.mrf.mxu0
    %3287 = vdwg.mxu0
    %v3288 = vmul.f32 %v3285, 0.35355338
    %v3289 = vsel %vm416, %v3288, -inf
    %3290 = vmax.xlane.f32.xlu0 %v3289
    %v3291 = vpop.xlane.xlu0 %3290
    %v3292 = vsub.f32 %v3288, %v3291
    %v3293 = vmul.f32 %v3292, 1.442695
    %v3294 = vpow.pop %v3293
    %v3295 = vsel %vm416, %v3294, 0.0
    %3296 = vadd.xlane.f32.xlu0 %v3295
    %v3297 = vpop.xlane.xlu0 %3296
    %v3298 = vrcp.pop %v3297
    %v3299 = vmul.f32 %v3294, %v3298
    %3300 = vrot.lane.b32.xlu0 %v2730, 48
    %v3301 = vpop.permute.xlu0 %3300
    %v3303 = vsel %vm430, %v3299, 0
    %v3305 = vsel %vm434, %v3301, 0
    %3307 = vmatprep.subr.mxu0 0.0
    %3308 = vmatpush1.msra.mxu0 0.0
    %3309 = vmatprep.subr.mxu0 0.0
    %3310 = vmatpush1.msra.mxu0 0.0
    %3311 = vmatprep.subr.mxu0 0.0
    %3312 = vmatpush1.msra.mxu0 0.0
    %3313 = vmatprep.subr.mxu0 0.0
    %3314 = vmatpush1.msra.mxu0 0.0
    %3315 = vmatprep.subr.mxu0 0.0
    %3316 = vmatpush1.msra.mxu0 0.0
    %3317 = vmatprep.subr.mxu0 0.0
    %3318 = vmatpush1.msra.mxu0 0.0
    %3319 = vmatprep.subr.mxu0 0.0
    %3320 = vmatpush1.msra.mxu0 0.0
    %3321 = vmatprep.subr.mxu0 0.0
    %3322 = vmatpush1.msra.mxu0 0.0
    %3323 = vmatprep.subr.mxu0 0.0
    %3324 = vmatpush1.msra.mxu0 0.0
    %3325 = vmatprep.subr.mxu0 0.0
    %3326 = vmatpush1.msra.mxu0 0.0
    %3327 = vmatprep.subr.mxu0 0.0
    %3328 = vmatpush1.msra.mxu0 0.0
    %3329 = vmatprep.subr.mxu0 0.0
    %3330 = vmatpush1.msra.mxu0 0.0
    %3331 = vmatprep.subr.mxu0 0.0
    %3332 = vmatpush1.msra.mxu0 0.0
    %3333 = vmatprep.subr.mxu0 0.0
    %3334 = vmatpush1.msra.mxu0 0.0
    %3335 = vmatprep.subr.mxu0 0.0
    %3336 = vmatpush1.msra.mxu0 0.0
    %3337 = vmatprep.subr.mxu0 0.0
    %3338 = vmatpush1.msra.mxu0 %v3305
    %3339 = vmatprep.subr.mxu0 0.0
    %3340 = vmatpush2.msra.mxu0 0.0
    %3341 = vmatprep.subr.mxu0 0.0
    %3342 = vmatpush2.msra.mxu0 0.0
    %3343 = vmatprep.subr.mxu0 0.0
    %3344 = vmatpush2.msra.mxu0 0.0
    %3345 = vmatprep.subr.mxu0 0.0
    %3346 = vmatpush2.msra.mxu0 0.0
    %3347 = vmatprep.subr.mxu0 0.0
    %3348 = vmatpush2.msra.mxu0 0.0
    %3349 = vmatprep.subr.mxu0 0.0
    %3350 = vmatpush2.msra.mxu0 0.0
    %3351 = vmatprep.subr.mxu0 0.0
    %3352 = vmatpush2.msra.mxu0 0.0
    %3353 = vmatprep.subr.mxu0 0.0
    %3354 = vmatpush2.msra.mxu0 0.0
    %3355 = vmatprep.subr.mxu0 0.0
    %3356 = vmatpush2.msra.mxu0 0.0
    %3357 = vmatprep.subr.mxu0 0.0
    %3358 = vmatpush2.msra.mxu0 0.0
    %3359 = vmatprep.subr.mxu0 0.0
    %3360 = vmatpush2.msra.mxu0 0.0
    %3361 = vmatprep.subr.mxu0 0.0
    %3362 = vmatpush2.msra.mxu0 0.0
    %3363 = vmatprep.subr.mxu0 0.0
    %3364 = vmatpush2.msra.mxu0 0.0
    %3365 = vmatprep.subr.mxu0 0.0
    %3366 = vmatpush2.msra.mxu0 0.0
    %3367 = vmatprep.subr.mxu0 0.0
    %3368 = vmatpush2.msra.mxu0 0.0
    %3369 = vmatprep.subr.mxu0 0.0
    %3370 = vmatpush2.msra.mxu0 0.0
    %3371 = vmatprep.mubr.f32.mxu0 0.0
    %3372 = vmatmul.mubr.f32.gmra.mxu0 %v3303
    %v3373 = vpop.f32.mrf.mxu0
    %v3374 = vadd.f32 0.0, %v3373
    %v3375 = vpop.f32.mrf.mxu0
    %3376 = vdwg.mxu0
    %v3378 = vsel %vm340, %v3374, 0
    %3380 = vmatprep.subr.mxu0 0.0
    %3381 = vmatpush1.msra.mxu0 0.0
    %3382 = vmatprep.subr.mxu0 0.0
    %3383 = vmatpush1.msra.mxu0 0.0
    %3384 = vmatprep.subr.mxu0 0.0
    %3385 = vmatpush1.msra.mxu0 0.0
    %3386 = vmatprep.subr.mxu0 0.0
    %3387 = vmatpush1.msra.mxu0 0.0
    %3388 = vmatprep.subr.mxu0 0.0
    %3389 = vmatpush1.msra.mxu0 0.0
    %3390 = vmatprep.subr.mxu0 0.0
    %3391 = vmatpush1.msra.mxu0 0.0
    %3392 = vmatprep.subr.mxu0 0.0
    %3393 = vmatpush1.msra.mxu0 0.0
    %3394 = vmatprep.subr.mxu0 0.0
    %3395 = vmatpush1.msra.mxu0 0.0
    %3396 = vmatprep.subr.mxu0 0.0
    %3397 = vmatpush1.msra.mxu0 0.0
    %3398 = vmatprep.subr.mxu0 0.0
    %3399 = vmatpush1.msra.mxu0 0.0
    %3400 = vmatprep.subr.mxu0 0.0
    %3401 = vmatpush1.msra.mxu0 0.0
    %3402 = vmatprep.subr.mxu0 0.0
    %3403 = vmatpush1.msra.mxu0 0.0
    %3404 = vmatprep.subr.mxu0 0.0
    %3405 = vmatpush1.msra.mxu0 0.0
    %3406 = vmatprep.subr.mxu0 0.0
    %3407 = vmatpush1.msra.mxu0 0.0
    %3408 = vmatprep.subr.mxu0 0.0
    %3409 = vmatpush1.msra.mxu0 0.0
    %3410 = vmatprep.subr.mxu0 0.0
    %3411 = vmatpush1.msra.mxu0 %v2728
    %3412 = vmatprep.subr.mxu0 0.0
    %3413 = vmatpush2.msra.mxu0 0.0
    %3414 = vmatprep.subr.mxu0 0.0
    %3415 = vmatpush2.msra.mxu0 0.0
    %3416 = vmatprep.subr.mxu0 0.0
    %3417 = vmatpush2.msra.mxu0 0.0
    %3418 = vmatprep.subr.mxu0 0.0
    %3419 = vmatpush2.msra.mxu0 0.0
    %3420 = vmatprep.subr.mxu0 0.0
    %3421 = vmatpush2.msra.mxu0 0.0
    %3422 = vmatprep.subr.mxu0 0.0
    %3423 = vmatpush2.msra.mxu0 0.0
    %3424 = vmatprep.subr.mxu0 0.0
    %3425 = vmatpush2.msra.mxu0 0.0
    %3426 = vmatprep.subr.mxu0 0.0
    %3427 = vmatpush2.msra.mxu0 0.0
    %3428 = vmatprep.subr.mxu0 0.0
    %3429 = vmatpush2.msra.mxu0 0.0
    %3430 = vmatprep.subr.mxu0 0.0
    %3431 = vmatpush2.msra.mxu0 0.0
    %3432 = vmatprep.subr.mxu0 0.0
    %3433 = vmatpush2.msra.mxu0 0.0
    %3434 = vmatprep.subr.mxu0 0.0
    %3435 = vmatpush2.msra.mxu0 0.0
    %3436 = vmatprep.subr.mxu0 0.0
    %3437 = vmatpush2.msra.mxu0 0.0
    %3438 = vmatprep.subr.mxu0 0.0
    %3439 = vmatpush2.msra.mxu0 0.0
    %3440 = vmatprep.subr.mxu0 0.0
    %3441 = vmatpush2.msra.mxu0 0.0
    %3442 = vmatprep.subr.mxu0 0.0
    %3443 = vmatpush2.msra.mxu0 0.0
    %3444 = vmatprep.mubr.f32.mxu0 0.0
    %3445 = vmatmul.mubr.f32.gmra.mxu0 %v3378
    %v3446 = vpop.f32.mrf.mxu0
    %v3447 = vadd.f32 0.0, %v3446
    %v3448 = vpop.f32.mrf.mxu0
    %3449 = vdwg.mxu0
    %v3450 = vadd.f32 %v3207, %v3447
    %3451 = vrot.lane.b32.xlu0 %v2730, 104
    %v3452 = vpop.permute.xlu0 %3451
    %3453 = vrot.lane.b32.xlu0 %v2730, 72
    %v3454 = vpop.permute.xlu0 %3453
    %v3455 = vsel %vm340, %v3452, 0
    %v3457 = vsel %vm340, %v3454, 0
    %3459 = vmatprep.subr.mxu0 0.0
    %3460 = vmatpush1.xpose.msra.mxu0 0.0
    %3461 = vmatprep.subr.mxu0 0.0
    %3462 = vmatpush1.xpose.msra.mxu0 0.0
    %3463 = vmatprep.subr.mxu0 0.0
    %3464 = vmatpush1.xpose.msra.mxu0 0.0
    %3465 = vmatprep.subr.mxu0 0.0
    %3466 = vmatpush1.xpose.msra.mxu0 0.0
    %3467 = vmatprep.subr.mxu0 0.0
    %3468 = vmatpush1.xpose.msra.mxu0 0.0
    %3469 = vmatprep.subr.mxu0 0.0
    %3470 = vmatpush1.xpose.msra.mxu0 0.0
    %3471 = vmatprep.subr.mxu0 0.0
    %3472 = vmatpush1.xpose.msra.mxu0 0.0
    %3473 = vmatprep.subr.mxu0 0.0
    %3474 = vmatpush1.xpose.msra.mxu0 0.0
    %3475 = vmatprep.subr.mxu0 0.0
    %3476 = vmatpush1.xpose.msra.mxu0 0.0
    %3477 = vmatprep.subr.mxu0 0.0
    %3478 = vmatpush1.xpose.msra.mxu0 0.0
    %3479 = vmatprep.subr.mxu0 0.0
    %3480 = vmatpush1.xpose.msra.mxu0 0.0
    %3481 = vmatprep.subr.mxu0 0.0
    %3482 = vmatpush1.xpose.msra.mxu0 0.0
    %3483 = vmatprep.subr.mxu0 0.0
    %3484 = vmatpush1.xpose.msra.mxu0 0.0
    %3485 = vmatprep.subr.mxu0 0.0
    %3486 = vmatpush1.xpose.msra.mxu0 0.0
    %3487 = vmatprep.subr.mxu0 0.0
    %3488 = vmatpush1.xpose.msra.mxu0 0.0
    %3489 = vmatprep.subr.mxu0 0.0
    %3490 = vmatpush1.xpose.msra.mxu0 %v3457
    %3491 = vmatprep.subr.mxu0 0.0
    %3492 = vmatpush2.xpose.msra.mxu0 0.0
    %3493 = vmatprep.subr.mxu0 0.0
    %3494 = vmatpush2.xpose.msra.mxu0 0.0
    %3495 = vmatprep.subr.mxu0 0.0
    %3496 = vmatpush2.xpose.msra.mxu0 0.0
    %3497 = vmatprep.subr.mxu0 0.0
    %3498 = vmatpush2.xpose.msra.mxu0 0.0
    %3499 = vmatprep.subr.mxu0 0.0
    %3500 = vmatpush2.xpose.msra.mxu0 0.0
    %3501 = vmatprep.subr.mxu0 0.0
    %3502 = vmatpush2.xpose.msra.mxu0 0.0
    %3503 = vmatprep.subr.mxu0 0.0
    %3504 = vmatpush2.xpose.msra.mxu0 0.0
    %3505 = vmatprep.subr.mxu0 0.0
    %3506 = vmatpush2.xpose.msra.mxu0 0.0
    %3507 = vmatprep.subr.mxu0 0.0
    %3508 = vmatpush2.xpose.msra.mxu0 0.0
    %3509 = vmatprep.subr.mxu0 0.0
    %3510 = vmatpush2.xpose.msra.mxu0 0.0
    %3511 = vmatprep.subr.mxu0 0.0
    %3512 = vmatpush2.xpose.msra.mxu0 0.0
    %3513 = vmatprep.subr.mxu0 0.0
    %3514 = vmatpush2.xpose.msra.mxu0 0.0
    %3515 = vmatprep.subr.mxu0 0.0
    %3516 = vmatpush2.xpose.msra.mxu0 0.0
    %3517 = vmatprep.subr.mxu0 0.0
    %3518 = vmatpush2.xpose.msra.mxu0 0.0
    %3519 = vmatprep.subr.mxu0 0.0
    %3520 = vmatpush2.xpose.msra.mxu0 0.0
    %3521 = vmatprep.subr.mxu0 0.0
    %3522 = vmatpush2.xpose.msra.mxu0 0.0
    %3523 = vmatprep.mubr.f32.mxu0 0.0
    %3524 = vmatmul.mubr.f32.gmra.mxu0 %v3455
    %v3525 = vpop.f32.mrf.mxu0
    %v3526 = vadd.f32 0.0, %v3525
    %v3527 = vpop.f32.mrf.mxu0
    %3528 = vdwg.mxu0
    %v3529 = vmul.f32 %v3526, 0.35355338
    %v3530 = vsel %vm416, %v3529, -inf
    %3531 = vmax.xlane.f32.xlu0 %v3530
    %v3532 = vpop.xlane.xlu0 %3531
    %v3533 = vsub.f32 %v3529, %v3532
    %v3534 = vmul.f32 %v3533, 1.442695
    %v3535 = vpow.pop %v3534
    %v3536 = vsel %vm416, %v3535, 0.0
    %3537 = vadd.xlane.f32.xlu0 %v3536
    %v3538 = vpop.xlane.xlu0 %3537
    %v3539 = vrcp.pop %v3538
    %v3540 = vmul.f32 %v3535, %v3539
    %3541 = vrot.lane.b32.xlu0 %v2730, 40
    %v3542 = vpop.permute.xlu0 %3541
    %v3544 = vsel %vm430, %v3540, 0
    %v3546 = vsel %vm434, %v3542, 0
    %3548 = vmatprep.subr.mxu0 0.0
    %3549 = vmatpush1.msra.mxu0 0.0
    %3550 = vmatprep.subr.mxu0 0.0
    %3551 = vmatpush1.msra.mxu0 0.0
    %3552 = vmatprep.subr.mxu0 0.0
    %3553 = vmatpush1.msra.mxu0 0.0
    %3554 = vmatprep.subr.mxu0 0.0
    %3555 = vmatpush1.msra.mxu0 0.0
    %3556 = vmatprep.subr.mxu0 0.0
    %3557 = vmatpush1.msra.mxu0 0.0
    %3558 = vmatprep.subr.mxu0 0.0
    %3559 = vmatpush1.msra.mxu0 0.0
    %3560 = vmatprep.subr.mxu0 0.0
    %3561 = vmatpush1.msra.mxu0 0.0
    %3562 = vmatprep.subr.mxu0 0.0
    %3563 = vmatpush1.msra.mxu0 0.0
    %3564 = vmatprep.subr.mxu0 0.0
    %3565 = vmatpush1.msra.mxu0 0.0
    %3566 = vmatprep.subr.mxu0 0.0
    %3567 = vmatpush1.msra.mxu0 0.0
    %3568 = vmatprep.subr.mxu0 0.0
    %3569 = vmatpush1.msra.mxu0 0.0
    %3570 = vmatprep.subr.mxu0 0.0
    %3571 = vmatpush1.msra.mxu0 0.0
    %3572 = vmatprep.subr.mxu0 0.0
    %3573 = vmatpush1.msra.mxu0 0.0
    %3574 = vmatprep.subr.mxu0 0.0
    %3575 = vmatpush1.msra.mxu0 0.0
    %3576 = vmatprep.subr.mxu0 0.0
    %3577 = vmatpush1.msra.mxu0 0.0
    %3578 = vmatprep.subr.mxu0 0.0
    %3579 = vmatpush1.msra.mxu0 %v3546
    %3580 = vmatprep.subr.mxu0 0.0
    %3581 = vmatpush2.msra.mxu0 0.0
    %3582 = vmatprep.subr.mxu0 0.0
    %3583 = vmatpush2.msra.mxu0 0.0
    %3584 = vmatprep.subr.mxu0 0.0
    %3585 = vmatpush2.msra.mxu0 0.0
    %3586 = vmatprep.subr.mxu0 0.0
    %3587 = vmatpush2.msra.mxu0 0.0
    %3588 = vmatprep.subr.mxu0 0.0
    %3589 = vmatpush2.msra.mxu0 0.0
    %3590 = vmatprep.subr.mxu0 0.0
    %3591 = vmatpush2.msra.mxu0 0.0
    %3592 = vmatprep.subr.mxu0 0.0
    %3593 = vmatpush2.msra.mxu0 0.0
    %3594 = vmatprep.subr.mxu0 0.0
    %3595 = vmatpush2.msra.mxu0 0.0
    %3596 = vmatprep.subr.mxu0 0.0
    %3597 = vmatpush2.msra.mxu0 0.0
    %3598 = vmatprep.subr.mxu0 0.0
    %3599 = vmatpush2.msra.mxu0 0.0
    %3600 = vmatprep.subr.mxu0 0.0
    %3601 = vmatpush2.msra.mxu0 0.0
    %3602 = vmatprep.subr.mxu0 0.0
    %3603 = vmatpush2.msra.mxu0 0.0
    %3604 = vmatprep.subr.mxu0 0.0
    %3605 = vmatpush2.msra.mxu0 0.0
    %3606 = vmatprep.subr.mxu0 0.0
    %3607 = vmatpush2.msra.mxu0 0.0
    %3608 = vmatprep.subr.mxu0 0.0
    %3609 = vmatpush2.msra.mxu0 0.0
    %3610 = vmatprep.subr.mxu0 0.0
    %3611 = vmatpush2.msra.mxu0 0.0
    %3612 = vmatprep.mubr.f32.mxu0 0.0
    %3613 = vmatmul.mubr.f32.gmra.mxu0 %v3544
    %v3614 = vpop.f32.mrf.mxu0
    %v3615 = vadd.f32 0.0, %v3614
    %v3616 = vpop.f32.mrf.mxu0
    %3617 = vdwg.mxu0
    %v3619 = vsel %vm340, %v3615, 0
    %3621 = vmatprep.subr.mxu0 0.0
    %3622 = vmatpush1.msra.mxu0 0.0
    %3623 = vmatprep.subr.mxu0 0.0
    %3624 = vmatpush1.msra.mxu0 0.0
    %3625 = vmatprep.subr.mxu0 0.0
    %3626 = vmatpush1.msra.mxu0 0.0
    %3627 = vmatprep.subr.mxu0 0.0
    %3628 = vmatpush1.msra.mxu0 0.0
    %3629 = vmatprep.subr.mxu0 0.0
    %3630 = vmatpush1.msra.mxu0 0.0
    %3631 = vmatprep.subr.mxu0 0.0
    %3632 = vmatpush1.msra.mxu0 0.0
    %3633 = vmatprep.subr.mxu0 0.0
    %3634 = vmatpush1.msra.mxu0 0.0
    %3635 = vmatprep.subr.mxu0 0.0
    %3636 = vmatpush1.msra.mxu0 0.0
    %3637 = vmatprep.subr.mxu0 0.0
    %3638 = vmatpush1.msra.mxu0 0.0
    %3639 = vmatprep.subr.mxu0 0.0
    %3640 = vmatpush1.msra.mxu0 0.0
    %3641 = vmatprep.subr.mxu0 0.0
    %3642 = vmatpush1.msra.mxu0 0.0
    %3643 = vmatprep.subr.mxu0 0.0
    %3644 = vmatpush1.msra.mxu0 0.0
    %3645 = vmatprep.subr.mxu0 0.0
    %3646 = vmatpush1.msra.mxu0 0.0
    %3647 = vmatprep.subr.mxu0 0.0
    %3648 = vmatpush1.msra.mxu0 0.0
    %3649 = vmatprep.subr.mxu0 0.0
    %3650 = vmatpush1.msra.mxu0 0.0
    %3651 = vmatprep.subr.mxu0 0.0
    %3652 = vmatpush1.msra.mxu0 %v2729
    %3653 = vmatprep.subr.mxu0 0.0
    %3654 = vmatpush2.msra.mxu0 0.0
    %3655 = vmatprep.subr.mxu0 0.0
    %3656 = vmatpush2.msra.mxu0 0.0
    %3657 = vmatprep.subr.mxu0 0.0
    %3658 = vmatpush2.msra.mxu0 0.0
    %3659 = vmatprep.subr.mxu0 0.0
    %3660 = vmatpush2.msra.mxu0 0.0
    %3661 = vmatprep.subr.mxu0 0.0
    %3662 = vmatpush2.msra.mxu0 0.0
    %3663 = vmatprep.subr.mxu0 0.0
    %3664 = vmatpush2.msra.mxu0 0.0
    %3665 = vmatprep.subr.mxu0 0.0
    %3666 = vmatpush2.msra.mxu0 0.0
    %3667 = vmatprep.subr.mxu0 0.0
    %3668 = vmatpush2.msra.mxu0 0.0
    %3669 = vmatprep.subr.mxu0 0.0
    %3670 = vmatpush2.msra.mxu0 0.0
    %3671 = vmatprep.subr.mxu0 0.0
    %3672 = vmatpush2.msra.mxu0 0.0
    %3673 = vmatprep.subr.mxu0 0.0
    %3674 = vmatpush2.msra.mxu0 0.0
    %3675 = vmatprep.subr.mxu0 0.0
    %3676 = vmatpush2.msra.mxu0 0.0
    %3677 = vmatprep.subr.mxu0 0.0
    %3678 = vmatpush2.msra.mxu0 0.0
    %3679 = vmatprep.subr.mxu0 0.0
    %3680 = vmatpush2.msra.mxu0 0.0
    %3681 = vmatprep.subr.mxu0 0.0
    %3682 = vmatpush2.msra.mxu0 0.0
    %3683 = vmatprep.subr.mxu0 0.0
    %3684 = vmatpush2.msra.mxu0 0.0
    %3685 = vmatprep.mubr.f32.mxu0 0.0
    %3686 = vmatmul.mubr.f32.gmra.mxu0 %v3619
    %v3687 = vpop.f32.mrf.mxu0
    %v3688 = vadd.f32 0.0, %v3687
    %v3689 = vpop.f32.mrf.mxu0
    %3690 = vdwg.mxu0
    %v3691 = vadd.f32 %v3450, %v3688
    %v3692 = vld [vmem:[#allocation2] sm:$0x1f]
    %v3693 = vadd.f32 %v3692, %v3691
    %s3694 = scalar_lea.vmem %s8, 1
    %v3695 = vld [vmem:[%s3694] sm:$0x1]
    %v3697 = vlaneseq
    %v3698 = vshrl.u32 %v3697, 7
    %v3699 = vsub.s32 0, %v3698
    %v3700 = vrot.slane %v3695, %v3699
    %v3702 = vadd.f32 %v3693, %v3700
    %3703 = vst.msk [vmem:[#allocation2] sm:$0x1f] %vm1312, %v3702
    %v3704 = vld [vmem:[#allocation3 + $0x5] sm:$0x1f]
    %3706 = vrot.lane.b32.xlu0 %v3704, 96
    %v3707 = vpop.permute.xlu0 %3706
    %v3708 = vsel %vm340, %v3704, 0
    %v3710 = vsel %vm340, %v3707, 0
    %3712 = vmatprep.subr.mxu0 0.0
    %3713 = vmatpush1.xpose.msra.mxu0 0.0
    %3714 = vmatprep.subr.mxu0 0.0
    %3715 = vmatpush1.xpose.msra.mxu0 0.0
    %3716 = vmatprep.subr.mxu0 0.0
    %3717 = vmatpush1.xpose.msra.mxu0 0.0
    %3718 = vmatprep.subr.mxu0 0.0
    %3719 = vmatpush1.xpose.msra.mxu0 0.0
    %3720 = vmatprep.subr.mxu0 0.0
    %3721 = vmatpush1.xpose.msra.mxu0 0.0
    %3722 = vmatprep.subr.mxu0 0.0
    %3723 = vmatpush1.xpose.msra.mxu0 0.0
    %3724 = vmatprep.subr.mxu0 0.0
    %3725 = vmatpush1.xpose.msra.mxu0 0.0
    %3726 = vmatprep.subr.mxu0 0.0
    %3727 = vmatpush1.xpose.msra.mxu0 0.0
    %3728 = vmatprep.subr.mxu0 0.0
    %3729 = vmatpush1.xpose.msra.mxu0 0.0
    %3730 = vmatprep.subr.mxu0 0.0
    %3731 = vmatpush1.xpose.msra.mxu0 0.0
    %3732 = vmatprep.subr.mxu0 0.0
    %3733 = vmatpush1.xpose.msra.mxu0 0.0
    %3734 = vmatprep.subr.mxu0 0.0
    %3735 = vmatpush1.xpose.msra.mxu0 0.0
    %3736 = vmatprep.subr.mxu0 0.0
    %3737 = vmatpush1.xpose.msra.mxu0 0.0
    %3738 = vmatprep.subr.mxu0 0.0
    %3739 = vmatpush1.xpose.msra.mxu0 0.0
    %3740 = vmatprep.subr.mxu0 0.0
    %3741 = vmatpush1.xpose.msra.mxu0 0.0
    %3742 = vmatprep.subr.mxu0 0.0
    %3743 = vmatpush1.xpose.msra.mxu0 %v3710
    %3744 = vmatprep.subr.mxu0 0.0
    %3745 = vmatpush2.xpose.msra.mxu0 0.0
    %3746 = vmatprep.subr.mxu0 0.0
    %3747 = vmatpush2.xpose.msra.mxu0 0.0
    %3748 = vmatprep.subr.mxu0 0.0
    %3749 = vmatpush2.xpose.msra.mxu0 0.0
    %3750 = vmatprep.subr.mxu0 0.0
    %3751 = vmatpush2.xpose.msra.mxu0 0.0
    %3752 = vmatprep.subr.mxu0 0.0
    %3753 = vmatpush2.xpose.msra.mxu0 0.0
    %3754 = vmatprep.subr.mxu0 0.0
    %3755 = vmatpush2.xpose.msra.mxu0 0.0
    %3756 = vmatprep.subr.mxu0 0.0
    %3757 = vmatpush2.xpose.msra.mxu0 0.0
    %3758 = vmatprep.subr.mxu0 0.0
    %3759 = vmatpush2.xpose.msra.mxu0 0.0
    %3760 = vmatprep.subr.mxu0 0.0
    %3761 = vmatpush2.xpose.msra.mxu0 0.0
    %3762 = vmatprep.subr.mxu0 0.0
    %3763 = vmatpush2.xpose.msra.mxu0 0.0
    %3764 = vmatprep.subr.mxu0 0.0
    %3765 = vmatpush2.xpose.msra.mxu0 0.0
    %3766 = vmatprep.subr.mxu0 0.0
    %3767 = vmatpush2.xpose.msra.mxu0 0.0
    %3768 = vmatprep.subr.mxu0 0.0
    %3769 = vmatpush2.xpose.msra.mxu0 0.0
    %3770 = vmatprep.subr.mxu0 0.0
    %3771 = vmatpush2.xpose.msra.mxu0 0.0
    %3772 = vmatprep.subr.mxu0 0.0
    %3773 = vmatpush2.xpose.msra.mxu0 0.0
    %3774 = vmatprep.subr.mxu0 0.0
    %3775 = vmatpush2.xpose.msra.mxu0 0.0
    %3776 = vmatprep.mubr.f32.mxu0 0.0
    %3777 = vmatmul.mubr.f32.gmra.mxu0 %v3708
    %v3778 = vpop.f32.mrf.mxu0
    %v3779 = vadd.f32 0.0, %v3778
    %v3780 = vpop.f32.mrf.mxu0
    %3781 = vdwg.mxu0
    %v3782 = vmul.f32 %v3779, 0.35355338
    %v3783 = vsel %vm416, %v3782, -inf
    %3784 = vmax.xlane.f32.xlu0 %v3783
    %v3785 = vpop.xlane.xlu0 %3784
    %v3786 = vsub.f32 %v3782, %v3785
    %v3787 = vmul.f32 %v3786, 1.442695
    %v3788 = vpow.pop %v3787
    %v3789 = vsel %vm416, %v3788, 0.0
    %3790 = vadd.xlane.f32.xlu0 %v3789
    %v3791 = vpop.xlane.xlu0 %3790
    %v3792 = vrcp.pop %v3791
    %v3793 = vmul.f32 %v3788, %v3792
    %3794 = vrot.lane.b32.xlu0 %v3704, 64
    %v3795 = vpop.permute.xlu0 %3794
    %v3797 = vsel %vm430, %v3793, 0
    %v3799 = vsel %vm434, %v3795, 0
    %3801 = vmatprep.subr.mxu0 0.0
    %3802 = vmatpush1.msra.mxu0 0.0
    %3803 = vmatprep.subr.mxu0 0.0
    %3804 = vmatpush1.msra.mxu0 0.0
    %3805 = vmatprep.subr.mxu0 0.0
    %3806 = vmatpush1.msra.mxu0 0.0
    %3807 = vmatprep.subr.mxu0 0.0
    %3808 = vmatpush1.msra.mxu0 0.0
    %3809 = vmatprep.subr.mxu0 0.0
    %3810 = vmatpush1.msra.mxu0 0.0
    %3811 = vmatprep.subr.mxu0 0.0
    %3812 = vmatpush1.msra.mxu0 0.0
    %3813 = vmatprep.subr.mxu0 0.0
    %3814 = vmatpush1.msra.mxu0 0.0
    %3815 = vmatprep.subr.mxu0 0.0
    %3816 = vmatpush1.msra.mxu0 0.0
    %3817 = vmatprep.subr.mxu0 0.0
    %3818 = vmatpush1.msra.mxu0 0.0
    %3819 = vmatprep.subr.mxu0 0.0
    %3820 = vmatpush1.msra.mxu0 0.0
    %3821 = vmatprep.subr.mxu0 0.0
    %3822 = vmatpush1.msra.mxu0 0.0
    %3823 = vmatprep.subr.mxu0 0.0
    %3824 = vmatpush1.msra.mxu0 0.0
    %3825 = vmatprep.subr.mxu0 0.0
    %3826 = vmatpush1.msra.mxu0 0.0
    %3827 = vmatprep.subr.mxu0 0.0
    %3828 = vmatpush1.msra.mxu0 0.0
    %3829 = vmatprep.subr.mxu0 0.0
    %3830 = vmatpush1.msra.mxu0 0.0
    %3831 = vmatprep.subr.mxu0 0.0
    %3832 = vmatpush1.msra.mxu0 %v3799
    %3833 = vmatprep.subr.mxu0 0.0
    %3834 = vmatpush2.msra.mxu0 0.0
    %3835 = vmatprep.subr.mxu0 0.0
    %3836 = vmatpush2.msra.mxu0 0.0
    %3837 = vmatprep.subr.mxu0 0.0
    %3838 = vmatpush2.msra.mxu0 0.0
    %3839 = vmatprep.subr.mxu0 0.0
    %3840 = vmatpush2.msra.mxu0 0.0
    %3841 = vmatprep.subr.mxu0 0.0
    %3842 = vmatpush2.msra.mxu0 0.0
    %3843 = vmatprep.subr.mxu0 0.0
    %3844 = vmatpush2.msra.mxu0 0.0
    %3845 = vmatprep.subr.mxu0 0.0
    %3846 = vmatpush2.msra.mxu0 0.0
    %3847 = vmatprep.subr.mxu0 0.0
    %3848 = vmatpush2.msra.mxu0 0.0
    %3849 = vmatprep.subr.mxu0 0.0
    %3850 = vmatpush2.msra.mxu0 0.0
    %3851 = vmatprep.subr.mxu0 0.0
    %3852 = vmatpush2.msra.mxu0 0.0
    %3853 = vmatprep.subr.mxu0 0.0
    %3854 = vmatpush2.msra.mxu0 0.0
    %3855 = vmatprep.subr.mxu0 0.0
    %3856 = vmatpush2.msra.mxu0 0.0
    %3857 = vmatprep.subr.mxu0 0.0
    %3858 = vmatpush2.msra.mxu0 0.0
    %3859 = vmatprep.subr.mxu0 0.0
    %3860 = vmatpush2.msra.mxu0 0.0
    %3861 = vmatprep.subr.mxu0 0.0
    %3862 = vmatpush2.msra.mxu0 0.0
    %3863 = vmatprep.subr.mxu0 0.0
    %3864 = vmatpush2.msra.mxu0 0.0
    %3865 = vmatprep.mubr.f32.mxu0 0.0
    %3866 = vmatmul.mubr.f32.gmra.mxu0 %v3797
    %v3867 = vpop.f32.mrf.mxu0
    %v3868 = vadd.f32 0.0, %v3867
    %v3869 = vpop.f32.mrf.mxu0
    %3870 = vdwg.mxu0
    %3871 = vrot.lane.b32.xlu0 %v3704, 120
    %v3872 = vpop.permute.xlu0 %3871
    %3873 = vrot.lane.b32.xlu0 %v3704, 88
    %v3874 = vpop.permute.xlu0 %3873
    %v3875 = vsel %vm340, %v3872, 0
    %v3877 = vsel %vm340, %v3874, 0
    %3879 = vmatprep.subr.mxu0 0.0
    %3880 = vmatpush1.xpose.msra.mxu0 0.0
    %3881 = vmatprep.subr.mxu0 0.0
    %3882 = vmatpush1.xpose.msra.mxu0 0.0
    %3883 = vmatprep.subr.mxu0 0.0
    %3884 = vmatpush1.xpose.msra.mxu0 0.0
    %3885 = vmatprep.subr.mxu0 0.0
    %3886 = vmatpush1.xpose.msra.mxu0 0.0
    %3887 = vmatprep.subr.mxu0 0.0
    %3888 = vmatpush1.xpose.msra.mxu0 0.0
    %3889 = vmatprep.subr.mxu0 0.0
    %3890 = vmatpush1.xpose.msra.mxu0 0.0
    %3891 = vmatprep.subr.mxu0 0.0
    %3892 = vmatpush1.xpose.msra.mxu0 0.0
    %3893 = vmatprep.subr.mxu0 0.0
    %3894 = vmatpush1.xpose.msra.mxu0 0.0
    %3895 = vmatprep.subr.mxu0 0.0
    %3896 = vmatpush1.xpose.msra.mxu0 0.0
    %3897 = vmatprep.subr.mxu0 0.0
    %3898 = vmatpush1.xpose.msra.mxu0 0.0
    %3899 = vmatprep.subr.mxu0 0.0
    %3900 = vmatpush1.xpose.msra.mxu0 0.0
    %3901 = vmatprep.subr.mxu0 0.0
    %3902 = vmatpush1.xpose.msra.mxu0 0.0
    %3903 = vmatprep.subr.mxu0 0.0
    %3904 = vmatpush1.xpose.msra.mxu0 0.0
    %3905 = vmatprep.subr.mxu0 0.0
    %3906 = vmatpush1.xpose.msra.mxu0 0.0
    %3907 = vmatprep.subr.mxu0 0.0
    %3908 = vmatpush1.xpose.msra.mxu0 0.0
    %3909 = vmatprep.subr.mxu0 0.0
    %3910 = vmatpush1.xpose.msra.mxu0 %v3877
    %3911 = vmatprep.subr.mxu0 0.0
    %3912 = vmatpush2.xpose.msra.mxu0 0.0
    %3913 = vmatprep.subr.mxu0 0.0
    %3914 = vmatpush2.xpose.msra.mxu0 0.0
    %3915 = vmatprep.subr.mxu0 0.0
    %3916 = vmatpush2.xpose.msra.mxu0 0.0
    %3917 = vmatprep.subr.mxu0 0.0
    %3918 = vmatpush2.xpose.msra.mxu0 0.0
    %3919 = vmatprep.subr.mxu0 0.0
    %3920 = vmatpush2.xpose.msra.mxu0 0.0
    %3921 = vmatprep.subr.mxu0 0.0
    %3922 = vmatpush2.xpose.msra.mxu0 0.0
    %3923 = vmatprep.subr.mxu0 0.0
    %3924 = vmatpush2.xpose.msra.mxu0 0.0
    %3925 = vmatprep.subr.mxu0 0.0
    %3926 = vmatpush2.xpose.msra.mxu0 0.0
    %3927 = vmatprep.subr.mxu0 0.0
    %3928 = vmatpush2.xpose.msra.mxu0 0.0
    %3929 = vmatprep.subr.mxu0 0.0
    %3930 = vmatpush2.xpose.msra.mxu0 0.0
    %3931 = vmatprep.subr.mxu0 0.0
    %3932 = vmatpush2.xpose.msra.mxu0 0.0
    %3933 = vmatprep.subr.mxu0 0.0
    %3934 = vmatpush2.xpose.msra.mxu0 0.0
    %3935 = vmatprep.subr.mxu0 0.0
    %3936 = vmatpush2.xpose.msra.mxu0 0.0
    %3937 = vmatprep.subr.mxu0 0.0
    %3938 = vmatpush2.xpose.msra.mxu0 0.0
    %3939 = vmatprep.subr.mxu0 0.0
    %3940 = vmatpush2.xpose.msra.mxu0 0.0
    %3941 = vmatprep.subr.mxu0 0.0
    %3942 = vmatpush2.xpose.msra.mxu0 0.0
    %3943 = vmatprep.mubr.f32.mxu0 0.0
    %3944 = vmatmul.mubr.f32.gmra.mxu0 %v3875
    %v3945 = vpop.f32.mrf.mxu0
    %v3946 = vadd.f32 0.0, %v3945
    %v3947 = vpop.f32.mrf.mxu0
    %3948 = vdwg.mxu0
    %v3949 = vmul.f32 %v3946, 0.35355338
    %v3950 = vsel %vm416, %v3949, -inf
    %3951 = vmax.xlane.f32.xlu0 %v3950
    %v3952 = vpop.xlane.xlu0 %3951
    %v3953 = vsub.f32 %v3949, %v3952
    %v3954 = vmul.f32 %v3953, 1.442695
    %v3955 = vpow.pop %v3954
    %v3956 = vsel %vm416, %v3955, 0.0
    %3957 = vadd.xlane.f32.xlu0 %v3956
    %v3958 = vpop.xlane.xlu0 %3957
    %v3959 = vrcp.pop %v3958
    %v3960 = vmul.f32 %v3955, %v3959
    %3961 = vrot.lane.b32.xlu0 %v3704, 56
    %v3962 = vpop.permute.xlu0 %3961
    %v3964 = vsel %vm430, %v3960, 0
    %v3966 = vsel %vm434, %v3962, 0
    %3968 = vmatprep.subr.mxu0 0.0
    %3969 = vmatpush1.msra.mxu0 0.0
    %3970 = vmatprep.subr.mxu0 0.0
    %3971 = vmatpush1.msra.mxu0 0.0
    %3972 = vmatprep.subr.mxu0 0.0
    %3973 = vmatpush1.msra.mxu0 0.0
    %3974 = vmatprep.subr.mxu0 0.0
    %3975 = vmatpush1.msra.mxu0 0.0
    %3976 = vmatprep.subr.mxu0 0.0
    %3977 = vmatpush1.msra.mxu0 0.0
    %3978 = vmatprep.subr.mxu0 0.0
    %3979 = vmatpush1.msra.mxu0 0.0
    %3980 = vmatprep.subr.mxu0 0.0
    %3981 = vmatpush1.msra.mxu0 0.0
    %3982 = vmatprep.subr.mxu0 0.0
    %3983 = vmatpush1.msra.mxu0 0.0
    %3984 = vmatprep.subr.mxu0 0.0
    %3985 = vmatpush1.msra.mxu0 0.0
    %3986 = vmatprep.subr.mxu0 0.0
    %3987 = vmatpush1.msra.mxu0 0.0
    %3988 = vmatprep.subr.mxu0 0.0
    %3989 = vmatpush1.msra.mxu0 0.0
    %3990 = vmatprep.subr.mxu0 0.0
    %3991 = vmatpush1.msra.mxu0 0.0
    %3992 = vmatprep.subr.mxu0 0.0
    %3993 = vmatpush1.msra.mxu0 0.0
    %3994 = vmatprep.subr.mxu0 0.0
    %3995 = vmatpush1.msra.mxu0 0.0
    %3996 = vmatprep.subr.mxu0 0.0
    %3997 = vmatpush1.msra.mxu0 0.0
    %3998 = vmatprep.subr.mxu0 0.0
    %3999 = vmatpush1.msra.mxu0 %v3966
    %4000 = vmatprep.subr.mxu0 0.0
    %4001 = vmatpush2.msra.mxu0 0.0
    %4002 = vmatprep.subr.mxu0 0.0
    %4003 = vmatpush2.msra.mxu0 0.0
    %4004 = vmatprep.subr.mxu0 0.0
    %4005 = vmatpush2.msra.mxu0 0.0
    %4006 = vmatprep.subr.mxu0 0.0
    %4007 = vmatpush2.msra.mxu0 0.0
    %4008 = vmatprep.subr.mxu0 0.0
    %4009 = vmatpush2.msra.mxu0 0.0
    %4010 = vmatprep.subr.mxu0 0.0
    %4011 = vmatpush2.msra.mxu0 0.0
    %4012 = vmatprep.subr.mxu0 0.0
    %4013 = vmatpush2.msra.mxu0 0.0
    %4014 = vmatprep.subr.mxu0 0.0
    %4015 = vmatpush2.msra.mxu0 0.0
    %4016 = vmatprep.subr.mxu0 0.0
    %4017 = vmatpush2.msra.mxu0 0.0
    %4018 = vmatprep.subr.mxu0 0.0
    %4019 = vmatpush2.msra.mxu0 0.0
    %4020 = vmatprep.subr.mxu0 0.0
    %4021 = vmatpush2.msra.mxu0 0.0
    %4022 = vmatprep.subr.mxu0 0.0
    %4023 = vmatpush2.msra.mxu0 0.0
    %4024 = vmatprep.subr.mxu0 0.0
    %4025 = vmatpush2.msra.mxu0 0.0
    %4026 = vmatprep.subr.mxu0 0.0
    %4027 = vmatpush2.msra.mxu0 0.0
    %4028 = vmatprep.subr.mxu0 0.0
    %4029 = vmatpush2.msra.mxu0 0.0
    %4030 = vmatprep.subr.mxu0 0.0
    %4031 = vmatpush2.msra.mxu0 0.0
    %4032 = vmatprep.mubr.f32.mxu0 0.0
    %4033 = vmatmul.mubr.f32.gmra.mxu0 %v3964
    %v4034 = vpop.f32.mrf.mxu0
    %v4035 = vadd.f32 0.0, %v4034
    %v4036 = vpop.f32.mrf.mxu0
    %4037 = vdwg.mxu0
    %v4039 = vsel %vm340, %v4035, 0
    %4041 = vmatprep.subr.mxu0 0.0
    %4042 = vmatpush1.msra.mxu0 0.0
    %4043 = vmatprep.subr.mxu0 0.0
    %4044 = vmatpush1.msra.mxu0 0.0
    %4045 = vmatprep.subr.mxu0 0.0
    %4046 = vmatpush1.msra.mxu0 0.0
    %4047 = vmatprep.subr.mxu0 0.0
    %4048 = vmatpush1.msra.mxu0 0.0
    %4049 = vmatprep.subr.mxu0 0.0
    %4050 = vmatpush1.msra.mxu0 0.0
    %4051 = vmatprep.subr.mxu0 0.0
    %4052 = vmatpush1.msra.mxu0 0.0
    %4053 = vmatprep.subr.mxu0 0.0
    %4054 = vmatpush1.msra.mxu0 0.0
    %4055 = vmatprep.subr.mxu0 0.0
    %4056 = vmatpush1.msra.mxu0 0.0
    %4057 = vmatprep.subr.mxu0 0.0
    %4058 = vmatpush1.msra.mxu0 0.0
    %4059 = vmatprep.subr.mxu0 0.0
    %4060 = vmatpush1.msra.mxu0 0.0
    %4061 = vmatprep.subr.mxu0 0.0
    %4062 = vmatpush1.msra.mxu0 0.0
    %4063 = vmatprep.subr.mxu0 0.0
    %4064 = vmatpush1.msra.mxu0 0.0
    %4065 = vmatprep.subr.mxu0 0.0
    %4066 = vmatpush1.msra.mxu0 0.0
    %4067 = vmatprep.subr.mxu0 0.0
    %4068 = vmatpush1.msra.mxu0 0.0
    %4069 = vmatprep.subr.mxu0 0.0
    %4070 = vmatpush1.msra.mxu0 0.0
    %4071 = vmatprep.subr.mxu0 0.0
    %4072 = vmatpush1.msra.mxu0 %v2727
    %4073 = vmatprep.subr.mxu0 0.0
    %4074 = vmatpush2.msra.mxu0 0.0
    %4075 = vmatprep.subr.mxu0 0.0
    %4076 = vmatpush2.msra.mxu0 0.0
    %4077 = vmatprep.subr.mxu0 0.0
    %4078 = vmatpush2.msra.mxu0 0.0
    %4079 = vmatprep.subr.mxu0 0.0
    %4080 = vmatpush2.msra.mxu0 0.0
    %4081 = vmatprep.subr.mxu0 0.0
    %4082 = vmatpush2.msra.mxu0 0.0
    %4083 = vmatprep.subr.mxu0 0.0
    %4084 = vmatpush2.msra.mxu0 0.0
    %4085 = vmatprep.subr.mxu0 0.0
    %4086 = vmatpush2.msra.mxu0 0.0
    %4087 = vmatprep.subr.mxu0 0.0
    %4088 = vmatpush2.msra.mxu0 0.0
    %4089 = vmatprep.subr.mxu0 0.0
    %4090 = vmatpush2.msra.mxu0 0.0
    %4091 = vmatprep.subr.mxu0 0.0
    %4092 = vmatpush2.msra.mxu0 0.0
    %4093 = vmatprep.subr.mxu0 0.0
    %4094 = vmatpush2.msra.mxu0 0.0
    %4095 = vmatprep.subr.mxu0 0.0
    %4096 = vmatpush2.msra.mxu0 0.0
    %4097 = vmatprep.subr.mxu0 0.0
    %4098 = vmatpush2.msra.mxu0 0.0
    %4099 = vmatprep.subr.mxu0 0.0
    %4100 = vmatpush2.msra.mxu0 0.0
    %4101 = vmatprep.subr.mxu0 0.0
    %4102 = vmatpush2.msra.mxu0 0.0
    %4103 = vmatprep.subr.mxu0 0.0
    %4104 = vmatpush2.msra.mxu0 0.0
    %4105 = vmatprep.mubr.f32.mxu0 0.0
    %4106 = vmatmul.mubr.f32.gmra.mxu0 %v4039
    %v4107 = vpop.f32.mrf.mxu0
    %v4108 = vadd.f32 0.0, %v4107
    %v4109 = vpop.f32.mrf.mxu0
    %4110 = vdwg.mxu0
    %v4112 = vsel %vm340, %v3868, 0
    %4114 = vmatprep.subr.mxu0 0.0
    %4115 = vmatpush1.msra.mxu0 0.0
    %4116 = vmatprep.subr.mxu0 0.0
    %4117 = vmatpush1.msra.mxu0 0.0
    %4118 = vmatprep.subr.mxu0 0.0
    %4119 = vmatpush1.msra.mxu0 0.0
    %4120 = vmatprep.subr.mxu0 0.0
    %4121 = vmatpush1.msra.mxu0 0.0
    %4122 = vmatprep.subr.mxu0 0.0
    %4123 = vmatpush1.msra.mxu0 0.0
    %4124 = vmatprep.subr.mxu0 0.0
    %4125 = vmatpush1.msra.mxu0 0.0
    %4126 = vmatprep.subr.mxu0 0.0
    %4127 = vmatpush1.msra.mxu0 0.0
    %4128 = vmatprep.subr.mxu0 0.0
    %4129 = vmatpush1.msra.mxu0 0.0
    %4130 = vmatprep.subr.mxu0 0.0
    %4131 = vmatpush1.msra.mxu0 0.0
    %4132 = vmatprep.subr.mxu0 0.0
    %4133 = vmatpush1.msra.mxu0 0.0
    %4134 = vmatprep.subr.mxu0 0.0
    %4135 = vmatpush1.msra.mxu0 0.0
    %4136 = vmatprep.subr.mxu0 0.0
    %4137 = vmatpush1.msra.mxu0 0.0
    %4138 = vmatprep.subr.mxu0 0.0
    %4139 = vmatpush1.msra.mxu0 0.0
    %4140 = vmatprep.subr.mxu0 0.0
    %4141 = vmatpush1.msra.mxu0 0.0
    %4142 = vmatprep.subr.mxu0 0.0
    %4143 = vmatpush1.msra.mxu0 0.0
    %4144 = vmatprep.subr.mxu0 0.0
    %4145 = vmatpush1.msra.mxu0 %v2726
    %4146 = vmatprep.subr.mxu0 0.0
    %4147 = vmatpush2.msra.mxu0 0.0
    %4148 = vmatprep.subr.mxu0 0.0
    %4149 = vmatpush2.msra.mxu0 0.0
    %4150 = vmatprep.subr.mxu0 0.0
    %4151 = vmatpush2.msra.mxu0 0.0
    %4152 = vmatprep.subr.mxu0 0.0
    %4153 = vmatpush2.msra.mxu0 0.0
    %4154 = vmatprep.subr.mxu0 0.0
    %4155 = vmatpush2.msra.mxu0 0.0
    %4156 = vmatprep.subr.mxu0 0.0
    %4157 = vmatpush2.msra.mxu0 0.0
    %4158 = vmatprep.subr.mxu0 0.0
    %4159 = vmatpush2.msra.mxu0 0.0
    %4160 = vmatprep.subr.mxu0 0.0
    %4161 = vmatpush2.msra.mxu0 0.0
    %4162 = vmatprep.subr.mxu0 0.0
    %4163 = vmatpush2.msra.mxu0 0.0
    %4164 = vmatprep.subr.mxu0 0.0
    %4165 = vmatpush2.msra.mxu0 0.0
    %4166 = vmatprep.subr.mxu0 0.0
    %4167 = vmatpush2.msra.mxu0 0.0
    %4168 = vmatprep.subr.mxu0 0.0
    %4169 = vmatpush2.msra.mxu0 0.0
    %4170 = vmatprep.subr.mxu0 0.0
    %4171 = vmatpush2.msra.mxu0 0.0
    %4172 = vmatprep.subr.mxu0 0.0
    %4173 = vmatpush2.msra.mxu0 0.0
    %4174 = vmatprep.subr.mxu0 0.0
    %4175 = vmatpush2.msra.mxu0 0.0
    %4176 = vmatprep.subr.mxu0 0.0
    %4177 = vmatpush2.msra.mxu0 0.0
    %4178 = vmatprep.mubr.f32.mxu0 0.0
    %4179 = vmatmul.mubr.f32.gmra.mxu0 %v4112
    %v4180 = vpop.f32.mrf.mxu0
    %v4181 = vadd.f32 %v4108, %v4180
    %v4182 = vpop.f32.mrf.mxu0
    %4183 = vdwg.mxu0
    %4184 = vrot.lane.b32.xlu0 %v3704, 112
    %v4185 = vpop.permute.xlu0 %4184
    %4186 = vrot.lane.b32.xlu0 %v3704, 80
    %v4187 = vpop.permute.xlu0 %4186
    %v4188 = vsel %vm340, %v4185, 0
    %v4190 = vsel %vm340, %v4187, 0
    %4192 = vmatprep.subr.mxu0 0.0
    %4193 = vmatpush1.xpose.msra.mxu0 0.0
    %4194 = vmatprep.subr.mxu0 0.0
    %4195 = vmatpush1.xpose.msra.mxu0 0.0
    %4196 = vmatprep.subr.mxu0 0.0
    %4197 = vmatpush1.xpose.msra.mxu0 0.0
    %4198 = vmatprep.subr.mxu0 0.0
    %4199 = vmatpush1.xpose.msra.mxu0 0.0
    %4200 = vmatprep.subr.mxu0 0.0
    %4201 = vmatpush1.xpose.msra.mxu0 0.0
    %4202 = vmatprep.subr.mxu0 0.0
    %4203 = vmatpush1.xpose.msra.mxu0 0.0
    %4204 = vmatprep.subr.mxu0 0.0
    %4205 = vmatpush1.xpose.msra.mxu0 0.0
    %4206 = vmatprep.subr.mxu0 0.0
    %4207 = vmatpush1.xpose.msra.mxu0 0.0
    %4208 = vmatprep.subr.mxu0 0.0
    %4209 = vmatpush1.xpose.msra.mxu0 0.0
    %4210 = vmatprep.subr.mxu0 0.0
    %4211 = vmatpush1.xpose.msra.mxu0 0.0
    %4212 = vmatprep.subr.mxu0 0.0
    %4213 = vmatpush1.xpose.msra.mxu0 0.0
    %4214 = vmatprep.subr.mxu0 0.0
    %4215 = vmatpush1.xpose.msra.mxu0 0.0
    %4216 = vmatprep.subr.mxu0 0.0
    %4217 = vmatpush1.xpose.msra.mxu0 0.0
    %4218 = vmatprep.subr.mxu0 0.0
    %4219 = vmatpush1.xpose.msra.mxu0 0.0
    %4220 = vmatprep.subr.mxu0 0.0
    %4221 = vmatpush1.xpose.msra.mxu0 0.0
    %4222 = vmatprep.subr.mxu0 0.0
    %4223 = vmatpush1.xpose.msra.mxu0 %v4190
    %4224 = vmatprep.subr.mxu0 0.0
    %4225 = vmatpush2.xpose.msra.mxu0 0.0
    %4226 = vmatprep.subr.mxu0 0.0
    %4227 = vmatpush2.xpose.msra.mxu0 0.0
    %4228 = vmatprep.subr.mxu0 0.0
    %4229 = vmatpush2.xpose.msra.mxu0 0.0
    %4230 = vmatprep.subr.mxu0 0.0
    %4231 = vmatpush2.xpose.msra.mxu0 0.0
    %4232 = vmatprep.subr.mxu0 0.0
    %4233 = vmatpush2.xpose.msra.mxu0 0.0
    %4234 = vmatprep.subr.mxu0 0.0
    %4235 = vmatpush2.xpose.msra.mxu0 0.0
    %4236 = vmatprep.subr.mxu0 0.0
    %4237 = vmatpush2.xpose.msra.mxu0 0.0
    %4238 = vmatprep.subr.mxu0 0.0
    %4239 = vmatpush2.xpose.msra.mxu0 0.0
    %4240 = vmatprep.subr.mxu0 0.0
    %4241 = vmatpush2.xpose.msra.mxu0 0.0
    %4242 = vmatprep.subr.mxu0 0.0
    %4243 = vmatpush2.xpose.msra.mxu0 0.0
    %4244 = vmatprep.subr.mxu0 0.0
    %4245 = vmatpush2.xpose.msra.mxu0 0.0
    %4246 = vmatprep.subr.mxu0 0.0
    %4247 = vmatpush2.xpose.msra.mxu0 0.0
    %4248 = vmatprep.subr.mxu0 0.0
    %4249 = vmatpush2.xpose.msra.mxu0 0.0
    %4250 = vmatprep.subr.mxu0 0.0
    %4251 = vmatpush2.xpose.msra.mxu0 0.0
    %4252 = vmatprep.subr.mxu0 0.0
    %4253 = vmatpush2.xpose.msra.mxu0 0.0
    %4254 = vmatprep.subr.mxu0 0.0
    %4255 = vmatpush2.xpose.msra.mxu0 0.0
    %4256 = vmatprep.mubr.f32.mxu0 0.0
    %4257 = vmatmul.mubr.f32.gmra.mxu0 %v4188
    %v4258 = vpop.f32.mrf.mxu0
    %v4259 = vadd.f32 0.0, %v4258
    %v4260 = vpop.f32.mrf.mxu0
    %4261 = vdwg.mxu0
    %v4262 = vmul.f32 %v4259, 0.35355338
    %v4263 = vsel %vm416, %v4262, -inf
    %4264 = vmax.xlane.f32.xlu0 %v4263
    %v4265 = vpop.xlane.xlu0 %4264
    %v4266 = vsub.f32 %v4262, %v4265
    %v4267 = vmul.f32 %v4266, 1.442695
    %v4268 = vpow.pop %v4267
    %v4269 = vsel %vm416, %v4268, 0.0
    %4270 = vadd.xlane.f32.xlu0 %v4269
    %v4271 = vpop.xlane.xlu0 %4270
    %v4272 = vrcp.pop %v4271
    %v4273 = vmul.f32 %v4268, %v4272
    %4274 = vrot.lane.b32.xlu0 %v3704, 48
    %v4275 = vpop.permute.xlu0 %4274
    %v4277 = vsel %vm430, %v4273, 0
    %v4279 = vsel %vm434, %v4275, 0
    %4281 = vmatprep.subr.mxu0 0.0
    %4282 = vmatpush1.msra.mxu0 0.0
    %4283 = vmatprep.subr.mxu0 0.0
    %4284 = vmatpush1.msra.mxu0 0.0
    %4285 = vmatprep.subr.mxu0 0.0
    %4286 = vmatpush1.msra.mxu0 0.0
    %4287 = vmatprep.subr.mxu0 0.0
    %4288 = vmatpush1.msra.mxu0 0.0
    %4289 = vmatprep.subr.mxu0 0.0
    %4290 = vmatpush1.msra.mxu0 0.0
    %4291 = vmatprep.subr.mxu0 0.0
    %4292 = vmatpush1.msra.mxu0 0.0
    %4293 = vmatprep.subr.mxu0 0.0
    %4294 = vmatpush1.msra.mxu0 0.0
    %4295 = vmatprep.subr.mxu0 0.0
    %4296 = vmatpush1.msra.mxu0 0.0
    %4297 = vmatprep.subr.mxu0 0.0
    %4298 = vmatpush1.msra.mxu0 0.0
    %4299 = vmatprep.subr.mxu0 0.0
    %4300 = vmatpush1.msra.mxu0 0.0
    %4301 = vmatprep.subr.mxu0 0.0
    %4302 = vmatpush1.msra.mxu0 0.0
    %4303 = vmatprep.subr.mxu0 0.0
    %4304 = vmatpush1.msra.mxu0 0.0
    %4305 = vmatprep.subr.mxu0 0.0
    %4306 = vmatpush1.msra.mxu0 0.0
    %4307 = vmatprep.subr.mxu0 0.0
    %4308 = vmatpush1.msra.mxu0 0.0
    %4309 = vmatprep.subr.mxu0 0.0
    %4310 = vmatpush1.msra.mxu0 0.0
    %4311 = vmatprep.subr.mxu0 0.0
    %4312 = vmatpush1.msra.mxu0 %v4279
    %4313 = vmatprep.subr.mxu0 0.0
    %4314 = vmatpush2.msra.mxu0 0.0
    %4315 = vmatprep.subr.mxu0 0.0
    %4316 = vmatpush2.msra.mxu0 0.0
    %4317 = vmatprep.subr.mxu0 0.0
    %4318 = vmatpush2.msra.mxu0 0.0
    %4319 = vmatprep.subr.mxu0 0.0
    %4320 = vmatpush2.msra.mxu0 0.0
    %4321 = vmatprep.subr.mxu0 0.0
    %4322 = vmatpush2.msra.mxu0 0.0
    %4323 = vmatprep.subr.mxu0 0.0
    %4324 = vmatpush2.msra.mxu0 0.0
    %4325 = vmatprep.subr.mxu0 0.0
    %4326 = vmatpush2.msra.mxu0 0.0
    %4327 = vmatprep.subr.mxu0 0.0
    %4328 = vmatpush2.msra.mxu0 0.0
    %4329 = vmatprep.subr.mxu0 0.0
    %4330 = vmatpush2.msra.mxu0 0.0
    %4331 = vmatprep.subr.mxu0 0.0
    %4332 = vmatpush2.msra.mxu0 0.0
    %4333 = vmatprep.subr.mxu0 0.0
    %4334 = vmatpush2.msra.mxu0 0.0
    %4335 = vmatprep.subr.mxu0 0.0
    %4336 = vmatpush2.msra.mxu0 0.0
    %4337 = vmatprep.subr.mxu0 0.0
    %4338 = vmatpush2.msra.mxu0 0.0
    %4339 = vmatprep.subr.mxu0 0.0
    %4340 = vmatpush2.msra.mxu0 0.0
    %4341 = vmatprep.subr.mxu0 0.0
    %4342 = vmatpush2.msra.mxu0 0.0
    %4343 = vmatprep.subr.mxu0 0.0
    %4344 = vmatpush2.msra.mxu0 0.0
    %4345 = vmatprep.mubr.f32.mxu0 0.0
    %4346 = vmatmul.mubr.f32.gmra.mxu0 %v4277
    %v4347 = vpop.f32.mrf.mxu0
    %v4348 = vadd.f32 0.0, %v4347
    %v4349 = vpop.f32.mrf.mxu0
    %4350 = vdwg.mxu0
    %v4352 = vsel %vm340, %v4348, 0
    %4354 = vmatprep.subr.mxu0 0.0
    %4355 = vmatpush1.msra.mxu0 0.0
    %4356 = vmatprep.subr.mxu0 0.0
    %4357 = vmatpush1.msra.mxu0 0.0
    %4358 = vmatprep.subr.mxu0 0.0
    %4359 = vmatpush1.msra.mxu0 0.0
    %4360 = vmatprep.subr.mxu0 0.0
    %4361 = vmatpush1.msra.mxu0 0.0
    %4362 = vmatprep.subr.mxu0 0.0
    %4363 = vmatpush1.msra.mxu0 0.0
    %4364 = vmatprep.subr.mxu0 0.0
    %4365 = vmatpush1.msra.mxu0 0.0
    %4366 = vmatprep.subr.mxu0 0.0
    %4367 = vmatpush1.msra.mxu0 0.0
    %4368 = vmatprep.subr.mxu0 0.0
    %4369 = vmatpush1.msra.mxu0 0.0
    %4370 = vmatprep.subr.mxu0 0.0
    %4371 = vmatpush1.msra.mxu0 0.0
    %4372 = vmatprep.subr.mxu0 0.0
    %4373 = vmatpush1.msra.mxu0 0.0
    %4374 = vmatprep.subr.mxu0 0.0
    %4375 = vmatpush1.msra.mxu0 0.0
    %4376 = vmatprep.subr.mxu0 0.0
    %4377 = vmatpush1.msra.mxu0 0.0
    %4378 = vmatprep.subr.mxu0 0.0
    %4379 = vmatpush1.msra.mxu0 0.0
    %4380 = vmatprep.subr.mxu0 0.0
    %4381 = vmatpush1.msra.mxu0 0.0
    %4382 = vmatprep.subr.mxu0 0.0
    %4383 = vmatpush1.msra.mxu0 0.0
    %4384 = vmatprep.subr.mxu0 0.0
    %4385 = vmatpush1.msra.mxu0 %v2728
    %4386 = vmatprep.subr.mxu0 0.0
    %4387 = vmatpush2.msra.mxu0 0.0
    %4388 = vmatprep.subr.mxu0 0.0
    %4389 = vmatpush2.msra.mxu0 0.0
    %4390 = vmatprep.subr.mxu0 0.0
    %4391 = vmatpush2.msra.mxu0 0.0
    %4392 = vmatprep.subr.mxu0 0.0
    %4393 = vmatpush2.msra.mxu0 0.0
    %4394 = vmatprep.subr.mxu0 0.0
    %4395 = vmatpush2.msra.mxu0 0.0
    %4396 = vmatprep.subr.mxu0 0.0
    %4397 = vmatpush2.msra.mxu0 0.0
    %4398 = vmatprep.subr.mxu0 0.0
    %4399 = vmatpush2.msra.mxu0 0.0
    %4400 = vmatprep.subr.mxu0 0.0
    %4401 = vmatpush2.msra.mxu0 0.0
    %4402 = vmatprep.subr.mxu0 0.0
    %4403 = vmatpush2.msra.mxu0 0.0
    %4404 = vmatprep.subr.mxu0 0.0
    %4405 = vmatpush2.msra.mxu0 0.0
    %4406 = vmatprep.subr.mxu0 0.0
    %4407 = vmatpush2.msra.mxu0 0.0
    %4408 = vmatprep.subr.mxu0 0.0
    %4409 = vmatpush2.msra.mxu0 0.0
    %4410 = vmatprep.subr.mxu0 0.0
    %4411 = vmatpush2.msra.mxu0 0.0
    %4412 = vmatprep.subr.mxu0 0.0
    %4413 = vmatpush2.msra.mxu0 0.0
    %4414 = vmatprep.subr.mxu0 0.0
    %4415 = vmatpush2.msra.mxu0 0.0
    %4416 = vmatprep.subr.mxu0 0.0
    %4417 = vmatpush2.msra.mxu0 0.0
    %4418 = vmatprep.mubr.f32.mxu0 0.0
    %4419 = vmatmul.mubr.f32.gmra.mxu0 %v4352
    %v4420 = vpop.f32.mrf.mxu0
    %v4421 = vadd.f32 0.0, %v4420
    %v4422 = vpop.f32.mrf.mxu0
    %4423 = vdwg.mxu0
    %v4424 = vadd.f32 %v4181, %v4421
    %4425 = vrot.lane.b32.xlu0 %v3704, 104
    %v4426 = vpop.permute.xlu0 %4425
    %4427 = vrot.lane.b32.xlu0 %v3704, 72
    %v4428 = vpop.permute.xlu0 %4427
    %v4429 = vsel %vm340, %v4426, 0
    %v4431 = vsel %vm340, %v4428, 0
    %4433 = vmatprep.subr.mxu0 0.0
    %4434 = vmatpush1.xpose.msra.mxu0 0.0
    %4435 = vmatprep.subr.mxu0 0.0
    %4436 = vmatpush1.xpose.msra.mxu0 0.0
    %4437 = vmatprep.subr.mxu0 0.0
    %4438 = vmatpush1.xpose.msra.mxu0 0.0
    %4439 = vmatprep.subr.mxu0 0.0
    %4440 = vmatpush1.xpose.msra.mxu0 0.0
    %4441 = vmatprep.subr.mxu0 0.0
    %4442 = vmatpush1.xpose.msra.mxu0 0.0
    %4443 = vmatprep.subr.mxu0 0.0
    %4444 = vmatpush1.xpose.msra.mxu0 0.0
    %4445 = vmatprep.subr.mxu0 0.0
    %4446 = vmatpush1.xpose.msra.mxu0 0.0
    %4447 = vmatprep.subr.mxu0 0.0
    %4448 = vmatpush1.xpose.msra.mxu0 0.0
    %4449 = vmatprep.subr.mxu0 0.0
    %4450 = vmatpush1.xpose.msra.mxu0 0.0
    %4451 = vmatprep.subr.mxu0 0.0
    %4452 = vmatpush1.xpose.msra.mxu0 0.0
    %4453 = vmatprep.subr.mxu0 0.0
    %4454 = vmatpush1.xpose.msra.mxu0 0.0
    %4455 = vmatprep.subr.mxu0 0.0
    %4456 = vmatpush1.xpose.msra.mxu0 0.0
    %4457 = vmatprep.subr.mxu0 0.0
    %4458 = vmatpush1.xpose.msra.mxu0 0.0
    %4459 = vmatprep.subr.mxu0 0.0
    %4460 = vmatpush1.xpose.msra.mxu0 0.0
    %4461 = vmatprep.subr.mxu0 0.0
    %4462 = vmatpush1.xpose.msra.mxu0 0.0
    %4463 = vmatprep.subr.mxu0 0.0
    %4464 = vmatpush1.xpose.msra.mxu0 %v4431
    %4465 = vmatprep.subr.mxu0 0.0
    %4466 = vmatpush2.xpose.msra.mxu0 0.0
    %4467 = vmatprep.subr.mxu0 0.0
    %4468 = vmatpush2.xpose.msra.mxu0 0.0
    %4469 = vmatprep.subr.mxu0 0.0
    %4470 = vmatpush2.xpose.msra.mxu0 0.0
    %4471 = vmatprep.subr.mxu0 0.0
    %4472 = vmatpush2.xpose.msra.mxu0 0.0
    %4473 = vmatprep.subr.mxu0 0.0
    %4474 = vmatpush2.xpose.msra.mxu0 0.0
    %4475 = vmatprep.subr.mxu0 0.0
    %4476 = vmatpush2.xpose.msra.mxu0 0.0
    %4477 = vmatprep.subr.mxu0 0.0
    %4478 = vmatpush2.xpose.msra.mxu0 0.0
    %4479 = vmatprep.subr.mxu0 0.0
    %4480 = vmatpush2.xpose.msra.mxu0 0.0
    %4481 = vmatprep.subr.mxu0 0.0
    %4482 = vmatpush2.xpose.msra.mxu0 0.0
    %4483 = vmatprep.subr.mxu0 0.0
    %4484 = vmatpush2.xpose.msra.mxu0 0.0
    %4485 = vmatprep.subr.mxu0 0.0
    %4486 = vmatpush2.xpose.msra.mxu0 0.0
    %4487 = vmatprep.subr.mxu0 0.0
    %4488 = vmatpush2.xpose.msra.mxu0 0.0
    %4489 = vmatprep.subr.mxu0 0.0
    %4490 = vmatpush2.xpose.msra.mxu0 0.0
    %4491 = vmatprep.subr.mxu0 0.0
    %4492 = vmatpush2.xpose.msra.mxu0 0.0
    %4493 = vmatprep.subr.mxu0 0.0
    %4494 = vmatpush2.xpose.msra.mxu0 0.0
    %4495 = vmatprep.subr.mxu0 0.0
    %4496 = vmatpush2.xpose.msra.mxu0 0.0
    %4497 = vmatprep.mubr.f32.mxu0 0.0
    %4498 = vmatmul.mubr.f32.gmra.mxu0 %v4429
    %v4499 = vpop.f32.mrf.mxu0
    %v4500 = vadd.f32 0.0, %v4499
    %v4501 = vpop.f32.mrf.mxu0
    %4502 = vdwg.mxu0
    %v4503 = vmul.f32 %v4500, 0.35355338
    %v4504 = vsel %vm416, %v4503, -inf
    %4505 = vmax.xlane.f32.xlu0 %v4504
    %v4506 = vpop.xlane.xlu0 %4505
    %v4507 = vsub.f32 %v4503, %v4506
    %v4508 = vmul.f32 %v4507, 1.442695
    %v4509 = vpow.pop %v4508
    %v4510 = vsel %vm416, %v4509, 0.0
    %4511 = vadd.xlane.f32.xlu0 %v4510
    %v4512 = vpop.xlane.xlu0 %4511
    %v4513 = vrcp.pop %v4512
    %v4514 = vmul.f32 %v4509, %v4513
    %4515 = vrot.lane.b32.xlu0 %v3704, 40
    %v4516 = vpop.permute.xlu0 %4515
    %v4518 = vsel %vm430, %v4514, 0
    %v4520 = vsel %vm434, %v4516, 0
    %4522 = vmatprep.subr.mxu0 0.0
    %4523 = vmatpush1.msra.mxu0 0.0
    %4524 = vmatprep.subr.mxu0 0.0
    %4525 = vmatpush1.msra.mxu0 0.0
    %4526 = vmatprep.subr.mxu0 0.0
    %4527 = vmatpush1.msra.mxu0 0.0
    %4528 = vmatprep.subr.mxu0 0.0
    %4529 = vmatpush1.msra.mxu0 0.0
    %4530 = vmatprep.subr.mxu0 0.0
    %4531 = vmatpush1.msra.mxu0 0.0
    %4532 = vmatprep.subr.mxu0 0.0
    %4533 = vmatpush1.msra.mxu0 0.0
    %4534 = vmatprep.subr.mxu0 0.0
    %4535 = vmatpush1.msra.mxu0 0.0
    %4536 = vmatprep.subr.mxu0 0.0
    %4537 = vmatpush1.msra.mxu0 0.0
    %4538 = vmatprep.subr.mxu0 0.0
    %4539 = vmatpush1.msra.mxu0 0.0
    %4540 = vmatprep.subr.mxu0 0.0
    %4541 = vmatpush1.msra.mxu0 0.0
    %4542 = vmatprep.subr.mxu0 0.0
    %4543 = vmatpush1.msra.mxu0 0.0
    %4544 = vmatprep.subr.mxu0 0.0
    %4545 = vmatpush1.msra.mxu0 0.0
    %4546 = vmatprep.subr.mxu0 0.0
    %4547 = vmatpush1.msra.mxu0 0.0
    %4548 = vmatprep.subr.mxu0 0.0
    %4549 = vmatpush1.msra.mxu0 0.0
    %4550 = vmatprep.subr.mxu0 0.0
    %4551 = vmatpush1.msra.mxu0 0.0
    %4552 = vmatprep.subr.mxu0 0.0
    %4553 = vmatpush1.msra.mxu0 %v4520
    %4554 = vmatprep.subr.mxu0 0.0
    %4555 = vmatpush2.msra.mxu0 0.0
    %4556 = vmatprep.subr.mxu0 0.0
    %4557 = vmatpush2.msra.mxu0 0.0
    %4558 = vmatprep.subr.mxu0 0.0
    %4559 = vmatpush2.msra.mxu0 0.0
    %4560 = vmatprep.subr.mxu0 0.0
    %4561 = vmatpush2.msra.mxu0 0.0
    %4562 = vmatprep.subr.mxu0 0.0
    %4563 = vmatpush2.msra.mxu0 0.0
    %4564 = vmatprep.subr.mxu0 0.0
    %4565 = vmatpush2.msra.mxu0 0.0
    %4566 = vmatprep.subr.mxu0 0.0
    %4567 = vmatpush2.msra.mxu0 0.0
    %4568 = vmatprep.subr.mxu0 0.0
    %4569 = vmatpush2.msra.mxu0 0.0
    %4570 = vmatprep.subr.mxu0 0.0
    %4571 = vmatpush2.msra.mxu0 0.0
    %4572 = vmatprep.subr.mxu0 0.0
    %4573 = vmatpush2.msra.mxu0 0.0
    %4574 = vmatprep.subr.mxu0 0.0
    %4575 = vmatpush2.msra.mxu0 0.0
    %4576 = vmatprep.subr.mxu0 0.0
    %4577 = vmatpush2.msra.mxu0 0.0
    %4578 = vmatprep.subr.mxu0 0.0
    %4579 = vmatpush2.msra.mxu0 0.0
    %4580 = vmatprep.subr.mxu0 0.0
    %4581 = vmatpush2.msra.mxu0 0.0
    %4582 = vmatprep.subr.mxu0 0.0
    %4583 = vmatpush2.msra.mxu0 0.0
    %4584 = vmatprep.subr.mxu0 0.0
    %4585 = vmatpush2.msra.mxu0 0.0
    %4586 = vmatprep.mubr.f32.mxu0 0.0
    %4587 = vmatmul.mubr.f32.gmra.mxu0 %v4518
    %v4588 = vpop.f32.mrf.mxu0
    %v4589 = vadd.f32 0.0, %v4588
    %v4590 = vpop.f32.mrf.mxu0
    %4591 = vdwg.mxu0
    %v4593 = vsel %vm340, %v4589, 0
    %4595 = vmatprep.subr.mxu0 0.0
    %4596 = vmatpush1.msra.mxu0 0.0
    %4597 = vmatprep.subr.mxu0 0.0
    %4598 = vmatpush1.msra.mxu0 0.0
    %4599 = vmatprep.subr.mxu0 0.0
    %4600 = vmatpush1.msra.mxu0 0.0
    %4601 = vmatprep.subr.mxu0 0.0
    %4602 = vmatpush1.msra.mxu0 0.0
    %4603 = vmatprep.subr.mxu0 0.0
    %4604 = vmatpush1.msra.mxu0 0.0
    %4605 = vmatprep.subr.mxu0 0.0
    %4606 = vmatpush1.msra.mxu0 0.0
    %4607 = vmatprep.subr.mxu0 0.0
    %4608 = vmatpush1.msra.mxu0 0.0
    %4609 = vmatprep.subr.mxu0 0.0
    %4610 = vmatpush1.msra.mxu0 0.0
    %4611 = vmatprep.subr.mxu0 0.0
    %4612 = vmatpush1.msra.mxu0 0.0
    %4613 = vmatprep.subr.mxu0 0.0
    %4614 = vmatpush1.msra.mxu0 0.0
    %4615 = vmatprep.subr.mxu0 0.0
    %4616 = vmatpush1.msra.mxu0 0.0
    %4617 = vmatprep.subr.mxu0 0.0
    %4618 = vmatpush1.msra.mxu0 0.0
    %4619 = vmatprep.subr.mxu0 0.0
    %4620 = vmatpush1.msra.mxu0 0.0
    %4621 = vmatprep.subr.mxu0 0.0
    %4622 = vmatpush1.msra.mxu0 0.0
    %4623 = vmatprep.subr.mxu0 0.0
    %4624 = vmatpush1.msra.mxu0 0.0
    %4625 = vmatprep.subr.mxu0 0.0
    %4626 = vmatpush1.msra.mxu0 %v2729
    %4627 = vmatprep.subr.mxu0 0.0
    %4628 = vmatpush2.msra.mxu0 0.0
    %4629 = vmatprep.subr.mxu0 0.0
    %4630 = vmatpush2.msra.mxu0 0.0
    %4631 = vmatprep.subr.mxu0 0.0
    %4632 = vmatpush2.msra.mxu0 0.0
    %4633 = vmatprep.subr.mxu0 0.0
    %4634 = vmatpush2.msra.mxu0 0.0
    %4635 = vmatprep.subr.mxu0 0.0
    %4636 = vmatpush2.msra.mxu0 0.0
    %4637 = vmatprep.subr.mxu0 0.0
    %4638 = vmatpush2.msra.mxu0 0.0
    %4639 = vmatprep.subr.mxu0 0.0
    %4640 = vmatpush2.msra.mxu0 0.0
    %4641 = vmatprep.subr.mxu0 0.0
    %4642 = vmatpush2.msra.mxu0 0.0
    %4643 = vmatprep.subr.mxu0 0.0
    %4644 = vmatpush2.msra.mxu0 0.0
    %4645 = vmatprep.subr.mxu0 0.0
    %4646 = vmatpush2.msra.mxu0 0.0
    %4647 = vmatprep.subr.mxu0 0.0
    %4648 = vmatpush2.msra.mxu0 0.0
    %4649 = vmatprep.subr.mxu0 0.0
    %4650 = vmatpush2.msra.mxu0 0.0
    %4651 = vmatprep.subr.mxu0 0.0
    %4652 = vmatpush2.msra.mxu0 0.0
    %4653 = vmatprep.subr.mxu0 0.0
    %4654 = vmatpush2.msra.mxu0 0.0
    %4655 = vmatprep.subr.mxu0 0.0
    %4656 = vmatpush2.msra.mxu0 0.0
    %4657 = vmatprep.subr.mxu0 0.0
    %4658 = vmatpush2.msra.mxu0 0.0
    %4659 = vmatprep.mubr.f32.mxu0 0.0
    %4660 = vmatmul.mubr.f32.gmra.mxu0 %v4593
    %v4661 = vpop.f32.mrf.mxu0
    %v4662 = vadd.f32 0.0, %v4661
    %v4663 = vpop.f32.mrf.mxu0
    %4664 = vdwg.mxu0
    %v4665 = vadd.f32 %v4424, %v4662
    %v4666 = vld [vmem:[#allocation2 + $0x5] sm:$0x1f]
    %v4667 = vadd.f32 %v4666, %v4665
    %v4668 = vld [vmem:[%s3694] sm:$0x1]
    %v4670 = vlaneseq
    %v4671 = vshrl.u32 %v4670, 7
    %v4672 = vsub.s32 0, %v4671
    %v4673 = vrot.slane %v4668, %v4672
    %v4675 = vadd.f32 %v4667, %v4673
    %4676 = vst.msk [vmem:[#allocation2 + $0x5] sm:$0x1f] %vm1312, %v4675
    %v4677 = vld [vmem:[#allocation2] sm:$0xff]
    %v4678 = vld [vmem:[#allocation2 + $0x8] sm:$0x3]
    %s4679 = scalar_lea.vmem %s9, 1
    %v4680 = vld [vmem:[%s4679] sm:$0x1]
    %s4681 = scalar_lea.vmem %s10, 1
    %v4682 = vld [vmem:[%s4681] sm:$0x1]
    %v4683 = vsel %vm185, %v4677, 0.0
    %4684 = vadd.xlane.f32.xlu0 %v4683
    %v4685 = vpop.xlane.xlu0 %4684
    %v4686 = vsel %vm187, %v4678, 0.0
    %4687 = vadd.xlane.f32.xlu0 %v4686
    %v4688 = vpop.xlane.xlu0 %4687
    %v4689 = vmul.f32 %v4685, %v199
    %v4690 = vmul.f32 %v4688, %v199
    %v4691 = vsub.f32 %v4677, %v4689
    %v4692 = vsub.f32 %v4678, %v4690
    %v4693 = vmul.f32 %v4691, %v4691
    %v4694 = vmul.f32 %v4692, %v4692
    %v4695 = vsel %vm185, %v4693, 0.0
    %4696 = vadd.xlane.f32.xlu0 %v4695
    %v4697 = vpop.xlane.xlu0 %4696
    %v4698 = vsel %vm187, %v4694, 0.0
    %4699 = vadd.xlane.f32.xlu0 %v4698
    %v4700 = vpop.xlane.xlu0 %4699
    %v4701 = vmul.f32 %v4697, %v199
    %v4702 = vmul.f32 %v4700, %v199
    %v4703 = vadd.f32 %v4701, 1e-05
    %v4704 = vadd.f32 %v4702, 1e-05
    %v4705 = vrsqrt.pop %v4703
    %v4706 = vrsqrt.pop %v4704
    %v4707 = vmul.f32 %v4691, %v4705
    %v4708 = vmul.f32 %v4692, %v4706
    %v4710 = vlaneseq
    %v4711 = vshrl.u32 %v4710, 7
    %v4712 = vsub.s32 0, %v4711
    %v4713 = vrot.slane %v4680, %v4712
    %v4715 = vmul.f32 %v4707, %v4713
    %v4716 = vmul.f32 %v4708, %v4713
    %v4718 = vlaneseq
    %v4719 = vshrl.u32 %v4718, 7
    %v4720 = vsub.s32 0, %v4719
    %v4721 = vrot.slane %v4682, %v4720
    %v4723 = vadd.f32 %v4715, %v4721
    %v4724 = vadd.f32 %v4716, %v4721
    %s4725 = scalar_lea.vmem %s11, 32
    %v4726 = vld [vmem:[%s4725] sm:$0xff]
    %v4727 = vld [vmem:[%s4725 + $0x8] sm:$0xff]
    %v4728 = vld [vmem:[%s4725 + $0x10] sm:$0xff]
    %v4729 = vld [vmem:[%s4725 + $0x18] sm:$0xff]
    %s4730 = scalar_lea.vmem %s12, 1
    %v4731 = vld [vmem:[%s4730] sm:$0x1]
    %v4733 = vlaneseq
    %v4734 = vshrl.u32 %v4733, 7
    %v4735 = vsub.s32 0, %v4734
    %v4736 = vrot.slane %v4731, %v4735
    %v4739 = vsel %vm185, %v4723, 0
    %v4742 = vsel %vm185, %v4724, 0
    %4744 = vmatprep.subr.mxu0 0.0
    %4745 = vmatpush1.msra.mxu0 0.0
    %4746 = vmatprep.subr.mxu0 0.0
    %4747 = vmatpush1.msra.mxu0 0.0
    %4748 = vmatprep.subr.mxu0 0.0
    %4749 = vmatpush1.msra.mxu0 0.0
    %4750 = vmatprep.subr.mxu0 0.0
    %4751 = vmatpush1.msra.mxu0 0.0
    %4752 = vmatprep.subr.mxu0 0.0
    %4753 = vmatpush1.msra.mxu0 0.0
    %4754 = vmatprep.subr.mxu0 0.0
    %4755 = vmatpush1.msra.mxu0 0.0
    %4756 = vmatprep.subr.mxu0 0.0
    %4757 = vmatpush1.msra.mxu0 0.0
    %4758 = vmatprep.subr.mxu0 0.0
    %4759 = vmatpush1.msra.mxu0 0.0
    %4760 = vmatprep.subr.mxu0 0.0
    %4761 = vmatpush1.msra.mxu0 0.0
    %4762 = vmatprep.subr.mxu0 0.0
    %4763 = vmatpush1.msra.mxu0 0.0
    %4764 = vmatprep.subr.mxu0 0.0
    %4765 = vmatpush1.msra.mxu0 0.0
    %4766 = vmatprep.subr.mxu0 0.0
    %4767 = vmatpush1.msra.mxu0 0.0
    %4768 = vmatprep.subr.mxu0 0.0
    %4769 = vmatpush1.msra.mxu0 %v4729
    %4770 = vmatprep.subr.mxu0 0.0
    %4771 = vmatpush1.msra.mxu0 %v4728
    %4772 = vmatprep.subr.mxu0 0.0
    %4773 = vmatpush1.msra.mxu0 %v4727
    %4774 = vmatprep.subr.mxu0 0.0
    %4775 = vmatpush1.msra.mxu0 %v4726
    %4776 = vmatprep.subr.mxu0 0.0
    %4777 = vmatpush2.msra.mxu0 0.0
    %4778 = vmatprep.subr.mxu0 0.0
    %4779 = vmatpush2.msra.mxu0 0.0
    %4780 = vmatprep.subr.mxu0 0.0
    %4781 = vmatpush2.msra.mxu0 0.0
    %4782 = vmatprep.subr.mxu0 0.0
    %4783 = vmatpush2.msra.mxu0 0.0
    %4784 = vmatprep.subr.mxu0 0.0
    %4785 = vmatpush2.msra.mxu0 0.0
    %4786 = vmatprep.subr.mxu0 0.0
    %4787 = vmatpush2.msra.mxu0 0.0
    %4788 = vmatprep.subr.mxu0 0.0
    %4789 = vmatpush2.msra.mxu0 0.0
    %4790 = vmatprep.subr.mxu0 0.0
    %4791 = vmatpush2.msra.mxu0 0.0
    %4792 = vmatprep.subr.mxu0 0.0
    %4793 = vmatpush2.msra.mxu0 0.0
    %4794 = vmatprep.subr.mxu0 0.0
    %4795 = vmatpush2.msra.mxu0 0.0
    %4796 = vmatprep.subr.mxu0 0.0
    %4797 = vmatpush2.msra.mxu0 0.0
    %4798 = vmatprep.subr.mxu0 0.0
    %4799 = vmatpush2.msra.mxu0 0.0
    %4800 = vmatprep.subr.mxu0 0.0
    %4801 = vmatpush2.msra.mxu0 0.0
    %4802 = vmatprep.subr.mxu0 0.0
    %4803 = vmatpush2.msra.mxu0 0.0
    %4804 = vmatprep.subr.mxu0 0.0
    %4805 = vmatpush2.msra.mxu0 0.0
    %4806 = vmatprep.subr.mxu0 0.0
    %4807 = vmatpush2.msra.mxu0 0.0
    %4808 = vmatprep.mubr.f32.mxu0 0.0
    %4809 = vmatmul.mubr.f32.gmra.mxu0 %v4739
    %v4810 = vpop.f32.mrf.mxu0
    %v4811 = vadd.f32 %v4736, %v4810
    %v4812 = vpop.f32.mrf.mxu0
    %4813 = vmatprep.mubr.f32.mxu0 0.0
    %4814 = vmatmul.mubr.f32.gmra.mxu0 %v4742
    %v4815 = vpop.f32.mrf.mxu0
    %v4816 = vadd.f32 %v4736, %v4815
    %v4817 = vpop.f32.mrf.mxu0
    %4818 = vdwg.mxu0
    %v4819 = vmul.f32 %v4811, 0.5
    %v4820 = vmul.f32 %v4816, 0.5
    %v4821 = vmul.f32 %v4811, 0.70710677
    %v4822 = vmul.f32 %v4816, 0.70710677
    %v4823 = vand.u32 2147483647, %v4821
    %v4824 = vand.u32 2147483647, %v4822
    %v4825 = vmul.f32 %v4823, 0.3275911
    %v4826 = vmul.f32 %v4824, 0.3275911
    %v4827 = vadd.f32 %v4825, 1.0
    %v4828 = vadd.f32 %v4826, 1.0
    %v4829 = vrcp.pop %v4827
    %v4830 = vmul.f32 1.0, %v4829
    %v4831 = vrcp.pop %v4828
    %v4832 = vmul.f32 1.0, %v4831
    %v4833 = vmul.f32 %v4830, 1.0614054
    %v4834 = vmul.f32 %v4832, 1.0614054
    %v4835 = vadd.f32 %v4833, -1.4531521
    %v4836 = vadd.f32 %v4834, -1.4531521
    %v4837 = vmul.f32 %v4835, %v4830
    %v4838 = vmul.f32 %v4836, %v4832
    %v4839 = vadd.f32 %v4837, 1.4214138
    %v4840 = vadd.f32 %v4838, 1.4214138
    %v4841 = vmul.f32 %v4839, %v4830
    %v4842 = vmul.f32 %v4840, %v4832
    %v4843 = vadd.f32 %v4841, -0.28449672
    %v4844 = vadd.f32 %v4842, -0.28449672
    %v4845 = vmul.f32 %v4843, %v4830
    %v4846 = vmul.f32 %v4844, %v4832
    %v4847 = vadd.f32 %v4845, 0.2548296
    %v4848 = vadd.f32 %v4846, 0.2548296
    %v4849 = vmul.f32 %v4847, %v4830
    %v4850 = vmul.f32 %v4848, %v4832
    %v4851 = vsub.f32 0.0, %v4823
    %v4852 = vsub.f32 0.0, %v4824
    %v4853 = vmul.f32 %v4851, %v4823
    %v4854 = vmul.f32 %v4852, %v4824
    %v4855 = vmul.f32 %v4853, 1.442695
    %v4856 = vpow.pop %v4855
    %v4857 = vmul.f32 %v4854, 1.442695
    %v4858 = vpow.pop %v4857
    %v4859 = vmul.f32 %v4849, %v4856
    %v4860 = vmul.f32 %v4850, %v4858
    %v4861 = vsub.f32 1.0, %v4859
    %v4862 = vsub.f32 1.0, %v4860
    %vm4863 = vcmp.ge.f32.partialorder %v4821, 0.0
    %vm4864 = vcmp.ge.f32.partialorder %v4822, 0.0
    %v4865 = vsub.f32 0.0, %v4861
    %v4866 = vsub.f32 0.0, %v4862
    %v4867 = vsel %vm4863, %v4861, %v4865
    %v4868 = vsel %vm4864, %v4862, %v4866
    %v4869 = vadd.f32 %v4867, 1.0
    %v4870 = vadd.f32 %v4868, 1.0
    %v4871 = vmul.f32 %v4819, %v4869
    %v4872 = vmul.f32 %v4820, %v4870
    %s4873 = scalar_lea.vmem %s13, 128
    %v4874 = vld [vmem:[%s4873] sm:$0xff]
    %v4875 = vld [vmem:[%s4873 + $0x8] sm:$0xff]
    %v4876 = vld [vmem:[%s4873 + $0x10] sm:$0xff]
    %v4877 = vld [vmem:[%s4873 + $0x18] sm:$0xff]
    %v4878 = vld [vmem:[%s4873 + $0x20] sm:$0xff]
    %v4879 = vld [vmem:[%s4873 + $0x28] sm:$0xff]
    %v4880 = vld [vmem:[%s4873 + $0x30] sm:$0xff]
    %v4881 = vld [vmem:[%s4873 + $0x38] sm:$0xff]
    %v4882 = vld [vmem:[%s4873 + $0x40] sm:$0xff]
    %v4883 = vld [vmem:[%s4873 + $0x48] sm:$0xff]
    %v4884 = vld [vmem:[%s4873 + $0x50] sm:$0xff]
    %v4885 = vld [vmem:[%s4873 + $0x58] sm:$0xff]
    %v4886 = vld [vmem:[%s4873 + $0x60] sm:$0xff]
    %v4887 = vld [vmem:[%s4873 + $0x68] sm:$0xff]
    %v4888 = vld [vmem:[%s4873 + $0x70] sm:$0xff]
    %v4889 = vld [vmem:[%s4873 + $0x78] sm:$0xff]
    %s4890 = scalar_lea.vmem %s14, 1
    %v4891 = vld [vmem:[%s4890] sm:$0x1]
    %v4893 = vlaneseq
    %v4894 = vshrl.u32 %v4893, 7
    %v4895 = vsub.s32 0, %v4894
    %v4896 = vrot.slane %v4891, %v4895
    %4898 = vmatprep.subr.mxu0 0.0
    %4899 = vmatpush1.msra.mxu0 %v4889
    %4900 = vmatprep.subr.mxu0 0.0
    %4901 = vmatpush1.msra.mxu0 %v4888
    %4902 = vmatprep.subr.mxu0 0.0
    %4903 = vmatpush1.msra.mxu0 %v4887
    %4904 = vmatprep.subr.mxu0 0.0
    %4905 = vmatpush1.msra.mxu0 %v4886
    %4906 = vmatprep.subr.mxu0 0.0
    %4907 = vmatpush1.msra.mxu0 %v4885
    %4908 = vmatprep.subr.mxu0 0.0
    %4909 = vmatpush1.msra.mxu0 %v4884
    %4910 = vmatprep.subr.mxu0 0.0
    %4911 = vmatpush1.msra.mxu0 %v4883
    %4912 = vmatprep.subr.mxu0 0.0
    %4913 = vmatpush1.msra.mxu0 %v4882
    %4914 = vmatprep.subr.mxu0 0.0
    %4915 = vmatpush1.msra.mxu0 %v4881
    %4916 = vmatprep.subr.mxu0 0.0
    %4917 = vmatpush1.msra.mxu0 %v4880
    %4918 = vmatprep.subr.mxu0 0.0
    %4919 = vmatpush1.msra.mxu0 %v4879
    %4920 = vmatprep.subr.mxu0 0.0
    %4921 = vmatpush1.msra.mxu0 %v4878
    %4922 = vmatprep.subr.mxu0 0.0
    %4923 = vmatpush1.msra.mxu0 %v4877
    %4924 = vmatprep.subr.mxu0 0.0
    %4925 = vmatpush1.msra.mxu0 %v4876
    %4926 = vmatprep.subr.mxu0 0.0
    %4927 = vmatpush1.msra.mxu0 %v4875
    %4928 = vmatprep.subr.mxu0 0.0
    %4929 = vmatpush1.msra.mxu0 %v4874
    %4930 = vmatprep.subr.mxu0 0.0
    %4931 = vmatpush2.msra.mxu0 0.0
    %4932 = vmatprep.subr.mxu0 0.0
    %4933 = vmatpush2.msra.mxu0 0.0
    %4934 = vmatprep.subr.mxu0 0.0
    %4935 = vmatpush2.msra.mxu0 0.0
    %4936 = vmatprep.subr.mxu0 0.0
    %4937 = vmatpush2.msra.mxu0 0.0
    %4938 = vmatprep.subr.mxu0 0.0
    %4939 = vmatpush2.msra.mxu0 0.0
    %4940 = vmatprep.subr.mxu0 0.0
    %4941 = vmatpush2.msra.mxu0 0.0
    %4942 = vmatprep.subr.mxu0 0.0
    %4943 = vmatpush2.msra.mxu0 0.0
    %4944 = vmatprep.subr.mxu0 0.0
    %4945 = vmatpush2.msra.mxu0 0.0
    %4946 = vmatprep.subr.mxu0 0.0
    %4947 = vmatpush2.msra.mxu0 0.0
    %4948 = vmatprep.subr.mxu0 0.0
    %4949 = vmatpush2.msra.mxu0 0.0
    %4950 = vmatprep.subr.mxu0 0.0
    %4951 = vmatpush2.msra.mxu0 0.0
    %4952 = vmatprep.subr.mxu0 0.0
    %4953 = vmatpush2.msra.mxu0 0.0
    %4954 = vmatprep.subr.mxu0 0.0
    %4955 = vmatpush2.msra.mxu0 0.0
    %4956 = vmatprep.subr.mxu0 0.0
    %4957 = vmatpush2.msra.mxu0 0.0
    %4958 = vmatprep.subr.mxu0 0.0
    %4959 = vmatpush2.msra.mxu0 0.0
    %4960 = vmatprep.subr.mxu0 0.0
    %4961 = vmatpush2.msra.mxu0 0.0
    %4962 = vmatprep.mubr.f32.mxu0 0.0
    %4963 = vmatmul.mubr.f32.gmra.mxu0 %v4871
    %v4964 = vpop.f32.mrf.mxu0
    %v4965 = vadd.f32 %v4896, %v4964
    %v4966 = vpop.f32.mrf.mxu0
    %4967 = vmatprep.mubr.f32.mxu0 0.0
    %4968 = vmatmul.mubr.f32.gmra.mxu0 %v4872
    %v4969 = vpop.f32.mrf.mxu0
    %v4970 = vadd.f32 %v4896, %v4969
    %v4971 = vpop.f32.mrf.mxu0
    %4972 = vdwg.mxu0
    %v4973 = vadd.f32 %v4677, %v4965
    %v4974 = vadd.f32 %v4678, %v4970
    %4975 = vst.msk [vmem:[#allocation2] sm:$0xff] %vm185, %v4973
    %4976 = vst.msk [vmem:[#allocation2 + $0x8] sm:$0x3] %vm187, %v4974
    %v4977 = vld [vmem:[#allocation2] sm:$0xff]
    %v4978 = vld [vmem:[#allocation2 + $0x8] sm:$0x3]
    %s4979 = scalar_lea.vmem %s3, 2
    %v4980 = vld [vmem:[%s4979] sm:$0x1]
    %s4981 = scalar_lea.vmem %s4, 2
    %v4982 = vld [vmem:[%s4981] sm:$0x1]
    %v4983 = vsel %vm185, %v4977, 0.0
    %4984 = vadd.xlane.f32.xlu0 %v4983
    %v4985 = vpop.xlane.xlu0 %4984
    %v4986 = vsel %vm187, %v4978, 0.0
    %4987 = vadd.xlane.f32.xlu0 %v4986
    %v4988 = vpop.xlane.xlu0 %4987
    %v4989 = vmul.f32 %v4985, %v199
    %v4990 = vmul.f32 %v4988, %v199
    %v4991 = vsub.f32 %v4977, %v4989
    %v4992 = vsub.f32 %v4978, %v4990
    %v4993 = vmul.f32 %v4991, %v4991
    %v4994 = vmul.f32 %v4992, %v4992
    %v4995 = vsel %vm185, %v4993, 0.0
    %4996 = vadd.xlane.f32.xlu0 %v4995
    %v4997 = vpop.xlane.xlu0 %4996
    %v4998 = vsel %vm187, %v4994, 0.0
    %4999 = vadd.xlane.f32.xlu0 %v4998
    %v5000 = vpop.xlane.xlu0 %4999
    %v5001 = vmul.f32 %v4997, %v199
    %v5002 = vmul.f32 %v5000, %v199
    %v5003 = vadd.f32 %v5001, 1e-05
    %v5004 = vadd.f32 %v5002, 1e-05
    %v5005 = vrsqrt.pop %v5003
    %v5006 = vrsqrt.pop %v5004
    %v5007 = vmul.f32 %v4991, %v5005
    %v5008 = vmul.f32 %v4992, %v5006
    %v5010 = vlaneseq
    %v5011 = vshrl.u32 %v5010, 7
    %v5012 = vsub.s32 0, %v5011
    %v5013 = vrot.slane %v4980, %v5012
    %v5015 = vmul.f32 %v5007, %v5013
    %v5016 = vmul.f32 %v5008, %v5013
    %v5018 = vlaneseq
    %v5019 = vshrl.u32 %v5018, 7
    %v5020 = vsub.s32 0, %v5019
    %v5021 = vrot.slane %v4982, %v5020
    %v5023 = vadd.f32 %v5015, %v5021
    %v5024 = vadd.f32 %v5016, %v5021
    %s5025 = scalar_lea.vmem %s5, 64
    %v5026 = vld [vmem:[%s5025] sm:$0xff]
    %v5027 = vld [vmem:[%s5025 + $0x8] sm:$0xff]
    %v5028 = vld [vmem:[%s5025 + $0x10] sm:$0xff]
    %v5029 = vld [vmem:[%s5025 + $0x18] sm:$0xff]
    %s5030 = scalar_lea.vmem %s6, 2
    %v5031 = vld [vmem:[%s5030] sm:$0x1]
    %v5033 = vlaneseq
    %v5034 = vshrl.u32 %v5033, 7
    %v5035 = vsub.s32 0, %v5034
    %v5036 = vrot.slane %v5031, %v5035
    %v5039 = vsel %vm185, %v5023, 0
    %v5042 = vsel %vm185, %v5024, 0
    %5044 = vmatprep.subr.mxu0 0.0
    %5045 = vmatpush1.msra.mxu0 0.0
    %5046 = vmatprep.subr.mxu0 0.0
    %5047 = vmatpush1.msra.mxu0 0.0
    %5048 = vmatprep.subr.mxu0 0.0
    %5049 = vmatpush1.msra.mxu0 0.0
    %5050 = vmatprep.subr.mxu0 0.0
    %5051 = vmatpush1.msra.mxu0 0.0
    %5052 = vmatprep.subr.mxu0 0.0
    %5053 = vmatpush1.msra.mxu0 0.0
    %5054 = vmatprep.subr.mxu0 0.0
    %5055 = vmatpush1.msra.mxu0 0.0
    %5056 = vmatprep.subr.mxu0 0.0
    %5057 = vmatpush1.msra.mxu0 0.0
    %5058 = vmatprep.subr.mxu0 0.0
    %5059 = vmatpush1.msra.mxu0 0.0
    %5060 = vmatprep.subr.mxu0 0.0
    %5061 = vmatpush1.msra.mxu0 0.0
    %5062 = vmatprep.subr.mxu0 0.0
    %5063 = vmatpush1.msra.mxu0 0.0
    %5064 = vmatprep.subr.mxu0 0.0
    %5065 = vmatpush1.msra.mxu0 0.0
    %5066 = vmatprep.subr.mxu0 0.0
    %5067 = vmatpush1.msra.mxu0 0.0
    %5068 = vmatprep.subr.mxu0 0.0
    %5069 = vmatpush1.msra.mxu0 %v5029
    %5070 = vmatprep.subr.mxu0 0.0
    %5071 = vmatpush1.msra.mxu0 %v5028
    %5072 = vmatprep.subr.mxu0 0.0
    %5073 = vmatpush1.msra.mxu0 %v5027
    %5074 = vmatprep.subr.mxu0 0.0
    %5075 = vmatpush1.msra.mxu0 %v5026
    %5076 = vmatprep.subr.mxu0 0.0
    %5077 = vmatpush2.msra.mxu0 0.0
    %5078 = vmatprep.subr.mxu0 0.0
    %5079 = vmatpush2.msra.mxu0 0.0
    %5080 = vmatprep.subr.mxu0 0.0
    %5081 = vmatpush2.msra.mxu0 0.0
    %5082 = vmatprep.subr.mxu0 0.0
    %5083 = vmatpush2.msra.mxu0 0.0
    %5084 = vmatprep.subr.mxu0 0.0
    %5085 = vmatpush2.msra.mxu0 0.0
    %5086 = vmatprep.subr.mxu0 0.0
    %5087 = vmatpush2.msra.mxu0 0.0
    %5088 = vmatprep.subr.mxu0 0.0
    %5089 = vmatpush2.msra.mxu0 0.0
    %5090 = vmatprep.subr.mxu0 0.0
    %5091 = vmatpush2.msra.mxu0 0.0
    %5092 = vmatprep.subr.mxu0 0.0
    %5093 = vmatpush2.msra.mxu0 0.0
    %5094 = vmatprep.subr.mxu0 0.0
    %5095 = vmatpush2.msra.mxu0 0.0
    %5096 = vmatprep.subr.mxu0 0.0
    %5097 = vmatpush2.msra.mxu0 0.0
    %5098 = vmatprep.subr.mxu0 0.0
    %5099 = vmatpush2.msra.mxu0 0.0
    %5100 = vmatprep.subr.mxu0 0.0
    %5101 = vmatpush2.msra.mxu0 0.0
    %5102 = vmatprep.subr.mxu0 0.0
    %5103 = vmatpush2.msra.mxu0 0.0
    %5104 = vmatprep.subr.mxu0 0.0
    %5105 = vmatpush2.msra.mxu0 0.0
    %5106 = vmatprep.subr.mxu0 0.0
    %5107 = vmatpush2.msra.mxu0 0.0
    %5108 = vmatprep.mubr.f32.mxu0 0.0
    %5109 = vmatmul.mubr.f32.gmra.mxu0 %v5039
    %v5110 = vpop.f32.mrf.mxu0
    %v5111 = vadd.f32 %v5036, %v5110
    %v5112 = vpop.f32.mrf.mxu0
    %5113 = vmatprep.mubr.f32.mxu0 0.0
    %5114 = vmatmul.mubr.f32.gmra.mxu0 %v5042
    %v5115 = vpop.f32.mrf.mxu0
    %v5116 = vadd.f32 %v5036, %v5115
    %v5117 = vpop.f32.mrf.mxu0
    %5118 = vdwg.mxu0
    %5119 = vst.msk [vmem:[#allocation3] sm:$0xff] %vm328, %v5111
    %5120 = vst.msk [vmem:[#allocation3 + $0x8] sm:$0x3] %vm330, %v5116
    %s5121 = scalar_lea.vmem %s7, 64
    %v5122 = vld [vmem:[%s5121] sm:$0xff]
    %v5123 = vld [vmem:[%s5121 + $0x8] sm:$0xff]
    %v5124 = vld [vmem:[%s5121 + $0x10] sm:$0xff]
    %v5125 = vld [vmem:[%s5121 + $0x18] sm:$0xff]
    %v5126 = vld [vmem:[#allocation3] sm:$0x1f]
    %5128 = vrot.lane.b32.xlu0 %v5126, 96
    %v5129 = vpop.permute.xlu0 %5128
    %v5130 = vsel %vm340, %v5126, 0
    %v5132 = vsel %vm340, %v5129, 0
    %5134 = vmatprep.subr.mxu0 0.0
    %5135 = vmatpush1.xpose.msra.mxu0 0.0
    %5136 = vmatprep.subr.mxu0 0.0
    %5137 = vmatpush1.xpose.msra.mxu0 0.0
    %5138 = vmatprep.subr.mxu0 0.0
    %5139 = vmatpush1.xpose.msra.mxu0 0.0
    %5140 = vmatprep.subr.mxu0 0.0
    %5141 = vmatpush1.xpose.msra.mxu0 0.0
    %5142 = vmatprep.subr.mxu0 0.0
    %5143 = vmatpush1.xpose.msra.mxu0 0.0
    %5144 = vmatprep.subr.mxu0 0.0
    %5145 = vmatpush1.xpose.msra.mxu0 0.0
    %5146 = vmatprep.subr.mxu0 0.0
    %5147 = vmatpush1.xpose.msra.mxu0 0.0
    %5148 = vmatprep.subr.mxu0 0.0
    %5149 = vmatpush1.xpose.msra.mxu0 0.0
    %5150 = vmatprep.subr.mxu0 0.0
    %5151 = vmatpush1.xpose.msra.mxu0 0.0
    %5152 = vmatprep.subr.mxu0 0.0
    %5153 = vmatpush1.xpose.msra.mxu0 0.0
    %5154 = vmatprep.subr.mxu0 0.0
    %5155 = vmatpush1.xpose.msra.mxu0 0.0
    %5156 = vmatprep.subr.mxu0 0.0
    %5157 = vmatpush1.xpose.msra.mxu0 0.0
    %5158 = vmatprep.subr.mxu0 0.0
    %5159 = vmatpush1.xpose.msra.mxu0 0.0
    %5160 = vmatprep.subr.mxu0 0.0
    %5161 = vmatpush1.xpose.msra.mxu0 0.0
    %5162 = vmatprep.subr.mxu0 0.0
    %5163 = vmatpush1.xpose.msra.mxu0 0.0
    %5164 = vmatprep.subr.mxu0 0.0
    %5165 = vmatpush1.xpose.msra.mxu0 %v5132
    %5166 = vmatprep.subr.mxu0 0.0
    %5167 = vmatpush2.xpose.msra.mxu0 0.0
    %5168 = vmatprep.subr.mxu0 0.0
    %5169 = vmatpush2.xpose.msra.mxu0 0.0
    %5170 = vmatprep.subr.mxu0 0.0
    %5171 = vmatpush2.xpose.msra.mxu0 0.0
    %5172 = vmatprep.subr.mxu0 0.0
    %5173 = vmatpush2.xpose.msra.mxu0 0.0
    %5174 = vmatprep.subr.mxu0 0.0
    %5175 = vmatpush2.xpose.msra.mxu0 0.0
    %5176 = vmatprep.subr.mxu0 0.0
    %5177 = vmatpush2.xpose.msra.mxu0 0.0
    %5178 = vmatprep.subr.mxu0 0.0
    %5179 = vmatpush2.xpose.msra.mxu0 0.0
    %5180 = vmatprep.subr.mxu0 0.0
    %5181 = vmatpush2.xpose.msra.mxu0 0.0
    %5182 = vmatprep.subr.mxu0 0.0
    %5183 = vmatpush2.xpose.msra.mxu0 0.0
    %5184 = vmatprep.subr.mxu0 0.0
    %5185 = vmatpush2.xpose.msra.mxu0 0.0
    %5186 = vmatprep.subr.mxu0 0.0
    %5187 = vmatpush2.xpose.msra.mxu0 0.0
    %5188 = vmatprep.subr.mxu0 0.0
    %5189 = vmatpush2.xpose.msra.mxu0 0.0
    %5190 = vmatprep.subr.mxu0 0.0
    %5191 = vmatpush2.xpose.msra.mxu0 0.0
    %5192 = vmatprep.subr.mxu0 0.0
    %5193 = vmatpush2.xpose.msra.mxu0 0.0
    %5194 = vmatprep.subr.mxu0 0.0
    %5195 = vmatpush2.xpose.msra.mxu0 0.0
    %5196 = vmatprep.subr.mxu0 0.0
    %5197 = vmatpush2.xpose.msra.mxu0 0.0
    %5198 = vmatprep.mubr.f32.mxu0 0.0
    %5199 = vmatmul.mubr.f32.gmra.mxu0 %v5130
    %v5200 = vpop.f32.mrf.mxu0
    %v5201 = vadd.f32 0.0, %v5200
    %v5202 = vpop.f32.mrf.mxu0
    %5203 = vdwg.mxu0
    %v5204 = vmul.f32 %v5201, 0.35355338
    %v5205 = vsel %vm416, %v5204, -inf
    %5206 = vmax.xlane.f32.xlu0 %v5205
    %v5207 = vpop.xlane.xlu0 %5206
    %v5208 = vsub.f32 %v5204, %v5207
    %v5209 = vmul.f32 %v5208, 1.442695
    %v5210 = vpow.pop %v5209
    %v5211 = vsel %vm416, %v5210, 0.0
    %5212 = vadd.xlane.f32.xlu0 %v5211
    %v5213 = vpop.xlane.xlu0 %5212
    %v5214 = vrcp.pop %v5213
    %v5215 = vmul.f32 %v5210, %v5214
    %5216 = vrot.lane.b32.xlu0 %v5126, 64
    %v5217 = vpop.permute.xlu0 %5216
    %v5219 = vsel %vm430, %v5215, 0
    %v5221 = vsel %vm434, %v5217, 0
    %5223 = vmatprep.subr.mxu0 0.0
    %5224 = vmatpush1.msra.mxu0 0.0
    %5225 = vmatprep.subr.mxu0 0.0
    %5226 = vmatpush1.msra.mxu0 0.0
    %5227 = vmatprep.subr.mxu0 0.0
    %5228 = vmatpush1.msra.mxu0 0.0
    %5229 = vmatprep.subr.mxu0 0.0
    %5230 = vmatpush1.msra.mxu0 0.0
    %5231 = vmatprep.subr.mxu0 0.0
    %5232 = vmatpush1.msra.mxu0 0.0
    %5233 = vmatprep.subr.mxu0 0.0
    %5234 = vmatpush1.msra.mxu0 0.0
    %5235 = vmatprep.subr.mxu0 0.0
    %5236 = vmatpush1.msra.mxu0 0.0
    %5237 = vmatprep.subr.mxu0 0.0
    %5238 = vmatpush1.msra.mxu0 0.0
    %5239 = vmatprep.subr.mxu0 0.0
    %5240 = vmatpush1.msra.mxu0 0.0
    %5241 = vmatprep.subr.mxu0 0.0
    %5242 = vmatpush1.msra.mxu0 0.0
    %5243 = vmatprep.subr.mxu0 0.0
    %5244 = vmatpush1.msra.mxu0 0.0
    %5245 = vmatprep.subr.mxu0 0.0
    %5246 = vmatpush1.msra.mxu0 0.0
    %5247 = vmatprep.subr.mxu0 0.0
    %5248 = vmatpush1.msra.mxu0 0.0
    %5249 = vmatprep.subr.mxu0 0.0
    %5250 = vmatpush1.msra.mxu0 0.0
    %5251 = vmatprep.subr.mxu0 0.0
    %5252 = vmatpush1.msra.mxu0 0.0
    %5253 = vmatprep.subr.mxu0 0.0
    %5254 = vmatpush1.msra.mxu0 %v5221
    %5255 = vmatprep.subr.mxu0 0.0
    %5256 = vmatpush2.msra.mxu0 0.0
    %5257 = vmatprep.subr.mxu0 0.0
    %5258 = vmatpush2.msra.mxu0 0.0
    %5259 = vmatprep.subr.mxu0 0.0
    %5260 = vmatpush2.msra.mxu0 0.0
    %5261 = vmatprep.subr.mxu0 0.0
    %5262 = vmatpush2.msra.mxu0 0.0
    %5263 = vmatprep.subr.mxu0 0.0
    %5264 = vmatpush2.msra.mxu0 0.0
    %5265 = vmatprep.subr.mxu0 0.0
    %5266 = vmatpush2.msra.mxu0 0.0
    %5267 = vmatprep.subr.mxu0 0.0
    %5268 = vmatpush2.msra.mxu0 0.0
    %5269 = vmatprep.subr.mxu0 0.0
    %5270 = vmatpush2.msra.mxu0 0.0
    %5271 = vmatprep.subr.mxu0 0.0
    %5272 = vmatpush2.msra.mxu0 0.0
    %5273 = vmatprep.subr.mxu0 0.0
    %5274 = vmatpush2.msra.mxu0 0.0
    %5275 = vmatprep.subr.mxu0 0.0
    %5276 = vmatpush2.msra.mxu0 0.0
    %5277 = vmatprep.subr.mxu0 0.0
    %5278 = vmatpush2.msra.mxu0 0.0
    %5279 = vmatprep.subr.mxu0 0.0
    %5280 = vmatpush2.msra.mxu0 0.0
    %5281 = vmatprep.subr.mxu0 0.0
    %5282 = vmatpush2.msra.mxu0 0.0
    %5283 = vmatprep.subr.mxu0 0.0
    %5284 = vmatpush2.msra.mxu0 0.0
    %5285 = vmatprep.subr.mxu0 0.0
    %5286 = vmatpush2.msra.mxu0 0.0
    %5287 = vmatprep.mubr.f32.mxu0 0.0
    %5288 = vmatmul.mubr.f32.gmra.mxu0 %v5219
    %v5289 = vpop.f32.mrf.mxu0
    %v5290 = vadd.f32 0.0, %v5289
    %v5291 = vpop.f32.mrf.mxu0
    %5292 = vdwg.mxu0
    %5293 = vrot.lane.b32.xlu0 %v5126, 120
    %v5294 = vpop.permute.xlu0 %5293
    %5295 = vrot.lane.b32.xlu0 %v5126, 88
    %v5296 = vpop.permute.xlu0 %5295
    %v5297 = vsel %vm340, %v5294, 0
    %v5299 = vsel %vm340, %v5296, 0
    %5301 = vmatprep.subr.mxu0 0.0
    %5302 = vmatpush1.xpose.msra.mxu0 0.0
    %5303 = vmatprep.subr.mxu0 0.0
    %5304 = vmatpush1.xpose.msra.mxu0 0.0
    %5305 = vmatprep.subr.mxu0 0.0
    %5306 = vmatpush1.xpose.msra.mxu0 0.0
    %5307 = vmatprep.subr.mxu0 0.0
    %5308 = vmatpush1.xpose.msra.mxu0 0.0
    %5309 = vmatprep.subr.mxu0 0.0
    %5310 = vmatpush1.xpose.msra.mxu0 0.0
    %5311 = vmatprep.subr.mxu0 0.0
    %5312 = vmatpush1.xpose.msra.mxu0 0.0
    %5313 = vmatprep.subr.mxu0 0.0
    %5314 = vmatpush1.xpose.msra.mxu0 0.0
    %5315 = vmatprep.subr.mxu0 0.0
    %5316 = vmatpush1.xpose.msra.mxu0 0.0
    %5317 = vmatprep.subr.mxu0 0.0
    %5318 = vmatpush1.xpose.msra.mxu0 0.0
    %5319 = vmatprep.subr.mxu0 0.0
    %5320 = vmatpush1.xpose.msra.mxu0 0.0
    %5321 = vmatprep.subr.mxu0 0.0
    %5322 = vmatpush1.xpose.msra.mxu0 0.0
    %5323 = vmatprep.subr.mxu0 0.0
    %5324 = vmatpush1.xpose.msra.mxu0 0.0
    %5325 = vmatprep.subr.mxu0 0.0
    %5326 = vmatpush1.xpose.msra.mxu0 0.0
    %5327 = vmatprep.subr.mxu0 0.0
    %5328 = vmatpush1.xpose.msra.mxu0 0.0
    %5329 = vmatprep.subr.mxu0 0.0
    %5330 = vmatpush1.xpose.msra.mxu0 0.0
    %5331 = vmatprep.subr.mxu0 0.0
    %5332 = vmatpush1.xpose.msra.mxu0 %v5299
    %5333 = vmatprep.subr.mxu0 0.0
    %5334 = vmatpush2.xpose.msra.mxu0 0.0
    %5335 = vmatprep.subr.mxu0 0.0
    %5336 = vmatpush2.xpose.msra.mxu0 0.0
    %5337 = vmatprep.subr.mxu0 0.0
    %5338 = vmatpush2.xpose.msra.mxu0 0.0
    %5339 = vmatprep.subr.mxu0 0.0
    %5340 = vmatpush2.xpose.msra.mxu0 0.0
    %5341 = vmatprep.subr.mxu0 0.0
    %5342 = vmatpush2.xpose.msra.mxu0 0.0
    %5343 = vmatprep.subr.mxu0 0.0
    %5344 = vmatpush2.xpose.msra.mxu0 0.0
    %5345 = vmatprep.subr.mxu0 0.0
    %5346 = vmatpush2.xpose.msra.mxu0 0.0
    %5347 = vmatprep.subr.mxu0 0.0
    %5348 = vmatpush2.xpose.msra.mxu0 0.0
    %5349 = vmatprep.subr.mxu0 0.0
    %5350 = vmatpush2.xpose.msra.mxu0 0.0
    %5351 = vmatprep.subr.mxu0 0.0
    %5352 = vmatpush2.xpose.msra.mxu0 0.0
    %5353 = vmatprep.subr.mxu0 0.0
    %5354 = vmatpush2.xpose.msra.mxu0 0.0
    %5355 = vmatprep.subr.mxu0 0.0
    %5356 = vmatpush2.xpose.msra.mxu0 0.0
    %5357 = vmatprep.subr.mxu0 0.0
    %5358 = vmatpush2.xpose.msra.mxu0 0.0
    %5359 = vmatprep.subr.mxu0 0.0
    %5360 = vmatpush2.xpose.msra.mxu0 0.0
    %5361 = vmatprep.subr.mxu0 0.0
    %5362 = vmatpush2.xpose.msra.mxu0 0.0
    %5363 = vmatprep.subr.mxu0 0.0
    %5364 = vmatpush2.xpose.msra.mxu0 0.0
    %5365 = vmatprep.mubr.f32.mxu0 0.0
    %5366 = vmatmul.mubr.f32.gmra.mxu0 %v5297
    %v5367 = vpop.f32.mrf.mxu0
    %v5368 = vadd.f32 0.0, %v5367
    %v5369 = vpop.f32.mrf.mxu0
    %5370 = vdwg.mxu0
    %v5371 = vmul.f32 %v5368, 0.35355338
    %v5372 = vsel %vm416, %v5371, -inf
    %5373 = vmax.xlane.f32.xlu0 %v5372
    %v5374 = vpop.xlane.xlu0 %5373
    %v5375 = vsub.f32 %v5371, %v5374
    %v5376 = vmul.f32 %v5375, 1.442695
    %v5377 = vpow.pop %v5376
    %v5378 = vsel %vm416, %v5377, 0.0
    %5379 = vadd.xlane.f32.xlu0 %v5378
    %v5380 = vpop.xlane.xlu0 %5379
    %v5381 = vrcp.pop %v5380
    %v5382 = vmul.f32 %v5377, %v5381
    %5383 = vrot.lane.b32.xlu0 %v5126, 56
    %v5384 = vpop.permute.xlu0 %5383
    %v5386 = vsel %vm430, %v5382, 0
    %v5388 = vsel %vm434, %v5384, 0
    %5390 = vmatprep.subr.mxu0 0.0
    %5391 = vmatpush1.msra.mxu0 0.0
    %5392 = vmatprep.subr.mxu0 0.0
    %5393 = vmatpush1.msra.mxu0 0.0
    %5394 = vmatprep.subr.mxu0 0.0
    %5395 = vmatpush1.msra.mxu0 0.0
    %5396 = vmatprep.subr.mxu0 0.0
    %5397 = vmatpush1.msra.mxu0 0.0
    %5398 = vmatprep.subr.mxu0 0.0
    %5399 = vmatpush1.msra.mxu0 0.0
    %5400 = vmatprep.subr.mxu0 0.0
    %5401 = vmatpush1.msra.mxu0 0.0
    %5402 = vmatprep.subr.mxu0 0.0
    %5403 = vmatpush1.msra.mxu0 0.0
    %5404 = vmatprep.subr.mxu0 0.0
    %5405 = vmatpush1.msra.mxu0 0.0
    %5406 = vmatprep.subr.mxu0 0.0
    %5407 = vmatpush1.msra.mxu0 0.0
    %5408 = vmatprep.subr.mxu0 0.0
    %5409 = vmatpush1.msra.mxu0 0.0
    %5410 = vmatprep.subr.mxu0 0.0
    %5411 = vmatpush1.msra.mxu0 0.0
    %5412 = vmatprep.subr.mxu0 0.0
    %5413 = vmatpush1.msra.mxu0 0.0
    %5414 = vmatprep.subr.mxu0 0.0
    %5415 = vmatpush1.msra.mxu0 0.0
    %5416 = vmatprep.subr.mxu0 0.0
    %5417 = vmatpush1.msra.mxu0 0.0
    %5418 = vmatprep.subr.mxu0 0.0
    %5419 = vmatpush1.msra.mxu0 0.0
    %5420 = vmatprep.subr.mxu0 0.0
    %5421 = vmatpush1.msra.mxu0 %v5388
    %5422 = vmatprep.subr.mxu0 0.0
    %5423 = vmatpush2.msra.mxu0 0.0
    %5424 = vmatprep.subr.mxu0 0.0
    %5425 = vmatpush2.msra.mxu0 0.0
    %5426 = vmatprep.subr.mxu0 0.0
    %5427 = vmatpush2.msra.mxu0 0.0
    %5428 = vmatprep.subr.mxu0 0.0
    %5429 = vmatpush2.msra.mxu0 0.0
    %5430 = vmatprep.subr.mxu0 0.0
    %5431 = vmatpush2.msra.mxu0 0.0
    %5432 = vmatprep.subr.mxu0 0.0
    %5433 = vmatpush2.msra.mxu0 0.0
    %5434 = vmatprep.subr.mxu0 0.0
    %5435 = vmatpush2.msra.mxu0 0.0
    %5436 = vmatprep.subr.mxu0 0.0
    %5437 = vmatpush2.msra.mxu0 0.0
    %5438 = vmatprep.subr.mxu0 0.0
    %5439 = vmatpush2.msra.mxu0 0.0
    %5440 = vmatprep.subr.mxu0 0.0
    %5441 = vmatpush2.msra.mxu0 0.0
    %5442 = vmatprep.subr.mxu0 0.0
    %5443 = vmatpush2.msra.mxu0 0.0
    %5444 = vmatprep.subr.mxu0 0.0
    %5445 = vmatpush2.msra.mxu0 0.0
    %5446 = vmatprep.subr.mxu0 0.0
    %5447 = vmatpush2.msra.mxu0 0.0
    %5448 = vmatprep.subr.mxu0 0.0
    %5449 = vmatpush2.msra.mxu0 0.0
    %5450 = vmatprep.subr.mxu0 0.0
    %5451 = vmatpush2.msra.mxu0 0.0
    %5452 = vmatprep.subr.mxu0 0.0
    %5453 = vmatpush2.msra.mxu0 0.0
    %5454 = vmatprep.mubr.f32.mxu0 0.0
    %5455 = vmatmul.mubr.f32.gmra.mxu0 %v5386
    %v5456 = vpop.f32.mrf.mxu0
    %v5457 = vadd.f32 0.0, %v5456
    %v5458 = vpop.f32.mrf.mxu0
    %5459 = vdwg.mxu0
    %v5461 = vsel %vm340, %v5457, 0
    %5463 = vmatprep.subr.mxu0 0.0
    %5464 = vmatpush1.msra.mxu0 0.0
    %5465 = vmatprep.subr.mxu0 0.0
    %5466 = vmatpush1.msra.mxu0 0.0
    %5467 = vmatprep.subr.mxu0 0.0
    %5468 = vmatpush1.msra.mxu0 0.0
    %5469 = vmatprep.subr.mxu0 0.0
    %5470 = vmatpush1.msra.mxu0 0.0
    %5471 = vmatprep.subr.mxu0 0.0
    %5472 = vmatpush1.msra.mxu0 0.0
    %5473 = vmatprep.subr.mxu0 0.0
    %5474 = vmatpush1.msra.mxu0 0.0
    %5475 = vmatprep.subr.mxu0 0.0
    %5476 = vmatpush1.msra.mxu0 0.0
    %5477 = vmatprep.subr.mxu0 0.0
    %5478 = vmatpush1.msra.mxu0 0.0
    %5479 = vmatprep.subr.mxu0 0.0
    %5480 = vmatpush1.msra.mxu0 0.0
    %5481 = vmatprep.subr.mxu0 0.0
    %5482 = vmatpush1.msra.mxu0 0.0
    %5483 = vmatprep.subr.mxu0 0.0
    %5484 = vmatpush1.msra.mxu0 0.0
    %5485 = vmatprep.subr.mxu0 0.0
    %5486 = vmatpush1.msra.mxu0 0.0
    %5487 = vmatprep.subr.mxu0 0.0
    %5488 = vmatpush1.msra.mxu0 0.0
    %5489 = vmatprep.subr.mxu0 0.0
    %5490 = vmatpush1.msra.mxu0 0.0
    %5491 = vmatprep.subr.mxu0 0.0
    %5492 = vmatpush1.msra.mxu0 0.0
    %5493 = vmatprep.subr.mxu0 0.0
    %5494 = vmatpush1.msra.mxu0 %v5123
    %5495 = vmatprep.subr.mxu0 0.0
    %5496 = vmatpush2.msra.mxu0 0.0
    %5497 = vmatprep.subr.mxu0 0.0
    %5498 = vmatpush2.msra.mxu0 0.0
    %5499 = vmatprep.subr.mxu0 0.0
    %5500 = vmatpush2.msra.mxu0 0.0
    %5501 = vmatprep.subr.mxu0 0.0
    %5502 = vmatpush2.msra.mxu0 0.0
    %5503 = vmatprep.subr.mxu0 0.0
    %5504 = vmatpush2.msra.mxu0 0.0
    %5505 = vmatprep.subr.mxu0 0.0
    %5506 = vmatpush2.msra.mxu0 0.0
    %5507 = vmatprep.subr.mxu0 0.0
    %5508 = vmatpush2.msra.mxu0 0.0
    %5509 = vmatprep.subr.mxu0 0.0
    %5510 = vmatpush2.msra.mxu0 0.0
    %5511 = vmatprep.subr.mxu0 0.0
    %5512 = vmatpush2.msra.mxu0 0.0
    %5513 = vmatprep.subr.mxu0 0.0
    %5514 = vmatpush2.msra.mxu0 0.0
    %5515 = vmatprep.subr.mxu0 0.0
    %5516 = vmatpush2.msra.mxu0 0.0
    %5517 = vmatprep.subr.mxu0 0.0
    %5518 = vmatpush2.msra.mxu0 0.0
    %5519 = vmatprep.subr.mxu0 0.0
    %5520 = vmatpush2.msra.mxu0 0.0
    %5521 = vmatprep.subr.mxu0 0.0
    %5522 = vmatpush2.msra.mxu0 0.0
    %5523 = vmatprep.subr.mxu0 0.0
    %5524 = vmatpush2.msra.mxu0 0.0
    %5525 = vmatprep.subr.mxu0 0.0
    %5526 = vmatpush2.msra.mxu0 0.0
    %5527 = vmatprep.mubr.f32.mxu0 0.0
    %5528 = vmatmul.mubr.f32.gmra.mxu0 %v5461
    %v5529 = vpop.f32.mrf.mxu0
    %v5530 = vadd.f32 0.0, %v5529
    %v5531 = vpop.f32.mrf.mxu0
    %5532 = vdwg.mxu0
    %v5534 = vsel %vm340, %v5290, 0
    %5536 = vmatprep.subr.mxu0 0.0
    %5537 = vmatpush1.msra.mxu0 0.0
    %5538 = vmatprep.subr.mxu0 0.0
    %5539 = vmatpush1.msra.mxu0 0.0
    %5540 = vmatprep.subr.mxu0 0.0
    %5541 = vmatpush1.msra.mxu0 0.0
    %5542 = vmatprep.subr.mxu0 0.0
    %5543 = vmatpush1.msra.mxu0 0.0
    %5544 = vmatprep.subr.mxu0 0.0
    %5545 = vmatpush1.msra.mxu0 0.0
    %5546 = vmatprep.subr.mxu0 0.0
    %5547 = vmatpush1.msra.mxu0 0.0
    %5548 = vmatprep.subr.mxu0 0.0
    %5549 = vmatpush1.msra.mxu0 0.0
    %5550 = vmatprep.subr.mxu0 0.0
    %5551 = vmatpush1.msra.mxu0 0.0
    %5552 = vmatprep.subr.mxu0 0.0
    %5553 = vmatpush1.msra.mxu0 0.0
    %5554 = vmatprep.subr.mxu0 0.0
    %5555 = vmatpush1.msra.mxu0 0.0
    %5556 = vmatprep.subr.mxu0 0.0
    %5557 = vmatpush1.msra.mxu0 0.0
    %5558 = vmatprep.subr.mxu0 0.0
    %5559 = vmatpush1.msra.mxu0 0.0
    %5560 = vmatprep.subr.mxu0 0.0
    %5561 = vmatpush1.msra.mxu0 0.0
    %5562 = vmatprep.subr.mxu0 0.0
    %5563 = vmatpush1.msra.mxu0 0.0
    %5564 = vmatprep.subr.mxu0 0.0
    %5565 = vmatpush1.msra.mxu0 0.0
    %5566 = vmatprep.subr.mxu0 0.0
    %5567 = vmatpush1.msra.mxu0 %v5122
    %5568 = vmatprep.subr.mxu0 0.0
    %5569 = vmatpush2.msra.mxu0 0.0
    %5570 = vmatprep.subr.mxu0 0.0
    %5571 = vmatpush2.msra.mxu0 0.0
    %5572 = vmatprep.subr.mxu0 0.0
    %5573 = vmatpush2.msra.mxu0 0.0
    %5574 = vmatprep.subr.mxu0 0.0
    %5575 = vmatpush2.msra.mxu0 0.0
    %5576 = vmatprep.subr.mxu0 0.0
    %5577 = vmatpush2.msra.mxu0 0.0
    %5578 = vmatprep.subr.mxu0 0.0
    %5579 = vmatpush2.msra.mxu0 0.0
    %5580 = vmatprep.subr.mxu0 0.0
    %5581 = vmatpush2.msra.mxu0 0.0
    %5582 = vmatprep.subr.mxu0 0.0
    %5583 = vmatpush2.msra.mxu0 0.0
    %5584 = vmatprep.subr.mxu0 0.0
    %5585 = vmatpush2.msra.mxu0 0.0
    %5586 = vmatprep.subr.mxu0 0.0
    %5587 = vmatpush2.msra.mxu0 0.0
    %5588 = vmatprep.subr.mxu0 0.0
    %5589 = vmatpush2.msra.mxu0 0.0
    %5590 = vmatprep.subr.mxu0 0.0
    %5591 = vmatpush2.msra.mxu0 0.0
    %5592 = vmatprep.subr.mxu0 0.0
    %5593 = vmatpush2.msra.mxu0 0.0
    %5594 = vmatprep.subr.mxu0 0.0
    %5595 = vmatpush2.msra.mxu0 0.0
    %5596 = vmatprep.subr.mxu0 0.0
    %5597 = vmatpush2.msra.mxu0 0.0
    %5598 = vmatprep.subr.mxu0 0.0
    %5599 = vmatpush2.msra.mxu0 0.0
    %5600 = vmatprep.mubr.f32.mxu0 0.0
    %5601 = vmatmul.mubr.f32.gmra.mxu0 %v5534
    %v5602 = vpop.f32.mrf.mxu0
    %v5603 = vadd.f32 %v5530, %v5602
    %v5604 = vpop.f32.mrf.mxu0
    %5605 = vdwg.mxu0
    %5606 = vrot.lane.b32.xlu0 %v5126, 112
    %v5607 = vpop.permute.xlu0 %5606
    %5608 = vrot.lane.b32.xlu0 %v5126, 80
    %v5609 = vpop.permute.xlu0 %5608
    %v5610 = vsel %vm340, %v5607, 0
    %v5612 = vsel %vm340, %v5609, 0
    %5614 = vmatprep.subr.mxu0 0.0
    %5615 = vmatpush1.xpose.msra.mxu0 0.0
    %5616 = vmatprep.subr.mxu0 0.0
    %5617 = vmatpush1.xpose.msra.mxu0 0.0
    %5618 = vmatprep.subr.mxu0 0.0
    %5619 = vmatpush1.xpose.msra.mxu0 0.0
    %5620 = vmatprep.subr.mxu0 0.0
    %5621 = vmatpush1.xpose.msra.mxu0 0.0
    %5622 = vmatprep.subr.mxu0 0.0
    %5623 = vmatpush1.xpose.msra.mxu0 0.0
    %5624 = vmatprep.subr.mxu0 0.0
    %5625 = vmatpush1.xpose.msra.mxu0 0.0
    %5626 = vmatprep.subr.mxu0 0.0
    %5627 = vmatpush1.xpose.msra.mxu0 0.0
    %5628 = vmatprep.subr.mxu0 0.0
    %5629 = vmatpush1.xpose.msra.mxu0 0.0
    %5630 = vmatprep.subr.mxu0 0.0
    %5631 = vmatpush1.xpose.msra.mxu0 0.0
    %5632 = vmatprep.subr.mxu0 0.0
    %5633 = vmatpush1.xpose.msra.mxu0 0.0
    %5634 = vmatprep.subr.mxu0 0.0
    %5635 = vmatpush1.xpose.msra.mxu0 0.0
    %5636 = vmatprep.subr.mxu0 0.0
    %5637 = vmatpush1.xpose.msra.mxu0 0.0
    %5638 = vmatprep.subr.mxu0 0.0
    %5639 = vmatpush1.xpose.msra.mxu0 0.0
    %5640 = vmatprep.subr.mxu0 0.0
    %5641 = vmatpush1.xpose.msra.mxu0 0.0
    %5642 = vmatprep.subr.mxu0 0.0
    %5643 = vmatpush1.xpose.msra.mxu0 0.0
    %5644 = vmatprep.subr.mxu0 0.0
    %5645 = vmatpush1.xpose.msra.mxu0 %v5612
    %5646 = vmatprep.subr.mxu0 0.0
    %5647 = vmatpush2.xpose.msra.mxu0 0.0
    %5648 = vmatprep.subr.mxu0 0.0
    %5649 = vmatpush2.xpose.msra.mxu0 0.0
    %5650 = vmatprep.subr.mxu0 0.0
    %5651 = vmatpush2.xpose.msra.mxu0 0.0
    %5652 = vmatprep.subr.mxu0 0.0
    %5653 = vmatpush2.xpose.msra.mxu0 0.0
    %5654 = vmatprep.subr.mxu0 0.0
    %5655 = vmatpush2.xpose.msra.mxu0 0.0
    %5656 = vmatprep.subr.mxu0 0.0
    %5657 = vmatpush2.xpose.msra.mxu0 0.0
    %5658 = vmatprep.subr.mxu0 0.0
    %5659 = vmatpush2.xpose.msra.mxu0 0.0
    %5660 = vmatprep.subr.mxu0 0.0
    %5661 = vmatpush2.xpose.msra.mxu0 0.0
    %5662 = vmatprep.subr.mxu0 0.0
    %5663 = vmatpush2.xpose.msra.mxu0 0.0
    %5664 = vmatprep.subr.mxu0 0.0
    %5665 = vmatpush2.xpose.msra.mxu0 0.0
    %5666 = vmatprep.subr.mxu0 0.0
    %5667 = vmatpush2.xpose.msra.mxu0 0.0
    %5668 = vmatprep.subr.mxu0 0.0
    %5669 = vmatpush2.xpose.msra.mxu0 0.0
    %5670 = vmatprep.subr.mxu0 0.0
    %5671 = vmatpush2.xpose.msra.mxu0 0.0
    %5672 = vmatprep.subr.mxu0 0.0
    %5673 = vmatpush2.xpose.msra.mxu0 0.0
    %5674 = vmatprep.subr.mxu0 0.0
    %5675 = vmatpush2.xpose.msra.mxu0 0.0
    %5676 = vmatprep.subr.mxu0 0.0
    %5677 = vmatpush2.xpose.msra.mxu0 0.0
    %5678 = vmatprep.mubr.f32.mxu0 0.0
    %5679 = vmatmul.mubr.f32.gmra.mxu0 %v5610
    %v5680 = vpop.f32.mrf.mxu0
    %v5681 = vadd.f32 0.0, %v5680
    %v5682 = vpop.f32.mrf.mxu0
    %5683 = vdwg.mxu0
    %v5684 = vmul.f32 %v5681, 0.35355338
    %v5685 = vsel %vm416, %v5684, -inf
    %5686 = vmax.xlane.f32.xlu0 %v5685
    %v5687 = vpop.xlane.xlu0 %5686
    %v5688 = vsub.f32 %v5684, %v5687
    %v5689 = vmul.f32 %v5688, 1.442695
    %v5690 = vpow.pop %v5689
    %v5691 = vsel %vm416, %v5690, 0.0
    %5692 = vadd.xlane.f32.xlu0 %v5691
    %v5693 = vpop.xlane.xlu0 %5692
    %v5694 = vrcp.pop %v5693
    %v5695 = vmul.f32 %v5690, %v5694
    %5696 = vrot.lane.b32.xlu0 %v5126, 48
    %v5697 = vpop.permute.xlu0 %5696
    %v5699 = vsel %vm430, %v5695, 0
    %v5701 = vsel %vm434, %v5697, 0
    %5703 = vmatprep.subr.mxu0 0.0
    %5704 = vmatpush1.msra.mxu0 0.0
    %5705 = vmatprep.subr.mxu0 0.0
    %5706 = vmatpush1.msra.mxu0 0.0
    %5707 = vmatprep.subr.mxu0 0.0
    %5708 = vmatpush1.msra.mxu0 0.0
    %5709 = vmatprep.subr.mxu0 0.0
    %5710 = vmatpush1.msra.mxu0 0.0
    %5711 = vmatprep.subr.mxu0 0.0
    %5712 = vmatpush1.msra.mxu0 0.0
    %5713 = vmatprep.subr.mxu0 0.0
    %5714 = vmatpush1.msra.mxu0 0.0
    %5715 = vmatprep.subr.mxu0 0.0
    %5716 = vmatpush1.msra.mxu0 0.0
    %5717 = vmatprep.subr.mxu0 0.0
    %5718 = vmatpush1.msra.mxu0 0.0
    %5719 = vmatprep.subr.mxu0 0.0
    %5720 = vmatpush1.msra.mxu0 0.0
    %5721 = vmatprep.subr.mxu0 0.0
    %5722 = vmatpush1.msra.mxu0 0.0
    %5723 = vmatprep.subr.mxu0 0.0
    %5724 = vmatpush1.msra.mxu0 0.0
    %5725 = vmatprep.subr.mxu0 0.0
    %5726 = vmatpush1.msra.mxu0 0.0
    %5727 = vmatprep.subr.mxu0 0.0
    %5728 = vmatpush1.msra.mxu0 0.0
    %5729 = vmatprep.subr.mxu0 0.0
    %5730 = vmatpush1.msra.mxu0 0.0
    %5731 = vmatprep.subr.mxu0 0.0
    %5732 = vmatpush1.msra.mxu0 0.0
    %5733 = vmatprep.subr.mxu0 0.0
    %5734 = vmatpush1.msra.mxu0 %v5701
    %5735 = vmatprep.subr.mxu0 0.0
    %5736 = vmatpush2.msra.mxu0 0.0
    %5737 = vmatprep.subr.mxu0 0.0
    %5738 = vmatpush2.msra.mxu0 0.0
    %5739 = vmatprep.subr.mxu0 0.0
    %5740 = vmatpush2.msra.mxu0 0.0
    %5741 = vmatprep.subr.mxu0 0.0
    %5742 = vmatpush2.msra.mxu0 0.0
    %5743 = vmatprep.subr.mxu0 0.0
    %5744 = vmatpush2.msra.mxu0 0.0
    %5745 = vmatprep.subr.mxu0 0.0
    %5746 = vmatpush2.msra.mxu0 0.0
    %5747 = vmatprep.subr.mxu0 0.0
    %5748 = vmatpush2.msra.mxu0 0.0
    %5749 = vmatprep.subr.mxu0 0.0
    %5750 = vmatpush2.msra.mxu0 0.0
    %5751 = vmatprep.subr.mxu0 0.0
    %5752 = vmatpush2.msra.mxu0 0.0
    %5753 = vmatprep.subr.mxu0 0.0
    %5754 = vmatpush2.msra.mxu0 0.0
    %5755 = vmatprep.subr.mxu0 0.0
    %5756 = vmatpush2.msra.mxu0 0.0
    %5757 = vmatprep.subr.mxu0 0.0
    %5758 = vmatpush2.msra.mxu0 0.0
    %5759 = vmatprep.subr.mxu0 0.0
    %5760 = vmatpush2.msra.mxu0 0.0
    %5761 = vmatprep.subr.mxu0 0.0
    %5762 = vmatpush2.msra.mxu0 0.0
    %5763 = vmatprep.subr.mxu0 0.0
    %5764 = vmatpush2.msra.mxu0 0.0
    %5765 = vmatprep.subr.mxu0 0.0
    %5766 = vmatpush2.msra.mxu0 0.0
    %5767 = vmatprep.mubr.f32.mxu0 0.0
    %5768 = vmatmul.mubr.f32.gmra.mxu0 %v5699
    %v5769 = vpop.f32.mrf.mxu0
    %v5770 = vadd.f32 0.0, %v5769
    %v5771 = vpop.f32.mrf.mxu0
    %5772 = vdwg.mxu0
    %v5774 = vsel %vm340, %v5770, 0
    %5776 = vmatprep.subr.mxu0 0.0
    %5777 = vmatpush1.msra.mxu0 0.0
    %5778 = vmatprep.subr.mxu0 0.0
    %5779 = vmatpush1.msra.mxu0 0.0
    %5780 = vmatprep.subr.mxu0 0.0
    %5781 = vmatpush1.msra.mxu0 0.0
    %5782 = vmatprep.subr.mxu0 0.0
    %5783 = vmatpush1.msra.mxu0 0.0
    %5784 = vmatprep.subr.mxu0 0.0
    %5785 = vmatpush1.msra.mxu0 0.0
    %5786 = vmatprep.subr.mxu0 0.0
    %5787 = vmatpush1.msra.mxu0 0.0
    %5788 = vmatprep.subr.mxu0 0.0
    %5789 = vmatpush1.msra.mxu0 0.0
    %5790 = vmatprep.subr.mxu0 0.0
    %5791 = vmatpush1.msra.mxu0 0.0
    %5792 = vmatprep.subr.mxu0 0.0
    %5793 = vmatpush1.msra.mxu0 0.0
    %5794 = vmatprep.subr.mxu0 0.0
    %5795 = vmatpush1.msra.mxu0 0.0
    %5796 = vmatprep.subr.mxu0 0.0
    %5797 = vmatpush1.msra.mxu0 0.0
    %5798 = vmatprep.subr.mxu0 0.0
    %5799 = vmatpush1.msra.mxu0 0.0
    %5800 = vmatprep.subr.mxu0 0.0
    %5801 = vmatpush1.msra.mxu0 0.0
    %5802 = vmatprep.subr.mxu0 0.0
    %5803 = vmatpush1.msra.mxu0 0.0
    %5804 = vmatprep.subr.mxu0 0.0
    %5805 = vmatpush1.msra.mxu0 0.0
    %5806 = vmatprep.subr.mxu0 0.0
    %5807 = vmatpush1.msra.mxu0 %v5124
    %5808 = vmatprep.subr.mxu0 0.0
    %5809 = vmatpush2.msra.mxu0 0.0
    %5810 = vmatprep.subr.mxu0 0.0
    %5811 = vmatpush2.msra.mxu0 0.0
    %5812 = vmatprep.subr.mxu0 0.0
    %5813 = vmatpush2.msra.mxu0 0.0
    %5814 = vmatprep.subr.mxu0 0.0
    %5815 = vmatpush2.msra.mxu0 0.0
    %5816 = vmatprep.subr.mxu0 0.0
    %5817 = vmatpush2.msra.mxu0 0.0
    %5818 = vmatprep.subr.mxu0 0.0
    %5819 = vmatpush2.msra.mxu0 0.0
    %5820 = vmatprep.subr.mxu0 0.0
    %5821 = vmatpush2.msra.mxu0 0.0
    %5822 = vmatprep.subr.mxu0 0.0
    %5823 = vmatpush2.msra.mxu0 0.0
    %5824 = vmatprep.subr.mxu0 0.0
    %5825 = vmatpush2.msra.mxu0 0.0
    %5826 = vmatprep.subr.mxu0 0.0
    %5827 = vmatpush2.msra.mxu0 0.0
    %5828 = vmatprep.subr.mxu0 0.0
    %5829 = vmatpush2.msra.mxu0 0.0
    %5830 = vmatprep.subr.mxu0 0.0
    %5831 = vmatpush2.msra.mxu0 0.0
    %5832 = vmatprep.subr.mxu0 0.0
    %5833 = vmatpush2.msra.mxu0 0.0
    %5834 = vmatprep.subr.mxu0 0.0
    %5835 = vmatpush2.msra.mxu0 0.0
    %5836 = vmatprep.subr.mxu0 0.0
    %5837 = vmatpush2.msra.mxu0 0.0
    %5838 = vmatprep.subr.mxu0 0.0
    %5839 = vmatpush2.msra.mxu0 0.0
    %5840 = vmatprep.mubr.f32.mxu0 0.0
    %5841 = vmatmul.mubr.f32.gmra.mxu0 %v5774
    %v5842 = vpop.f32.mrf.mxu0
    %v5843 = vadd.f32 0.0, %v5842
    %v5844 = vpop.f32.mrf.mxu0
    %5845 = vdwg.mxu0
    %v5846 = vadd.f32 %v5603, %v5843
    %5847 = vrot.lane.b32.xlu0 %v5126, 104
    %v5848 = vpop.permute.xlu0 %5847
    %5849 = vrot.lane.b32.xlu0 %v5126, 72
    %v5850 = vpop.permute.xlu0 %5849
    %v5851 = vsel %vm340, %v5848, 0
    %v5853 = vsel %vm340, %v5850, 0
    %5855 = vmatprep.subr.mxu0 0.0
    %5856 = vmatpush1.xpose.msra.mxu0 0.0
    %5857 = vmatprep.subr.mxu0 0.0
    %5858 = vmatpush1.xpose.msra.mxu0 0.0
    %5859 = vmatprep.subr.mxu0 0.0
    %5860 = vmatpush1.xpose.msra.mxu0 0.0
    %5861 = vmatprep.subr.mxu0 0.0
    %5862 = vmatpush1.xpose.msra.mxu0 0.0
    %5863 = vmatprep.subr.mxu0 0.0
    %5864 = vmatpush1.xpose.msra.mxu0 0.0
    %5865 = vmatprep.subr.mxu0 0.0
    %5866 = vmatpush1.xpose.msra.mxu0 0.0
    %5867 = vmatprep.subr.mxu0 0.0
    %5868 = vmatpush1.xpose.msra.mxu0 0.0
    %5869 = vmatprep.subr.mxu0 0.0
    %5870 = vmatpush1.xpose.msra.mxu0 0.0
    %5871 = vmatprep.subr.mxu0 0.0
    %5872 = vmatpush1.xpose.msra.mxu0 0.0
    %5873 = vmatprep.subr.mxu0 0.0
    %5874 = vmatpush1.xpose.msra.mxu0 0.0
    %5875 = vmatprep.subr.mxu0 0.0
    %5876 = vmatpush1.xpose.msra.mxu0 0.0
    %5877 = vmatprep.subr.mxu0 0.0
    %5878 = vmatpush1.xpose.msra.mxu0 0.0
    %5879 = vmatprep.subr.mxu0 0.0
    %5880 = vmatpush1.xpose.msra.mxu0 0.0
    %5881 = vmatprep.subr.mxu0 0.0
    %5882 = vmatpush1.xpose.msra.mxu0 0.0
    %5883 = vmatprep.subr.mxu0 0.0
    %5884 = vmatpush1.xpose.msra.mxu0 0.0
    %5885 = vmatprep.subr.mxu0 0.0
    %5886 = vmatpush1.xpose.msra.mxu0 %v5853
    %5887 = vmatprep.subr.mxu0 0.0
    %5888 = vmatpush2.xpose.msra.mxu0 0.0
    %5889 = vmatprep.subr.mxu0 0.0
    %5890 = vmatpush2.xpose.msra.mxu0 0.0
    %5891 = vmatprep.subr.mxu0 0.0
    %5892 = vmatpush2.xpose.msra.mxu0 0.0
    %5893 = vmatprep.subr.mxu0 0.0
    %5894 = vmatpush2.xpose.msra.mxu0 0.0
    %5895 = vmatprep.subr.mxu0 0.0
    %5896 = vmatpush2.xpose.msra.mxu0 0.0
    %5897 = vmatprep.subr.mxu0 0.0
    %5898 = vmatpush2.xpose.msra.mxu0 0.0
    %5899 = vmatprep.subr.mxu0 0.0
    %5900 = vmatpush2.xpose.msra.mxu0 0.0
    %5901 = vmatprep.subr.mxu0 0.0
    %5902 = vmatpush2.xpose.msra.mxu0 0.0
    %5903 = vmatprep.subr.mxu0 0.0
    %5904 = vmatpush2.xpose.msra.mxu0 0.0
    %5905 = vmatprep.subr.mxu0 0.0
    %5906 = vmatpush2.xpose.msra.mxu0 0.0
    %5907 = vmatprep.subr.mxu0 0.0
    %5908 = vmatpush2.xpose.msra.mxu0 0.0
    %5909 = vmatprep.subr.mxu0 0.0
    %5910 = vmatpush2.xpose.msra.mxu0 0.0
    %5911 = vmatprep.subr.mxu0 0.0
    %5912 = vmatpush2.xpose.msra.mxu0 0.0
    %5913 = vmatprep.subr.mxu0 0.0
    %5914 = vmatpush2.xpose.msra.mxu0 0.0
    %5915 = vmatprep.subr.mxu0 0.0
    %5916 = vmatpush2.xpose.msra.mxu0 0.0
    %5917 = vmatprep.subr.mxu0 0.0
    %5918 = vmatpush2.xpose.msra.mxu0 0.0
    %5919 = vmatprep.mubr.f32.mxu0 0.0
    %5920 = vmatmul.mubr.f32.gmra.mxu0 %v5851
    %v5921 = vpop.f32.mrf.mxu0
    %v5922 = vadd.f32 0.0, %v5921
    %v5923 = vpop.f32.mrf.mxu0
    %5924 = vdwg.mxu0
    %v5925 = vmul.f32 %v5922, 0.35355338
    %v5926 = vsel %vm416, %v5925, -inf
    %5927 = vmax.xlane.f32.xlu0 %v5926
    %v5928 = vpop.xlane.xlu0 %5927
    %v5929 = vsub.f32 %v5925, %v5928
    %v5930 = vmul.f32 %v5929, 1.442695
    %v5931 = vpow.pop %v5930
    %v5932 = vsel %vm416, %v5931, 0.0
    %5933 = vadd.xlane.f32.xlu0 %v5932
    %v5934 = vpop.xlane.xlu0 %5933
    %v5935 = vrcp.pop %v5934
    %v5936 = vmul.f32 %v5931, %v5935
    %5937 = vrot.lane.b32.xlu0 %v5126, 40
    %v5938 = vpop.permute.xlu0 %5937
    %v5940 = vsel %vm430, %v5936, 0
    %v5942 = vsel %vm434, %v5938, 0
    %5944 = vmatprep.subr.mxu0 0.0
    %5945 = vmatpush1.msra.mxu0 0.0
    %5946 = vmatprep.subr.mxu0 0.0
    %5947 = vmatpush1.msra.mxu0 0.0
    %5948 = vmatprep.subr.mxu0 0.0
    %5949 = vmatpush1.msra.mxu0 0.0
    %5950 = vmatprep.subr.mxu0 0.0
    %5951 = vmatpush1.msra.mxu0 0.0
    %5952 = vmatprep.subr.mxu0 0.0
    %5953 = vmatpush1.msra.mxu0 0.0
    %5954 = vmatprep.subr.mxu0 0.0
    %5955 = vmatpush1.msra.mxu0 0.0
    %5956 = vmatprep.subr.mxu0 0.0
    %5957 = vmatpush1.msra.mxu0 0.0
    %5958 = vmatprep.subr.mxu0 0.0
    %5959 = vmatpush1.msra.mxu0 0.0
    %5960 = vmatprep.subr.mxu0 0.0
    %5961 = vmatpush1.msra.mxu0 0.0
    %5962 = vmatprep.subr.mxu0 0.0
    %5963 = vmatpush1.msra.mxu0 0.0
    %5964 = vmatprep.subr.mxu0 0.0
    %5965 = vmatpush1.msra.mxu0 0.0
    %5966 = vmatprep.subr.mxu0 0.0
    %5967 = vmatpush1.msra.mxu0 0.0
    %5968 = vmatprep.subr.mxu0 0.0
    %5969 = vmatpush1.msra.mxu0 0.0
    %5970 = vmatprep.subr.mxu0 0.0
    %5971 = vmatpush1.msra.mxu0 0.0
    %5972 = vmatprep.subr.mxu0 0.0
    %5973 = vmatpush1.msra.mxu0 0.0
    %5974 = vmatprep.subr.mxu0 0.0
    %5975 = vmatpush1.msra.mxu0 %v5942
    %5976 = vmatprep.subr.mxu0 0.0
    %5977 = vmatpush2.msra.mxu0 0.0
    %5978 = vmatprep.subr.mxu0 0.0
    %5979 = vmatpush2.msra.mxu0 0.0
    %5980 = vmatprep.subr.mxu0 0.0
    %5981 = vmatpush2.msra.mxu0 0.0
    %5982 = vmatprep.subr.mxu0 0.0
    %5983 = vmatpush2.msra.mxu0 0.0
    %5984 = vmatprep.subr.mxu0 0.0
    %5985 = vmatpush2.msra.mxu0 0.0
    %5986 = vmatprep.subr.mxu0 0.0
    %5987 = vmatpush2.msra.mxu0 0.0
    %5988 = vmatprep.subr.mxu0 0.0
    %5989 = vmatpush2.msra.mxu0 0.0
    %5990 = vmatprep.subr.mxu0 0.0
    %5991 = vmatpush2.msra.mxu0 0.0
    %5992 = vmatprep.subr.mxu0 0.0
    %5993 = vmatpush2.msra.mxu0 0.0
    %5994 = vmatprep.subr.mxu0 0.0
    %5995 = vmatpush2.msra.mxu0 0.0
    %5996 = vmatprep.subr.mxu0 0.0
    %5997 = vmatpush2.msra.mxu0 0.0
    %5998 = vmatprep.subr.mxu0 0.0
    %5999 = vmatpush2.msra.mxu0 0.0
    %6000 = vmatprep.subr.mxu0 0.0
    %6001 = vmatpush2.msra.mxu0 0.0
    %6002 = vmatprep.subr.mxu0 0.0
    %6003 = vmatpush2.msra.mxu0 0.0
    %6004 = vmatprep.subr.mxu0 0.0
    %6005 = vmatpush2.msra.mxu0 0.0
    %6006 = vmatprep.subr.mxu0 0.0
    %6007 = vmatpush2.msra.mxu0 0.0
    %6008 = vmatprep.mubr.f32.mxu0 0.0
    %6009 = vmatmul.mubr.f32.gmra.mxu0 %v5940
    %v6010 = vpop.f32.mrf.mxu0
    %v6011 = vadd.f32 0.0, %v6010
    %v6012 = vpop.f32.mrf.mxu0
    %6013 = vdwg.mxu0
    %v6015 = vsel %vm340, %v6011, 0
    %6017 = vmatprep.subr.mxu0 0.0
    %6018 = vmatpush1.msra.mxu0 0.0
    %6019 = vmatprep.subr.mxu0 0.0
    %6020 = vmatpush1.msra.mxu0 0.0
    %6021 = vmatprep.subr.mxu0 0.0
    %6022 = vmatpush1.msra.mxu0 0.0
    %6023 = vmatprep.subr.mxu0 0.0
    %6024 = vmatpush1.msra.mxu0 0.0
    %6025 = vmatprep.subr.mxu0 0.0
    %6026 = vmatpush1.msra.mxu0 0.0
    %6027 = vmatprep.subr.mxu0 0.0
    %6028 = vmatpush1.msra.mxu0 0.0
    %6029 = vmatprep.subr.mxu0 0.0
    %6030 = vmatpush1.msra.mxu0 0.0
    %6031 = vmatprep.subr.mxu0 0.0
    %6032 = vmatpush1.msra.mxu0 0.0
    %6033 = vmatprep.subr.mxu0 0.0
    %6034 = vmatpush1.msra.mxu0 0.0
    %6035 = vmatprep.subr.mxu0 0.0
    %6036 = vmatpush1.msra.mxu0 0.0
    %6037 = vmatprep.subr.mxu0 0.0
    %6038 = vmatpush1.msra.mxu0 0.0
    %6039 = vmatprep.subr.mxu0 0.0
    %6040 = vmatpush1.msra.mxu0 0.0
    %6041 = vmatprep.subr.mxu0 0.0
    %6042 = vmatpush1.msra.mxu0 0.0
    %6043 = vmatprep.subr.mxu0 0.0
    %6044 = vmatpush1.msra.mxu0 0.0
    %6045 = vmatprep.subr.mxu0 0.0
    %6046 = vmatpush1.msra.mxu0 0.0
    %6047 = vmatprep.subr.mxu0 0.0
    %6048 = vmatpush1.msra.mxu0 %v5125
    %6049 = vmatprep.subr.mxu0 0.0
    %6050 = vmatpush2.msra.mxu0 0.0
    %6051 = vmatprep.subr.mxu0 0.0
    %6052 = vmatpush2.msra.mxu0 0.0
    %6053 = vmatprep.subr.mxu0 0.0
    %6054 = vmatpush2.msra.mxu0 0.0
    %6055 = vmatprep.subr.mxu0 0.0
    %6056 = vmatpush2.msra.mxu0 0.0
    %6057 = vmatprep.subr.mxu0 0.0
    %6058 = vmatpush2.msra.mxu0 0.0
    %6059 = vmatprep.subr.mxu0 0.0
    %6060 = vmatpush2.msra.mxu0 0.0
    %6061 = vmatprep.subr.mxu0 0.0
    %6062 = vmatpush2.msra.mxu0 0.0
    %6063 = vmatprep.subr.mxu0 0.0
    %6064 = vmatpush2.msra.mxu0 0.0
    %6065 = vmatprep.subr.mxu0 0.0
    %6066 = vmatpush2.msra.mxu0 0.0
    %6067 = vmatprep.subr.mxu0 0.0
    %6068 = vmatpush2.msra.mxu0 0.0
    %6069 = vmatprep.subr.mxu0 0.0
    %6070 = vmatpush2.msra.mxu0 0.0
    %6071 = vmatprep.subr.mxu0 0.0
    %6072 = vmatpush2.msra.mxu0 0.0
    %6073 = vmatprep.subr.mxu0 0.0
    %6074 = vmatpush2.msra.mxu0 0.0
    %6075 = vmatprep.subr.mxu0 0.0
    %6076 = vmatpush2.msra.mxu0 0.0
    %6077 = vmatprep.subr.mxu0 0.0
    %6078 = vmatpush2.msra.mxu0 0.0
    %6079 = vmatprep.subr.mxu0 0.0
    %6080 = vmatpush2.msra.mxu0 0.0
    %6081 = vmatprep.mubr.f32.mxu0 0.0
    %6082 = vmatmul.mubr.f32.gmra.mxu0 %v6015
    %v6083 = vpop.f32.mrf.mxu0
    %v6084 = vadd.f32 0.0, %v6083
    %v6085 = vpop.f32.mrf.mxu0
    %6086 = vdwg.mxu0
    %v6087 = vadd.f32 %v5846, %v6084
    %v6088 = vld [vmem:[#allocation2] sm:$0x1f]
    %v6089 = vadd.f32 %v6088, %v6087
    %s6090 = scalar_lea.vmem %s8, 2
    %v6091 = vld [vmem:[%s6090] sm:$0x1]
    %v6093 = vlaneseq
    %v6094 = vshrl.u32 %v6093, 7
    %v6095 = vsub.s32 0, %v6094
    %v6096 = vrot.slane %v6091, %v6095
    %v6098 = vadd.f32 %v6089, %v6096
    %6099 = vst.msk [vmem:[#allocation2] sm:$0x1f] %vm1312, %v6098
    %v6100 = vld [vmem:[#allocation3 + $0x5] sm:$0x1f]
    %6102 = vrot.lane.b32.xlu0 %v6100, 96
    %v6103 = vpop.permute.xlu0 %6102
    %v6104 = vsel %vm340, %v6100, 0
    %v6106 = vsel %vm340, %v6103, 0
    %6108 = vmatprep.subr.mxu0 0.0
    %6109 = vmatpush1.xpose.msra.mxu0 0.0
    %6110 = vmatprep.subr.mxu0 0.0
    %6111 = vmatpush1.xpose.msra.mxu0 0.0
    %6112 = vmatprep.subr.mxu0 0.0
    %6113 = vmatpush1.xpose.msra.mxu0 0.0
    %6114 = vmatprep.subr.mxu0 0.0
    %6115 = vmatpush1.xpose.msra.mxu0 0.0
    %6116 = vmatprep.subr.mxu0 0.0
    %6117 = vmatpush1.xpose.msra.mxu0 0.0
    %6118 = vmatprep.subr.mxu0 0.0
    %6119 = vmatpush1.xpose.msra.mxu0 0.0
    %6120 = vmatprep.subr.mxu0 0.0
    %6121 = vmatpush1.xpose.msra.mxu0 0.0
    %6122 = vmatprep.subr.mxu0 0.0
    %6123 = vmatpush1.xpose.msra.mxu0 0.0
    %6124 = vmatprep.subr.mxu0 0.0
    %6125 = vmatpush1.xpose.msra.mxu0 0.0
    %6126 = vmatprep.subr.mxu0 0.0
    %6127 = vmatpush1.xpose.msra.mxu0 0.0
    %6128 = vmatprep.subr.mxu0 0.0
    %6129 = vmatpush1.xpose.msra.mxu0 0.0
    %6130 = vmatprep.subr.mxu0 0.0
    %6131 = vmatpush1.xpose.msra.mxu0 0.0
    %6132 = vmatprep.subr.mxu0 0.0
    %6133 = vmatpush1.xpose.msra.mxu0 0.0
    %6134 = vmatprep.subr.mxu0 0.0
    %6135 = vmatpush1.xpose.msra.mxu0 0.0
    %6136 = vmatprep.subr.mxu0 0.0
    %6137 = vmatpush1.xpose.msra.mxu0 0.0
    %6138 = vmatprep.subr.mxu0 0.0
    %6139 = vmatpush1.xpose.msra.mxu0 %v6106
    %6140 = vmatprep.subr.mxu0 0.0
    %6141 = vmatpush2.xpose.msra.mxu0 0.0
    %6142 = vmatprep.subr.mxu0 0.0
    %6143 = vmatpush2.xpose.msra.mxu0 0.0
    %6144 = vmatprep.subr.mxu0 0.0
    %6145 = vmatpush2.xpose.msra.mxu0 0.0
    %6146 = vmatprep.subr.mxu0 0.0
    %6147 = vmatpush2.xpose.msra.mxu0 0.0
    %6148 = vmatprep.subr.mxu0 0.0
    %6149 = vmatpush2.xpose.msra.mxu0 0.0
    %6150 = vmatprep.subr.mxu0 0.0
    %6151 = vmatpush2.xpose.msra.mxu0 0.0
    %6152 = vmatprep.subr.mxu0 0.0
    %6153 = vmatpush2.xpose.msra.mxu0 0.0
    %6154 = vmatprep.subr.mxu0 0.0
    %6155 = vmatpush2.xpose.msra.mxu0 0.0
    %6156 = vmatprep.subr.mxu0 0.0
    %6157 = vmatpush2.xpose.msra.mxu0 0.0
    %6158 = vmatprep.subr.mxu0 0.0
    %6159 = vmatpush2.xpose.msra.mxu0 0.0
    %6160 = vmatprep.subr.mxu0 0.0
    %6161 = vmatpush2.xpose.msra.mxu0 0.0
    %6162 = vmatprep.subr.mxu0 0.0
    %6163 = vmatpush2.xpose.msra.mxu0 0.0
    %6164 = vmatprep.subr.mxu0 0.0
    %6165 = vmatpush2.xpose.msra.mxu0 0.0
    %6166 = vmatprep.subr.mxu0 0.0
    %6167 = vmatpush2.xpose.msra.mxu0 0.0
    %6168 = vmatprep.subr.mxu0 0.0
    %6169 = vmatpush2.xpose.msra.mxu0 0.0
    %6170 = vmatprep.subr.mxu0 0.0
    %6171 = vmatpush2.xpose.msra.mxu0 0.0
    %6172 = vmatprep.mubr.f32.mxu0 0.0
    %6173 = vmatmul.mubr.f32.gmra.mxu0 %v6104
    %v6174 = vpop.f32.mrf.mxu0
    %v6175 = vadd.f32 0.0, %v6174
    %v6176 = vpop.f32.mrf.mxu0
    %6177 = vdwg.mxu0
    %v6178 = vmul.f32 %v6175, 0.35355338
    %v6179 = vsel %vm416, %v6178, -inf
    %6180 = vmax.xlane.f32.xlu0 %v6179
    %v6181 = vpop.xlane.xlu0 %6180
    %v6182 = vsub.f32 %v6178, %v6181
    %v6183 = vmul.f32 %v6182, 1.442695
    %v6184 = vpow.pop %v6183
    %v6185 = vsel %vm416, %v6184, 0.0
    %6186 = vadd.xlane.f32.xlu0 %v6185
    %v6187 = vpop.xlane.xlu0 %6186
    %v6188 = vrcp.pop %v6187
    %v6189 = vmul.f32 %v6184, %v6188
    %6190 = vrot.lane.b32.xlu0 %v6100, 64
    %v6191 = vpop.permute.xlu0 %6190
    %v6193 = vsel %vm430, %v6189, 0
    %v6195 = vsel %vm434, %v6191, 0
    %6197 = vmatprep.subr.mxu0 0.0
    %6198 = vmatpush1.msra.mxu0 0.0
    %6199 = vmatprep.subr.mxu0 0.0
    %6200 = vmatpush1.msra.mxu0 0.0
    %6201 = vmatprep.subr.mxu0 0.0
    %6202 = vmatpush1.msra.mxu0 0.0
    %6203 = vmatprep.subr.mxu0 0.0
    %6204 = vmatpush1.msra.mxu0 0.0
    %6205 = vmatprep.subr.mxu0 0.0
    %6206 = vmatpush1.msra.mxu0 0.0
    %6207 = vmatprep.subr.mxu0 0.0
    %6208 = vmatpush1.msra.mxu0 0.0
    %6209 = vmatprep.subr.mxu0 0.0
    %6210 = vmatpush1.msra.mxu0 0.0
    %6211 = vmatprep.subr.mxu0 0.0
    %6212 = vmatpush1.msra.mxu0 0.0
    %6213 = vmatprep.subr.mxu0 0.0
    %6214 = vmatpush1.msra.mxu0 0.0
    %6215 = vmatprep.subr.mxu0 0.0
    %6216 = vmatpush1.msra.mxu0 0.0
    %6217 = vmatprep.subr.mxu0 0.0
    %6218 = vmatpush1.msra.mxu0 0.0
    %6219 = vmatprep.subr.mxu0 0.0
    %6220 = vmatpush1.msra.mxu0 0.0
    %6221 = vmatprep.subr.mxu0 0.0
    %6222 = vmatpush1.msra.mxu0 0.0
    %6223 = vmatprep.subr.mxu0 0.0
    %6224 = vmatpush1.msra.mxu0 0.0
    %6225 = vmatprep.subr.mxu0 0.0
    %6226 = vmatpush1.msra.mxu0 0.0
    %6227 = vmatprep.subr.mxu0 0.0
    %6228 = vmatpush1.msra.mxu0 %v6195
    %6229 = vmatprep.subr.mxu0 0.0
    %6230 = vmatpush2.msra.mxu0 0.0
    %6231 = vmatprep.subr.mxu0 0.0
    %6232 = vmatpush2.msra.mxu0 0.0
    %6233 = vmatprep.subr.mxu0 0.0
    %6234 = vmatpush2.msra.mxu0 0.0
    %6235 = vmatprep.subr.mxu0 0.0
    %6236 = vmatpush2.msra.mxu0 0.0
    %6237 = vmatprep.subr.mxu0 0.0
    %6238 = vmatpush2.msra.mxu0 0.0
    %6239 = vmatprep.subr.mxu0 0.0
    %6240 = vmatpush2.msra.mxu0 0.0
    %6241 = vmatprep.subr.mxu0 0.0
    %6242 = vmatpush2.msra.mxu0 0.0
    %6243 = vmatprep.subr.mxu0 0.0
    %6244 = vmatpush2.msra.mxu0 0.0
    %6245 = vmatprep.subr.mxu0 0.0
    %6246 = vmatpush2.msra.mxu0 0.0
    %6247 = vmatprep.subr.mxu0 0.0
    %6248 = vmatpush2.msra.mxu0 0.0
    %6249 = vmatprep.subr.mxu0 0.0
    %6250 = vmatpush2.msra.mxu0 0.0
    %6251 = vmatprep.subr.mxu0 0.0
    %6252 = vmatpush2.msra.mxu0 0.0
    %6253 = vmatprep.subr.mxu0 0.0
    %6254 = vmatpush2.msra.mxu0 0.0
    %6255 = vmatprep.subr.mxu0 0.0
    %6256 = vmatpush2.msra.mxu0 0.0
    %6257 = vmatprep.subr.mxu0 0.0
    %6258 = vmatpush2.msra.mxu0 0.0
    %6259 = vmatprep.subr.mxu0 0.0
    %6260 = vmatpush2.msra.mxu0 0.0
    %6261 = vmatprep.mubr.f32.mxu0 0.0
    %6262 = vmatmul.mubr.f32.gmra.mxu0 %v6193
    %v6263 = vpop.f32.mrf.mxu0
    %v6264 = vadd.f32 0.0, %v6263
    %v6265 = vpop.f32.mrf.mxu0
    %6266 = vdwg.mxu0
    %6267 = vrot.lane.b32.xlu0 %v6100, 120
    %v6268 = vpop.permute.xlu0 %6267
    %6269 = vrot.lane.b32.xlu0 %v6100, 88
    %v6270 = vpop.permute.xlu0 %6269
    %v6271 = vsel %vm340, %v6268, 0
    %v6273 = vsel %vm340, %v6270, 0
    %6275 = vmatprep.subr.mxu0 0.0
    %6276 = vmatpush1.xpose.msra.mxu0 0.0
    %6277 = vmatprep.subr.mxu0 0.0
    %6278 = vmatpush1.xpose.msra.mxu0 0.0
    %6279 = vmatprep.subr.mxu0 0.0
    %6280 = vmatpush1.xpose.msra.mxu0 0.0
    %6281 = vmatprep.subr.mxu0 0.0
    %6282 = vmatpush1.xpose.msra.mxu0 0.0
    %6283 = vmatprep.subr.mxu0 0.0
    %6284 = vmatpush1.xpose.msra.mxu0 0.0
    %6285 = vmatprep.subr.mxu0 0.0
    %6286 = vmatpush1.xpose.msra.mxu0 0.0
    %6287 = vmatprep.subr.mxu0 0.0
    %6288 = vmatpush1.xpose.msra.mxu0 0.0
    %6289 = vmatprep.subr.mxu0 0.0
    %6290 = vmatpush1.xpose.msra.mxu0 0.0
    %6291 = vmatprep.subr.mxu0 0.0
    %6292 = vmatpush1.xpose.msra.mxu0 0.0
    %6293 = vmatprep.subr.mxu0 0.0
    %6294 = vmatpush1.xpose.msra.mxu0 0.0
    %6295 = vmatprep.subr.mxu0 0.0
    %6296 = vmatpush1.xpose.msra.mxu0 0.0
    %6297 = vmatprep.subr.mxu0 0.0
    %6298 = vmatpush1.xpose.msra.mxu0 0.0
    %6299 = vmatprep.subr.mxu0 0.0
    %6300 = vmatpush1.xpose.msra.mxu0 0.0
    %6301 = vmatprep.subr.mxu0 0.0
    %6302 = vmatpush1.xpose.msra.mxu0 0.0
    %6303 = vmatprep.subr.mxu0 0.0
    %6304 = vmatpush1.xpose.msra.mxu0 0.0
    %6305 = vmatprep.subr.mxu0 0.0
    %6306 = vmatpush1.xpose.msra.mxu0 %v6273
    %6307 = vmatprep.subr.mxu0 0.0
    %6308 = vmatpush2.xpose.msra.mxu0 0.0
    %6309 = vmatprep.subr.mxu0 0.0
    %6310 = vmatpush2.xpose.msra.mxu0 0.0
    %6311 = vmatprep.subr.mxu0 0.0
    %6312 = vmatpush2.xpose.msra.mxu0 0.0
    %6313 = vmatprep.subr.mxu0 0.0
    %6314 = vmatpush2.xpose.msra.mxu0 0.0
    %6315 = vmatprep.subr.mxu0 0.0
    %6316 = vmatpush2.xpose.msra.mxu0 0.0
    %6317 = vmatprep.subr.mxu0 0.0
    %6318 = vmatpush2.xpose.msra.mxu0 0.0
    %6319 = vmatprep.subr.mxu0 0.0
    %6320 = vmatpush2.xpose.msra.mxu0 0.0
    %6321 = vmatprep.subr.mxu0 0.0
    %6322 = vmatpush2.xpose.msra.mxu0 0.0
    %6323 = vmatprep.subr.mxu0 0.0
    %6324 = vmatpush2.xpose.msra.mxu0 0.0
    %6325 = vmatprep.subr.mxu0 0.0
    %6326 = vmatpush2.xpose.msra.mxu0 0.0
    %6327 = vmatprep.subr.mxu0 0.0
    %6328 = vmatpush2.xpose.msra.mxu0 0.0
    %6329 = vmatprep.subr.mxu0 0.0
    %6330 = vmatpush2.xpose.msra.mxu0 0.0
    %6331 = vmatprep.subr.mxu0 0.0
    %6332 = vmatpush2.xpose.msra.mxu0 0.0
    %6333 = vmatprep.subr.mxu0 0.0
    %6334 = vmatpush2.xpose.msra.mxu0 0.0
    %6335 = vmatprep.subr.mxu0 0.0
    %6336 = vmatpush2.xpose.msra.mxu0 0.0
    %6337 = vmatprep.subr.mxu0 0.0
    %6338 = vmatpush2.xpose.msra.mxu0 0.0
    %6339 = vmatprep.mubr.f32.mxu0 0.0
    %6340 = vmatmul.mubr.f32.gmra.mxu0 %v6271
    %v6341 = vpop.f32.mrf.mxu0
    %v6342 = vadd.f32 0.0, %v6341
    %v6343 = vpop.f32.mrf.mxu0
    %6344 = vdwg.mxu0
    %v6345 = vmul.f32 %v6342, 0.35355338
    %v6346 = vsel %vm416, %v6345, -inf
    %6347 = vmax.xlane.f32.xlu0 %v6346
    %v6348 = vpop.xlane.xlu0 %6347
    %v6349 = vsub.f32 %v6345, %v6348
    %v6350 = vmul.f32 %v6349, 1.442695
    %v6351 = vpow.pop %v6350
    %v6352 = vsel %vm416, %v6351, 0.0
    %6353 = vadd.xlane.f32.xlu0 %v6352
    %v6354 = vpop.xlane.xlu0 %6353
    %v6355 = vrcp.pop %v6354
    %v6356 = vmul.f32 %v6351, %v6355
    %6357 = vrot.lane.b32.xlu0 %v6100, 56
    %v6358 = vpop.permute.xlu0 %6357
    %v6360 = vsel %vm430, %v6356, 0
    %v6362 = vsel %vm434, %v6358, 0
    %6364 = vmatprep.subr.mxu0 0.0
    %6365 = vmatpush1.msra.mxu0 0.0
    %6366 = vmatprep.subr.mxu0 0.0
    %6367 = vmatpush1.msra.mxu0 0.0
    %6368 = vmatprep.subr.mxu0 0.0
    %6369 = vmatpush1.msra.mxu0 0.0
    %6370 = vmatprep.subr.mxu0 0.0
    %6371 = vmatpush1.msra.mxu0 0.0
    %6372 = vmatprep.subr.mxu0 0.0
    %6373 = vmatpush1.msra.mxu0 0.0
    %6374 = vmatprep.subr.mxu0 0.0
    %6375 = vmatpush1.msra.mxu0 0.0
    %6376 = vmatprep.subr.mxu0 0.0
    %6377 = vmatpush1.msra.mxu0 0.0
    %6378 = vmatprep.subr.mxu0 0.0
    %6379 = vmatpush1.msra.mxu0 0.0
    %6380 = vmatprep.subr.mxu0 0.0
    %6381 = vmatpush1.msra.mxu0 0.0
    %6382 = vmatprep.subr.mxu0 0.0
    %6383 = vmatpush1.msra.mxu0 0.0
    %6384 = vmatprep.subr.mxu0 0.0
    %6385 = vmatpush1.msra.mxu0 0.0
    %6386 = vmatprep.subr.mxu0 0.0
    %6387 = vmatpush1.msra.mxu0 0.0
    %6388 = vmatprep.subr.mxu0 0.0
    %6389 = vmatpush1.msra.mxu0 0.0
    %6390 = vmatprep.subr.mxu0 0.0
    %6391 = vmatpush1.msra.mxu0 0.0
    %6392 = vmatprep.subr.mxu0 0.0
    %6393 = vmatpush1.msra.mxu0 0.0
    %6394 = vmatprep.subr.mxu0 0.0
    %6395 = vmatpush1.msra.mxu0 %v6362
    %6396 = vmatprep.subr.mxu0 0.0
    %6397 = vmatpush2.msra.mxu0 0.0
    %6398 = vmatprep.subr.mxu0 0.0
    %6399 = vmatpush2.msra.mxu0 0.0
    %6400 = vmatprep.subr.mxu0 0.0
    %6401 = vmatpush2.msra.mxu0 0.0
    %6402 = vmatprep.subr.mxu0 0.0
    %6403 = vmatpush2.msra.mxu0 0.0
    %6404 = vmatprep.subr.mxu0 0.0
    %6405 = vmatpush2.msra.mxu0 0.0
    %6406 = vmatprep.subr.mxu0 0.0
    %6407 = vmatpush2.msra.mxu0 0.0
    %6408 = vmatprep.subr.mxu0 0.0
    %6409 = vmatpush2.msra.mxu0 0.0
    %6410 = vmatprep.subr.mxu0 0.0
    %6411 = vmatpush2.msra.mxu0 0.0
    %6412 = vmatprep.subr.mxu0 0.0
    %6413 = vmatpush2.msra.mxu0 0.0
    %6414 = vmatprep.subr.mxu0 0.0
    %6415 = vmatpush2.msra.mxu0 0.0
    %6416 = vmatprep.subr.mxu0 0.0
    %6417 = vmatpush2.msra.mxu0 0.0
    %6418 = vmatprep.subr.mxu0 0.0
    %6419 = vmatpush2.msra.mxu0 0.0
    %6420 = vmatprep.subr.mxu0 0.0
    %6421 = vmatpush2.msra.mxu0 0.0
    %6422 = vmatprep.subr.mxu0 0.0
    %6423 = vmatpush2.msra.mxu0 0.0
    %6424 = vmatprep.subr.mxu0 0.0
    %6425 = vmatpush2.msra.mxu0 0.0
    %6426 = vmatprep.subr.mxu0 0.0
    %6427 = vmatpush2.msra.mxu0 0.0
    %6428 = vmatprep.mubr.f32.mxu0 0.0
    %6429 = vmatmul.mubr.f32.gmra.mxu0 %v6360
    %v6430 = vpop.f32.mrf.mxu0
    %v6431 = vadd.f32 0.0, %v6430
    %v6432 = vpop.f32.mrf.mxu0
    %6433 = vdwg.mxu0
    %v6435 = vsel %vm340, %v6431, 0
    %6437 = vmatprep.subr.mxu0 0.0
    %6438 = vmatpush1.msra.mxu0 0.0
    %6439 = vmatprep.subr.mxu0 0.0
    %6440 = vmatpush1.msra.mxu0 0.0
    %6441 = vmatprep.subr.mxu0 0.0
    %6442 = vmatpush1.msra.mxu0 0.0
    %6443 = vmatprep.subr.mxu0 0.0
    %6444 = vmatpush1.msra.mxu0 0.0
    %6445 = vmatprep.subr.mxu0 0.0
    %6446 = vmatpush1.msra.mxu0 0.0
    %6447 = vmatprep.subr.mxu0 0.0
    %6448 = vmatpush1.msra.mxu0 0.0
    %6449 = vmatprep.subr.mxu0 0.0
    %6450 = vmatpush1.msra.mxu0 0.0
    %6451 = vmatprep.subr.mxu0 0.0
    %6452 = vmatpush1.msra.mxu0 0.0
    %6453 = vmatprep.subr.mxu0 0.0
    %6454 = vmatpush1.msra.mxu0 0.0
    %6455 = vmatprep.subr.mxu0 0.0
    %6456 = vmatpush1.msra.mxu0 0.0
    %6457 = vmatprep.subr.mxu0 0.0
    %6458 = vmatpush1.msra.mxu0 0.0
    %6459 = vmatprep.subr.mxu0 0.0
    %6460 = vmatpush1.msra.mxu0 0.0
    %6461 = vmatprep.subr.mxu0 0.0
    %6462 = vmatpush1.msra.mxu0 0.0
    %6463 = vmatprep.subr.mxu0 0.0
    %6464 = vmatpush1.msra.mxu0 0.0
    %6465 = vmatprep.subr.mxu0 0.0
    %6466 = vmatpush1.msra.mxu0 0.0
    %6467 = vmatprep.subr.mxu0 0.0
    %6468 = vmatpush1.msra.mxu0 %v5123
    %6469 = vmatprep.subr.mxu0 0.0
    %6470 = vmatpush2.msra.mxu0 0.0
    %6471 = vmatprep.subr.mxu0 0.0
    %6472 = vmatpush2.msra.mxu0 0.0
    %6473 = vmatprep.subr.mxu0 0.0
    %6474 = vmatpush2.msra.mxu0 0.0
    %6475 = vmatprep.subr.mxu0 0.0
    %6476 = vmatpush2.msra.mxu0 0.0
    %6477 = vmatprep.subr.mxu0 0.0
    %6478 = vmatpush2.msra.mxu0 0.0
    %6479 = vmatprep.subr.mxu0 0.0
    %6480 = vmatpush2.msra.mxu0 0.0
    %6481 = vmatprep.subr.mxu0 0.0
    %6482 = vmatpush2.msra.mxu0 0.0
    %6483 = vmatprep.subr.mxu0 0.0
    %6484 = vmatpush2.msra.mxu0 0.0
    %6485 = vmatprep.subr.mxu0 0.0
    %6486 = vmatpush2.msra.mxu0 0.0
    %6487 = vmatprep.subr.mxu0 0.0
    %6488 = vmatpush2.msra.mxu0 0.0
    %6489 = vmatprep.subr.mxu0 0.0
    %6490 = vmatpush2.msra.mxu0 0.0
    %6491 = vmatprep.subr.mxu0 0.0
    %6492 = vmatpush2.msra.mxu0 0.0
    %6493 = vmatprep.subr.mxu0 0.0
    %6494 = vmatpush2.msra.mxu0 0.0
    %6495 = vmatprep.subr.mxu0 0.0
    %6496 = vmatpush2.msra.mxu0 0.0
    %6497 = vmatprep.subr.mxu0 0.0
    %6498 = vmatpush2.msra.mxu0 0.0
    %6499 = vmatprep.subr.mxu0 0.0
    %6500 = vmatpush2.msra.mxu0 0.0
    %6501 = vmatprep.mubr.f32.mxu0 0.0
    %6502 = vmatmul.mubr.f32.gmra.mxu0 %v6435
    %v6503 = vpop.f32.mrf.mxu0
    %v6504 = vadd.f32 0.0, %v6503
    %v6505 = vpop.f32.mrf.mxu0
    %6506 = vdwg.mxu0
    %v6508 = vsel %vm340, %v6264, 0
    %6510 = vmatprep.subr.mxu0 0.0
    %6511 = vmatpush1.msra.mxu0 0.0
    %6512 = vmatprep.subr.mxu0 0.0
    %6513 = vmatpush1.msra.mxu0 0.0
    %6514 = vmatprep.subr.mxu0 0.0
    %6515 = vmatpush1.msra.mxu0 0.0
    %6516 = vmatprep.subr.mxu0 0.0
    %6517 = vmatpush1.msra.mxu0 0.0
    %6518 = vmatprep.subr.mxu0 0.0
    %6519 = vmatpush1.msra.mxu0 0.0
    %6520 = vmatprep.subr.mxu0 0.0
    %6521 = vmatpush1.msra.mxu0 0.0
    %6522 = vmatprep.subr.mxu0 0.0
    %6523 = vmatpush1.msra.mxu0 0.0
    %6524 = vmatprep.subr.mxu0 0.0
    %6525 = vmatpush1.msra.mxu0 0.0
    %6526 = vmatprep.subr.mxu0 0.0
    %6527 = vmatpush1.msra.mxu0 0.0
    %6528 = vmatprep.subr.mxu0 0.0
    %6529 = vmatpush1.msra.mxu0 0.0
    %6530 = vmatprep.subr.mxu0 0.0
    %6531 = vmatpush1.msra.mxu0 0.0
    %6532 = vmatprep.subr.mxu0 0.0
    %6533 = vmatpush1.msra.mxu0 0.0
    %6534 = vmatprep.subr.mxu0 0.0
    %6535 = vmatpush1.msra.mxu0 0.0
    %6536 = vmatprep.subr.mxu0 0.0
    %6537 = vmatpush1.msra.mxu0 0.0
    %6538 = vmatprep.subr.mxu0 0.0
    %6539 = vmatpush1.msra.mxu0 0.0
    %6540 = vmatprep.subr.mxu0 0.0
    %6541 = vmatpush1.msra.mxu0 %v5122
    %6542 = vmatprep.subr.mxu0 0.0
    %6543 = vmatpush2.msra.mxu0 0.0
    %6544 = vmatprep.subr.mxu0 0.0
    %6545 = vmatpush2.msra.mxu0 0.0
    %6546 = vmatprep.subr.mxu0 0.0
    %6547 = vmatpush2.msra.mxu0 0.0
    %6548 = vmatprep.subr.mxu0 0.0
    %6549 = vmatpush2.msra.mxu0 0.0
    %6550 = vmatprep.subr.mxu0 0.0
    %6551 = vmatpush2.msra.mxu0 0.0
    %6552 = vmatprep.subr.mxu0 0.0
    %6553 = vmatpush2.msra.mxu0 0.0
    %6554 = vmatprep.subr.mxu0 0.0
    %6555 = vmatpush2.msra.mxu0 0.0
    %6556 = vmatprep.subr.mxu0 0.0
    %6557 = vmatpush2.msra.mxu0 0.0
    %6558 = vmatprep.subr.mxu0 0.0
    %6559 = vmatpush2.msra.mxu0 0.0
    %6560 = vmatprep.subr.mxu0 0.0
    %6561 = vmatpush2.msra.mxu0 0.0
    %6562 = vmatprep.subr.mxu0 0.0
    %6563 = vmatpush2.msra.mxu0 0.0
    %6564 = vmatprep.subr.mxu0 0.0
    %6565 = vmatpush2.msra.mxu0 0.0
    %6566 = vmatprep.subr.mxu0 0.0
    %6567 = vmatpush2.msra.mxu0 0.0
    %6568 = vmatprep.subr.mxu0 0.0
    %6569 = vmatpush2.msra.mxu0 0.0
    %6570 = vmatprep.subr.mxu0 0.0
    %6571 = vmatpush2.msra.mxu0 0.0
    %6572 = vmatprep.subr.mxu0 0.0
    %6573 = vmatpush2.msra.mxu0 0.0
    %6574 = vmatprep.mubr.f32.mxu0 0.0
    %6575 = vmatmul.mubr.f32.gmra.mxu0 %v6508
    %v6576 = vpop.f32.mrf.mxu0
    %v6577 = vadd.f32 %v6504, %v6576
    %v6578 = vpop.f32.mrf.mxu0
    %6579 = vdwg.mxu0
    %6580 = vrot.lane.b32.xlu0 %v6100, 112
    %v6581 = vpop.permute.xlu0 %6580
    %6582 = vrot.lane.b32.xlu0 %v6100, 80
    %v6583 = vpop.permute.xlu0 %6582
    %v6584 = vsel %vm340, %v6581, 0
    %v6586 = vsel %vm340, %v6583, 0
    %6588 = vmatprep.subr.mxu0 0.0
    %6589 = vmatpush1.xpose.msra.mxu0 0.0
    %6590 = vmatprep.subr.mxu0 0.0
    %6591 = vmatpush1.xpose.msra.mxu0 0.0
    %6592 = vmatprep.subr.mxu0 0.0
    %6593 = vmatpush1.xpose.msra.mxu0 0.0
    %6594 = vmatprep.subr.mxu0 0.0
    %6595 = vmatpush1.xpose.msra.mxu0 0.0
    %6596 = vmatprep.subr.mxu0 0.0
    %6597 = vmatpush1.xpose.msra.mxu0 0.0
    %6598 = vmatprep.subr.mxu0 0.0
    %6599 = vmatpush1.xpose.msra.mxu0 0.0
    %6600 = vmatprep.subr.mxu0 0.0
    %6601 = vmatpush1.xpose.msra.mxu0 0.0
    %6602 = vmatprep.subr.mxu0 0.0
    %6603 = vmatpush1.xpose.msra.mxu0 0.0
    %6604 = vmatprep.subr.mxu0 0.0
    %6605 = vmatpush1.xpose.msra.mxu0 0.0
    %6606 = vmatprep.subr.mxu0 0.0
    %6607 = vmatpush1.xpose.msra.mxu0 0.0
    %6608 = vmatprep.subr.mxu0 0.0
    %6609 = vmatpush1.xpose.msra.mxu0 0.0
    %6610 = vmatprep.subr.mxu0 0.0
    %6611 = vmatpush1.xpose.msra.mxu0 0.0
    %6612 = vmatprep.subr.mxu0 0.0
    %6613 = vmatpush1.xpose.msra.mxu0 0.0
    %6614 = vmatprep.subr.mxu0 0.0
    %6615 = vmatpush1.xpose.msra.mxu0 0.0
    %6616 = vmatprep.subr.mxu0 0.0
    %6617 = vmatpush1.xpose.msra.mxu0 0.0
    %6618 = vmatprep.subr.mxu0 0.0
    %6619 = vmatpush1.xpose.msra.mxu0 %v6586
    %6620 = vmatprep.subr.mxu0 0.0
    %6621 = vmatpush2.xpose.msra.mxu0 0.0
    %6622 = vmatprep.subr.mxu0 0.0
    %6623 = vmatpush2.xpose.msra.mxu0 0.0
    %6624 = vmatprep.subr.mxu0 0.0
    %6625 = vmatpush2.xpose.msra.mxu0 0.0
    %6626 = vmatprep.subr.mxu0 0.0
    %6627 = vmatpush2.xpose.msra.mxu0 0.0
    %6628 = vmatprep.subr.mxu0 0.0
    %6629 = vmatpush2.xpose.msra.mxu0 0.0
    %6630 = vmatprep.subr.mxu0 0.0
    %6631 = vmatpush2.xpose.msra.mxu0 0.0
    %6632 = vmatprep.subr.mxu0 0.0
    %6633 = vmatpush2.xpose.msra.mxu0 0.0
    %6634 = vmatprep.subr.mxu0 0.0
    %6635 = vmatpush2.xpose.msra.mxu0 0.0
    %6636 = vmatprep.subr.mxu0 0.0
    %6637 = vmatpush2.xpose.msra.mxu0 0.0
    %6638 = vmatprep.subr.mxu0 0.0
    %6639 = vmatpush2.xpose.msra.mxu0 0.0
    %6640 = vmatprep.subr.mxu0 0.0
    %6641 = vmatpush2.xpose.msra.mxu0 0.0
    %6642 = vmatprep.subr.mxu0 0.0
    %6643 = vmatpush2.xpose.msra.mxu0 0.0
    %6644 = vmatprep.subr.mxu0 0.0
    %6645 = vmatpush2.xpose.msra.mxu0 0.0
    %6646 = vmatprep.subr.mxu0 0.0
    %6647 = vmatpush2.xpose.msra.mxu0 0.0
    %6648 = vmatprep.subr.mxu0 0.0
    %6649 = vmatpush2.xpose.msra.mxu0 0.0
    %6650 = vmatprep.subr.mxu0 0.0
    %6651 = vmatpush2.xpose.msra.mxu0 0.0
    %6652 = vmatprep.mubr.f32.mxu0 0.0
    %6653 = vmatmul.mubr.f32.gmra.mxu0 %v6584
    %v6654 = vpop.f32.mrf.mxu0
    %v6655 = vadd.f32 0.0, %v6654
    %v6656 = vpop.f32.mrf.mxu0
    %6657 = vdwg.mxu0
    %v6658 = vmul.f32 %v6655, 0.35355338
    %v6659 = vsel %vm416, %v6658, -inf
    %6660 = vmax.xlane.f32.xlu0 %v6659
    %v6661 = vpop.xlane.xlu0 %6660
    %v6662 = vsub.f32 %v6658, %v6661
    %v6663 = vmul.f32 %v6662, 1.442695
    %v6664 = vpow.pop %v6663
    %v6665 = vsel %vm416, %v6664, 0.0
    %6666 = vadd.xlane.f32.xlu0 %v6665
    %v6667 = vpop.xlane.xlu0 %6666
    %v6668 = vrcp.pop %v6667
    %v6669 = vmul.f32 %v6664, %v6668
    %6670 = vrot.lane.b32.xlu0 %v6100, 48
    %v6671 = vpop.permute.xlu0 %6670
    %v6673 = vsel %vm430, %v6669, 0
    %v6675 = vsel %vm434, %v6671, 0
    %6677 = vmatprep.subr.mxu0 0.0
    %6678 = vmatpush1.msra.mxu0 0.0
    %6679 = vmatprep.subr.mxu0 0.0
    %6680 = vmatpush1.msra.mxu0 0.0
    %6681 = vmatprep.subr.mxu0 0.0
    %6682 = vmatpush1.msra.mxu0 0.0
    %6683 = vmatprep.subr.mxu0 0.0
    %6684 = vmatpush1.msra.mxu0 0.0
    %6685 = vmatprep.subr.mxu0 0.0
    %6686 = vmatpush1.msra.mxu0 0.0
    %6687 = vmatprep.subr.mxu0 0.0
    %6688 = vmatpush1.msra.mxu0 0.0
    %6689 = vmatprep.subr.mxu0 0.0
    %6690 = vmatpush1.msra.mxu0 0.0
    %6691 = vmatprep.subr.mxu0 0.0
    %6692 = vmatpush1.msra.mxu0 0.0
    %6693 = vmatprep.subr.mxu0 0.0
    %6694 = vmatpush1.msra.mxu0 0.0
    %6695 = vmatprep.subr.mxu0 0.0
    %6696 = vmatpush1.msra.mxu0 0.0
    %6697 = vmatprep.subr.mxu0 0.0
    %6698 = vmatpush1.msra.mxu0 0.0
    %6699 = vmatprep.subr.mxu0 0.0
    %6700 = vmatpush1.msra.mxu0 0.0
    %6701 = vmatprep.subr.mxu0 0.0
    %6702 = vmatpush1.msra.mxu0 0.0
    %6703 = vmatprep.subr.mxu0 0.0
    %6704 = vmatpush1.msra.mxu0 0.0
    %6705 = vmatprep.subr.mxu0 0.0
    %6706 = vmatpush1.msra.mxu0 0.0
    %6707 = vmatprep.subr.mxu0 0.0
    %6708 = vmatpush1.msra.mxu0 %v6675
    %6709 = vmatprep.subr.mxu0 0.0
    %6710 = vmatpush2.msra.mxu0 0.0
    %6711 = vmatprep.subr.mxu0 0.0
    %6712 = vmatpush2.msra.mxu0 0.0
    %6713 = vmatprep.subr.mxu0 0.0
    %6714 = vmatpush2.msra.mxu0 0.0
    %6715 = vmatprep.subr.mxu0 0.0
    %6716 = vmatpush2.msra.mxu0 0.0
    %6717 = vmatprep.subr.mxu0 0.0
    %6718 = vmatpush2.msra.mxu0 0.0
    %6719 = vmatprep.subr.mxu0 0.0
    %6720 = vmatpush2.msra.mxu0 0.0
    %6721 = vmatprep.subr.mxu0 0.0
    %6722 = vmatpush2.msra.mxu0 0.0
    %6723 = vmatprep.subr.mxu0 0.0
    %6724 = vmatpush2.msra.mxu0 0.0
    %6725 = vmatprep.subr.mxu0 0.0
    %6726 = vmatpush2.msra.mxu0 0.0
    %6727 = vmatprep.subr.mxu0 0.0
    %6728 = vmatpush2.msra.mxu0 0.0
    %6729 = vmatprep.subr.mxu0 0.0
    %6730 = vmatpush2.msra.mxu0 0.0
    %6731 = vmatprep.subr.mxu0 0.0
    %6732 = vmatpush2.msra.mxu0 0.0
    %6733 = vmatprep.subr.mxu0 0.0
    %6734 = vmatpush2.msra.mxu0 0.0
    %6735 = vmatprep.subr.mxu0 0.0
    %6736 = vmatpush2.msra.mxu0 0.0
    %6737 = vmatprep.subr.mxu0 0.0
    %6738 = vmatpush2.msra.mxu0 0.0
    %6739 = vmatprep.subr.mxu0 0.0
    %6740 = vmatpush2.msra.mxu0 0.0
    %6741 = vmatprep.mubr.f32.mxu0 0.0
    %6742 = vmatmul.mubr.f32.gmra.mxu0 %v6673
    %v6743 = vpop.f32.mrf.mxu0
    %v6744 = vadd.f32 0.0, %v6743
    %v6745 = vpop.f32.mrf.mxu0
    %6746 = vdwg.mxu0
    %v6748 = vsel %vm340, %v6744, 0
    %6750 = vmatprep.subr.mxu0 0.0
    %6751 = vmatpush1.msra.mxu0 0.0
    %6752 = vmatprep.subr.mxu0 0.0
    %6753 = vmatpush1.msra.mxu0 0.0
    %6754 = vmatprep.subr.mxu0 0.0
    %6755 = vmatpush1.msra.mxu0 0.0
    %6756 = vmatprep.subr.mxu0 0.0
    %6757 = vmatpush1.msra.mxu0 0.0
    %6758 = vmatprep.subr.mxu0 0.0
    %6759 = vmatpush1.msra.mxu0 0.0
    %6760 = vmatprep.subr.mxu0 0.0
    %6761 = vmatpush1.msra.mxu0 0.0
    %6762 = vmatprep.subr.mxu0 0.0
    %6763 = vmatpush1.msra.mxu0 0.0
    %6764 = vmatprep.subr.mxu0 0.0
    %6765 = vmatpush1.msra.mxu0 0.0
    %6766 = vmatprep.subr.mxu0 0.0
    %6767 = vmatpush1.msra.mxu0 0.0
    %6768 = vmatprep.subr.mxu0 0.0
    %6769 = vmatpush1.msra.mxu0 0.0
    %6770 = vmatprep.subr.mxu0 0.0
    %6771 = vmatpush1.msra.mxu0 0.0
    %6772 = vmatprep.subr.mxu0 0.0
    %6773 = vmatpush1.msra.mxu0 0.0
    %6774 = vmatprep.subr.mxu0 0.0
    %6775 = vmatpush1.msra.mxu0 0.0
    %6776 = vmatprep.subr.mxu0 0.0
    %6777 = vmatpush1.msra.mxu0 0.0
    %6778 = vmatprep.subr.mxu0 0.0
    %6779 = vmatpush1.msra.mxu0 0.0
    %6780 = vmatprep.subr.mxu0 0.0
    %6781 = vmatpush1.msra.mxu0 %v5124
    %6782 = vmatprep.subr.mxu0 0.0
    %6783 = vmatpush2.msra.mxu0 0.0
    %6784 = vmatprep.subr.mxu0 0.0
    %6785 = vmatpush2.msra.mxu0 0.0
    %6786 = vmatprep.subr.mxu0 0.0
    %6787 = vmatpush2.msra.mxu0 0.0
    %6788 = vmatprep.subr.mxu0 0.0
    %6789 = vmatpush2.msra.mxu0 0.0
    %6790 = vmatprep.subr.mxu0 0.0
    %6791 = vmatpush2.msra.mxu0 0.0
    %6792 = vmatprep.subr.mxu0 0.0
    %6793 = vmatpush2.msra.mxu0 0.0
    %6794 = vmatprep.subr.mxu0 0.0
    %6795 = vmatpush2.msra.mxu0 0.0
    %6796 = vmatprep.subr.mxu0 0.0
    %6797 = vmatpush2.msra.mxu0 0.0
    %6798 = vmatprep.subr.mxu0 0.0
    %6799 = vmatpush2.msra.mxu0 0.0
    %6800 = vmatprep.subr.mxu0 0.0
    %6801 = vmatpush2.msra.mxu0 0.0
    %6802 = vmatprep.subr.mxu0 0.0
    %6803 = vmatpush2.msra.mxu0 0.0
    %6804 = vmatprep.subr.mxu0 0.0
    %6805 = vmatpush2.msra.mxu0 0.0
    %6806 = vmatprep.subr.mxu0 0.0
    %6807 = vmatpush2.msra.mxu0 0.0
    %6808 = vmatprep.subr.mxu0 0.0
    %6809 = vmatpush2.msra.mxu0 0.0
    %6810 = vmatprep.subr.mxu0 0.0
    %6811 = vmatpush2.msra.mxu0 0.0
    %6812 = vmatprep.subr.mxu0 0.0
    %6813 = vmatpush2.msra.mxu0 0.0
    %6814 = vmatprep.mubr.f32.mxu0 0.0
    %6815 = vmatmul.mubr.f32.gmra.mxu0 %v6748
    %v6816 = vpop.f32.mrf.mxu0
    %v6817 = vadd.f32 0.0, %v6816
    %v6818 = vpop.f32.mrf.mxu0
    %6819 = vdwg.mxu0
    %v6820 = vadd.f32 %v6577, %v6817
    %6821 = vrot.lane.b32.xlu0 %v6100, 104
    %v6822 = vpop.permute.xlu0 %6821
    %6823 = vrot.lane.b32.xlu0 %v6100, 72
    %v6824 = vpop.permute.xlu0 %6823
    %v6825 = vsel %vm340, %v6822, 0
    %v6827 = vsel %vm340, %v6824, 0
    %6829 = vmatprep.subr.mxu0 0.0
    %6830 = vmatpush1.xpose.msra.mxu0 0.0
    %6831 = vmatprep.subr.mxu0 0.0
    %6832 = vmatpush1.xpose.msra.mxu0 0.0
    %6833 = vmatprep.subr.mxu0 0.0
    %6834 = vmatpush1.xpose.msra.mxu0 0.0
    %6835 = vmatprep.subr.mxu0 0.0
    %6836 = vmatpush1.xpose.msra.mxu0 0.0
    %6837 = vmatprep.subr.mxu0 0.0
    %6838 = vmatpush1.xpose.msra.mxu0 0.0
    %6839 = vmatprep.subr.mxu0 0.0
    %6840 = vmatpush1.xpose.msra.mxu0 0.0
    %6841 = vmatprep.subr.mxu0 0.0
    %6842 = vmatpush1.xpose.msra.mxu0 0.0
    %6843 = vmatprep.subr.mxu0 0.0
    %6844 = vmatpush1.xpose.msra.mxu0 0.0
    %6845 = vmatprep.subr.mxu0 0.0
    %6846 = vmatpush1.xpose.msra.mxu0 0.0
    %6847 = vmatprep.subr.mxu0 0.0
    %6848 = vmatpush1.xpose.msra.mxu0 0.0
    %6849 = vmatprep.subr.mxu0 0.0
    %6850 = vmatpush1.xpose.msra.mxu0 0.0
    %6851 = vmatprep.subr.mxu0 0.0
    %6852 = vmatpush1.xpose.msra.mxu0 0.0
    %6853 = vmatprep.subr.mxu0 0.0
    %6854 = vmatpush1.xpose.msra.mxu0 0.0
    %6855 = vmatprep.subr.mxu0 0.0
    %6856 = vmatpush1.xpose.msra.mxu0 0.0
    %6857 = vmatprep.subr.mxu0 0.0
    %6858 = vmatpush1.xpose.msra.mxu0 0.0
    %6859 = vmatprep.subr.mxu0 0.0
    %6860 = vmatpush1.xpose.msra.mxu0 %v6827
    %6861 = vmatprep.subr.mxu0 0.0
    %6862 = vmatpush2.xpose.msra.mxu0 0.0
    %6863 = vmatprep.subr.mxu0 0.0
    %6864 = vmatpush2.xpose.msra.mxu0 0.0
    %6865 = vmatprep.subr.mxu0 0.0
    %6866 = vmatpush2.xpose.msra.mxu0 0.0
    %6867 = vmatprep.subr.mxu0 0.0
    %6868 = vmatpush2.xpose.msra.mxu0 0.0
    %6869 = vmatprep.subr.mxu0 0.0
    %6870 = vmatpush2.xpose.msra.mxu0 0.0
    %6871 = vmatprep.subr.mxu0 0.0
    %6872 = vmatpush2.xpose.msra.mxu0 0.0
    %6873 = vmatprep.subr.mxu0 0.0
    %6874 = vmatpush2.xpose.msra.mxu0 0.0
    %6875 = vmatprep.subr.mxu0 0.0
    %6876 = vmatpush2.xpose.msra.mxu0 0.0
    %6877 = vmatprep.subr.mxu0 0.0
    %6878 = vmatpush2.xpose.msra.mxu0 0.0
    %6879 = vmatprep.subr.mxu0 0.0
    %6880 = vmatpush2.xpose.msra.mxu0 0.0
    %6881 = vmatprep.subr.mxu0 0.0
    %6882 = vmatpush2.xpose.msra.mxu0 0.0
    %6883 = vmatprep.subr.mxu0 0.0
    %6884 = vmatpush2.xpose.msra.mxu0 0.0
    %6885 = vmatprep.subr.mxu0 0.0
    %6886 = vmatpush2.xpose.msra.mxu0 0.0
    %6887 = vmatprep.subr.mxu0 0.0
    %6888 = vmatpush2.xpose.msra.mxu0 0.0
    %6889 = vmatprep.subr.mxu0 0.0
    %6890 = vmatpush2.xpose.msra.mxu0 0.0
    %6891 = vmatprep.subr.mxu0 0.0
    %6892 = vmatpush2.xpose.msra.mxu0 0.0
    %6893 = vmatprep.mubr.f32.mxu0 0.0
    %6894 = vmatmul.mubr.f32.gmra.mxu0 %v6825
    %v6895 = vpop.f32.mrf.mxu0
    %v6896 = vadd.f32 0.0, %v6895
    %v6897 = vpop.f32.mrf.mxu0
    %6898 = vdwg.mxu0
    %v6899 = vmul.f32 %v6896, 0.35355338
    %v6900 = vsel %vm416, %v6899, -inf
    %6901 = vmax.xlane.f32.xlu0 %v6900
    %v6902 = vpop.xlane.xlu0 %6901
    %v6903 = vsub.f32 %v6899, %v6902
    %v6904 = vmul.f32 %v6903, 1.442695
    %v6905 = vpow.pop %v6904
    %v6906 = vsel %vm416, %v6905, 0.0
    %6907 = vadd.xlane.f32.xlu0 %v6906
    %v6908 = vpop.xlane.xlu0 %6907
    %v6909 = vrcp.pop %v6908
    %v6910 = vmul.f32 %v6905, %v6909
    %6911 = vrot.lane.b32.xlu0 %v6100, 40
    %v6912 = vpop.permute.xlu0 %6911
    %v6914 = vsel %vm430, %v6910, 0
    %v6916 = vsel %vm434, %v6912, 0
    %6918 = vmatprep.subr.mxu0 0.0
    %6919 = vmatpush1.msra.mxu0 0.0
    %6920 = vmatprep.subr.mxu0 0.0
    %6921 = vmatpush1.msra.mxu0 0.0
    %6922 = vmatprep.subr.mxu0 0.0
    %6923 = vmatpush1.msra.mxu0 0.0
    %6924 = vmatprep.subr.mxu0 0.0
    %6925 = vmatpush1.msra.mxu0 0.0
    %6926 = vmatprep.subr.mxu0 0.0
    %6927 = vmatpush1.msra.mxu0 0.0
    %6928 = vmatprep.subr.mxu0 0.0
    %6929 = vmatpush1.msra.mxu0 0.0
    %6930 = vmatprep.subr.mxu0 0.0
    %6931 = vmatpush1.msra.mxu0 0.0
    %6932 = vmatprep.subr.mxu0 0.0
    %6933 = vmatpush1.msra.mxu0 0.0
    %6934 = vmatprep.subr.mxu0 0.0
    %6935 = vmatpush1.msra.mxu0 0.0
    %6936 = vmatprep.subr.mxu0 0.0
    %6937 = vmatpush1.msra.mxu0 0.0
    %6938 = vmatprep.subr.mxu0 0.0
    %6939 = vmatpush1.msra.mxu0 0.0
    %6940 = vmatprep.subr.mxu0 0.0
    %6941 = vmatpush1.msra.mxu0 0.0
    %6942 = vmatprep.subr.mxu0 0.0
    %6943 = vmatpush1.msra.mxu0 0.0
    %6944 = vmatprep.subr.mxu0 0.0
    %6945 = vmatpush1.msra.mxu0 0.0
    %6946 = vmatprep.subr.mxu0 0.0
    %6947 = vmatpush1.msra.mxu0 0.0
    %6948 = vmatprep.subr.mxu0 0.0
    %6949 = vmatpush1.msra.mxu0 %v6916
    %6950 = vmatprep.subr.mxu0 0.0
    %6951 = vmatpush2.msra.mxu0 0.0
    %6952 = vmatprep.subr.mxu0 0.0
    %6953 = vmatpush2.msra.mxu0 0.0
    %6954 = vmatprep.subr.mxu0 0.0
    %6955 = vmatpush2.msra.mxu0 0.0
    %6956 = vmatprep.subr.mxu0 0.0
    %6957 = vmatpush2.msra.mxu0 0.0
    %6958 = vmatprep.subr.mxu0 0.0
    %6959 = vmatpush2.msra.mxu0 0.0
    %6960 = vmatprep.subr.mxu0 0.0
    %6961 = vmatpush2.msra.mxu0 0.0
    %6962 = vmatprep.subr.mxu0 0.0
    %6963 = vmatpush2.msra.mxu0 0.0
    %6964 = vmatprep.subr.mxu0 0.0
    %6965 = vmatpush2.msra.mxu0 0.0
    %6966 = vmatprep.subr.mxu0 0.0
    %6967 = vmatpush2.msra.mxu0 0.0
    %6968 = vmatprep.subr.mxu0 0.0
    %6969 = vmatpush2.msra.mxu0 0.0
    %6970 = vmatprep.subr.mxu0 0.0
    %6971 = vmatpush2.msra.mxu0 0.0
    %6972 = vmatprep.subr.mxu0 0.0
    %6973 = vmatpush2.msra.mxu0 0.0
    %6974 = vmatprep.subr.mxu0 0.0
    %6975 = vmatpush2.msra.mxu0 0.0
    %6976 = vmatprep.subr.mxu0 0.0
    %6977 = vmatpush2.msra.mxu0 0.0
    %6978 = vmatprep.subr.mxu0 0.0
    %6979 = vmatpush2.msra.mxu0 0.0
    %6980 = vmatprep.subr.mxu0 0.0
    %6981 = vmatpush2.msra.mxu0 0.0
    %6982 = vmatprep.mubr.f32.mxu0 0.0
    %6983 = vmatmul.mubr.f32.gmra.mxu0 %v6914
    %v6984 = vpop.f32.mrf.mxu0
    %v6985 = vadd.f32 0.0, %v6984
    %v6986 = vpop.f32.mrf.mxu0
    %6987 = vdwg.mxu0
    %v6989 = vsel %vm340, %v6985, 0
    %6991 = vmatprep.subr.mxu0 0.0
    %6992 = vmatpush1.msra.mxu0 0.0
    %6993 = vmatprep.subr.mxu0 0.0
    %6994 = vmatpush1.msra.mxu0 0.0
    %6995 = vmatprep.subr.mxu0 0.0
    %6996 = vmatpush1.msra.mxu0 0.0
    %6997 = vmatprep.subr.mxu0 0.0
    %6998 = vmatpush1.msra.mxu0 0.0
    %6999 = vmatprep.subr.mxu0 0.0
    %7000 = vmatpush1.msra.mxu0 0.0
    %7001 = vmatprep.subr.mxu0 0.0
    %7002 = vmatpush1.msra.mxu0 0.0
    %7003 = vmatprep.subr.mxu0 0.0
    %7004 = vmatpush1.msra.mxu0 0.0
    %7005 = vmatprep.subr.mxu0 0.0
    %7006 = vmatpush1.msra.mxu0 0.0
    %7007 = vmatprep.subr.mxu0 0.0
    %7008 = vmatpush1.msra.mxu0 0.0
    %7009 = vmatprep.subr.mxu0 0.0
    %7010 = vmatpush1.msra.mxu0 0.0
    %7011 = vmatprep.subr.mxu0 0.0
    %7012 = vmatpush1.msra.mxu0 0.0
    %7013 = vmatprep.subr.mxu0 0.0
    %7014 = vmatpush1.msra.mxu0 0.0
    %7015 = vmatprep.subr.mxu0 0.0
    %7016 = vmatpush1.msra.mxu0 0.0
    %7017 = vmatprep.subr.mxu0 0.0
    %7018 = vmatpush1.msra.mxu0 0.0
    %7019 = vmatprep.subr.mxu0 0.0
    %7020 = vmatpush1.msra.mxu0 0.0
    %7021 = vmatprep.subr.mxu0 0.0
    %7022 = vmatpush1.msra.mxu0 %v5125
    %7023 = vmatprep.subr.mxu0 0.0
    %7024 = vmatpush2.msra.mxu0 0.0
    %7025 = vmatprep.subr.mxu0 0.0
    %7026 = vmatpush2.msra.mxu0 0.0
    %7027 = vmatprep.subr.mxu0 0.0
    %7028 = vmatpush2.msra.mxu0 0.0
    %7029 = vmatprep.subr.mxu0 0.0
    %7030 = vmatpush2.msra.mxu0 0.0
    %7031 = vmatprep.subr.mxu0 0.0
    %7032 = vmatpush2.msra.mxu0 0.0
    %7033 = vmatprep.subr.mxu0 0.0
    %7034 = vmatpush2.msra.mxu0 0.0
    %7035 = vmatprep.subr.mxu0 0.0
    %7036 = vmatpush2.msra.mxu0 0.0
    %7037 = vmatprep.subr.mxu0 0.0
    %7038 = vmatpush2.msra.mxu0 0.0
    %7039 = vmatprep.subr.mxu0 0.0
    %7040 = vmatpush2.msra.mxu0 0.0
    %7041 = vmatprep.subr.mxu0 0.0
    %7042 = vmatpush2.msra.mxu0 0.0
    %7043 = vmatprep.subr.mxu0 0.0
    %7044 = vmatpush2.msra.mxu0 0.0
    %7045 = vmatprep.subr.mxu0 0.0
    %7046 = vmatpush2.msra.mxu0 0.0
    %7047 = vmatprep.subr.mxu0 0.0
    %7048 = vmatpush2.msra.mxu0 0.0
    %7049 = vmatprep.subr.mxu0 0.0
    %7050 = vmatpush2.msra.mxu0 0.0
    %7051 = vmatprep.subr.mxu0 0.0
    %7052 = vmatpush2.msra.mxu0 0.0
    %7053 = vmatprep.subr.mxu0 0.0
    %7054 = vmatpush2.msra.mxu0 0.0
    %7055 = vmatprep.mubr.f32.mxu0 0.0
    %7056 = vmatmul.mubr.f32.gmra.mxu0 %v6989
    %v7057 = vpop.f32.mrf.mxu0
    %v7058 = vadd.f32 0.0, %v7057
    %v7059 = vpop.f32.mrf.mxu0
    %7060 = vdwg.mxu0
    %v7061 = vadd.f32 %v6820, %v7058
    %v7062 = vld [vmem:[#allocation2 + $0x5] sm:$0x1f]
    %v7063 = vadd.f32 %v7062, %v7061
    %v7064 = vld [vmem:[%s6090] sm:$0x1]
    %v7066 = vlaneseq
    %v7067 = vshrl.u32 %v7066, 7
    %v7068 = vsub.s32 0, %v7067
    %v7069 = vrot.slane %v7064, %v7068
    %v7071 = vadd.f32 %v7063, %v7069
    %7072 = vst.msk [vmem:[#allocation2 + $0x5] sm:$0x1f] %vm1312, %v7071
    %v7073 = vld [vmem:[#allocation2] sm:$0xff]
    %v7074 = vld [vmem:[#allocation2 + $0x8] sm:$0x3]
    %s7075 = scalar_lea.vmem %s9, 2
    %v7076 = vld [vmem:[%s7075] sm:$0x1]
    %s7077 = scalar_lea.vmem %s10, 2
    %v7078 = vld [vmem:[%s7077] sm:$0x1]
    %v7079 = vsel %vm185, %v7073, 0.0
    %7080 = vadd.xlane.f32.xlu0 %v7079
    %v7081 = vpop.xlane.xlu0 %7080
    %v7082 = vsel %vm187, %v7074, 0.0
    %7083 = vadd.xlane.f32.xlu0 %v7082
    %v7084 = vpop.xlane.xlu0 %7083
    %v7085 = vmul.f32 %v7081, %v199
    %v7086 = vmul.f32 %v7084, %v199
    %v7087 = vsub.f32 %v7073, %v7085
    %v7088 = vsub.f32 %v7074, %v7086
    %v7089 = vmul.f32 %v7087, %v7087
    %v7090 = vmul.f32 %v7088, %v7088
    %v7091 = vsel %vm185, %v7089, 0.0
    %7092 = vadd.xlane.f32.xlu0 %v7091
    %v7093 = vpop.xlane.xlu0 %7092
    %v7094 = vsel %vm187, %v7090, 0.0
    %7095 = vadd.xlane.f32.xlu0 %v7094
    %v7096 = vpop.xlane.xlu0 %7095
    %v7097 = vmul.f32 %v7093, %v199
    %v7098 = vmul.f32 %v7096, %v199
    %v7099 = vadd.f32 %v7097, 1e-05
    %v7100 = vadd.f32 %v7098, 1e-05
    %v7101 = vrsqrt.pop %v7099
    %v7102 = vrsqrt.pop %v7100
    %v7103 = vmul.f32 %v7087, %v7101
    %v7104 = vmul.f32 %v7088, %v7102
    %v7106 = vlaneseq
    %v7107 = vshrl.u32 %v7106, 7
    %v7108 = vsub.s32 0, %v7107
    %v7109 = vrot.slane %v7076, %v7108
    %v7111 = vmul.f32 %v7103, %v7109
    %v7112 = vmul.f32 %v7104, %v7109
    %v7114 = vlaneseq
    %v7115 = vshrl.u32 %v7114, 7
    %v7116 = vsub.s32 0, %v7115
    %v7117 = vrot.slane %v7078, %v7116
    %v7119 = vadd.f32 %v7111, %v7117
    %v7120 = vadd.f32 %v7112, %v7117
    %s7121 = scalar_lea.vmem %s11, 64
    %v7122 = vld [vmem:[%s7121] sm:$0xff]
    %v7123 = vld [vmem:[%s7121 + $0x8] sm:$0xff]
    %v7124 = vld [vmem:[%s7121 + $0x10] sm:$0xff]
    %v7125 = vld [vmem:[%s7121 + $0x18] sm:$0xff]
    %s7126 = scalar_lea.vmem %s12, 2
    %v7127 = vld [vmem:[%s7126] sm:$0x1]
    %v7129 = vlaneseq
    %v7130 = vshrl.u32 %v7129, 7
    %v7131 = vsub.s32 0, %v7130
    %v7132 = vrot.slane %v7127, %v7131
    %v7135 = vsel %vm185, %v7119, 0
    %v7138 = vsel %vm185, %v7120, 0
    %7140 = vmatprep.subr.mxu0 0.0
    %7141 = vmatpush1.msra.mxu0 0.0
    %7142 = vmatprep.subr.mxu0 0.0
    %7143 = vmatpush1.msra.mxu0 0.0
    %7144 = vmatprep.subr.mxu0 0.0
    %7145 = vmatpush1.msra.mxu0 0.0
    %7146 = vmatprep.subr.mxu0 0.0
    %7147 = vmatpush1.msra.mxu0 0.0
    %7148 = vmatprep.subr.mxu0 0.0
    %7149 = vmatpush1.msra.mxu0 0.0
    %7150 = vmatprep.subr.mxu0 0.0
    %7151 = vmatpush1.msra.mxu0 0.0
    %7152 = vmatprep.subr.mxu0 0.0
    %7153 = vmatpush1.msra.mxu0 0.0
    %7154 = vmatprep.subr.mxu0 0.0
    %7155 = vmatpush1.msra.mxu0 0.0
    %7156 = vmatprep.subr.mxu0 0.0
    %7157 = vmatpush1.msra.mxu0 0.0
    %7158 = vmatprep.subr.mxu0 0.0
    %7159 = vmatpush1.msra.mxu0 0.0
    %7160 = vmatprep.subr.mxu0 0.0
    %7161 = vmatpush1.msra.mxu0 0.0
    %7162 = vmatprep.subr.mxu0 0.0
    %7163 = vmatpush1.msra.mxu0 0.0
    %7164 = vmatprep.subr.mxu0 0.0
    %7165 = vmatpush1.msra.mxu0 %v7125
    %7166 = vmatprep.subr.mxu0 0.0
    %7167 = vmatpush1.msra.mxu0 %v7124
    %7168 = vmatprep.subr.mxu0 0.0
    %7169 = vmatpush1.msra.mxu0 %v7123
    %7170 = vmatprep.subr.mxu0 0.0
    %7171 = vmatpush1.msra.mxu0 %v7122
    %7172 = vmatprep.subr.mxu0 0.0
    %7173 = vmatpush2.msra.mxu0 0.0
    %7174 = vmatprep.subr.mxu0 0.0
    %7175 = vmatpush2.msra.mxu0 0.0
    %7176 = vmatprep.subr.mxu0 0.0
    %7177 = vmatpush2.msra.mxu0 0.0
    %7178 = vmatprep.subr.mxu0 0.0
    %7179 = vmatpush2.msra.mxu0 0.0
    %7180 = vmatprep.subr.mxu0 0.0
    %7181 = vmatpush2.msra.mxu0 0.0
    %7182 = vmatprep.subr.mxu0 0.0
    %7183 = vmatpush2.msra.mxu0 0.0
    %7184 = vmatprep.subr.mxu0 0.0
    %7185 = vmatpush2.msra.mxu0 0.0
    %7186 = vmatprep.subr.mxu0 0.0
    %7187 = vmatpush2.msra.mxu0 0.0
    %7188 = vmatprep.subr.mxu0 0.0
    %7189 = vmatpush2.msra.mxu0 0.0
    %7190 = vmatprep.subr.mxu0 0.0
    %7191 = vmatpush2.msra.mxu0 0.0
    %7192 = vmatprep.subr.mxu0 0.0
    %7193 = vmatpush2.msra.mxu0 0.0
    %7194 = vmatprep.subr.mxu0 0.0
    %7195 = vmatpush2.msra.mxu0 0.0
    %7196 = vmatprep.subr.mxu0 0.0
    %7197 = vmatpush2.msra.mxu0 0.0
    %7198 = vmatprep.subr.mxu0 0.0
    %7199 = vmatpush2.msra.mxu0 0.0
    %7200 = vmatprep.subr.mxu0 0.0
    %7201 = vmatpush2.msra.mxu0 0.0
    %7202 = vmatprep.subr.mxu0 0.0
    %7203 = vmatpush2.msra.mxu0 0.0
    %7204 = vmatprep.mubr.f32.mxu0 0.0
    %7205 = vmatmul.mubr.f32.gmra.mxu0 %v7135
    %v7206 = vpop.f32.mrf.mxu0
    %v7207 = vadd.f32 %v7132, %v7206
    %v7208 = vpop.f32.mrf.mxu0
    %7209 = vmatprep.mubr.f32.mxu0 0.0
    %7210 = vmatmul.mubr.f32.gmra.mxu0 %v7138
    %v7211 = vpop.f32.mrf.mxu0
    %v7212 = vadd.f32 %v7132, %v7211
    %v7213 = vpop.f32.mrf.mxu0
    %7214 = vdwg.mxu0
    %v7215 = vmul.f32 %v7207, 0.5
    %v7216 = vmul.f32 %v7212, 0.5
    %v7217 = vmul.f32 %v7207, 0.70710677
    %v7218 = vmul.f32 %v7212, 0.70710677
    %v7219 = vand.u32 2147483647, %v7217
    %v7220 = vand.u32 2147483647, %v7218
    %v7221 = vmul.f32 %v7219, 0.3275911
    %v7222 = vmul.f32 %v7220, 0.3275911
    %v7223 = vadd.f32 %v7221, 1.0
    %v7224 = vadd.f32 %v7222, 1.0
    %v7225 = vrcp.pop %v7223
    %v7226 = vmul.f32 1.0, %v7225
    %v7227 = vrcp.pop %v7224
    %v7228 = vmul.f32 1.0, %v7227
    %v7229 = vmul.f32 %v7226, 1.0614054
    %v7230 = vmul.f32 %v7228, 1.0614054
    %v7231 = vadd.f32 %v7229, -1.4531521
    %v7232 = vadd.f32 %v7230, -1.4531521
    %v7233 = vmul.f32 %v7231, %v7226
    %v7234 = vmul.f32 %v7232, %v7228
    %v7235 = vadd.f32 %v7233, 1.4214138
    %v7236 = vadd.f32 %v7234, 1.4214138
    %v7237 = vmul.f32 %v7235, %v7226
    %v7238 = vmul.f32 %v7236, %v7228
    %v7239 = vadd.f32 %v7237, -0.28449672
    %v7240 = vadd.f32 %v7238, -0.28449672
    %v7241 = vmul.f32 %v7239, %v7226
    %v7242 = vmul.f32 %v7240, %v7228
    %v7243 = vadd.f32 %v7241, 0.2548296
    %v7244 = vadd.f32 %v7242, 0.2548296
    %v7245 = vmul.f32 %v7243, %v7226
    %v7246 = vmul.f32 %v7244, %v7228
    %v7247 = vsub.f32 0.0, %v7219
    %v7248 = vsub.f32 0.0, %v7220
    %v7249 = vmul.f32 %v7247, %v7219
    %v7250 = vmul.f32 %v7248, %v7220
    %v7251 = vmul.f32 %v7249, 1.442695
    %v7252 = vpow.pop %v7251
    %v7253 = vmul.f32 %v7250, 1.442695
    %v7254 = vpow.pop %v7253
    %v7255 = vmul.f32 %v7245, %v7252
    %v7256 = vmul.f32 %v7246, %v7254
    %v7257 = vsub.f32 1.0, %v7255
    %v7258 = vsub.f32 1.0, %v7256
    %vm7259 = vcmp.ge.f32.partialorder %v7217, 0.0
    %vm7260 = vcmp.ge.f32.partialorder %v7218, 0.0
    %v7261 = vsub.f32 0.0, %v7257
    %v7262 = vsub.f32 0.0, %v7258
    %v7263 = vsel %vm7259, %v7257, %v7261
    %v7264 = vsel %vm7260, %v7258, %v7262
    %v7265 = vadd.f32 %v7263, 1.0
    %v7266 = vadd.f32 %v7264, 1.0
    %v7267 = vmul.f32 %v7215, %v7265
    %v7268 = vmul.f32 %v7216, %v7266
    %s7269 = scalar_lea.vmem %s13, 256
    %v7270 = vld [vmem:[%s7269] sm:$0xff]
    %v7271 = vld [vmem:[%s7269 + $0x8] sm:$0xff]
    %v7272 = vld [vmem:[%s7269 + $0x10] sm:$0xff]
    %v7273 = vld [vmem:[%s7269 + $0x18] sm:$0xff]
    %v7274 = vld [vmem:[%s7269 + $0x20] sm:$0xff]
    %v7275 = vld [vmem:[%s7269 + $0x28] sm:$0xff]
    %v7276 = vld [vmem:[%s7269 + $0x30] sm:$0xff]
    %v7277 = vld [vmem:[%s7269 + $0x38] sm:$0xff]
    %v7278 = vld [vmem:[%s7269 + $0x40] sm:$0xff]
    %v7279 = vld [vmem:[%s7269 + $0x48] sm:$0xff]
    %v7280 = vld [vmem:[%s7269 + $0x50] sm:$0xff]
    %v7281 = vld [vmem:[%s7269 + $0x58] sm:$0xff]
    %v7282 = vld [vmem:[%s7269 + $0x60] sm:$0xff]
    %v7283 = vld [vmem:[%s7269 + $0x68] sm:$0xff]
    %v7284 = vld [vmem:[%s7269 + $0x70] sm:$0xff]
    %v7285 = vld [vmem:[%s7269 + $0x78] sm:$0xff]
    %s7286 = scalar_lea.vmem %s14, 2
    %v7287 = vld [vmem:[%s7286] sm:$0x1]
    %v7289 = vlaneseq
    %v7290 = vshrl.u32 %v7289, 7
    %v7291 = vsub.s32 0, %v7290
    %v7292 = vrot.slane %v7287, %v7291
    %7294 = vmatprep.subr.mxu0 0.0
    %7295 = vmatpush1.msra.mxu0 %v7285
    %7296 = vmatprep.subr.mxu0 0.0
    %7297 = vmatpush1.msra.mxu0 %v7284
    %7298 = vmatprep.subr.mxu0 0.0
    %7299 = vmatpush1.msra.mxu0 %v7283
    %7300 = vmatprep.subr.mxu0 0.0
    %7301 = vmatpush1.msra.mxu0 %v7282
    %7302 = vmatprep.subr.mxu0 0.0
    %7303 = vmatpush1.msra.mxu0 %v7281
    %7304 = vmatprep.subr.mxu0 0.0
    %7305 = vmatpush1.msra.mxu0 %v7280
    %7306 = vmatprep.subr.mxu0 0.0
    %7307 = vmatpush1.msra.mxu0 %v7279
    %7308 = vmatprep.subr.mxu0 0.0
    %7309 = vmatpush1.msra.mxu0 %v7278
    %7310 = vmatprep.subr.mxu0 0.0
    %7311 = vmatpush1.msra.mxu0 %v7277
    %7312 = vmatprep.subr.mxu0 0.0
    %7313 = vmatpush1.msra.mxu0 %v7276
    %7314 = vmatprep.subr.mxu0 0.0
    %7315 = vmatpush1.msra.mxu0 %v7275
    %7316 = vmatprep.subr.mxu0 0.0
    %7317 = vmatpush1.msra.mxu0 %v7274
    %7318 = vmatprep.subr.mxu0 0.0
    %7319 = vmatpush1.msra.mxu0 %v7273
    %7320 = vmatprep.subr.mxu0 0.0
    %7321 = vmatpush1.msra.mxu0 %v7272
    %7322 = vmatprep.subr.mxu0 0.0
    %7323 = vmatpush1.msra.mxu0 %v7271
    %7324 = vmatprep.subr.mxu0 0.0
    %7325 = vmatpush1.msra.mxu0 %v7270
    %7326 = vmatprep.subr.mxu0 0.0
    %7327 = vmatpush2.msra.mxu0 0.0
    %7328 = vmatprep.subr.mxu0 0.0
    %7329 = vmatpush2.msra.mxu0 0.0
    %7330 = vmatprep.subr.mxu0 0.0
    %7331 = vmatpush2.msra.mxu0 0.0
    %7332 = vmatprep.subr.mxu0 0.0
    %7333 = vmatpush2.msra.mxu0 0.0
    %7334 = vmatprep.subr.mxu0 0.0
    %7335 = vmatpush2.msra.mxu0 0.0
    %7336 = vmatprep.subr.mxu0 0.0
    %7337 = vmatpush2.msra.mxu0 0.0
    %7338 = vmatprep.subr.mxu0 0.0
    %7339 = vmatpush2.msra.mxu0 0.0
    %7340 = vmatprep.subr.mxu0 0.0
    %7341 = vmatpush2.msra.mxu0 0.0
    %7342 = vmatprep.subr.mxu0 0.0
    %7343 = vmatpush2.msra.mxu0 0.0
    %7344 = vmatprep.subr.mxu0 0.0
    %7345 = vmatpush2.msra.mxu0 0.0
    %7346 = vmatprep.subr.mxu0 0.0
    %7347 = vmatpush2.msra.mxu0 0.0
    %7348 = vmatprep.subr.mxu0 0.0
    %7349 = vmatpush2.msra.mxu0 0.0
    %7350 = vmatprep.subr.mxu0 0.0
    %7351 = vmatpush2.msra.mxu0 0.0
    %7352 = vmatprep.subr.mxu0 0.0
    %7353 = vmatpush2.msra.mxu0 0.0
    %7354 = vmatprep.subr.mxu0 0.0
    %7355 = vmatpush2.msra.mxu0 0.0
    %7356 = vmatprep.subr.mxu0 0.0
    %7357 = vmatpush2.msra.mxu0 0.0
    %7358 = vmatprep.mubr.f32.mxu0 0.0
    %7359 = vmatmul.mubr.f32.gmra.mxu0 %v7267
    %v7360 = vpop.f32.mrf.mxu0
    %v7361 = vadd.f32 %v7292, %v7360
    %v7362 = vpop.f32.mrf.mxu0
    %7363 = vmatprep.mubr.f32.mxu0 0.0
    %7364 = vmatmul.mubr.f32.gmra.mxu0 %v7268
    %v7365 = vpop.f32.mrf.mxu0
    %v7366 = vadd.f32 %v7292, %v7365
    %v7367 = vpop.f32.mrf.mxu0
    %7368 = vdwg.mxu0
    %v7369 = vadd.f32 %v7073, %v7361
    %v7370 = vadd.f32 %v7074, %v7366
    %7371 = vst.msk [vmem:[#allocation2] sm:$0xff] %vm185, %v7369
    %7372 = vst.msk [vmem:[#allocation2 + $0x8] sm:$0x3] %vm187, %v7370
    %v7373 = vld [vmem:[#allocation2] sm:$0xff]
    %v7374 = vld [vmem:[#allocation2 + $0x8] sm:$0x3]
    %v7375 = vld [vmem:[%s15] sm:$0x1]
    %v7376 = vld [vmem:[%s16] sm:$0x1]
    %v7377 = vsel %vm185, %v7373, 0.0
    %7378 = vadd.xlane.f32.xlu0 %v7377
    %v7379 = vpop.xlane.xlu0 %7378
    %v7380 = vsel %vm187, %v7374, 0.0
    %7381 = vadd.xlane.f32.xlu0 %v7380
    %v7382 = vpop.xlane.xlu0 %7381
    %v7383 = vmul.f32 %v7379, %v199
    %v7384 = vmul.f32 %v7382, %v199
    %v7385 = vsub.f32 %v7373, %v7383
    %v7386 = vsub.f32 %v7374, %v7384
    %v7387 = vmul.f32 %v7385, %v7385
    %v7388 = vmul.f32 %v7386, %v7386
    %v7389 = vsel %vm185, %v7387, 0.0
    %7390 = vadd.xlane.f32.xlu0 %v7389
    %v7391 = vpop.xlane.xlu0 %7390
    %v7392 = vsel %vm187, %v7388, 0.0
    %7393 = vadd.xlane.f32.xlu0 %v7392
    %v7394 = vpop.xlane.xlu0 %7393
    %v7395 = vmul.f32 %v7391, %v199
    %v7396 = vmul.f32 %v7394, %v199
    %v7397 = vadd.f32 %v7395, 1e-05
    %v7398 = vadd.f32 %v7396, 1e-05
    %v7399 = vrsqrt.pop %v7397
    %v7400 = vrsqrt.pop %v7398
    %v7401 = vmul.f32 %v7385, %v7399
    %v7402 = vmul.f32 %v7386, %v7400
    %v7404 = vlaneseq
    %v7405 = vshrl.u32 %v7404, 7
    %v7406 = vsub.s32 0, %v7405
    %v7407 = vrot.slane %v7375, %v7406
    %v7409 = vmul.f32 %v7401, %v7407
    %v7410 = vmul.f32 %v7402, %v7407
    %v7412 = vlaneseq
    %v7413 = vshrl.u32 %v7412, 7
    %v7414 = vsub.s32 0, %v7413
    %v7415 = vrot.slane %v7376, %v7414
    %v7417 = vadd.f32 %v7409, %v7415
    %v7418 = vadd.f32 %v7410, %v7415
    %7419 = vst.msk [vmem:[#allocation2] sm:$0xff] %vm185, %v7417
    %7420 = vst.msk [vmem:[#allocation2 + $0x8] sm:$0x3] %vm187, %v7418
    %v7421 = vld [vmem:[%s17] sm:$0xff]
    %v7422 = vld [vmem:[%s17 + $0x8] sm:$0xff]
    %v7423 = vld [vmem:[%s17 + $0x10] sm:$0xff]
    %v7424 = vld [vmem:[%s17 + $0x18] sm:$0xff]
    %v7425 = vld [vmem:[%s18] sm:$0x1]
    %v7426 = vld [vmem:[%s19] sm:$0xff]
    %v7427 = vld [vmem:[%s20] sm:$0x1]
    %v7428 = vld [vmem:[#allocation2] sm:$0x1]
    %v7429 = vld [vmem:[#allocation2] sm:$0x1f]
    %v7430 = vsel %vm1312, %v7429, 0.0
    %v7431 = vrot.slane %v7430, 4
    %v7432 = vadd.f32 %v7430, %v7431
    %v7433 = vrot.slane %v7432, 2
    %v7434 = vadd.f32 %v7432, %v7433
    %v7435 = vrot.slane %v7434, 1
    %v7436 = vadd.f32 %v7434, %v7435
    %v7437 = vrcp.pop 5.0
    %v7438 = vmul.f32 %v7436, %v7437
    %v7439 = vld [vmem:[#allocation2 + $0x1] sm:$0xf]
    %v7441 = vlaneseq
    %v7442 = vshrl.u32 %v7441, 7
    %v7443 = vsub.s32 0, %v7442
    %v7444 = vrot.slane %v7425, %v7443
    %v7447 = vsel %vm185, %v7439, 0
    %7449 = vmatprep.subr.mxu0 0.0
    %7450 = vmatpush1.msra.mxu0 0.0
    %7451 = vmatprep.subr.mxu0 0.0
    %7452 = vmatpush1.msra.mxu0 0.0
    %7453 = vmatprep.subr.mxu0 0.0
    %7454 = vmatpush1.msra.mxu0 0.0
    %7455 = vmatprep.subr.mxu0 0.0
    %7456 = vmatpush1.msra.mxu0 0.0
    %7457 = vmatprep.subr.mxu0 0.0
    %7458 = vmatpush1.msra.mxu0 0.0
    %7459 = vmatprep.subr.mxu0 0.0
    %7460 = vmatpush1.msra.mxu0 0.0
    %7461 = vmatprep.subr.mxu0 0.0
    %7462 = vmatpush1.msra.mxu0 0.0
    %7463 = vmatprep.subr.mxu0 0.0
    %7464 = vmatpush1.msra.mxu0 0.0
    %7465 = vmatprep.subr.mxu0 0.0
    %7466 = vmatpush1.msra.mxu0 0.0
    %7467 = vmatprep.subr.mxu0 0.0
    %7468 = vmatpush1.msra.mxu0 0.0
    %7469 = vmatprep.subr.mxu0 0.0
    %7470 = vmatpush1.msra.mxu0 0.0
    %7471 = vmatprep.subr.mxu0 0.0
    %7472 = vmatpush1.msra.mxu0 0.0
    %7473 = vmatprep.subr.mxu0 0.0
    %7474 = vmatpush1.msra.mxu0 %v7424
    %7475 = vmatprep.subr.mxu0 0.0
    %7476 = vmatpush1.msra.mxu0 %v7423
    %7477 = vmatprep.subr.mxu0 0.0
    %7478 = vmatpush1.msra.mxu0 %v7422
    %7479 = vmatprep.subr.mxu0 0.0
    %7480 = vmatpush1.msra.mxu0 %v7421
    %7481 = vmatprep.subr.mxu0 0.0
    %7482 = vmatpush2.msra.mxu0 0.0
    %7483 = vmatprep.subr.mxu0 0.0
    %7484 = vmatpush2.msra.mxu0 0.0
    %7485 = vmatprep.subr.mxu0 0.0
    %7486 = vmatpush2.msra.mxu0 0.0
    %7487 = vmatprep.subr.mxu0 0.0
    %7488 = vmatpush2.msra.mxu0 0.0
    %7489 = vmatprep.subr.mxu0 0.0
    %7490 = vmatpush2.msra.mxu0 0.0
    %7491 = vmatprep.subr.mxu0 0.0
    %7492 = vmatpush2.msra.mxu0 0.0
    %7493 = vmatprep.subr.mxu0 0.0
    %7494 = vmatpush2.msra.mxu0 0.0
    %7495 = vmatprep.subr.mxu0 0.0
    %7496 = vmatpush2.msra.mxu0 0.0
    %7497 = vmatprep.subr.mxu0 0.0
    %7498 = vmatpush2.msra.mxu0 0.0
    %7499 = vmatprep.subr.mxu0 0.0
    %7500 = vmatpush2.msra.mxu0 0.0
    %7501 = vmatprep.subr.mxu0 0.0
    %7502 = vmatpush2.msra.mxu0 0.0
    %7503 = vmatprep.subr.mxu0 0.0
    %7504 = vmatpush2.msra.mxu0 0.0
    %7505 = vmatprep.subr.mxu0 0.0
    %7506 = vmatpush2.msra.mxu0 0.0
    %7507 = vmatprep.subr.mxu0 0.0
    %7508 = vmatpush2.msra.mxu0 0.0
    %7509 = vmatprep.subr.mxu0 0.0
    %7510 = vmatpush2.msra.mxu0 0.0
    %7511 = vmatprep.subr.mxu0 0.0
    %7512 = vmatpush2.msra.mxu0 0.0
    %7513 = vmatprep.mubr.f32.mxu0 0.0
    %7514 = vmatmul.mubr.f32.gmra.mxu0 %v7447
    %v7515 = vpop.f32.mrf.mxu0
    %v7516 = vadd.f32 %v7444, %v7515
    %v7517 = vpop.f32.mrf.mxu0
    %7518 = vdwg.mxu0
    %v7519 = vmul.f32 %v7516, 0.5
    %v7520 = vmul.f32 %v7516, 0.70710677
    %v7521 = vand.u32 2147483647, %v7520
    %v7522 = vmul.f32 %v7521, 0.3275911
    %v7523 = vadd.f32 %v7522, 1.0
    %v7524 = vrcp.pop %v7523
    %v7525 = vmul.f32 1.0, %v7524
    %v7526 = vmul.f32 %v7525, 1.0614054
    %v7527 = vadd.f32 %v7526, -1.4531521
    %v7528 = vmul.f32 %v7527, %v7525
    %v7529 = vadd.f32 %v7528, 1.4214138
    %v7530 = vmul.f32 %v7529, %v7525
    %v7531 = vadd.f32 %v7530, -0.28449672
    %v7532 = vmul.f32 %v7531, %v7525
    %v7533 = vadd.f32 %v7532, 0.2548296
    %v7534 = vmul.f32 %v7533, %v7525
    %v7535 = vsub.f32 0.0, %v7521
    %v7536 = vmul.f32 %v7535, %v7521
    %v7537 = vmul.f32 %v7536, 1.442695
    %v7538 = vpow.pop %v7537
    %v7539 = vmul.f32 %v7534, %v7538
    %v7540 = vsub.f32 1.0, %v7539
    %vm7541 = vcmp.ge.f32.partialorder %v7520, 0.0
    %v7542 = vsub.f32 0.0, %v7540
    %v7543 = vsel %vm7541, %v7540, %v7542
    %v7544 = vadd.f32 %v7543, 1.0
    %v7545 = vmul.f32 %v7519, %v7544
    %v7547 = vlaneseq
    %v7548 = vshrl.u32 %v7547, 7
    %v7549 = vsub.s32 0, %v7548
    %v7550 = vrot.slane %v7427, %v7549
    %v7553 = vsel %vm340, %v7545, 0
    %7555 = vmatprep.subr.mxu0 0.0
    %7556 = vmatpush1.msra.mxu0 0.0
    %7557 = vmatprep.subr.mxu0 0.0
    %7558 = vmatpush1.msra.mxu0 0.0
    %7559 = vmatprep.subr.mxu0 0.0
    %7560 = vmatpush1.msra.mxu0 0.0
    %7561 = vmatprep.subr.mxu0 0.0
    %7562 = vmatpush1.msra.mxu0 0.0
    %7563 = vmatprep.subr.mxu0 0.0
    %7564 = vmatpush1.msra.mxu0 0.0
    %7565 = vmatprep.subr.mxu0 0.0
    %7566 = vmatpush1.msra.mxu0 0.0
    %7567 = vmatprep.subr.mxu0 0.0
    %7568 = vmatpush1.msra.mxu0 0.0
    %7569 = vmatprep.subr.mxu0 0.0
    %7570 = vmatpush1.msra.mxu0 0.0
    %7571 = vmatprep.subr.mxu0 0.0
    %7572 = vmatpush1.msra.mxu0 0.0
    %7573 = vmatprep.subr.mxu0 0.0
    %7574 = vmatpush1.msra.mxu0 0.0
    %7575 = vmatprep.subr.mxu0 0.0
    %7576 = vmatpush1.msra.mxu0 0.0
    %7577 = vmatprep.subr.mxu0 0.0
    %7578 = vmatpush1.msra.mxu0 0.0
    %7579 = vmatprep.subr.mxu0 0.0
    %7580 = vmatpush1.msra.mxu0 0.0
    %7581 = vmatprep.subr.mxu0 0.0
    %7582 = vmatpush1.msra.mxu0 0.0
    %7583 = vmatprep.subr.mxu0 0.0
    %7584 = vmatpush1.msra.mxu0 0.0
    %7585 = vmatprep.subr.mxu0 0.0
    %7586 = vmatpush1.msra.mxu0 %v7426
    %7587 = vmatprep.subr.mxu0 0.0
    %7588 = vmatpush2.msra.mxu0 0.0
    %7589 = vmatprep.subr.mxu0 0.0
    %7590 = vmatpush2.msra.mxu0 0.0
    %7591 = vmatprep.subr.mxu0 0.0
    %7592 = vmatpush2.msra.mxu0 0.0
    %7593 = vmatprep.subr.mxu0 0.0
    %7594 = vmatpush2.msra.mxu0 0.0
    %7595 = vmatprep.subr.mxu0 0.0
    %7596 = vmatpush2.msra.mxu0 0.0
    %7597 = vmatprep.subr.mxu0 0.0
    %7598 = vmatpush2.msra.mxu0 0.0
    %7599 = vmatprep.subr.mxu0 0.0
    %7600 = vmatpush2.msra.mxu0 0.0
    %7601 = vmatprep.subr.mxu0 0.0
    %7602 = vmatpush2.msra.mxu0 0.0
    %7603 = vmatprep.subr.mxu0 0.0
    %7604 = vmatpush2.msra.mxu0 0.0
    %7605 = vmatprep.subr.mxu0 0.0
    %7606 = vmatpush2.msra.mxu0 0.0
    %7607 = vmatprep.subr.mxu0 0.0
    %7608 = vmatpush2.msra.mxu0 0.0
    %7609 = vmatprep.subr.mxu0 0.0
    %7610 = vmatpush2.msra.mxu0 0.0
    %7611 = vmatprep.subr.mxu0 0.0
    %7612 = vmatpush2.msra.mxu0 0.0
    %7613 = vmatprep.subr.mxu0 0.0
    %7614 = vmatpush2.msra.mxu0 0.0
    %7615 = vmatprep.subr.mxu0 0.0
    %7616 = vmatpush2.msra.mxu0 0.0
    %7617 = vmatprep.subr.mxu0 0.0
    %7618 = vmatpush2.msra.mxu0 0.0
    %7619 = vmatprep.mubr.f32.mxu0 0.0
    %7620 = vmatmul.mubr.f32.gmra.mxu0 %v7553
    %v7621 = vpop.f32.mrf.mxu0
    %v7622 = vadd.f32 %v7550, %v7621
    %v7623 = vpop.f32.mrf.mxu0
    %7624 = vdwg.mxu0
    %v7625 = vmul.f32 %v7622, 0.5
    %v7626 = vmul.f32 %v7622, 0.70710677
    %v7627 = vand.u32 2147483647, %v7626
    %v7628 = vmul.f32 %v7627, 0.3275911
    %v7629 = vadd.f32 %v7628, 1.0
    %v7630 = vrcp.pop %v7629
    %v7631 = vmul.f32 1.0, %v7630
    %v7632 = vmul.f32 %v7631, 1.0614054
    %v7633 = vadd.f32 %v7632, -1.4531521
    %v7634 = vmul.f32 %v7633, %v7631
    %v7635 = vadd.f32 %v7634, 1.4214138
    %v7636 = vmul.f32 %v7635, %v7631
    %v7637 = vadd.f32 %v7636, -0.28449672
    %v7638 = vmul.f32 %v7637, %v7631
    %v7639 = vadd.f32 %v7638, 0.2548296
    %v7640 = vmul.f32 %v7639, %v7631
    %v7641 = vsub.f32 0.0, %v7627
    %v7642 = vmul.f32 %v7641, %v7627
    %v7643 = vmul.f32 %v7642, 1.442695
    %v7644 = vpow.pop %v7643
    %v7645 = vmul.f32 %v7640, %v7644
    %v7646 = vsub.f32 1.0, %v7645
    %vm7647 = vcmp.ge.f32.partialorder %v7626, 0.0
    %v7648 = vsub.f32 0.0, %v7646
    %v7649 = vsel %vm7647, %v7646, %v7648
    %v7650 = vadd.f32 %v7649, 1.0
    %v7651 = vmul.f32 %v7625, %v7650
    %vm7652 = vcmask 257024
    %v7653 = vsel %vm7652, %v7651, -inf
    %v7654 = vrot.slane %v7653, 4
    %v7655 = vmax.f32 %v7653, %v7654
    %v7656 = vrot.slane %v7655, 2
    %v7657 = vmax.f32 %v7655, %v7656
    %v7658 = vrot.slane %v7657, 1
    %v7659 = vmax.f32 %v7657, %v7658
    %vm7660 = vcmask 253952
    %7661 = vst.msk [vmem:[#allocation4] sm:$0x1] %vm7660, %v7428
    %7662 = vst.msk [vmem:[%s22] sm:$0x1] %vm7660, %v7659
    %v7663 = vmul.f32 %v7428, %v7428
    %v7664 = vsel %vm7660, %v7663, 0.0
    %7665 = vadd.xlane.f32.xlu0 %v7664
    %v7666 = vpop.xlane.xlu0 %7665
    %v7667 = vrsqrt.pop %v7666
    %v7668 = vmul.f32 %v7666, %v7667
    %vm7669 = vcmp.eq.f32.partialorder %v7666, inf
    %v7670 = vsel %vm7669, %v7666, %v7668
    %vm7671 = vcmp.eq.f32.partialorder %v7666, 0.0
    %v7672 = vand.u32 %v7666, 2147483648
    %v7673 = vsel %vm7671, %v7672, %v7670
    %v7674 = vmax.f32 %v7673, 1e-12
    %v7675 = vrcp.pop %v7674
    %v7676 = vmul.f32 %v7428, %v7675
    %7677 = vst.msk [vmem:[#allocation6] sm:$0x1] %vm7660, %v7676
    %v7678 = vmul.f32 %v7438, %v7438
    %v7679 = vsel %vm185, %v7678, 0.0
    %7680 = vadd.xlane.f32.xlu0 %v7679
    %v7681 = vpop.xlane.xlu0 %7680
    %v7682 = vrsqrt.pop %v7681
    %v7683 = vmul.f32 %v7681, %v7682
    %vm7684 = vcmp.eq.f32.partialorder %v7681, inf
    %v7685 = vsel %vm7684, %v7681, %v7683
    %vm7686 = vcmp.eq.f32.partialorder %v7681, 0.0
    %v7687 = vand.u32 %v7681, 2147483648
    %v7688 = vsel %vm7686, %v7687, %v7685
    %v7689 = vmax.f32 %v7688, 1e-12
    %v7690 = vrcp.pop %v7689
    %v7691 = vmul.f32 %v7438, %v7690
    %7693 = vrot.lane.b32.xlu0 %v7691, 32
    %v7694 = vpop.permute.xlu0 %7693
    %vm7696 = vcmask 516352
    %7697 = vst.msk [vmem:[#allocation6] sm:$0x1] %vm7696, %v7694
    %v7698 = vld [vmem:[#allocation2 + $0x5] sm:$0x1]
    %v7699 = vld [vmem:[#allocation2 + $0x5] sm:$0x1f]
    %v7700 = vsel %vm1312, %v7699, 0.0
    %v7701 = vrot.slane %v7700, 4
    %v7702 = vadd.f32 %v7700, %v7701
    %v7703 = vrot.slane %v7702, 2
    %v7704 = vadd.f32 %v7702, %v7703
    %v7705 = vrot.slane %v7704, 1
    %v7706 = vadd.f32 %v7704, %v7705
    %v7707 = vmul.f32 %v7706, %v7437
    %v7708 = vld [vmem:[#allocation2 + $0x6] sm:$0xf]
    %v7710 = vsel %vm185, %v7708, 0
    %7712 = vmatprep.subr.mxu0 0.0
    %7713 = vmatpush1.msra.mxu0 0.0
    %7714 = vmatprep.subr.mxu0 0.0
    %7715 = vmatpush1.msra.mxu0 0.0
    %7716 = vmatprep.subr.mxu0 0.0
    %7717 = vmatpush1.msra.mxu0 0.0
    %7718 = vmatprep.subr.mxu0 0.0
    %7719 = vmatpush1.msra.mxu0 0.0
    %7720 = vmatprep.subr.mxu0 0.0
    %7721 = vmatpush1.msra.mxu0 0.0
    %7722 = vmatprep.subr.mxu0 0.0
    %7723 = vmatpush1.msra.mxu0 0.0
    %7724 = vmatprep.subr.mxu0 0.0
    %7725 = vmatpush1.msra.mxu0 0.0
    %7726 = vmatprep.subr.mxu0 0.0
    %7727 = vmatpush1.msra.mxu0 0.0
    %7728 = vmatprep.subr.mxu0 0.0
    %7729 = vmatpush1.msra.mxu0 0.0
    %7730 = vmatprep.subr.mxu0 0.0
    %7731 = vmatpush1.msra.mxu0 0.0
    %7732 = vmatprep.subr.mxu0 0.0
    %7733 = vmatpush1.msra.mxu0 0.0
    %7734 = vmatprep.subr.mxu0 0.0
    %7735 = vmatpush1.msra.mxu0 0.0
    %7736 = vmatprep.subr.mxu0 0.0
    %7737 = vmatpush1.msra.mxu0 %v7424
    %7738 = vmatprep.subr.mxu0 0.0
    %7739 = vmatpush1.msra.mxu0 %v7423
    %7740 = vmatprep.subr.mxu0 0.0
    %7741 = vmatpush1.msra.mxu0 %v7422
    %7742 = vmatprep.subr.mxu0 0.0
    %7743 = vmatpush1.msra.mxu0 %v7421
    %7744 = vmatprep.subr.mxu0 0.0
    %7745 = vmatpush2.msra.mxu0 0.0
    %7746 = vmatprep.subr.mxu0 0.0
    %7747 = vmatpush2.msra.mxu0 0.0
    %7748 = vmatprep.subr.mxu0 0.0
    %7749 = vmatpush2.msra.mxu0 0.0
    %7750 = vmatprep.subr.mxu0 0.0
    %7751 = vmatpush2.msra.mxu0 0.0
    %7752 = vmatprep.subr.mxu0 0.0
    %7753 = vmatpush2.msra.mxu0 0.0
    %7754 = vmatprep.subr.mxu0 0.0
    %7755 = vmatpush2.msra.mxu0 0.0
    %7756 = vmatprep.subr.mxu0 0.0
    %7757 = vmatpush2.msra.mxu0 0.0
    %7758 = vmatprep.subr.mxu0 0.0
    %7759 = vmatpush2.msra.mxu0 0.0
    %7760 = vmatprep.subr.mxu0 0.0
    %7761 = vmatpush2.msra.mxu0 0.0
    %7762 = vmatprep.subr.mxu0 0.0
    %7763 = vmatpush2.msra.mxu0 0.0
    %7764 = vmatprep.subr.mxu0 0.0
    %7765 = vmatpush2.msra.mxu0 0.0
    %7766 = vmatprep.subr.mxu0 0.0
    %7767 = vmatpush2.msra.mxu0 0.0
    %7768 = vmatprep.subr.mxu0 0.0
    %7769 = vmatpush2.msra.mxu0 0.0
    %7770 = vmatprep.subr.mxu0 0.0
    %7771 = vmatpush2.msra.mxu0 0.0
    %7772 = vmatprep.subr.mxu0 0.0
    %7773 = vmatpush2.msra.mxu0 0.0
    %7774 = vmatprep.subr.mxu0 0.0
    %7775 = vmatpush2.msra.mxu0 0.0
    %7776 = vmatprep.mubr.f32.mxu0 0.0
    %7777 = vmatmul.mubr.f32.gmra.mxu0 %v7710
    %v7778 = vpop.f32.mrf.mxu0
    %v7779 = vadd.f32 %v7444, %v7778
    %v7780 = vpop.f32.mrf.mxu0
    %7781 = vdwg.mxu0
    %v7782 = vmul.f32 %v7779, 0.5
    %v7783 = vmul.f32 %v7779, 0.70710677
    %v7784 = vand.u32 2147483647, %v7783
    %v7785 = vmul.f32 %v7784, 0.3275911
    %v7786 = vadd.f32 %v7785, 1.0
    %v7787 = vrcp.pop %v7786
    %v7788 = vmul.f32 1.0, %v7787
    %v7789 = vmul.f32 %v7788, 1.0614054
    %v7790 = vadd.f32 %v7789, -1.4531521
    %v7791 = vmul.f32 %v7790, %v7788
    %v7792 = vadd.f32 %v7791, 1.4214138
    %v7793 = vmul.f32 %v7792, %v7788
    %v7794 = vadd.f32 %v7793, -0.28449672
    %v7795 = vmul.f32 %v7794, %v7788
    %v7796 = vadd.f32 %v7795, 0.2548296
    %v7797 = vmul.f32 %v7796, %v7788
    %v7798 = vsub.f32 0.0, %v7784
    %v7799 = vmul.f32 %v7798, %v7784
    %v7800 = vmul.f32 %v7799, 1.442695
    %v7801 = vpow.pop %v7800
    %v7802 = vmul.f32 %v7797, %v7801
    %v7803 = vsub.f32 1.0, %v7802
    %vm7804 = vcmp.ge.f32.partialorder %v7783, 0.0
    %v7805 = vsub.f32 0.0, %v7803
    %v7806 = vsel %vm7804, %v7803, %v7805
    %v7807 = vadd.f32 %v7806, 1.0
    %v7808 = vmul.f32 %v7782, %v7807
    %v7810 = vsel %vm340, %v7808, 0
    %7812 = vmatprep.subr.mxu0 0.0
    %7813 = vmatpush1.msra.mxu0 0.0
    %7814 = vmatprep.subr.mxu0 0.0
    %7815 = vmatpush1.msra.mxu0 0.0
    %7816 = vmatprep.subr.mxu0 0.0
    %7817 = vmatpush1.msra.mxu0 0.0
    %7818 = vmatprep.subr.mxu0 0.0
    %7819 = vmatpush1.msra.mxu0 0.0
    %7820 = vmatprep.subr.mxu0 0.0
    %7821 = vmatpush1.msra.mxu0 0.0
    %7822 = vmatprep.subr.mxu0 0.0
    %7823 = vmatpush1.msra.mxu0 0.0
    %7824 = vmatprep.subr.mxu0 0.0
    %7825 = vmatpush1.msra.mxu0 0.0
    %7826 = vmatprep.subr.mxu0 0.0
    %7827 = vmatpush1.msra.mxu0 0.0
    %7828 = vmatprep.subr.mxu0 0.0
    %7829 = vmatpush1.msra.mxu0 0.0
    %7830 = vmatprep.subr.mxu0 0.0
    %7831 = vmatpush1.msra.mxu0 0.0
    %7832 = vmatprep.subr.mxu0 0.0
    %7833 = vmatpush1.msra.mxu0 0.0
    %7834 = vmatprep.subr.mxu0 0.0
    %7835 = vmatpush1.msra.mxu0 0.0
    %7836 = vmatprep.subr.mxu0 0.0
    %7837 = vmatpush1.msra.mxu0 0.0
    %7838 = vmatprep.subr.mxu0 0.0
    %7839 = vmatpush1.msra.mxu0 0.0
    %7840 = vmatprep.subr.mxu0 0.0
    %7841 = vmatpush1.msra.mxu0 0.0
    %7842 = vmatprep.subr.mxu0 0.0
    %7843 = vmatpush1.msra.mxu0 %v7426
    %7844 = vmatprep.subr.mxu0 0.0
    %7845 = vmatpush2.msra.mxu0 0.0
    %7846 = vmatprep.subr.mxu0 0.0
    %7847 = vmatpush2.msra.mxu0 0.0
    %7848 = vmatprep.subr.mxu0 0.0
    %7849 = vmatpush2.msra.mxu0 0.0
    %7850 = vmatprep.subr.mxu0 0.0
    %7851 = vmatpush2.msra.mxu0 0.0
    %7852 = vmatprep.subr.mxu0 0.0
    %7853 = vmatpush2.msra.mxu0 0.0
    %7854 = vmatprep.subr.mxu0 0.0
    %7855 = vmatpush2.msra.mxu0 0.0
    %7856 = vmatprep.subr.mxu0 0.0
    %7857 = vmatpush2.msra.mxu0 0.0
    %7858 = vmatprep.subr.mxu0 0.0
    %7859 = vmatpush2.msra.mxu0 0.0
    %7860 = vmatprep.subr.mxu0 0.0
    %7861 = vmatpush2.msra.mxu0 0.0
    %7862 = vmatprep.subr.mxu0 0.0
    %7863 = vmatpush2.msra.mxu0 0.0
    %7864 = vmatprep.subr.mxu0 0.0
    %7865 = vmatpush2.msra.mxu0 0.0
    %7866 = vmatprep.subr.mxu0 0.0
    %7867 = vmatpush2.msra.mxu0 0.0
    %7868 = vmatprep.subr.mxu0 0.0
    %7869 = vmatpush2.msra.mxu0 0.0
    %7870 = vmatprep.subr.mxu0 0.0
    %7871 = vmatpush2.msra.mxu0 0.0
    %7872 = vmatprep.subr.mxu0 0.0
    %7873 = vmatpush2.msra.mxu0 0.0
    %7874 = vmatprep.subr.mxu0 0.0
    %7875 = vmatpush2.msra.mxu0 0.0
    %7876 = vmatprep.mubr.f32.mxu0 0.0
    %7877 = vmatmul.mubr.f32.gmra.mxu0 %v7810
    %v7878 = vpop.f32.mrf.mxu0
    %v7879 = vadd.f32 %v7550, %v7878
    %v7880 = vpop.f32.mrf.mxu0
    %7881 = vdwg.mxu0
    %v7882 = vmul.f32 %v7879, 0.5
    %v7883 = vmul.f32 %v7879, 0.70710677
    %v7884 = vand.u32 2147483647, %v7883
    %v7885 = vmul.f32 %v7884, 0.3275911
    %v7886 = vadd.f32 %v7885, 1.0
    %v7887 = vrcp.pop %v7886
    %v7888 = vmul.f32 1.0, %v7887
    %v7889 = vmul.f32 %v7888, 1.0614054
    %v7890 = vadd.f32 %v7889, -1.4531521
    %v7891 = vmul.f32 %v7890, %v7888
    %v7892 = vadd.f32 %v7891, 1.4214138
    %v7893 = vmul.f32 %v7892, %v7888
    %v7894 = vadd.f32 %v7893, -0.28449672
    %v7895 = vmul.f32 %v7894, %v7888
    %v7896 = vadd.f32 %v7895, 0.2548296
    %v7897 = vmul.f32 %v7896, %v7888
    %v7898 = vsub.f32 0.0, %v7884
    %v7899 = vmul.f32 %v7898, %v7884
    %v7900 = vmul.f32 %v7899, 1.442695
    %v7901 = vpow.pop %v7900
    %v7902 = vmul.f32 %v7897, %v7901
    %v7903 = vsub.f32 1.0, %v7902
    %vm7904 = vcmp.ge.f32.partialorder %v7883, 0.0
    %v7905 = vsub.f32 0.0, %v7903
    %v7906 = vsel %vm7904, %v7903, %v7905
    %v7907 = vadd.f32 %v7906, 1.0
    %v7908 = vmul.f32 %v7882, %v7907
    %v7909 = vsel %vm7652, %v7908, -inf
    %v7910 = vrot.slane %v7909, 4
    %v7911 = vmax.f32 %v7909, %v7910
    %v7912 = vrot.slane %v7911, 2
    %v7913 = vmax.f32 %v7911, %v7912
    %v7914 = vrot.slane %v7913, 1
    %v7915 = vmax.f32 %v7913, %v7914
    %7916 = vst.msk [vmem:[#allocation4 + $0x1] sm:$0x1] %vm7660, %v7698
    %7917 = vst.msk [vmem:[%s22 + $0x1] sm:$0x1] %vm7660, %v7915
    %v7918 = vmul.f32 %v7698, %v7698
    %v7919 = vsel %vm7660, %v7918, 0.0
    %7920 = vadd.xlane.f32.xlu0 %v7919
    %v7921 = vpop.xlane.xlu0 %7920
    %v7922 = vrsqrt.pop %v7921
    %v7923 = vmul.f32 %v7921, %v7922
    %vm7924 = vcmp.eq.f32.partialorder %v7921, inf
    %v7925 = vsel %vm7924, %v7921, %v7923
    %vm7926 = vcmp.eq.f32.partialorder %v7921, 0.0
    %v7927 = vand.u32 %v7921, 2147483648
    %v7928 = vsel %vm7926, %v7927, %v7925
    %v7929 = vmax.f32 %v7928, 1e-12
    %v7930 = vrcp.pop %v7929
    %v7931 = vmul.f32 %v7698, %v7930
    %7932 = vst.msk [vmem:[#allocation6 + $0x1] sm:$0x1] %vm7660, %v7931
    %v7933 = vmul.f32 %v7707, %v7707
    %v7934 = vsel %vm185, %v7933, 0.0
    %7935 = vadd.xlane.f32.xlu0 %v7934
    %v7936 = vpop.xlane.xlu0 %7935
    %v7937 = vrsqrt.pop %v7936
    %v7938 = vmul.f32 %v7936, %v7937
    %vm7939 = vcmp.eq.f32.partialorder %v7936, inf
    %v7940 = vsel %vm7939, %v7936, %v7938
    %vm7941 = vcmp.eq.f32.partialorder %v7936, 0.0
    %v7942 = vand.u32 %v7936, 2147483648
    %v7943 = vsel %vm7941, %v7942, %v7940
    %v7944 = vmax.f32 %v7943, 1e-12
    %v7945 = vrcp.pop %v7944
    %v7946 = vmul.f32 %v7707, %v7945
    %7948 = vrot.lane.b32.xlu0 %v7946, 32
    %v7949 = vpop.permute.xlu0 %7948
    %7951 = vst.msk [vmem:[#allocation6 + $0x1] sm:$0x1] %vm7696, %v7949
    // Predicated region
    $region86: #{attribute_transformer_forward.1} parent=1 // pred_check
      _
    $region87: #{attribute_transformer_forward.1} parent=1 // pred_check_branch
      %7953 = sbr.rel (0) target = $region89
    $region88: #{attribute_transformer_forward.1} parent=1 // pred_region
      %s7955 = ssub.s32 32, 32
      %7956 = vsyncadd [#allocation5], %s7955
      %s7958 = sshll.u32 [#allocation4], 4
      %s7959 = int_to_ptr.vmem [resolvable:$true] %s7958
      %7961 = dma.vmem_to_hbm [thread:$0]  %s7959, 32, %s21, [#allocation5]
    $region89: #{attribute_transformer_forward.1} parent=1 // pred_fallthru
      _
    // Predicated region
    $region90: #{attribute_transformer_forward.1} parent=1 // pred_check
      _
    $region91: #{attribute_transformer_forward.1} parent=1 // pred_check_branch
      %7963 = sbr.rel (0) target = $region93
    $region92: #{attribute_transformer_forward.1} parent=1 // pred_region
      _
    $region93: #{attribute_transformer_forward.1} parent=1 // pred_fallthru
      _
    // Predicated region
    $region94: #{attribute_transformer_forward.1} parent=1 // pred_check
      _
    $region95: #{attribute_transformer_forward.1} parent=1 // pred_check_branch
      %7965 = sbr.rel (0) target = $region97
    $region96: #{attribute_transformer_forward.1} parent=1 // pred_region
      %s7967 = ssub.s32 32, 32
      %7968 = vsyncadd [#allocation7], %s7967
      %s7970 = sshll.u32 [#allocation6], 4
      %s7971 = int_to_ptr.vmem [resolvable:$true] %s7970
      %7973 = dma.vmem_to_hbm [thread:$0]  %s7971, 32, %s23, [#allocation7]
    $region97: #{attribute_transformer_forward.1} parent=1 // pred_fallthru
      _
    // Predicated region
    $region98: #{attribute_transformer_forward.1} parent=1 // pred_check
      _
    $region99: #{attribute_transformer_forward.1} parent=1 // pred_check_branch
      %7975 = sbr.rel (0) target = $region101
    $region100: #{attribute_transformer_forward.1} parent=1 // pred_region
      %7976 = dma.done [#allocation5], 32
    $region101: #{attribute_transformer_forward.1} parent=1 // pred_fallthru
      _
    // Predicated region
    $region102: #{attribute_transformer_forward.1} parent=1 // pred_check
      _
    $region103: #{attribute_transformer_forward.1} parent=1 // pred_check_branch
      %7978 = sbr.rel (0) target = $region105
    $region104: #{attribute_transformer_forward.1} parent=1 // pred_region
      _
    $region105: #{attribute_transformer_forward.1} parent=1 // pred_fallthru
      _
    // Predicated region
    $region106: #{attribute_transformer_forward.1} parent=1 // pred_check
      _
    $region107: #{attribute_transformer_forward.1} parent=1 // pred_check_branch
      %7980 = sbr.rel (0) target = $region109
    $region108: #{attribute_transformer_forward.1} parent=1 // pred_region
      %7981 = dma.done [#allocation7], 32
    $region109: #{attribute_transformer_forward.1} parent=1 // pred_fallthru
      _
    %7982 = vsyncpa [#allocation5], 1
    %7983 = vsyncpa [#allocation7], 1

</llo_original>
